<compile_context>
chip_gen: v5e
topology: v5e:2x2
jax: 0.10.0
libtpu: 0.0.40
codegen_flags: <defaults>
</compile_context>

<pallas_src>
import jax
import jax.numpy as jnp
from jax.experimental import pallas as pl
from jax.experimental.pallas import tpu as pltpu

IMAGE_PIXELS = 28 * 28                 # 784
N_HIDDENS = [1000, 500, 250, 30]
LANE = 128
SUBLANE = 8


def _round_up(x, m):
    return (x + m - 1) // m * m


# Layer widths: encoder 784->1000->500->250->30, decoder mirrors back to 784.
_ENC = [IMAGE_PIXELS] + N_HIDDENS
ORIG_DIMS = _ENC + _ENC[-2::-1]        # 784,1000,500,250,30,250,500,1000,784
# Pad interior (hidden) dims to 128; leave the outer 784 dims unpadded
# (full-dim blocks are legal and avoid wrapper-side feature padding).
PAD_DIMS = [d if i in (0, len(ORIG_DIMS) - 1) else _round_up(d, LANE)
            for i, d in enumerate(ORIG_DIMS)]          # 784,1024,512,256,128,256,512,1024,784
N_LAYERS = len(ORIG_DIMS) - 1                          # 8


# ---------------------------------------------------------------------------
# Fused kernel: one batch tile through all 8 Linear(+RoSwish) layers.
# refs = (x_tile, [w, packed_params] * 8 ..., out_tile)
#   w            : (K_pad, N_pad) bf16, VMEM-resident (constant index_map)
#   packed_params: (4, N_pad) f32 rows = [bias, alpha, beta, alpha/2]
# ---------------------------------------------------------------------------
def fused_ae_kernel(*refs):
    x_ref = refs[0]
    out_ref = refs[-1]
    prm = refs[1:-1]

    h = x_ref[...]                                     # (TM, 784) bf16
    for li in range(N_LAYERS):
        w_ref = prm[2 * li]                            # (K_pad, N_pad) bf16
        p_ref = prm[2 * li + 1]                        # (4, N_pad) f32
        # bf16 x bf16 matmul with f32 accumulation on the MXU, + bias.
        y = jnp.dot(h, w_ref[...],
                    preferred_element_type=jnp.float32) + p_ref[0:1, :]
        if li == N_LAYERS - 1:
            out_ref[...] = y.astype(out_ref.dtype)     # no activation on last
        else:
            a = p_ref[1:2, :]                          # alpha
            bt = p_ref[2:3, :]                         # beta
            ha = p_ref[3:4, :]                         # alpha / 2 (precomputed)
            # RoSwish in f32 (VPU/EUP), then cast to bf16 immediately so the
            # inter-layer activation spills/reloads at half the traffic and
            # feeds the next MXU matmul directly.
            h = ((y + a) * jax.nn.sigmoid(y * bt) - ha).astype(jnp.bfloat16)


# ---------------------------------------------------------------------------
# Batch tiling: big tiles for big batches, a single full-dim tile otherwise.
# ---------------------------------------------------------------------------
def _pick_batch_tile(B):
    if B <= 512:
        return B, B                        # one tile, no batch padding at all
    for tm in (512, 256, 128):             # prefer large tiles that divide B
        if B % tm == 0:
            return tm, B
    return 512, _round_up(B, 512)


# ---------------------------------------------------------------------------
# Wrapper: single pallas_call; bf16 input streaming; resident bf16 weights.
# ---------------------------------------------------------------------------
def _forward_impl(x, layers):
    B = x.shape[0]
    tm, b_pad = _pick_batch_tile(B)

    xb = x.astype(jnp.bfloat16)            # stream activations as bf16
    if b_pad != B:                         # batch-axis pad only when tiling needs it
        xb = jnp.zeros((b_pad, IMAGE_PIXELS), jnp.bfloat16).at[:B].set(xb)

    args = [xb]
    in_specs = [pl.BlockSpec((tm, IMAGE_PIXELS), lambda i: (i, 0))]
    for w, p in layers:
        args += [w, p]
        # Constant block index -> fetched once, stays resident in VMEM.
        # Single-buffered: double-buffering a never-changing block wastes VMEM.
        in_specs.append(pl.BlockSpec(w.shape, lambda i: (0, 0),
                                     pipeline_mode=pl.Buffered(1)))
        in_specs.append(pl.BlockSpec(p.shape, lambda i: (0, 0),
                                     pipeline_mode=pl.Buffered(1)))

    out = pl.pallas_call(
        fused_ae_kernel,
        out_shape=jax.ShapeDtypeStruct((b_pad, IMAGE_PIXELS), jnp.float32),
        grid=(b_pad // tm,),
        in_specs=in_specs,
        out_specs=pl.BlockSpec((tm, IMAGE_PIXELS), lambda i: (i, 0)),
        compiler_params=pltpu.CompilerParams(
            dimension_semantics=("parallel",),   # megacore / v7x 2-TC sharding
            vmem_limit_bytes=48 * 1024 * 1024,   # ~6.2 MiB resident weights +
                                                 # TM=512 tiles/activations << 48 MiB,
                                                 # and 48 MiB < v7x's 64 MiB physical
        ),
    )(*args)
    return out if b_pad == B else out[:B]


autoencoder_forward = jax.jit(_forward_impl)


# ---------------------------------------------------------------------------
# Parameter construction (PyTorch-Linear-style uniform init), padded + packed.
# Each layer -> (w_pad bf16 (K_pad, N_pad), packed f32 (4, N_pad)):
#   row 0 = bias, row 1 = alpha, row 2 = beta, row 3 = alpha/2  (zeros padded;
#   last layer has no activation -> rows 1..3 stay zero).
# ---------------------------------------------------------------------------
def init_params(key, weight_dtype=jnp.bfloat16):
    layers = []
    for li, (fan_in, fan_out) in enumerate(zip(ORIG_DIMS[:-1], ORIG_DIMS[1:])):
        k_pad, n_pad = PAD_DIMS[li], PAD_DIMS[li + 1]
        key, kw, kb = jax.random.split(key, 3)
        bound = float(fan_in) ** -0.5
        w = jax.random.uniform(kw, (fan_in, fan_out), jnp.float32, -bound, bound)
        b = jax.random.uniform(kb, (fan_out,), jnp.float32, -bound, bound)
        w_pad = (jnp.zeros((k_pad, n_pad), jnp.float32)
                 .at[:fan_in, :fan_out].set(w).astype(weight_dtype))
        p = jnp.zeros((4, n_pad), jnp.float32).at[0, :fan_out].set(b)
        if li != N_LAYERS - 1:             # RoSwish after every Linear but the last
            p = p.at[1, :fan_out].set(0.817)        # alpha
            p = p.at[2, :fan_out].set(3.0)          # beta
            p = p.at[3, :fan_out].set(0.817 / 2.0)  # alpha/2 precomputed
        layers.append((w_pad, p))
    return layers


# ---------------------------------------------------------------------------
# Pure-JAX reference with identical (padded weights, bf16-activation) numerics.
# ---------------------------------------------------------------------------
def autoencoder_reference(x, layers):
    h = x.astype(jnp.bfloat16)
    for li, (w, p) in enumerate(layers):
        y = jnp.dot(h, w, preferred_element_type=jnp.float32) + p[0:1, :]
        if li == N_LAYERS - 1:
            return y
        a, bt, ha = p[1:2, :], p[2:3, :], p[3:4, :]
        h = ((y + a) * jax.nn.sigmoid(y * bt) - ha).astype(jnp.bfloat16)


# ---------------------------------------------------------------------------
if __name__ == "__main__":
    key = jax.random.PRNGKey(0)
    key, kx = jax.random.split(key)

    batch = 2
    x = jax.random.normal(kx, (batch, IMAGE_PIXELS), jnp.float32)

    layers = init_params(key)

    out = autoencoder_forward(x, layers)
    out = jax.block_until_ready(out)
    assert out.shape == (batch, IMAGE_PIXELS), out.shape

    ref = autoencoder_reference(x, layers)
    max_err = float(jnp.max(jnp.abs(out - ref)))
    assert jnp.allclose(out, ref, atol=2e-2, rtol=2e-2), max_err

    print("KERNEL_OK")
</pallas_src>

<mosaic_0001>
module attributes {stable_mosaic.version = 11 : i64} {
  func.func @fused_ae_kernel(%arg0: i32, %arg1: memref<2x784xbf16, #tpu.memory_space<vmem>>, %arg2: memref<784x1024xbf16, #tpu.memory_space<vmem>>, %arg3: memref<4x1024xf32, #tpu.memory_space<vmem>>, %arg4: memref<1024x512xbf16, #tpu.memory_space<vmem>>, %arg5: memref<4x512xf32, #tpu.memory_space<vmem>>, %arg6: memref<512x256xbf16, #tpu.memory_space<vmem>>, %arg7: memref<4x256xf32, #tpu.memory_space<vmem>>, %arg8: memref<256x128xbf16, #tpu.memory_space<vmem>>, %arg9: memref<4x128xf32, #tpu.memory_space<vmem>>, %arg10: memref<128x256xbf16, #tpu.memory_space<vmem>>, %arg11: memref<4x256xf32, #tpu.memory_space<vmem>>, %arg12: memref<256x512xbf16, #tpu.memory_space<vmem>>, %arg13: memref<4x512xf32, #tpu.memory_space<vmem>>, %arg14: memref<512x1024xbf16, #tpu.memory_space<vmem>>, %arg15: memref<4x1024xf32, #tpu.memory_space<vmem>>, %arg16: memref<1024x784xbf16, #tpu.memory_space<vmem>>, %arg17: memref<4x784xf32, #tpu.memory_space<vmem>>, %arg18: memref<2x784xf32, #tpu.memory_space<vmem>>) attributes {dimension_semantics = [#tpu.dimension_semantics<parallel>], iteration_bounds = array<i64: 1>, scalar_prefetch = 0 : i64, scratch_operands = 0 : i64, tpu.core_type = #tpu.core_type<tc>, window_params = [{transform_indices = @transform_0, window_bounds = array<i64: 2, 784>}, {pipeline_mode = #tpu.pipeline_mode<synchronous>, transform_indices = @transform_1, window_bounds = array<i64: 784, 1024>}, {pipeline_mode = #tpu.pipeline_mode<synchronous>, transform_indices = @transform_2, window_bounds = array<i64: 4, 1024>}, {pipeline_mode = #tpu.pipeline_mode<synchronous>, transform_indices = @transform_3, window_bounds = array<i64: 1024, 512>}, {pipeline_mode = #tpu.pipeline_mode<synchronous>, transform_indices = @transform_4, window_bounds = array<i64: 4, 512>}, {pipeline_mode = #tpu.pipeline_mode<synchronous>, transform_indices = @transform_5, window_bounds = array<i64: 512, 256>}, {pipeline_mode = #tpu.pipeline_mode<synchronous>, transform_indices = @transform_6, window_bounds = array<i64: 4, 256>}, {pipeline_mode = #tpu.pipeline_mode<synchronous>, transform_indices = @transform_7, window_bounds = array<i64: 256, 128>}, {pipeline_mode = #tpu.pipeline_mode<synchronous>, transform_indices = @transform_8, window_bounds = array<i64: 4, 128>}, {pipeline_mode = #tpu.pipeline_mode<synchronous>, transform_indices = @transform_9, window_bounds = array<i64: 128, 256>}, {pipeline_mode = #tpu.pipeline_mode<synchronous>, transform_indices = @transform_10, window_bounds = array<i64: 4, 256>}, {pipeline_mode = #tpu.pipeline_mode<synchronous>, transform_indices = @transform_11, window_bounds = array<i64: 256, 512>}, {pipeline_mode = #tpu.pipeline_mode<synchronous>, transform_indices = @transform_12, window_bounds = array<i64: 4, 512>}, {pipeline_mode = #tpu.pipeline_mode<synchronous>, transform_indices = @transform_13, window_bounds = array<i64: 512, 1024>}, {pipeline_mode = #tpu.pipeline_mode<synchronous>, transform_indices = @transform_14, window_bounds = array<i64: 4, 1024>}, {pipeline_mode = #tpu.pipeline_mode<synchronous>, transform_indices = @transform_15, window_bounds = array<i64: 1024, 784>}, {pipeline_mode = #tpu.pipeline_mode<synchronous>, transform_indices = @transform_16, window_bounds = array<i64: 4, 784>}, {transform_indices = @transform_17, window_bounds = array<i64: 2, 784>}]} {
    %c0 = arith.constant 0 : index
    %c0_0 = arith.constant 0 : index
    %0 = vector.load %arg1[%c0, %c0_0] : memref<2x784xbf16, #tpu.memory_space<vmem>>, vector<2x784xbf16>
    %c0_1 = arith.constant 0 : index
    %c0_2 = arith.constant 0 : index
    %1 = vector.load %arg2[%c0_1, %c0_2] : memref<784x1024xbf16, #tpu.memory_space<vmem>>, vector<784x1024xbf16>
    %cst = arith.constant dense<0.000000e+00> : vector<2x1024xf32>
    %2 = tpu.matmul %0, %1, %cst {dimension_numbers = #tpu.dot_dimension_numbers<[1], [0], [0], [1], [0, 0, 1, 1], [], []>} : vector<2x784xbf16>, vector<784x1024xbf16>, vector<2x1024xf32> -> vector<2x1024xf32>
    %c0_3 = arith.constant 0 : index
    %c0_4 = arith.constant 0 : index
    %3 = vector.load %arg3[%c0_3, %c0_4] : memref<4x1024xf32, #tpu.memory_space<vmem>>, vector<1x1024xf32>
    %4 = vector.broadcast %3 : vector<1x1024xf32> to vector<2x1024xf32>
    %5 = arith.addf %2, %4 : vector<2x1024xf32>
    %c1 = arith.constant 1 : index
    %c0_5 = arith.constant 0 : index
    %6 = vector.load %arg3[%c1, %c0_5] : memref<4x1024xf32, #tpu.memory_space<vmem>>, vector<1x1024xf32>
    %c2 = arith.constant 2 : index
    %c0_6 = arith.constant 0 : index
    %7 = vector.load %arg3[%c2, %c0_6] : memref<4x1024xf32, #tpu.memory_space<vmem>>, vector<1x1024xf32>
    %c3 = arith.constant 3 : index
    %c0_7 = arith.constant 0 : index
    %8 = vector.load %arg3[%c3, %c0_7] : memref<4x1024xf32, #tpu.memory_space<vmem>>, vector<1x1024xf32>
    %9 = vector.broadcast %6 : vector<1x1024xf32> to vector<2x1024xf32>
    %10 = arith.addf %5, %9 : vector<2x1024xf32>
    %11 = vector.broadcast %7 : vector<1x1024xf32> to vector<2x1024xf32>
    %12 = arith.mulf %5, %11 : vector<2x1024xf32>
    %13 = arith.negf %12 : vector<2x1024xf32>
    %14 = math.exp %13 : vector<2x1024xf32>
    %cst_8 = arith.constant 1.000000e+00 : f32
    %15 = vector.broadcast %cst_8 : f32 to vector<2x1024xf32>
    %16 = arith.addf %15, %14 : vector<2x1024xf32>
    %17 = arith.divf %15, %16 : vector<2x1024xf32>
    %18 = arith.mulf %10, %17 : vector<2x1024xf32>
    %19 = vector.broadcast %8 : vector<1x1024xf32> to vector<2x1024xf32>
    %20 = arith.subf %18, %19 : vector<2x1024xf32>
    %21 = arith.truncf %20 : vector<2x1024xf32> to vector<2x1024xbf16>
    %c0_9 = arith.constant 0 : index
    %c0_10 = arith.constant 0 : index
    %22 = vector.load %arg4[%c0_9, %c0_10] : memref<1024x512xbf16, #tpu.memory_space<vmem>>, vector<1024x512xbf16>
    %cst_11 = arith.constant dense<0.000000e+00> : vector<2x512xf32>
    %23 = tpu.matmul %21, %22, %cst_11 {dimension_numbers = #tpu.dot_dimension_numbers<[1], [0], [0], [1], [0, 0, 1, 1], [], []>} : vector<2x1024xbf16>, vector<1024x512xbf16>, vector<2x512xf32> -> vector<2x512xf32>
    %c0_12 = arith.constant 0 : index
    %c0_13 = arith.constant 0 : index
    %24 = vector.load %arg5[%c0_12, %c0_13] : memref<4x512xf32, #tpu.memory_space<vmem>>, vector<1x512xf32>
    %25 = vector.broadcast %24 : vector<1x512xf32> to vector<2x512xf32>
    %26 = arith.addf %23, %25 : vector<2x512xf32>
    %c1_14 = arith.constant 1 : index
    %c0_15 = arith.constant 0 : index
    %27 = vector.load %arg5[%c1_14, %c0_15] : memref<4x512xf32, #tpu.memory_space<vmem>>, vector<1x512xf32>
    %c2_16 = arith.constant 2 : index
    %c0_17 = arith.constant 0 : index
    %28 = vector.load %arg5[%c2_16, %c0_17] : memref<4x512xf32, #tpu.memory_space<vmem>>, vector<1x512xf32>
    %c3_18 = arith.constant 3 : index
    %c0_19 = arith.constant 0 : index
    %29 = vector.load %arg5[%c3_18, %c0_19] : memref<4x512xf32, #tpu.memory_space<vmem>>, vector<1x512xf32>
    %30 = vector.broadcast %27 : vector<1x512xf32> to vector<2x512xf32>
    %31 = arith.addf %26, %30 : vector<2x512xf32>
    %32 = vector.broadcast %28 : vector<1x512xf32> to vector<2x512xf32>
    %33 = arith.mulf %26, %32 : vector<2x512xf32>
    %34 = arith.negf %33 : vector<2x512xf32>
    %35 = math.exp %34 : vector<2x512xf32>
    %cst_20 = arith.constant 1.000000e+00 : f32
    %36 = vector.broadcast %cst_20 : f32 to vector<2x512xf32>
    %37 = arith.addf %36, %35 : vector<2x512xf32>
    %38 = arith.divf %36, %37 : vector<2x512xf32>
    %39 = arith.mulf %31, %38 : vector<2x512xf32>
    %40 = vector.broadcast %29 : vector<1x512xf32> to vector<2x512xf32>
    %41 = arith.subf %39, %40 : vector<2x512xf32>
    %42 = arith.truncf %41 : vector<2x512xf32> to vector<2x512xbf16>
    %c0_21 = arith.constant 0 : index
    %c0_22 = arith.constant 0 : index
    %43 = vector.load %arg6[%c0_21, %c0_22] : memref<512x256xbf16, #tpu.memory_space<vmem>>, vector<512x256xbf16>
    %cst_23 = arith.constant dense<0.000000e+00> : vector<2x256xf32>
    %44 = tpu.matmul %42, %43, %cst_23 {dimension_numbers = #tpu.dot_dimension_numbers<[1], [0], [0], [1], [0, 0, 1, 1], [], []>} : vector<2x512xbf16>, vector<512x256xbf16>, vector<2x256xf32> -> vector<2x256xf32>
    %c0_24 = arith.constant 0 : index
    %c0_25 = arith.constant 0 : index
    %45 = vector.load %arg7[%c0_24, %c0_25] : memref<4x256xf32, #tpu.memory_space<vmem>>, vector<1x256xf32>
    %46 = vector.broadcast %45 : vector<1x256xf32> to vector<2x256xf32>
    %47 = arith.addf %44, %46 : vector<2x256xf32>
    %c1_26 = arith.constant 1 : index
    %c0_27 = arith.constant 0 : index
    %48 = vector.load %arg7[%c1_26, %c0_27] : memref<4x256xf32, #tpu.memory_space<vmem>>, vector<1x256xf32>
    %c2_28 = arith.constant 2 : index
    %c0_29 = arith.constant 0 : index
    %49 = vector.load %arg7[%c2_28, %c0_29] : memref<4x256xf32, #tpu.memory_space<vmem>>, vector<1x256xf32>
    %c3_30 = arith.constant 3 : index
    %c0_31 = arith.constant 0 : index
    %50 = vector.load %arg7[%c3_30, %c0_31] : memref<4x256xf32, #tpu.memory_space<vmem>>, vector<1x256xf32>
    %51 = vector.broadcast %48 : vector<1x256xf32> to vector<2x256xf32>
    %52 = arith.addf %47, %51 : vector<2x256xf32>
    %53 = vector.broadcast %49 : vector<1x256xf32> to vector<2x256xf32>
    %54 = arith.mulf %47, %53 : vector<2x256xf32>
    %55 = arith.negf %54 : vector<2x256xf32>
    %56 = math.exp %55 : vector<2x256xf32>
    %cst_32 = arith.constant 1.000000e+00 : f32
    %57 = vector.broadcast %cst_32 : f32 to vector<2x256xf32>
    %58 = arith.addf %57, %56 : vector<2x256xf32>
    %59 = arith.divf %57, %58 : vector<2x256xf32>
    %60 = arith.mulf %52, %59 : vector<2x256xf32>
    %61 = vector.broadcast %50 : vector<1x256xf32> to vector<2x256xf32>
    %62 = arith.subf %60, %61 : vector<2x256xf32>
    %63 = arith.truncf %62 : vector<2x256xf32> to vector<2x256xbf16>
    %c0_33 = arith.constant 0 : index
    %c0_34 = arith.constant 0 : index
    %64 = vector.load %arg8[%c0_33, %c0_34] : memref<256x128xbf16, #tpu.memory_space<vmem>>, vector<256x128xbf16>
    %cst_35 = arith.constant dense<0.000000e+00> : vector<2x128xf32>
    %65 = tpu.matmul %63, %64, %cst_35 {dimension_numbers = #tpu.dot_dimension_numbers<[1], [0], [0], [1], [0, 0, 1, 1], [], []>} : vector<2x256xbf16>, vector<256x128xbf16>, vector<2x128xf32> -> vector<2x128xf32>
    %c0_36 = arith.constant 0 : index
    %c0_37 = arith.constant 0 : index
    %66 = vector.load %arg9[%c0_36, %c0_37] : memref<4x128xf32, #tpu.memory_space<vmem>>, vector<1x128xf32>
    %67 = vector.broadcast %66 : vector<1x128xf32> to vector<2x128xf32>
    %68 = arith.addf %65, %67 : vector<2x128xf32>
    %c1_38 = arith.constant 1 : index
    %c0_39 = arith.constant 0 : index
    %69 = vector.load %arg9[%c1_38, %c0_39] : memref<4x128xf32, #tpu.memory_space<vmem>>, vector<1x128xf32>
    %c2_40 = arith.constant 2 : index
    %c0_41 = arith.constant 0 : index
    %70 = vector.load %arg9[%c2_40, %c0_41] : memref<4x128xf32, #tpu.memory_space<vmem>>, vector<1x128xf32>
    %c3_42 = arith.constant 3 : index
    %c0_43 = arith.constant 0 : index
    %71 = vector.load %arg9[%c3_42, %c0_43] : memref<4x128xf32, #tpu.memory_space<vmem>>, vector<1x128xf32>
    %72 = vector.broadcast %69 : vector<1x128xf32> to vector<2x128xf32>
    %73 = arith.addf %68, %72 : vector<2x128xf32>
    %74 = vector.broadcast %70 : vector<1x128xf32> to vector<2x128xf32>
    %75 = arith.mulf %68, %74 : vector<2x128xf32>
    %76 = arith.negf %75 : vector<2x128xf32>
    %77 = math.exp %76 : vector<2x128xf32>
    %cst_44 = arith.constant 1.000000e+00 : f32
    %78 = vector.broadcast %cst_44 : f32 to vector<2x128xf32>
    %79 = arith.addf %78, %77 : vector<2x128xf32>
    %80 = arith.divf %78, %79 : vector<2x128xf32>
    %81 = arith.mulf %73, %80 : vector<2x128xf32>
    %82 = vector.broadcast %71 : vector<1x128xf32> to vector<2x128xf32>
    %83 = arith.subf %81, %82 : vector<2x128xf32>
    %84 = arith.truncf %83 : vector<2x128xf32> to vector<2x128xbf16>
    %c0_45 = arith.constant 0 : index
    %c0_46 = arith.constant 0 : index
    %85 = vector.load %arg10[%c0_45, %c0_46] : memref<128x256xbf16, #tpu.memory_space<vmem>>, vector<128x256xbf16>
    %cst_47 = arith.constant dense<0.000000e+00> : vector<2x256xf32>
    %86 = tpu.matmul %84, %85, %cst_47 {dimension_numbers = #tpu.dot_dimension_numbers<[1], [0], [0], [1], [0, 0, 1, 1], [], []>} : vector<2x128xbf16>, vector<128x256xbf16>, vector<2x256xf32> -> vector<2x256xf32>
    %c0_48 = arith.constant 0 : index
    %c0_49 = arith.constant 0 : index
    %87 = vector.load %arg11[%c0_48, %c0_49] : memref<4x256xf32, #tpu.memory_space<vmem>>, vector<1x256xf32>
    %88 = vector.broadcast %87 : vector<1x256xf32> to vector<2x256xf32>
    %89 = arith.addf %86, %88 : vector<2x256xf32>
    %c1_50 = arith.constant 1 : index
    %c0_51 = arith.constant 0 : index
    %90 = vector.load %arg11[%c1_50, %c0_51] : memref<4x256xf32, #tpu.memory_space<vmem>>, vector<1x256xf32>
    %c2_52 = arith.constant 2 : index
    %c0_53 = arith.constant 0 : index
    %91 = vector.load %arg11[%c2_52, %c0_53] : memref<4x256xf32, #tpu.memory_space<vmem>>, vector<1x256xf32>
    %c3_54 = arith.constant 3 : index
    %c0_55 = arith.constant 0 : index
    %92 = vector.load %arg11[%c3_54, %c0_55] : memref<4x256xf32, #tpu.memory_space<vmem>>, vector<1x256xf32>
    %93 = vector.broadcast %90 : vector<1x256xf32> to vector<2x256xf32>
    %94 = arith.addf %89, %93 : vector<2x256xf32>
    %95 = vector.broadcast %91 : vector<1x256xf32> to vector<2x256xf32>
    %96 = arith.mulf %89, %95 : vector<2x256xf32>
    %97 = arith.negf %96 : vector<2x256xf32>
    %98 = math.exp %97 : vector<2x256xf32>
    %cst_56 = arith.constant 1.000000e+00 : f32
    %99 = vector.broadcast %cst_56 : f32 to vector<2x256xf32>
    %100 = arith.addf %99, %98 : vector<2x256xf32>
    %101 = arith.divf %99, %100 : vector<2x256xf32>
    %102 = arith.mulf %94, %101 : vector<2x256xf32>
    %103 = vector.broadcast %92 : vector<1x256xf32> to vector<2x256xf32>
    %104 = arith.subf %102, %103 : vector<2x256xf32>
    %105 = arith.truncf %104 : vector<2x256xf32> to vector<2x256xbf16>
    %c0_57 = arith.constant 0 : index
    %c0_58 = arith.constant 0 : index
    %106 = vector.load %arg12[%c0_57, %c0_58] : memref<256x512xbf16, #tpu.memory_space<vmem>>, vector<256x512xbf16>
    %cst_59 = arith.constant dense<0.000000e+00> : vector<2x512xf32>
    %107 = tpu.matmul %105, %106, %cst_59 {dimension_numbers = #tpu.dot_dimension_numbers<[1], [0], [0], [1], [0, 0, 1, 1], [], []>} : vector<2x256xbf16>, vector<256x512xbf16>, vector<2x512xf32> -> vector<2x512xf32>
    %c0_60 = arith.constant 0 : index
    %c0_61 = arith.constant 0 : index
    %108 = vector.load %arg13[%c0_60, %c0_61] : memref<4x512xf32, #tpu.memory_space<vmem>>, vector<1x512xf32>
    %109 = vector.broadcast %108 : vector<1x512xf32> to vector<2x512xf32>
    %110 = arith.addf %107, %109 : vector<2x512xf32>
    %c1_62 = arith.constant 1 : index
    %c0_63 = arith.constant 0 : index
    %111 = vector.load %arg13[%c1_62, %c0_63] : memref<4x512xf32, #tpu.memory_space<vmem>>, vector<1x512xf32>
    %c2_64 = arith.constant 2 : index
    %c0_65 = arith.constant 0 : index
    %112 = vector.load %arg13[%c2_64, %c0_65] : memref<4x512xf32, #tpu.memory_space<vmem>>, vector<1x512xf32>
    %c3_66 = arith.constant 3 : index
    %c0_67 = arith.constant 0 : index
    %113 = vector.load %arg13[%c3_66, %c0_67] : memref<4x512xf32, #tpu.memory_space<vmem>>, vector<1x512xf32>
    %114 = vector.broadcast %111 : vector<1x512xf32> to vector<2x512xf32>
    %115 = arith.addf %110, %114 : vector<2x512xf32>
    %116 = vector.broadcast %112 : vector<1x512xf32> to vector<2x512xf32>
    %117 = arith.mulf %110, %116 : vector<2x512xf32>
    %118 = arith.negf %117 : vector<2x512xf32>
    %119 = math.exp %118 : vector<2x512xf32>
    %cst_68 = arith.constant 1.000000e+00 : f32
    %120 = vector.broadcast %cst_68 : f32 to vector<2x512xf32>
    %121 = arith.addf %120, %119 : vector<2x512xf32>
    %122 = arith.divf %120, %121 : vector<2x512xf32>
    %123 = arith.mulf %115, %122 : vector<2x512xf32>
    %124 = vector.broadcast %113 : vector<1x512xf32> to vector<2x512xf32>
    %125 = arith.subf %123, %124 : vector<2x512xf32>
    %126 = arith.truncf %125 : vector<2x512xf32> to vector<2x512xbf16>
    %c0_69 = arith.constant 0 : index
    %c0_70 = arith.constant 0 : index
    %127 = vector.load %arg14[%c0_69, %c0_70] : memref<512x1024xbf16, #tpu.memory_space<vmem>>, vector<512x1024xbf16>
    %cst_71 = arith.constant dense<0.000000e+00> : vector<2x1024xf32>
    %128 = tpu.matmul %126, %127, %cst_71 {dimension_numbers = #tpu.dot_dimension_numbers<[1], [0], [0], [1], [0, 0, 1, 1], [], []>} : vector<2x512xbf16>, vector<512x1024xbf16>, vector<2x1024xf32> -> vector<2x1024xf32>
    %c0_72 = arith.constant 0 : index
    %c0_73 = arith.constant 0 : index
    %129 = vector.load %arg15[%c0_72, %c0_73] : memref<4x1024xf32, #tpu.memory_space<vmem>>, vector<1x1024xf32>
    %130 = vector.broadcast %129 : vector<1x1024xf32> to vector<2x1024xf32>
    %131 = arith.addf %128, %130 : vector<2x1024xf32>
    %c1_74 = arith.constant 1 : index
    %c0_75 = arith.constant 0 : index
    %132 = vector.load %arg15[%c1_74, %c0_75] : memref<4x1024xf32, #tpu.memory_space<vmem>>, vector<1x1024xf32>
    %c2_76 = arith.constant 2 : index
    %c0_77 = arith.constant 0 : index
    %133 = vector.load %arg15[%c2_76, %c0_77] : memref<4x1024xf32, #tpu.memory_space<vmem>>, vector<1x1024xf32>
    %c3_78 = arith.constant 3 : index
    %c0_79 = arith.constant 0 : index
    %134 = vector.load %arg15[%c3_78, %c0_79] : memref<4x1024xf32, #tpu.memory_space<vmem>>, vector<1x1024xf32>
    %135 = vector.broadcast %132 : vector<1x1024xf32> to vector<2x1024xf32>
    %136 = arith.addf %131, %135 : vector<2x1024xf32>
    %137 = vector.broadcast %133 : vector<1x1024xf32> to vector<2x1024xf32>
    %138 = arith.mulf %131, %137 : vector<2x1024xf32>
    %139 = arith.negf %138 : vector<2x1024xf32>
    %140 = math.exp %139 : vector<2x1024xf32>
    %cst_80 = arith.constant 1.000000e+00 : f32
    %141 = vector.broadcast %cst_80 : f32 to vector<2x1024xf32>
    %142 = arith.addf %141, %140 : vector<2x1024xf32>
    %143 = arith.divf %141, %142 : vector<2x1024xf32>
    %144 = arith.mulf %136, %143 : vector<2x1024xf32>
    %145 = vector.broadcast %134 : vector<1x1024xf32> to vector<2x1024xf32>
    %146 = arith.subf %144, %145 : vector<2x1024xf32>
    %147 = arith.truncf %146 : vector<2x1024xf32> to vector<2x1024xbf16>
    %c0_81 = arith.constant 0 : index
    %c0_82 = arith.constant 0 : index
    %148 = vector.load %arg16[%c0_81, %c0_82] : memref<1024x784xbf16, #tpu.memory_space<vmem>>, vector<1024x784xbf16>
    %cst_83 = arith.constant dense<0.000000e+00> : vector<2x784xf32>
    %149 = tpu.matmul %147, %148, %cst_83 {dimension_numbers = #tpu.dot_dimension_numbers<[1], [0], [0], [1], [0, 0, 1, 1], [], []>} : vector<2x1024xbf16>, vector<1024x784xbf16>, vector<2x784xf32> -> vector<2x784xf32>
    %c0_84 = arith.constant 0 : index
    %c0_85 = arith.constant 0 : index
    %150 = vector.load %arg17[%c0_84, %c0_85] : memref<4x784xf32, #tpu.memory_space<vmem>>, vector<1x784xf32>
    %151 = vector.broadcast %150 : vector<1x784xf32> to vector<2x784xf32>
    %152 = arith.addf %149, %151 : vector<2x784xf32>
    %c0_86 = arith.constant 0 : index
    %c0_87 = arith.constant 0 : index
    %153 = vector.load %arg18[%c0_86, %c0_87] : memref<2x784xf32, #tpu.memory_space<vmem>>, vector<2x784xf32>
    tpu.vector_store %arg18[%c0_86, %c0_87], %152 {strides = array<i32>} : memref<2x784xf32, #tpu.memory_space<vmem>>, vector<2x784xf32>,
    return
  }
  func.func @transform_0(%arg0: i32) -> (i32, i32) {
    %c0_i32 = arith.constant 0 : i32
    %c0_i32_0 = arith.constant 0 : i32
    return %arg0, %c0_i32 : i32, i32
  }
  func.func @transform_1(%arg0: i32) -> (i32, i32) {
    %c0_i32 = arith.constant 0 : i32
    %c0_i32_0 = arith.constant 0 : i32
    %c0_i32_1 = arith.constant 0 : i32
    return %c0_i32, %c0_i32_0 : i32, i32
  }
  func.func @transform_2(%arg0: i32) -> (i32, i32) {
    %c0_i32 = arith.constant 0 : i32
    %c0_i32_0 = arith.constant 0 : i32
    %c0_i32_1 = arith.constant 0 : i32
    return %c0_i32, %c0_i32_0 : i32, i32
  }
  func.func @transform_3(%arg0: i32) -> (i32, i32) {
    %c0_i32 = arith.constant 0 : i32
    %c0_i32_0 = arith.constant 0 : i32
    %c0_i32_1 = arith.constant 0 : i32
    return %c0_i32, %c0_i32_0 : i32, i32
  }
  func.func @transform_4(%arg0: i32) -> (i32, i32) {
    %c0_i32 = arith.constant 0 : i32
    %c0_i32_0 = arith.constant 0 : i32
    %c0_i32_1 = arith.constant 0 : i32
    return %c0_i32, %c0_i32_0 : i32, i32
  }
  func.func @transform_5(%arg0: i32) -> (i32, i32) {
    %c0_i32 = arith.constant 0 : i32
    %c0_i32_0 = arith.constant 0 : i32
    %c0_i32_1 = arith.constant 0 : i32
    return %c0_i32, %c0_i32_0 : i32, i32
  }
  func.func @transform_6(%arg0: i32) -> (i32, i32) {
    %c0_i32 = arith.constant 0 : i32
    %c0_i32_0 = arith.constant 0 : i32
    %c0_i32_1 = arith.constant 0 : i32
    return %c0_i32, %c0_i32_0 : i32, i32
  }
  func.func @transform_7(%arg0: i32) -> (i32, i32) {
    %c0_i32 = arith.constant 0 : i32
    %c0_i32_0 = arith.constant 0 : i32
    %c0_i32_1 = arith.constant 0 : i32
    return %c0_i32, %c0_i32_0 : i32, i32
  }
  func.func @transform_8(%arg0: i32) -> (i32, i32) {
    %c0_i32 = arith.constant 0 : i32
    %c0_i32_0 = arith.constant 0 : i32
    %c0_i32_1 = arith.constant 0 : i32
    return %c0_i32, %c0_i32_0 : i32, i32
  }
  func.func @transform_9(%arg0: i32) -> (i32, i32) {
    %c0_i32 = arith.constant 0 : i32
    %c0_i32_0 = arith.constant 0 : i32
    %c0_i32_1 = arith.constant 0 : i32
    return %c0_i32, %c0_i32_0 : i32, i32
  }
  func.func @transform_10(%arg0: i32) -> (i32, i32) {
    %c0_i32 = arith.constant 0 : i32
    %c0_i32_0 = arith.constant 0 : i32
    %c0_i32_1 = arith.constant 0 : i32
    return %c0_i32, %c0_i32_0 : i32, i32
  }
  func.func @transform_11(%arg0: i32) -> (i32, i32) {
    %c0_i32 = arith.constant 0 : i32
    %c0_i32_0 = arith.constant 0 : i32
    %c0_i32_1 = arith.constant 0 : i32
    return %c0_i32, %c0_i32_0 : i32, i32
  }
  func.func @transform_12(%arg0: i32) -> (i32, i32) {
    %c0_i32 = arith.constant 0 : i32
    %c0_i32_0 = arith.constant 0 : i32
    %c0_i32_1 = arith.constant 0 : i32
    return %c0_i32, %c0_i32_0 : i32, i32
  }
  func.func @transform_13(%arg0: i32) -> (i32, i32) {
    %c0_i32 = arith.constant 0 : i32
    %c0_i32_0 = arith.constant 0 : i32
    %c0_i32_1 = arith.constant 0 : i32
    return %c0_i32, %c0_i32_0 : i32, i32
  }
  func.func @transform_14(%arg0: i32) -> (i32, i32) {
    %c0_i32 = arith.constant 0 : i32
    %c0_i32_0 = arith.constant 0 : i32
    %c0_i32_1 = arith.constant 0 : i32
    return %c0_i32, %c0_i32_0 : i32, i32
  }
  func.func @transform_15(%arg0: i32) -> (i32, i32) {
    %c0_i32 = arith.constant 0 : i32
    %c0_i32_0 = arith.constant 0 : i32
    %c0_i32_1 = arith.constant 0 : i32
    return %c0_i32, %c0_i32_0 : i32, i32
  }
  func.func @transform_16(%arg0: i32) -> (i32, i32) {
    %c0_i32 = arith.constant 0 : i32
    %c0_i32_0 = arith.constant 0 : i32
    %c0_i32_1 = arith.constant 0 : i32
    return %c0_i32, %c0_i32_0 : i32, i32
  }
  func.func @transform_17(%arg0: i32) -> (i32, i32) {
    %c0_i32 = arith.constant 0 : i32
    %c0_i32_0 = arith.constant 0 : i32
    return %arg0, %c0_i32 : i32, i32
  }
}

</mosaic_0001>

<llo_original>
// kernel: _forward_impl.1
$region0: #{_forward_impl.1}
  #allocation0 [shape = 'u32[]', space=smem, size = 0x4, offset = 0x4, fixed_abs, tag = 'smem constant byte address 0x4 - core index']
  #allocation1 [shape = 'u32[72,128]{1,0:T(1,128)}', space=vmem, size = 0x9000, scoped, tag = 'internal scratch']
  %s0 = inlined_call_operand.vmem [shape: bf16[2,784], index: 0, kind: input, shape index: {}]
  %s1 = inlined_call_operand.vmem [shape: bf16[784,1024], index: 1, kind: input, shape index: {}]
  %s2 = inlined_call_operand.vmem [shape: f32[4,1024], index: 2, kind: input, shape index: {}]
  %s3 = inlined_call_operand.vmem [shape: bf16[1024,512], index: 3, kind: input, shape index: {}]
  %s4 = inlined_call_operand.vmem [shape: f32[4,512], index: 4, kind: input, shape index: {}]
  %s5 = inlined_call_operand.vmem [shape: bf16[512,256], index: 5, kind: input, shape index: {}]
  %s6 = inlined_call_operand.vmem [shape: f32[4,256], index: 6, kind: input, shape index: {}]
  %s7 = inlined_call_operand.vmem [shape: bf16[256,128], index: 7, kind: input, shape index: {}]
  %s8 = inlined_call_operand.vmem [shape: f32[4,128], index: 8, kind: input, shape index: {}]
  %s9 = inlined_call_operand.vmem [shape: bf16[128,256], index: 9, kind: input, shape index: {}]
  %s10 = inlined_call_operand.vmem [shape: f32[4,256], index: 10, kind: input, shape index: {}]
  %s11 = inlined_call_operand.vmem [shape: bf16[256,512], index: 11, kind: input, shape index: {}]
  %s12 = inlined_call_operand.vmem [shape: f32[4,512], index: 12, kind: input, shape index: {}]
  %s13 = inlined_call_operand.hbm [shape: bf16[512,1024], index: 13, kind: input, shape index: {}]
  %s14 = inlined_call_operand.vmem [shape: f32[4,1024], index: 14, kind: input, shape index: {}]
  %s15 = inlined_call_operand.vmem [shape: bf16[1024,784], index: 15, kind: input, shape index: {}]
  %s16 = inlined_call_operand.vmem [shape: f32[4,784], index: 16, kind: input, shape index: {}]
  %s17 = inlined_call_operand.hbm [shape: f32[2,784], index: 17, kind: output, shape index: {}]
  %s18 = sld [smem:[#allocation0]]
  $region82: #{_forward_impl.1} parent=0
    _
  %s20 = ssub.s32 1, %s18
  %s21 = scalar_select 0, %s20, %s18
  $region1: #{_forward_impl.1} parent=0
    #allocation2 [shape = 'u8[1048576]{0}', space=vmem, size = 0x100000, scoped, tag = 'input window, operand 13, single buffered']
    #allocation3 [shape = 's32[1]{0}', space=sflag, size = 0x4, scoped, tag = 'scoped memory for _forward_impl.1']
    #allocation4 [shape = 's32[1]{0}', space=sflag, size = 0x4, scoped, tag = 'scoped memory for _forward_impl.1']
    #allocation5 [shape = 'u8[7168]{0}', space=vmem, size = 0x1c00, scoped, tag = 'output window, operand 0, single buffered']
    %22 = vsyncpa [#allocation3], 0
    %23 = vsyncpa [#allocation4], 0
    // Predicated region
    $region2: #{_forward_impl.1} parent=1 // pred_check
      _
    $region3: #{_forward_impl.1} parent=1 // pred_check_branch
      %25 = sbr.rel (0) target = $region5
    $region4: #{_forward_impl.1} parent=1 // pred_region
      _
    $region5: #{_forward_impl.1} parent=1 // pred_fallthru
      _
    // Predicated region
    $region6: #{_forward_impl.1} parent=1 // pred_check
      _
    $region7: #{_forward_impl.1} parent=1 // pred_check_branch
      %27 = sbr.rel (0) target = $region9
    $region8: #{_forward_impl.1} parent=1 // pred_region
      _
    $region9: #{_forward_impl.1} parent=1 // pred_fallthru
      _
    // Predicated region
    $region10: #{_forward_impl.1} parent=1 // pred_check
      _
    $region11: #{_forward_impl.1} parent=1 // pred_check_branch
      %29 = sbr.rel (0) target = $region13
    $region12: #{_forward_impl.1} parent=1 // pred_region
      _
    $region13: #{_forward_impl.1} parent=1 // pred_fallthru
      _
    // Predicated region
    $region14: #{_forward_impl.1} parent=1 // pred_check
      _
    $region15: #{_forward_impl.1} parent=1 // pred_check_branch
      %31 = sbr.rel (0) target = $region17
    $region16: #{_forward_impl.1} parent=1 // pred_region
      _
    $region17: #{_forward_impl.1} parent=1 // pred_fallthru
      _
    // Predicated region
    $region18: #{_forward_impl.1} parent=1 // pred_check
      _
    $region19: #{_forward_impl.1} parent=1 // pred_check_branch
      %33 = sbr.rel (0) target = $region21
    $region20: #{_forward_impl.1} parent=1 // pred_region
      _
    $region21: #{_forward_impl.1} parent=1 // pred_fallthru
      _
    // Predicated region
    $region22: #{_forward_impl.1} parent=1 // pred_check
      _
    $region23: #{_forward_impl.1} parent=1 // pred_check_branch
      %35 = sbr.rel (0) target = $region25
    $region24: #{_forward_impl.1} parent=1 // pred_region
      _
    $region25: #{_forward_impl.1} parent=1 // pred_fallthru
      _
    // Predicated region
    $region26: #{_forward_impl.1} parent=1 // pred_check
      _
    $region27: #{_forward_impl.1} parent=1 // pred_check_branch
      %37 = sbr.rel (0) target = $region29
    $region28: #{_forward_impl.1} parent=1 // pred_region
      _
    $region29: #{_forward_impl.1} parent=1 // pred_fallthru
      _
    // Predicated region
    $region30: #{_forward_impl.1} parent=1 // pred_check
      _
    $region31: #{_forward_impl.1} parent=1 // pred_check_branch
      %39 = sbr.rel (0) target = $region33
    $region32: #{_forward_impl.1} parent=1 // pred_region
      _
    $region33: #{_forward_impl.1} parent=1 // pred_fallthru
      _
    // Predicated region
    $region34: #{_forward_impl.1} parent=1 // pred_check
      _
    $region35: #{_forward_impl.1} parent=1 // pred_check_branch
      %41 = sbr.rel (0) target = $region37
    $region36: #{_forward_impl.1} parent=1 // pred_region
      _
    $region37: #{_forward_impl.1} parent=1 // pred_fallthru
      _
    // Predicated region
    $region38: #{_forward_impl.1} parent=1 // pred_check
      _
    $region39: #{_forward_impl.1} parent=1 // pred_check_branch
      %43 = sbr.rel (0) target = $region41
    $region40: #{_forward_impl.1} parent=1 // pred_region
      _
    $region41: #{_forward_impl.1} parent=1 // pred_fallthru
      _
    // Predicated region
    $region42: #{_forward_impl.1} parent=1 // pred_check
      _
    $region43: #{_forward_impl.1} parent=1 // pred_check_branch
      %45 = sbr.rel (0) target = $region45
    $region44: #{_forward_impl.1} parent=1 // pred_region
      _
    $region45: #{_forward_impl.1} parent=1 // pred_fallthru
      _
    // Predicated region
    $region46: #{_forward_impl.1} parent=1 // pred_check
      _
    $region47: #{_forward_impl.1} parent=1 // pred_check_branch
      %47 = sbr.rel (0) target = $region49
    $region48: #{_forward_impl.1} parent=1 // pred_region
      _
    $region49: #{_forward_impl.1} parent=1 // pred_fallthru
      _
    // Predicated region
    $region50: #{_forward_impl.1} parent=1 // pred_check
      _
    $region51: #{_forward_impl.1} parent=1 // pred_check_branch
      %49 = sbr.rel (0) target = $region53
    $region52: #{_forward_impl.1} parent=1 // pred_region
      _
    $region53: #{_forward_impl.1} parent=1 // pred_fallthru
      _
    // Predicated region
    $region54: #{_forward_impl.1} parent=1 // pred_check
      _
    $region55: #{_forward_impl.1} parent=1 // pred_check_branch
      %51 = sbr.rel (0) target = $region57
    $region56: #{_forward_impl.1} parent=1 // pred_region
      %53 = vsyncadd [#allocation3], 0
      %s54 = sshll.u32 %s13, 4
      %s55 = int_to_ptr.hbm [resolvable:$true] %s54
      %s56 = sshll.u32 [#allocation2], 4
      %s57 = int_to_ptr.vmem [resolvable:$true] %s56
      %62 = dma.hbm_to_vmem [thread:$0]  %s55, 32768, %s57, [#allocation3], 512, 512, 32
    $region57: #{_forward_impl.1} parent=1 // pred_fallthru
      _
    // Predicated region
    $region58: #{_forward_impl.1} parent=1 // pred_check
      _
    $region59: #{_forward_impl.1} parent=1 // pred_check_branch
      %64 = sbr.rel (0) target = $region61
    $region60: #{_forward_impl.1} parent=1 // pred_region
      _
    $region61: #{_forward_impl.1} parent=1 // pred_fallthru
      _
    // Predicated region
    $region62: #{_forward_impl.1} parent=1 // pred_check
      _
    $region63: #{_forward_impl.1} parent=1 // pred_check_branch
      %66 = sbr.rel (0) target = $region65
    $region64: #{_forward_impl.1} parent=1 // pred_region
      _
    $region65: #{_forward_impl.1} parent=1 // pred_fallthru
      _
    // Predicated region
    $region66: #{_forward_impl.1} parent=1 // pred_check
      _
    $region67: #{_forward_impl.1} parent=1 // pred_check_branch
      %68 = sbr.rel (0) target = $region69
    $region68: #{_forward_impl.1} parent=1 // pred_region
      _
    $region69: #{_forward_impl.1} parent=1 // pred_fallthru
      _
    // Predicated region
    $region70: #{_forward_impl.1} parent=1 // pred_check
      _
    $region71: #{_forward_impl.1} parent=1 // pred_check_branch
      %70 = sbr.rel (0) target = $region73
    $region72: #{_forward_impl.1} parent=1 // pred_region
      %72 = dma.done [#allocation3], 32768
    $region73: #{_forward_impl.1} parent=1 // pred_fallthru
      _
    %v74 = vld [vmem:[%s0] sm:$0x7f]
    %v75 = vld [vmem:[%s1] sm:$0xff]
    %v76 = vld [vmem:[%s1 + $0x8] sm:$0xff]
    %v77 = vld [vmem:[%s1 + $0x10] sm:$0xff]
    %v78 = vld [vmem:[%s1 + $0x18] sm:$0xff]
    %v79 = vld [vmem:[%s1 + $0x20] sm:$0xff]
    %v80 = vld [vmem:[%s1 + $0x28] sm:$0xff]
    %v81 = vld [vmem:[%s1 + $0x30] sm:$0xff]
    %v82 = vld [vmem:[%s1 + $0x38] sm:$0xff]
    %v83 = vld [vmem:[%s1 + $0x40] sm:$0xff]
    %v84 = vld [vmem:[%s1 + $0x48] sm:$0xff]
    %v85 = vld [vmem:[%s1 + $0x50] sm:$0xff]
    %v86 = vld [vmem:[%s1 + $0x58] sm:$0xff]
    %v87 = vld [vmem:[%s1 + $0x60] sm:$0xff]
    %v88 = vld [vmem:[%s1 + $0x68] sm:$0xff]
    %v89 = vld [vmem:[%s1 + $0x70] sm:$0xff]
    %v90 = vld [vmem:[%s1 + $0x78] sm:$0xff]
    %v91 = vld [vmem:[%s1 + $0x80] sm:$0xff]
    %v92 = vld [vmem:[%s1 + $0x88] sm:$0xff]
    %v93 = vld [vmem:[%s1 + $0x90] sm:$0xff]
    %v94 = vld [vmem:[%s1 + $0x98] sm:$0xff]
    %v95 = vld [vmem:[%s1 + $0xa0] sm:$0xff]
    %v96 = vld [vmem:[%s1 + $0xa8] sm:$0xff]
    %v97 = vld [vmem:[%s1 + $0xb0] sm:$0xff]
    %v98 = vld [vmem:[%s1 + $0xb8] sm:$0xff]
    %v99 = vld [vmem:[%s1 + $0xc0] sm:$0xff]
    %v100 = vld [vmem:[%s1 + $0xc8] sm:$0xff]
    %v101 = vld [vmem:[%s1 + $0xd0] sm:$0xff]
    %v102 = vld [vmem:[%s1 + $0xd8] sm:$0xff]
    %v103 = vld [vmem:[%s1 + $0xe0] sm:$0xff]
    %v104 = vld [vmem:[%s1 + $0xe8] sm:$0xff]
    %v105 = vld [vmem:[%s1 + $0xf0] sm:$0xff]
    %v106 = vld [vmem:[%s1 + $0xf8] sm:$0xff]
    %v107 = vld [vmem:[%s1 + $0x100] sm:$0xff]
    %v108 = vld [vmem:[%s1 + $0x108] sm:$0xff]
    %v109 = vld [vmem:[%s1 + $0x110] sm:$0xff]
    %v110 = vld [vmem:[%s1 + $0x118] sm:$0xff]
    %v111 = vld [vmem:[%s1 + $0x120] sm:$0xff]
    %v112 = vld [vmem:[%s1 + $0x128] sm:$0xff]
    %v113 = vld [vmem:[%s1 + $0x130] sm:$0xff]
    %v114 = vld [vmem:[%s1 + $0x138] sm:$0xff]
    %v115 = vld [vmem:[%s1 + $0x140] sm:$0xff]
    %v116 = vld [vmem:[%s1 + $0x148] sm:$0xff]
    %v117 = vld [vmem:[%s1 + $0x150] sm:$0xff]
    %v118 = vld [vmem:[%s1 + $0x158] sm:$0xff]
    %v119 = vld [vmem:[%s1 + $0x160] sm:$0xff]
    %v120 = vld [vmem:[%s1 + $0x168] sm:$0xff]
    %v121 = vld [vmem:[%s1 + $0x170] sm:$0xff]
    %v122 = vld [vmem:[%s1 + $0x178] sm:$0xff]
    %v123 = vld [vmem:[%s1 + $0x180] sm:$0xff]
    %v124 = vld [vmem:[%s1 + $0x188] sm:$0xff]
    %v125 = vld [vmem:[%s1 + $0x190] sm:$0xff]
    %v126 = vld [vmem:[%s1 + $0x198] sm:$0xff]
    %v127 = vld [vmem:[%s1 + $0x1a0] sm:$0xff]
    %v128 = vld [vmem:[%s1 + $0x1a8] sm:$0xff]
    %v129 = vld [vmem:[%s1 + $0x1b0] sm:$0xff]
    %v130 = vld [vmem:[%s1 + $0x1b8] sm:$0xff]
    %v131 = vld [vmem:[%s1 + $0x1c0] sm:$0xff]
    %v132 = vld [vmem:[%s1 + $0x1c8] sm:$0xff]
    %v133 = vld [vmem:[%s1 + $0x1d0] sm:$0xff]
    %v134 = vld [vmem:[%s1 + $0x1d8] sm:$0xff]
    %v135 = vld [vmem:[%s1 + $0x1e0] sm:$0xff]
    %v136 = vld [vmem:[%s1 + $0x1e8] sm:$0xff]
    %v137 = vld [vmem:[%s1 + $0x1f0] sm:$0xff]
    %v138 = vld [vmem:[%s1 + $0x1f8] sm:$0xff]
    %v139 = vld [vmem:[%s1 + $0x200] sm:$0xff]
    %v140 = vld [vmem:[%s1 + $0x208] sm:$0xff]
    %v141 = vld [vmem:[%s1 + $0x210] sm:$0xff]
    %v142 = vld [vmem:[%s1 + $0x218] sm:$0xff]
    %v143 = vld [vmem:[%s1 + $0x220] sm:$0xff]
    %v144 = vld [vmem:[%s1 + $0x228] sm:$0xff]
    %v145 = vld [vmem:[%s1 + $0x230] sm:$0xff]
    %v146 = vld [vmem:[%s1 + $0x238] sm:$0xff]
    %v147 = vld [vmem:[%s1 + $0x240] sm:$0xff]
    %v148 = vld [vmem:[%s1 + $0x248] sm:$0xff]
    %v149 = vld [vmem:[%s1 + $0x250] sm:$0xff]
    %v150 = vld [vmem:[%s1 + $0x258] sm:$0xff]
    %v151 = vld [vmem:[%s1 + $0x260] sm:$0xff]
    %v152 = vld [vmem:[%s1 + $0x268] sm:$0xff]
    %v153 = vld [vmem:[%s1 + $0x270] sm:$0xff]
    %v154 = vld [vmem:[%s1 + $0x278] sm:$0xff]
    %v155 = vld [vmem:[%s1 + $0x280] sm:$0xff]
    %v156 = vld [vmem:[%s1 + $0x288] sm:$0xff]
    %v157 = vld [vmem:[%s1 + $0x290] sm:$0xff]
    %v158 = vld [vmem:[%s1 + $0x298] sm:$0xff]
    %v159 = vld [vmem:[%s1 + $0x2a0] sm:$0xff]
    %v160 = vld [vmem:[%s1 + $0x2a8] sm:$0xff]
    %v161 = vld [vmem:[%s1 + $0x2b0] sm:$0xff]
    %v162 = vld [vmem:[%s1 + $0x2b8] sm:$0xff]
    %v163 = vld [vmem:[%s1 + $0x2c0] sm:$0xff]
    %v164 = vld [vmem:[%s1 + $0x2c8] sm:$0xff]
    %v165 = vld [vmem:[%s1 + $0x2d0] sm:$0xff]
    %v166 = vld [vmem:[%s1 + $0x2d8] sm:$0xff]
    %v167 = vld [vmem:[%s1 + $0x2e0] sm:$0xff]
    %v168 = vld [vmem:[%s1 + $0x2e8] sm:$0xff]
    %v169 = vld [vmem:[%s1 + $0x2f0] sm:$0xff]
    %v170 = vld [vmem:[%s1 + $0x2f8] sm:$0xff]
    %v171 = vld [vmem:[%s1 + $0x300] sm:$0xff]
    %v172 = vld [vmem:[%s1 + $0x308] sm:$0xff]
    %v173 = vld [vmem:[%s1 + $0x310] sm:$0xff]
    %v174 = vld [vmem:[%s1 + $0x318] sm:$0xff]
    %v175 = vld [vmem:[%s1 + $0x320] sm:$0xff]
    %v176 = vld [vmem:[%s1 + $0x328] sm:$0xff]
    %v177 = vld [vmem:[%s1 + $0x330] sm:$0xff]
    %v178 = vld [vmem:[%s1 + $0x338] sm:$0xff]
    %v179 = vld [vmem:[%s1 + $0x340] sm:$0xff]
    %v180 = vld [vmem:[%s1 + $0x348] sm:$0xff]
    %v181 = vld [vmem:[%s1 + $0x350] sm:$0xff]
    %v182 = vld [vmem:[%s1 + $0x358] sm:$0xff]
    %v183 = vld [vmem:[%s1 + $0x360] sm:$0xff]
    %v184 = vld [vmem:[%s1 + $0x368] sm:$0xff]
    %v185 = vld [vmem:[%s1 + $0x370] sm:$0xff]
    %v186 = vld [vmem:[%s1 + $0x378] sm:$0xff]
    %v187 = vld [vmem:[%s1 + $0x380] sm:$0xff]
    %v188 = vld [vmem:[%s1 + $0x388] sm:$0xff]
    %v189 = vld [vmem:[%s1 + $0x390] sm:$0xff]
    %v190 = vld [vmem:[%s1 + $0x398] sm:$0xff]
    %v191 = vld [vmem:[%s1 + $0x3a0] sm:$0xff]
    %v192 = vld [vmem:[%s1 + $0x3a8] sm:$0xff]
    %v193 = vld [vmem:[%s1 + $0x3b0] sm:$0xff]
    %v194 = vld [vmem:[%s1 + $0x3b8] sm:$0xff]
    %v195 = vld [vmem:[%s1 + $0x3c0] sm:$0xff]
    %v196 = vld [vmem:[%s1 + $0x3c8] sm:$0xff]
    %v197 = vld [vmem:[%s1 + $0x3d0] sm:$0xff]
    %v198 = vld [vmem:[%s1 + $0x3d8] sm:$0xff]
    %v199 = vld [vmem:[%s1 + $0x3e0] sm:$0xff]
    %v200 = vld [vmem:[%s1 + $0x3e8] sm:$0xff]
    %v201 = vld [vmem:[%s1 + $0x3f0] sm:$0xff]
    %v202 = vld [vmem:[%s1 + $0x3f8] sm:$0xff]
    %v203 = vld [vmem:[%s1 + $0x400] sm:$0xff]
    %v204 = vld [vmem:[%s1 + $0x408] sm:$0xff]
    %v205 = vld [vmem:[%s1 + $0x410] sm:$0xff]
    %v206 = vld [vmem:[%s1 + $0x418] sm:$0xff]
    %v207 = vld [vmem:[%s1 + $0x420] sm:$0xff]
    %v208 = vld [vmem:[%s1 + $0x428] sm:$0xff]
    %v209 = vld [vmem:[%s1 + $0x430] sm:$0xff]
    %v210 = vld [vmem:[%s1 + $0x438] sm:$0xff]
    %v211 = vld [vmem:[%s1 + $0x440] sm:$0xff]
    %v212 = vld [vmem:[%s1 + $0x448] sm:$0xff]
    %v213 = vld [vmem:[%s1 + $0x450] sm:$0xff]
    %v214 = vld [vmem:[%s1 + $0x458] sm:$0xff]
    %v215 = vld [vmem:[%s1 + $0x460] sm:$0xff]
    %v216 = vld [vmem:[%s1 + $0x468] sm:$0xff]
    %v217 = vld [vmem:[%s1 + $0x470] sm:$0xff]
    %v218 = vld [vmem:[%s1 + $0x478] sm:$0xff]
    %v219 = vld [vmem:[%s1 + $0x480] sm:$0xff]
    %v220 = vld [vmem:[%s1 + $0x488] sm:$0xff]
    %v221 = vld [vmem:[%s1 + $0x490] sm:$0xff]
    %v222 = vld [vmem:[%s1 + $0x498] sm:$0xff]
    %v223 = vld [vmem:[%s1 + $0x4a0] sm:$0xff]
    %v224 = vld [vmem:[%s1 + $0x4a8] sm:$0xff]
    %v225 = vld [vmem:[%s1 + $0x4b0] sm:$0xff]
    %v226 = vld [vmem:[%s1 + $0x4b8] sm:$0xff]
    %v227 = vld [vmem:[%s1 + $0x4c0] sm:$0xff]
    %v228 = vld [vmem:[%s1 + $0x4c8] sm:$0xff]
    %v229 = vld [vmem:[%s1 + $0x4d0] sm:$0xff]
    %v230 = vld [vmem:[%s1 + $0x4d8] sm:$0xff]
    %v231 = vld [vmem:[%s1 + $0x4e0] sm:$0xff]
    %v232 = vld [vmem:[%s1 + $0x4e8] sm:$0xff]
    %v233 = vld [vmem:[%s1 + $0x4f0] sm:$0xff]
    %v234 = vld [vmem:[%s1 + $0x4f8] sm:$0xff]
    %v235 = vld [vmem:[%s1 + $0x500] sm:$0xff]
    %v236 = vld [vmem:[%s1 + $0x508] sm:$0xff]
    %v237 = vld [vmem:[%s1 + $0x510] sm:$0xff]
    %v238 = vld [vmem:[%s1 + $0x518] sm:$0xff]
    %v239 = vld [vmem:[%s1 + $0x520] sm:$0xff]
    %v240 = vld [vmem:[%s1 + $0x528] sm:$0xff]
    %v241 = vld [vmem:[%s1 + $0x530] sm:$0xff]
    %v242 = vld [vmem:[%s1 + $0x538] sm:$0xff]
    %v243 = vld [vmem:[%s1 + $0x540] sm:$0xff]
    %v244 = vld [vmem:[%s1 + $0x548] sm:$0xff]
    %v245 = vld [vmem:[%s1 + $0x550] sm:$0xff]
    %v246 = vld [vmem:[%s1 + $0x558] sm:$0xff]
    %v247 = vld [vmem:[%s1 + $0x560] sm:$0xff]
    %v248 = vld [vmem:[%s1 + $0x568] sm:$0xff]
    %v249 = vld [vmem:[%s1 + $0x570] sm:$0xff]
    %v250 = vld [vmem:[%s1 + $0x578] sm:$0xff]
    %v251 = vld [vmem:[%s1 + $0x580] sm:$0xff]
    %v252 = vld [vmem:[%s1 + $0x588] sm:$0xff]
    %v253 = vld [vmem:[%s1 + $0x590] sm:$0xff]
    %v254 = vld [vmem:[%s1 + $0x598] sm:$0xff]
    %v255 = vld [vmem:[%s1 + $0x5a0] sm:$0xff]
    %v256 = vld [vmem:[%s1 + $0x5a8] sm:$0xff]
    %v257 = vld [vmem:[%s1 + $0x5b0] sm:$0xff]
    %v258 = vld [vmem:[%s1 + $0x5b8] sm:$0xff]
    %v259 = vld [vmem:[%s1 + $0x5c0] sm:$0xff]
    %v260 = vld [vmem:[%s1 + $0x5c8] sm:$0xff]
    %v261 = vld [vmem:[%s1 + $0x5d0] sm:$0xff]
    %v262 = vld [vmem:[%s1 + $0x5d8] sm:$0xff]
    %v263 = vld [vmem:[%s1 + $0x5e0] sm:$0xff]
    %v264 = vld [vmem:[%s1 + $0x5e8] sm:$0xff]
    %v265 = vld [vmem:[%s1 + $0x5f0] sm:$0xff]
    %v266 = vld [vmem:[%s1 + $0x5f8] sm:$0xff]
    %v267 = vld [vmem:[%s1 + $0x600] sm:$0xff]
    %v268 = vld [vmem:[%s1 + $0x608] sm:$0xff]
    %v269 = vld [vmem:[%s1 + $0x610] sm:$0xff]
    %v270 = vld [vmem:[%s1 + $0x618] sm:$0xff]
    %v271 = vld [vmem:[%s1 + $0x620] sm:$0xff]
    %v272 = vld [vmem:[%s1 + $0x628] sm:$0xff]
    %v273 = vld [vmem:[%s1 + $0x630] sm:$0xff]
    %v274 = vld [vmem:[%s1 + $0x638] sm:$0xff]
    %v275 = vld [vmem:[%s1 + $0x640] sm:$0xff]
    %v276 = vld [vmem:[%s1 + $0x648] sm:$0xff]
    %v277 = vld [vmem:[%s1 + $0x650] sm:$0xff]
    %v278 = vld [vmem:[%s1 + $0x658] sm:$0xff]
    %v279 = vld [vmem:[%s1 + $0x660] sm:$0xff]
    %v280 = vld [vmem:[%s1 + $0x668] sm:$0xff]
    %v281 = vld [vmem:[%s1 + $0x670] sm:$0xff]
    %v282 = vld [vmem:[%s1 + $0x678] sm:$0xff]
    %v283 = vld [vmem:[%s1 + $0x680] sm:$0xff]
    %v284 = vld [vmem:[%s1 + $0x688] sm:$0xff]
    %v285 = vld [vmem:[%s1 + $0x690] sm:$0xff]
    %v286 = vld [vmem:[%s1 + $0x698] sm:$0xff]
    %v287 = vld [vmem:[%s1 + $0x6a0] sm:$0xff]
    %v288 = vld [vmem:[%s1 + $0x6a8] sm:$0xff]
    %v289 = vld [vmem:[%s1 + $0x6b0] sm:$0xff]
    %v290 = vld [vmem:[%s1 + $0x6b8] sm:$0xff]
    %v291 = vld [vmem:[%s1 + $0x6c0] sm:$0xff]
    %v292 = vld [vmem:[%s1 + $0x6c8] sm:$0xff]
    %v293 = vld [vmem:[%s1 + $0x6d0] sm:$0xff]
    %v294 = vld [vmem:[%s1 + $0x6d8] sm:$0xff]
    %v295 = vld [vmem:[%s1 + $0x6e0] sm:$0xff]
    %v296 = vld [vmem:[%s1 + $0x6e8] sm:$0xff]
    %v297 = vld [vmem:[%s1 + $0x6f0] sm:$0xff]
    %v298 = vld [vmem:[%s1 + $0x6f8] sm:$0xff]
    %v299 = vld [vmem:[%s1 + $0x700] sm:$0xff]
    %v300 = vld [vmem:[%s1 + $0x708] sm:$0xff]
    %v301 = vld [vmem:[%s1 + $0x710] sm:$0xff]
    %v302 = vld [vmem:[%s1 + $0x718] sm:$0xff]
    %v303 = vld [vmem:[%s1 + $0x720] sm:$0xff]
    %v304 = vld [vmem:[%s1 + $0x728] sm:$0xff]
    %v305 = vld [vmem:[%s1 + $0x730] sm:$0xff]
    %v306 = vld [vmem:[%s1 + $0x738] sm:$0xff]
    %v307 = vld [vmem:[%s1 + $0x740] sm:$0xff]
    %v308 = vld [vmem:[%s1 + $0x748] sm:$0xff]
    %v309 = vld [vmem:[%s1 + $0x750] sm:$0xff]
    %v310 = vld [vmem:[%s1 + $0x758] sm:$0xff]
    %v311 = vld [vmem:[%s1 + $0x760] sm:$0xff]
    %v312 = vld [vmem:[%s1 + $0x768] sm:$0xff]
    %v313 = vld [vmem:[%s1 + $0x770] sm:$0xff]
    %v314 = vld [vmem:[%s1 + $0x778] sm:$0xff]
    %v315 = vld [vmem:[%s1 + $0x780] sm:$0xff]
    %v316 = vld [vmem:[%s1 + $0x788] sm:$0xff]
    %v317 = vld [vmem:[%s1 + $0x790] sm:$0xff]
    %v318 = vld [vmem:[%s1 + $0x798] sm:$0xff]
    %v319 = vld [vmem:[%s1 + $0x7a0] sm:$0xff]
    %v320 = vld [vmem:[%s1 + $0x7a8] sm:$0xff]
    %v321 = vld [vmem:[%s1 + $0x7b0] sm:$0xff]
    %v322 = vld [vmem:[%s1 + $0x7b8] sm:$0xff]
    %v323 = vld [vmem:[%s1 + $0x7c0] sm:$0xff]
    %v324 = vld [vmem:[%s1 + $0x7c8] sm:$0xff]
    %v325 = vld [vmem:[%s1 + $0x7d0] sm:$0xff]
    %v326 = vld [vmem:[%s1 + $0x7d8] sm:$0xff]
    %v327 = vld [vmem:[%s1 + $0x7e0] sm:$0xff]
    %v328 = vld [vmem:[%s1 + $0x7e8] sm:$0xff]
    %v329 = vld [vmem:[%s1 + $0x7f0] sm:$0xff]
    %v330 = vld [vmem:[%s1 + $0x7f8] sm:$0xff]
    %v331 = vld [vmem:[%s1 + $0x800] sm:$0xff]
    %v332 = vld [vmem:[%s1 + $0x808] sm:$0xff]
    %v333 = vld [vmem:[%s1 + $0x810] sm:$0xff]
    %v334 = vld [vmem:[%s1 + $0x818] sm:$0xff]
    %v335 = vld [vmem:[%s1 + $0x820] sm:$0xff]
    %v336 = vld [vmem:[%s1 + $0x828] sm:$0xff]
    %v337 = vld [vmem:[%s1 + $0x830] sm:$0xff]
    %v338 = vld [vmem:[%s1 + $0x838] sm:$0xff]
    %v339 = vld [vmem:[%s1 + $0x840] sm:$0xff]
    %v340 = vld [vmem:[%s1 + $0x848] sm:$0xff]
    %v341 = vld [vmem:[%s1 + $0x850] sm:$0xff]
    %v342 = vld [vmem:[%s1 + $0x858] sm:$0xff]
    %v343 = vld [vmem:[%s1 + $0x860] sm:$0xff]
    %v344 = vld [vmem:[%s1 + $0x868] sm:$0xff]
    %v345 = vld [vmem:[%s1 + $0x870] sm:$0xff]
    %v346 = vld [vmem:[%s1 + $0x878] sm:$0xff]
    %v347 = vld [vmem:[%s1 + $0x880] sm:$0xff]
    %v348 = vld [vmem:[%s1 + $0x888] sm:$0xff]
    %v349 = vld [vmem:[%s1 + $0x890] sm:$0xff]
    %v350 = vld [vmem:[%s1 + $0x898] sm:$0xff]
    %v351 = vld [vmem:[%s1 + $0x8a0] sm:$0xff]
    %v352 = vld [vmem:[%s1 + $0x8a8] sm:$0xff]
    %v353 = vld [vmem:[%s1 + $0x8b0] sm:$0xff]
    %v354 = vld [vmem:[%s1 + $0x8b8] sm:$0xff]
    %v355 = vld [vmem:[%s1 + $0x8c0] sm:$0xff]
    %v356 = vld [vmem:[%s1 + $0x8c8] sm:$0xff]
    %v357 = vld [vmem:[%s1 + $0x8d0] sm:$0xff]
    %v358 = vld [vmem:[%s1 + $0x8d8] sm:$0xff]
    %v359 = vld [vmem:[%s1 + $0x8e0] sm:$0xff]
    %v360 = vld [vmem:[%s1 + $0x8e8] sm:$0xff]
    %v361 = vld [vmem:[%s1 + $0x8f0] sm:$0xff]
    %v362 = vld [vmem:[%s1 + $0x8f8] sm:$0xff]
    %v363 = vld [vmem:[%s1 + $0x900] sm:$0xff]
    %v364 = vld [vmem:[%s1 + $0x908] sm:$0xff]
    %v365 = vld [vmem:[%s1 + $0x910] sm:$0xff]
    %v366 = vld [vmem:[%s1 + $0x918] sm:$0xff]
    %v367 = vld [vmem:[%s1 + $0x920] sm:$0xff]
    %v368 = vld [vmem:[%s1 + $0x928] sm:$0xff]
    %v369 = vld [vmem:[%s1 + $0x930] sm:$0xff]
    %v370 = vld [vmem:[%s1 + $0x938] sm:$0xff]
    %v371 = vld [vmem:[%s1 + $0x940] sm:$0xff]
    %v372 = vld [vmem:[%s1 + $0x948] sm:$0xff]
    %v373 = vld [vmem:[%s1 + $0x950] sm:$0xff]
    %v374 = vld [vmem:[%s1 + $0x958] sm:$0xff]
    %v375 = vld [vmem:[%s1 + $0x960] sm:$0xff]
    %v376 = vld [vmem:[%s1 + $0x968] sm:$0xff]
    %v377 = vld [vmem:[%s1 + $0x970] sm:$0xff]
    %v378 = vld [vmem:[%s1 + $0x978] sm:$0xff]
    %v379 = vld [vmem:[%s1 + $0x980] sm:$0xff]
    %v380 = vld [vmem:[%s1 + $0x988] sm:$0xff]
    %v381 = vld [vmem:[%s1 + $0x990] sm:$0xff]
    %v382 = vld [vmem:[%s1 + $0x998] sm:$0xff]
    %v383 = vld [vmem:[%s1 + $0x9a0] sm:$0xff]
    %v384 = vld [vmem:[%s1 + $0x9a8] sm:$0xff]
    %v385 = vld [vmem:[%s1 + $0x9b0] sm:$0xff]
    %v386 = vld [vmem:[%s1 + $0x9b8] sm:$0xff]
    %v387 = vld [vmem:[%s1 + $0x9c0] sm:$0xff]
    %v388 = vld [vmem:[%s1 + $0x9c8] sm:$0xff]
    %v389 = vld [vmem:[%s1 + $0x9d0] sm:$0xff]
    %v390 = vld [vmem:[%s1 + $0x9d8] sm:$0xff]
    %v391 = vld [vmem:[%s1 + $0x9e0] sm:$0xff]
    %v392 = vld [vmem:[%s1 + $0x9e8] sm:$0xff]
    %v393 = vld [vmem:[%s1 + $0x9f0] sm:$0xff]
    %v394 = vld [vmem:[%s1 + $0x9f8] sm:$0xff]
    %v395 = vld [vmem:[%s1 + $0xa00] sm:$0xff]
    %v396 = vld [vmem:[%s1 + $0xa08] sm:$0xff]
    %v397 = vld [vmem:[%s1 + $0xa10] sm:$0xff]
    %v398 = vld [vmem:[%s1 + $0xa18] sm:$0xff]
    %v399 = vld [vmem:[%s1 + $0xa20] sm:$0xff]
    %v400 = vld [vmem:[%s1 + $0xa28] sm:$0xff]
    %v401 = vld [vmem:[%s1 + $0xa30] sm:$0xff]
    %v402 = vld [vmem:[%s1 + $0xa38] sm:$0xff]
    %v403 = vld [vmem:[%s1 + $0xa40] sm:$0xff]
    %v404 = vld [vmem:[%s1 + $0xa48] sm:$0xff]
    %v405 = vld [vmem:[%s1 + $0xa50] sm:$0xff]
    %v406 = vld [vmem:[%s1 + $0xa58] sm:$0xff]
    %v407 = vld [vmem:[%s1 + $0xa60] sm:$0xff]
    %v408 = vld [vmem:[%s1 + $0xa68] sm:$0xff]
    %v409 = vld [vmem:[%s1 + $0xa70] sm:$0xff]
    %v410 = vld [vmem:[%s1 + $0xa78] sm:$0xff]
    %v411 = vld [vmem:[%s1 + $0xa80] sm:$0xff]
    %v412 = vld [vmem:[%s1 + $0xa88] sm:$0xff]
    %v413 = vld [vmem:[%s1 + $0xa90] sm:$0xff]
    %v414 = vld [vmem:[%s1 + $0xa98] sm:$0xff]
    %v415 = vld [vmem:[%s1 + $0xaa0] sm:$0xff]
    %v416 = vld [vmem:[%s1 + $0xaa8] sm:$0xff]
    %v417 = vld [vmem:[%s1 + $0xab0] sm:$0xff]
    %v418 = vld [vmem:[%s1 + $0xab8] sm:$0xff]
    %v419 = vld [vmem:[%s1 + $0xac0] sm:$0xff]
    %v420 = vld [vmem:[%s1 + $0xac8] sm:$0xff]
    %v421 = vld [vmem:[%s1 + $0xad0] sm:$0xff]
    %v422 = vld [vmem:[%s1 + $0xad8] sm:$0xff]
    %v423 = vld [vmem:[%s1 + $0xae0] sm:$0xff]
    %v424 = vld [vmem:[%s1 + $0xae8] sm:$0xff]
    %v425 = vld [vmem:[%s1 + $0xaf0] sm:$0xff]
    %v426 = vld [vmem:[%s1 + $0xaf8] sm:$0xff]
    %v427 = vld [vmem:[%s1 + $0xb00] sm:$0xff]
    %v428 = vld [vmem:[%s1 + $0xb08] sm:$0xff]
    %v429 = vld [vmem:[%s1 + $0xb10] sm:$0xff]
    %v430 = vld [vmem:[%s1 + $0xb18] sm:$0xff]
    %v431 = vld [vmem:[%s1 + $0xb20] sm:$0xff]
    %v432 = vld [vmem:[%s1 + $0xb28] sm:$0xff]
    %v433 = vld [vmem:[%s1 + $0xb30] sm:$0xff]
    %v434 = vld [vmem:[%s1 + $0xb38] sm:$0xff]
    %v435 = vld [vmem:[%s1 + $0xb40] sm:$0xff]
    %v436 = vld [vmem:[%s1 + $0xb48] sm:$0xff]
    %v437 = vld [vmem:[%s1 + $0xb50] sm:$0xff]
    %v438 = vld [vmem:[%s1 + $0xb58] sm:$0xff]
    %v439 = vld [vmem:[%s1 + $0xb60] sm:$0xff]
    %v440 = vld [vmem:[%s1 + $0xb68] sm:$0xff]
    %v441 = vld [vmem:[%s1 + $0xb70] sm:$0xff]
    %v442 = vld [vmem:[%s1 + $0xb78] sm:$0xff]
    %v443 = vld [vmem:[%s1 + $0xb80] sm:$0xff]
    %v444 = vld [vmem:[%s1 + $0xb88] sm:$0xff]
    %v445 = vld [vmem:[%s1 + $0xb90] sm:$0xff]
    %v446 = vld [vmem:[%s1 + $0xb98] sm:$0xff]
    %v447 = vld [vmem:[%s1 + $0xba0] sm:$0xff]
    %v448 = vld [vmem:[%s1 + $0xba8] sm:$0xff]
    %v449 = vld [vmem:[%s1 + $0xbb0] sm:$0xff]
    %v450 = vld [vmem:[%s1 + $0xbb8] sm:$0xff]
    %v451 = vld [vmem:[%s1 + $0xbc0] sm:$0xff]
    %v452 = vld [vmem:[%s1 + $0xbc8] sm:$0xff]
    %v453 = vld [vmem:[%s1 + $0xbd0] sm:$0xff]
    %v454 = vld [vmem:[%s1 + $0xbd8] sm:$0xff]
    %v455 = vld [vmem:[%s1 + $0xbe0] sm:$0xff]
    %v456 = vld [vmem:[%s1 + $0xbe8] sm:$0xff]
    %v457 = vld [vmem:[%s1 + $0xbf0] sm:$0xff]
    %v458 = vld [vmem:[%s1 + $0xbf8] sm:$0xff]
    %v459 = vld [vmem:[%s1 + $0xc00] sm:$0xff]
    %v460 = vld [vmem:[%s1 + $0xc08] sm:$0xff]
    %v461 = vld [vmem:[%s1 + $0xc10] sm:$0xff]
    %v462 = vld [vmem:[%s1 + $0xc18] sm:$0xff]
    %v463 = vld [vmem:[%s1 + $0xc20] sm:$0xff]
    %v464 = vld [vmem:[%s1 + $0xc28] sm:$0xff]
    %v465 = vld [vmem:[%s1 + $0xc30] sm:$0xff]
    %v466 = vld [vmem:[%s1 + $0xc38] sm:$0xff]
    %v467 = vld [vmem:[%s2] ss:$4 sm:$0xff]
    %v469 = vperm.slane %v467, 0
    %v470 = vperm.slane %v467, 1
    %v471 = vperm.slane %v467, 2
    %v472 = vperm.slane %v467, 3
    %v473 = vperm.slane %v467, 4
    %v474 = vperm.slane %v467, 5
    %v475 = vperm.slane %v467, 6
    %v476 = vperm.slane %v467, 7
    %486 = vst [vmem:[#allocation1] ss:$9 sm:$0xff] %v74
    %v487 = vld [vmem:[#allocation1] sm:$0xff]
    %v488 = vld [vmem:[#allocation1 + $0x9] sm:$0xff]
    %v489 = vld [vmem:[#allocation1 + $0x12] sm:$0xff]
    %v490 = vld [vmem:[#allocation1 + $0x1b] sm:$0xff]
    %v491 = vld [vmem:[#allocation1 + $0x24] sm:$0xff]
    %v492 = vld [vmem:[#allocation1 + $0x2d] sm:$0xff]
    %v493 = vld [vmem:[#allocation1 + $0x36] sm:$0xff]
    %v892 = vunpack.c.l.b16 %v75
    %v893 = vunpack.c.h.b16 %v75
    %v894 = vunpack.c.l.b16 %v76
    %v895 = vunpack.c.h.b16 %v76
    %v896 = vunpack.c.l.b16 %v77
    %v897 = vunpack.c.h.b16 %v77
    %v898 = vunpack.c.l.b16 %v78
    %v899 = vunpack.c.h.b16 %v78
    %v900 = vunpack.c.l.b16 %v79
    %v901 = vunpack.c.h.b16 %v79
    %v902 = vunpack.c.l.b16 %v80
    %v903 = vunpack.c.h.b16 %v80
    %v904 = vunpack.c.l.b16 %v81
    %v905 = vunpack.c.h.b16 %v81
    %v906 = vunpack.c.l.b16 %v82
    %v907 = vunpack.c.h.b16 %v82
    %v908 = vunpack.c.l.b16 %v83
    %v909 = vunpack.c.h.b16 %v83
    %v910 = vunpack.c.l.b16 %v84
    %v911 = vunpack.c.h.b16 %v84
    %v912 = vunpack.c.l.b16 %v85
    %v913 = vunpack.c.h.b16 %v85
    %v914 = vunpack.c.l.b16 %v86
    %v915 = vunpack.c.h.b16 %v86
    %v916 = vunpack.c.l.b16 %v87
    %v917 = vunpack.c.h.b16 %v87
    %v918 = vunpack.c.l.b16 %v88
    %v919 = vunpack.c.h.b16 %v88
    %v920 = vunpack.c.l.b16 %v89
    %v921 = vunpack.c.h.b16 %v89
    %v922 = vunpack.c.l.b16 %v90
    %v923 = vunpack.c.h.b16 %v90
    %v924 = vunpack.c.l.b16 %v91
    %v925 = vunpack.c.h.b16 %v91
    %v926 = vunpack.c.l.b16 %v92
    %v927 = vunpack.c.h.b16 %v92
    %v928 = vunpack.c.l.b16 %v93
    %v929 = vunpack.c.h.b16 %v93
    %v930 = vunpack.c.l.b16 %v94
    %v931 = vunpack.c.h.b16 %v94
    %v932 = vunpack.c.l.b16 %v95
    %v933 = vunpack.c.h.b16 %v95
    %v934 = vunpack.c.l.b16 %v96
    %v935 = vunpack.c.h.b16 %v96
    %v936 = vunpack.c.l.b16 %v97
    %v937 = vunpack.c.h.b16 %v97
    %v938 = vunpack.c.l.b16 %v98
    %v939 = vunpack.c.h.b16 %v98
    %v940 = vunpack.c.l.b16 %v99
    %v941 = vunpack.c.h.b16 %v99
    %v942 = vunpack.c.l.b16 %v100
    %v943 = vunpack.c.h.b16 %v100
    %v944 = vunpack.c.l.b16 %v101
    %v945 = vunpack.c.h.b16 %v101
    %v946 = vunpack.c.l.b16 %v102
    %v947 = vunpack.c.h.b16 %v102
    %v948 = vunpack.c.l.b16 %v103
    %v949 = vunpack.c.h.b16 %v103
    %v950 = vunpack.c.l.b16 %v104
    %v951 = vunpack.c.h.b16 %v104
    %v952 = vunpack.c.l.b16 %v105
    %v953 = vunpack.c.h.b16 %v105
    %v954 = vunpack.c.l.b16 %v106
    %v955 = vunpack.c.h.b16 %v106
    %v956 = vunpack.c.l.b16 %v107
    %v957 = vunpack.c.h.b16 %v107
    %v958 = vunpack.c.l.b16 %v108
    %v959 = vunpack.c.h.b16 %v108
    %v960 = vunpack.c.l.b16 %v109
    %v961 = vunpack.c.h.b16 %v109
    %v962 = vunpack.c.l.b16 %v110
    %v963 = vunpack.c.h.b16 %v110
    %v964 = vunpack.c.l.b16 %v111
    %v965 = vunpack.c.h.b16 %v111
    %v966 = vunpack.c.l.b16 %v112
    %v967 = vunpack.c.h.b16 %v112
    %v968 = vunpack.c.l.b16 %v113
    %v969 = vunpack.c.h.b16 %v113
    %v970 = vunpack.c.l.b16 %v114
    %v971 = vunpack.c.h.b16 %v114
    %v972 = vunpack.c.l.b16 %v115
    %v973 = vunpack.c.h.b16 %v115
    %v974 = vunpack.c.l.b16 %v116
    %v975 = vunpack.c.h.b16 %v116
    %v976 = vunpack.c.l.b16 %v117
    %v977 = vunpack.c.h.b16 %v117
    %v978 = vunpack.c.l.b16 %v118
    %v979 = vunpack.c.h.b16 %v118
    %v980 = vunpack.c.l.b16 %v119
    %v981 = vunpack.c.h.b16 %v119
    %v982 = vunpack.c.l.b16 %v120
    %v983 = vunpack.c.h.b16 %v120
    %v984 = vunpack.c.l.b16 %v121
    %v985 = vunpack.c.h.b16 %v121
    %v986 = vunpack.c.l.b16 %v122
    %v987 = vunpack.c.h.b16 %v122
    %v988 = vunpack.c.l.b16 %v123
    %v989 = vunpack.c.h.b16 %v123
    %v990 = vunpack.c.l.b16 %v124
    %v991 = vunpack.c.h.b16 %v124
    %v992 = vunpack.c.l.b16 %v125
    %v993 = vunpack.c.h.b16 %v125
    %v994 = vunpack.c.l.b16 %v126
    %v995 = vunpack.c.h.b16 %v126
    %v996 = vunpack.c.l.b16 %v127
    %v997 = vunpack.c.h.b16 %v127
    %v998 = vunpack.c.l.b16 %v128
    %v999 = vunpack.c.h.b16 %v128
    %v1000 = vunpack.c.l.b16 %v129
    %v1001 = vunpack.c.h.b16 %v129
    %v1002 = vunpack.c.l.b16 %v130
    %v1003 = vunpack.c.h.b16 %v130
    %v1004 = vunpack.c.l.b16 %v131
    %v1005 = vunpack.c.h.b16 %v131
    %v1006 = vunpack.c.l.b16 %v132
    %v1007 = vunpack.c.h.b16 %v132
    %v1008 = vunpack.c.l.b16 %v133
    %v1009 = vunpack.c.h.b16 %v133
    %v1010 = vunpack.c.l.b16 %v134
    %v1011 = vunpack.c.h.b16 %v134
    %v1012 = vunpack.c.l.b16 %v135
    %v1013 = vunpack.c.h.b16 %v135
    %v1014 = vunpack.c.l.b16 %v136
    %v1015 = vunpack.c.h.b16 %v136
    %v1016 = vunpack.c.l.b16 %v137
    %v1017 = vunpack.c.h.b16 %v137
    %v1018 = vunpack.c.l.b16 %v138
    %v1019 = vunpack.c.h.b16 %v138
    %v1020 = vunpack.c.l.b16 %v139
    %v1021 = vunpack.c.h.b16 %v139
    %v1022 = vunpack.c.l.b16 %v140
    %v1023 = vunpack.c.h.b16 %v140
    %v1024 = vunpack.c.l.b16 %v141
    %v1025 = vunpack.c.h.b16 %v141
    %v1026 = vunpack.c.l.b16 %v142
    %v1027 = vunpack.c.h.b16 %v142
    %v1028 = vunpack.c.l.b16 %v143
    %v1029 = vunpack.c.h.b16 %v143
    %v1030 = vunpack.c.l.b16 %v144
    %v1031 = vunpack.c.h.b16 %v144
    %v1032 = vunpack.c.l.b16 %v145
    %v1033 = vunpack.c.h.b16 %v145
    %v1034 = vunpack.c.l.b16 %v146
    %v1035 = vunpack.c.h.b16 %v146
    %v1036 = vunpack.c.l.b16 %v147
    %v1037 = vunpack.c.h.b16 %v147
    %v1038 = vunpack.c.l.b16 %v148
    %v1039 = vunpack.c.h.b16 %v148
    %v1040 = vunpack.c.l.b16 %v149
    %v1041 = vunpack.c.h.b16 %v149
    %v1042 = vunpack.c.l.b16 %v150
    %v1043 = vunpack.c.h.b16 %v150
    %v1044 = vunpack.c.l.b16 %v151
    %v1045 = vunpack.c.h.b16 %v151
    %v1046 = vunpack.c.l.b16 %v152
    %v1047 = vunpack.c.h.b16 %v152
    %v1048 = vunpack.c.l.b16 %v153
    %v1049 = vunpack.c.h.b16 %v153
    %v1050 = vunpack.c.l.b16 %v154
    %v1051 = vunpack.c.h.b16 %v154
    %v1052 = vunpack.c.l.b16 %v155
    %v1053 = vunpack.c.h.b16 %v155
    %v1054 = vunpack.c.l.b16 %v156
    %v1055 = vunpack.c.h.b16 %v156
    %v1056 = vunpack.c.l.b16 %v157
    %v1057 = vunpack.c.h.b16 %v157
    %v1058 = vunpack.c.l.b16 %v158
    %v1059 = vunpack.c.h.b16 %v158
    %v1060 = vunpack.c.l.b16 %v159
    %v1061 = vunpack.c.h.b16 %v159
    %v1062 = vunpack.c.l.b16 %v160
    %v1063 = vunpack.c.h.b16 %v160
    %v1064 = vunpack.c.l.b16 %v161
    %v1065 = vunpack.c.h.b16 %v161
    %v1066 = vunpack.c.l.b16 %v162
    %v1067 = vunpack.c.h.b16 %v162
    %v1068 = vunpack.c.l.b16 %v163
    %v1069 = vunpack.c.h.b16 %v163
    %v1070 = vunpack.c.l.b16 %v164
    %v1071 = vunpack.c.h.b16 %v164
    %v1072 = vunpack.c.l.b16 %v165
    %v1073 = vunpack.c.h.b16 %v165
    %v1074 = vunpack.c.l.b16 %v166
    %v1075 = vunpack.c.h.b16 %v166
    %v1076 = vunpack.c.l.b16 %v167
    %v1077 = vunpack.c.h.b16 %v167
    %v1078 = vunpack.c.l.b16 %v168
    %v1079 = vunpack.c.h.b16 %v168
    %v1080 = vunpack.c.l.b16 %v169
    %v1081 = vunpack.c.h.b16 %v169
    %v1082 = vunpack.c.l.b16 %v170
    %v1083 = vunpack.c.h.b16 %v170
    %v1084 = vunpack.c.l.b16 %v171
    %v1085 = vunpack.c.h.b16 %v171
    %v1086 = vunpack.c.l.b16 %v172
    %v1087 = vunpack.c.h.b16 %v172
    %v1088 = vunpack.c.l.b16 %v173
    %v1089 = vunpack.c.h.b16 %v173
    %v1090 = vunpack.c.l.b16 %v174
    %v1091 = vunpack.c.h.b16 %v174
    %v1092 = vunpack.c.l.b16 %v175
    %v1093 = vunpack.c.h.b16 %v175
    %v1094 = vunpack.c.l.b16 %v176
    %v1095 = vunpack.c.h.b16 %v176
    %v1096 = vunpack.c.l.b16 %v177
    %v1097 = vunpack.c.h.b16 %v177
    %v1098 = vunpack.c.l.b16 %v178
    %v1099 = vunpack.c.h.b16 %v178
    %v1100 = vunpack.c.l.b16 %v179
    %v1101 = vunpack.c.h.b16 %v179
    %v1102 = vunpack.c.l.b16 %v180
    %v1103 = vunpack.c.h.b16 %v180
    %v1104 = vunpack.c.l.b16 %v181
    %v1105 = vunpack.c.h.b16 %v181
    %v1106 = vunpack.c.l.b16 %v182
    %v1107 = vunpack.c.h.b16 %v182
    %v1108 = vunpack.c.l.b16 %v183
    %v1109 = vunpack.c.h.b16 %v183
    %v1110 = vunpack.c.l.b16 %v184
    %v1111 = vunpack.c.h.b16 %v184
    %v1112 = vunpack.c.l.b16 %v185
    %v1113 = vunpack.c.h.b16 %v185
    %v1114 = vunpack.c.l.b16 %v186
    %v1115 = vunpack.c.h.b16 %v186
    %v1116 = vunpack.c.l.b16 %v187
    %v1117 = vunpack.c.h.b16 %v187
    %v1118 = vunpack.c.l.b16 %v188
    %v1119 = vunpack.c.h.b16 %v188
    %v1120 = vunpack.c.l.b16 %v189
    %v1121 = vunpack.c.h.b16 %v189
    %v1122 = vunpack.c.l.b16 %v190
    %v1123 = vunpack.c.h.b16 %v190
    %v1124 = vunpack.c.l.b16 %v191
    %v1125 = vunpack.c.h.b16 %v191
    %v1126 = vunpack.c.l.b16 %v192
    %v1127 = vunpack.c.h.b16 %v192
    %v1128 = vunpack.c.l.b16 %v193
    %v1129 = vunpack.c.h.b16 %v193
    %v1130 = vunpack.c.l.b16 %v194
    %v1131 = vunpack.c.h.b16 %v194
    %v1132 = vunpack.c.l.b16 %v195
    %v1133 = vunpack.c.h.b16 %v195
    %v1134 = vunpack.c.l.b16 %v196
    %v1135 = vunpack.c.h.b16 %v196
    %v1136 = vunpack.c.l.b16 %v197
    %v1137 = vunpack.c.h.b16 %v197
    %v1138 = vunpack.c.l.b16 %v198
    %v1139 = vunpack.c.h.b16 %v198
    %v1140 = vunpack.c.l.b16 %v199
    %v1141 = vunpack.c.h.b16 %v199
    %v1142 = vunpack.c.l.b16 %v200
    %v1143 = vunpack.c.h.b16 %v200
    %v1144 = vunpack.c.l.b16 %v201
    %v1145 = vunpack.c.h.b16 %v201
    %v1146 = vunpack.c.l.b16 %v202
    %v1147 = vunpack.c.h.b16 %v202
    %v1148 = vunpack.c.l.b16 %v203
    %v1149 = vunpack.c.h.b16 %v203
    %v1150 = vunpack.c.l.b16 %v204
    %v1151 = vunpack.c.h.b16 %v204
    %v1152 = vunpack.c.l.b16 %v205
    %v1153 = vunpack.c.h.b16 %v205
    %v1154 = vunpack.c.l.b16 %v206
    %v1155 = vunpack.c.h.b16 %v206
    %v1156 = vunpack.c.l.b16 %v207
    %v1157 = vunpack.c.h.b16 %v207
    %v1158 = vunpack.c.l.b16 %v208
    %v1159 = vunpack.c.h.b16 %v208
    %v1160 = vunpack.c.l.b16 %v209
    %v1161 = vunpack.c.h.b16 %v209
    %v1162 = vunpack.c.l.b16 %v210
    %v1163 = vunpack.c.h.b16 %v210
    %v1164 = vunpack.c.l.b16 %v211
    %v1165 = vunpack.c.h.b16 %v211
    %v1166 = vunpack.c.l.b16 %v212
    %v1167 = vunpack.c.h.b16 %v212
    %v1168 = vunpack.c.l.b16 %v213
    %v1169 = vunpack.c.h.b16 %v213
    %v1170 = vunpack.c.l.b16 %v214
    %v1171 = vunpack.c.h.b16 %v214
    %v1172 = vunpack.c.l.b16 %v215
    %v1173 = vunpack.c.h.b16 %v215
    %v1174 = vunpack.c.l.b16 %v216
    %v1175 = vunpack.c.h.b16 %v216
    %v1176 = vunpack.c.l.b16 %v217
    %v1177 = vunpack.c.h.b16 %v217
    %v1178 = vunpack.c.l.b16 %v218
    %v1179 = vunpack.c.h.b16 %v218
    %v1180 = vunpack.c.l.b16 %v219
    %v1181 = vunpack.c.h.b16 %v219
    %v1182 = vunpack.c.l.b16 %v220
    %v1183 = vunpack.c.h.b16 %v220
    %v1184 = vunpack.c.l.b16 %v221
    %v1185 = vunpack.c.h.b16 %v221
    %v1186 = vunpack.c.l.b16 %v222
    %v1187 = vunpack.c.h.b16 %v222
    %v1188 = vunpack.c.l.b16 %v223
    %v1189 = vunpack.c.h.b16 %v223
    %v1190 = vunpack.c.l.b16 %v224
    %v1191 = vunpack.c.h.b16 %v224
    %v1192 = vunpack.c.l.b16 %v225
    %v1193 = vunpack.c.h.b16 %v225
    %v1194 = vunpack.c.l.b16 %v226
    %v1195 = vunpack.c.h.b16 %v226
    %v1196 = vunpack.c.l.b16 %v227
    %v1197 = vunpack.c.h.b16 %v227
    %v1198 = vunpack.c.l.b16 %v228
    %v1199 = vunpack.c.h.b16 %v228
    %v1200 = vunpack.c.l.b16 %v229
    %v1201 = vunpack.c.h.b16 %v229
    %v1202 = vunpack.c.l.b16 %v230
    %v1203 = vunpack.c.h.b16 %v230
    %v1204 = vunpack.c.l.b16 %v231
    %v1205 = vunpack.c.h.b16 %v231
    %v1206 = vunpack.c.l.b16 %v232
    %v1207 = vunpack.c.h.b16 %v232
    %v1208 = vunpack.c.l.b16 %v233
    %v1209 = vunpack.c.h.b16 %v233
    %v1210 = vunpack.c.l.b16 %v234
    %v1211 = vunpack.c.h.b16 %v234
    %v1212 = vunpack.c.l.b16 %v235
    %v1213 = vunpack.c.h.b16 %v235
    %v1214 = vunpack.c.l.b16 %v236
    %v1215 = vunpack.c.h.b16 %v236
    %v1216 = vunpack.c.l.b16 %v237
    %v1217 = vunpack.c.h.b16 %v237
    %v1218 = vunpack.c.l.b16 %v238
    %v1219 = vunpack.c.h.b16 %v238
    %v1220 = vunpack.c.l.b16 %v239
    %v1221 = vunpack.c.h.b16 %v239
    %v1222 = vunpack.c.l.b16 %v240
    %v1223 = vunpack.c.h.b16 %v240
    %v1224 = vunpack.c.l.b16 %v241
    %v1225 = vunpack.c.h.b16 %v241
    %v1226 = vunpack.c.l.b16 %v242
    %v1227 = vunpack.c.h.b16 %v242
    %v1228 = vunpack.c.l.b16 %v243
    %v1229 = vunpack.c.h.b16 %v243
    %v1230 = vunpack.c.l.b16 %v244
    %v1231 = vunpack.c.h.b16 %v244
    %v1232 = vunpack.c.l.b16 %v245
    %v1233 = vunpack.c.h.b16 %v245
    %v1234 = vunpack.c.l.b16 %v246
    %v1235 = vunpack.c.h.b16 %v246
    %v1236 = vunpack.c.l.b16 %v247
    %v1237 = vunpack.c.h.b16 %v247
    %v1238 = vunpack.c.l.b16 %v248
    %v1239 = vunpack.c.h.b16 %v248
    %v1240 = vunpack.c.l.b16 %v249
    %v1241 = vunpack.c.h.b16 %v249
    %v1242 = vunpack.c.l.b16 %v250
    %v1243 = vunpack.c.h.b16 %v250
    %v1244 = vunpack.c.l.b16 %v251
    %v1245 = vunpack.c.h.b16 %v251
    %v1246 = vunpack.c.l.b16 %v252
    %v1247 = vunpack.c.h.b16 %v252
    %v1248 = vunpack.c.l.b16 %v253
    %v1249 = vunpack.c.h.b16 %v253
    %v1250 = vunpack.c.l.b16 %v254
    %v1251 = vunpack.c.h.b16 %v254
    %v1252 = vunpack.c.l.b16 %v255
    %v1253 = vunpack.c.h.b16 %v255
    %v1254 = vunpack.c.l.b16 %v256
    %v1255 = vunpack.c.h.b16 %v256
    %v1256 = vunpack.c.l.b16 %v257
    %v1257 = vunpack.c.h.b16 %v257
    %v1258 = vunpack.c.l.b16 %v258
    %v1259 = vunpack.c.h.b16 %v258
    %v1260 = vunpack.c.l.b16 %v259
    %v1261 = vunpack.c.h.b16 %v259
    %v1262 = vunpack.c.l.b16 %v260
    %v1263 = vunpack.c.h.b16 %v260
    %v1264 = vunpack.c.l.b16 %v261
    %v1265 = vunpack.c.h.b16 %v261
    %v1266 = vunpack.c.l.b16 %v262
    %v1267 = vunpack.c.h.b16 %v262
    %v1268 = vunpack.c.l.b16 %v263
    %v1269 = vunpack.c.h.b16 %v263
    %v1270 = vunpack.c.l.b16 %v264
    %v1271 = vunpack.c.h.b16 %v264
    %v1272 = vunpack.c.l.b16 %v265
    %v1273 = vunpack.c.h.b16 %v265
    %v1274 = vunpack.c.l.b16 %v266
    %v1275 = vunpack.c.h.b16 %v266
    %v1276 = vunpack.c.l.b16 %v267
    %v1277 = vunpack.c.h.b16 %v267
    %v1278 = vunpack.c.l.b16 %v268
    %v1279 = vunpack.c.h.b16 %v268
    %v1280 = vunpack.c.l.b16 %v269
    %v1281 = vunpack.c.h.b16 %v269
    %v1282 = vunpack.c.l.b16 %v270
    %v1283 = vunpack.c.h.b16 %v270
    %v1284 = vunpack.c.l.b16 %v271
    %v1285 = vunpack.c.h.b16 %v271
    %v1286 = vunpack.c.l.b16 %v272
    %v1287 = vunpack.c.h.b16 %v272
    %v1288 = vunpack.c.l.b16 %v273
    %v1289 = vunpack.c.h.b16 %v273
    %v1290 = vunpack.c.l.b16 %v274
    %v1291 = vunpack.c.h.b16 %v274
    %v1292 = vunpack.c.l.b16 %v275
    %v1293 = vunpack.c.h.b16 %v275
    %v1294 = vunpack.c.l.b16 %v276
    %v1295 = vunpack.c.h.b16 %v276
    %v1296 = vunpack.c.l.b16 %v277
    %v1297 = vunpack.c.h.b16 %v277
    %v1298 = vunpack.c.l.b16 %v278
    %v1299 = vunpack.c.h.b16 %v278
    %v1300 = vunpack.c.l.b16 %v279
    %v1301 = vunpack.c.h.b16 %v279
    %v1302 = vunpack.c.l.b16 %v280
    %v1303 = vunpack.c.h.b16 %v280
    %v1304 = vunpack.c.l.b16 %v281
    %v1305 = vunpack.c.h.b16 %v281
    %v1306 = vunpack.c.l.b16 %v282
    %v1307 = vunpack.c.h.b16 %v282
    %v1308 = vunpack.c.l.b16 %v283
    %v1309 = vunpack.c.h.b16 %v283
    %v1310 = vunpack.c.l.b16 %v284
    %v1311 = vunpack.c.h.b16 %v284
    %v1312 = vunpack.c.l.b16 %v285
    %v1313 = vunpack.c.h.b16 %v285
    %v1314 = vunpack.c.l.b16 %v286
    %v1315 = vunpack.c.h.b16 %v286
    %v1316 = vunpack.c.l.b16 %v287
    %v1317 = vunpack.c.h.b16 %v287
    %v1318 = vunpack.c.l.b16 %v288
    %v1319 = vunpack.c.h.b16 %v288
    %v1320 = vunpack.c.l.b16 %v289
    %v1321 = vunpack.c.h.b16 %v289
    %v1322 = vunpack.c.l.b16 %v290
    %v1323 = vunpack.c.h.b16 %v290
    %v1324 = vunpack.c.l.b16 %v291
    %v1325 = vunpack.c.h.b16 %v291
    %v1326 = vunpack.c.l.b16 %v292
    %v1327 = vunpack.c.h.b16 %v292
    %v1328 = vunpack.c.l.b16 %v293
    %v1329 = vunpack.c.h.b16 %v293
    %v1330 = vunpack.c.l.b16 %v294
    %v1331 = vunpack.c.h.b16 %v294
    %v1332 = vunpack.c.l.b16 %v295
    %v1333 = vunpack.c.h.b16 %v295
    %v1334 = vunpack.c.l.b16 %v296
    %v1335 = vunpack.c.h.b16 %v296
    %v1336 = vunpack.c.l.b16 %v297
    %v1337 = vunpack.c.h.b16 %v297
    %v1338 = vunpack.c.l.b16 %v298
    %v1339 = vunpack.c.h.b16 %v298
    %v1340 = vunpack.c.l.b16 %v299
    %v1341 = vunpack.c.h.b16 %v299
    %v1342 = vunpack.c.l.b16 %v300
    %v1343 = vunpack.c.h.b16 %v300
    %v1344 = vunpack.c.l.b16 %v301
    %v1345 = vunpack.c.h.b16 %v301
    %v1346 = vunpack.c.l.b16 %v302
    %v1347 = vunpack.c.h.b16 %v302
    %v1348 = vunpack.c.l.b16 %v303
    %v1349 = vunpack.c.h.b16 %v303
    %v1350 = vunpack.c.l.b16 %v304
    %v1351 = vunpack.c.h.b16 %v304
    %v1352 = vunpack.c.l.b16 %v305
    %v1353 = vunpack.c.h.b16 %v305
    %v1354 = vunpack.c.l.b16 %v306
    %v1355 = vunpack.c.h.b16 %v306
    %v1356 = vunpack.c.l.b16 %v307
    %v1357 = vunpack.c.h.b16 %v307
    %v1358 = vunpack.c.l.b16 %v308
    %v1359 = vunpack.c.h.b16 %v308
    %v1360 = vunpack.c.l.b16 %v309
    %v1361 = vunpack.c.h.b16 %v309
    %v1362 = vunpack.c.l.b16 %v310
    %v1363 = vunpack.c.h.b16 %v310
    %v1364 = vunpack.c.l.b16 %v311
    %v1365 = vunpack.c.h.b16 %v311
    %v1366 = vunpack.c.l.b16 %v312
    %v1367 = vunpack.c.h.b16 %v312
    %v1368 = vunpack.c.l.b16 %v313
    %v1369 = vunpack.c.h.b16 %v313
    %v1370 = vunpack.c.l.b16 %v314
    %v1371 = vunpack.c.h.b16 %v314
    %v1372 = vunpack.c.l.b16 %v315
    %v1373 = vunpack.c.h.b16 %v315
    %v1374 = vunpack.c.l.b16 %v316
    %v1375 = vunpack.c.h.b16 %v316
    %v1376 = vunpack.c.l.b16 %v317
    %v1377 = vunpack.c.h.b16 %v317
    %v1378 = vunpack.c.l.b16 %v318
    %v1379 = vunpack.c.h.b16 %v318
    %v1380 = vunpack.c.l.b16 %v319
    %v1381 = vunpack.c.h.b16 %v319
    %v1382 = vunpack.c.l.b16 %v320
    %v1383 = vunpack.c.h.b16 %v320
    %v1384 = vunpack.c.l.b16 %v321
    %v1385 = vunpack.c.h.b16 %v321
    %v1386 = vunpack.c.l.b16 %v322
    %v1387 = vunpack.c.h.b16 %v322
    %v1388 = vunpack.c.l.b16 %v323
    %v1389 = vunpack.c.h.b16 %v323
    %v1390 = vunpack.c.l.b16 %v324
    %v1391 = vunpack.c.h.b16 %v324
    %v1392 = vunpack.c.l.b16 %v325
    %v1393 = vunpack.c.h.b16 %v325
    %v1394 = vunpack.c.l.b16 %v326
    %v1395 = vunpack.c.h.b16 %v326
    %v1396 = vunpack.c.l.b16 %v327
    %v1397 = vunpack.c.h.b16 %v327
    %v1398 = vunpack.c.l.b16 %v328
    %v1399 = vunpack.c.h.b16 %v328
    %v1400 = vunpack.c.l.b16 %v329
    %v1401 = vunpack.c.h.b16 %v329
    %v1402 = vunpack.c.l.b16 %v330
    %v1403 = vunpack.c.h.b16 %v330
    %v1404 = vunpack.c.l.b16 %v331
    %v1405 = vunpack.c.h.b16 %v331
    %v1406 = vunpack.c.l.b16 %v332
    %v1407 = vunpack.c.h.b16 %v332
    %v1408 = vunpack.c.l.b16 %v333
    %v1409 = vunpack.c.h.b16 %v333
    %v1410 = vunpack.c.l.b16 %v334
    %v1411 = vunpack.c.h.b16 %v334
    %v1412 = vunpack.c.l.b16 %v335
    %v1413 = vunpack.c.h.b16 %v335
    %v1414 = vunpack.c.l.b16 %v336
    %v1415 = vunpack.c.h.b16 %v336
    %v1416 = vunpack.c.l.b16 %v337
    %v1417 = vunpack.c.h.b16 %v337
    %v1418 = vunpack.c.l.b16 %v338
    %v1419 = vunpack.c.h.b16 %v338
    %v1420 = vunpack.c.l.b16 %v339
    %v1421 = vunpack.c.h.b16 %v339
    %v1422 = vunpack.c.l.b16 %v340
    %v1423 = vunpack.c.h.b16 %v340
    %v1424 = vunpack.c.l.b16 %v341
    %v1425 = vunpack.c.h.b16 %v341
    %v1426 = vunpack.c.l.b16 %v342
    %v1427 = vunpack.c.h.b16 %v342
    %v1428 = vunpack.c.l.b16 %v343
    %v1429 = vunpack.c.h.b16 %v343
    %v1430 = vunpack.c.l.b16 %v344
    %v1431 = vunpack.c.h.b16 %v344
    %v1432 = vunpack.c.l.b16 %v345
    %v1433 = vunpack.c.h.b16 %v345
    %v1434 = vunpack.c.l.b16 %v346
    %v1435 = vunpack.c.h.b16 %v346
    %v1436 = vunpack.c.l.b16 %v347
    %v1437 = vunpack.c.h.b16 %v347
    %v1438 = vunpack.c.l.b16 %v348
    %v1439 = vunpack.c.h.b16 %v348
    %v1440 = vunpack.c.l.b16 %v349
    %v1441 = vunpack.c.h.b16 %v349
    %v1442 = vunpack.c.l.b16 %v350
    %v1443 = vunpack.c.h.b16 %v350
    %v1444 = vunpack.c.l.b16 %v351
    %v1445 = vunpack.c.h.b16 %v351
    %v1446 = vunpack.c.l.b16 %v352
    %v1447 = vunpack.c.h.b16 %v352
    %v1448 = vunpack.c.l.b16 %v353
    %v1449 = vunpack.c.h.b16 %v353
    %v1450 = vunpack.c.l.b16 %v354
    %v1451 = vunpack.c.h.b16 %v354
    %v1452 = vunpack.c.l.b16 %v355
    %v1453 = vunpack.c.h.b16 %v355
    %v1454 = vunpack.c.l.b16 %v356
    %v1455 = vunpack.c.h.b16 %v356
    %v1456 = vunpack.c.l.b16 %v357
    %v1457 = vunpack.c.h.b16 %v357
    %v1458 = vunpack.c.l.b16 %v358
    %v1459 = vunpack.c.h.b16 %v358
    %v1460 = vunpack.c.l.b16 %v359
    %v1461 = vunpack.c.h.b16 %v359
    %v1462 = vunpack.c.l.b16 %v360
    %v1463 = vunpack.c.h.b16 %v360
    %v1464 = vunpack.c.l.b16 %v361
    %v1465 = vunpack.c.h.b16 %v361
    %v1466 = vunpack.c.l.b16 %v362
    %v1467 = vunpack.c.h.b16 %v362
    %v1468 = vunpack.c.l.b16 %v363
    %v1469 = vunpack.c.h.b16 %v363
    %v1470 = vunpack.c.l.b16 %v364
    %v1471 = vunpack.c.h.b16 %v364
    %v1472 = vunpack.c.l.b16 %v365
    %v1473 = vunpack.c.h.b16 %v365
    %v1474 = vunpack.c.l.b16 %v366
    %v1475 = vunpack.c.h.b16 %v366
    %v1476 = vunpack.c.l.b16 %v367
    %v1477 = vunpack.c.h.b16 %v367
    %v1478 = vunpack.c.l.b16 %v368
    %v1479 = vunpack.c.h.b16 %v368
    %v1480 = vunpack.c.l.b16 %v369
    %v1481 = vunpack.c.h.b16 %v369
    %v1482 = vunpack.c.l.b16 %v370
    %v1483 = vunpack.c.h.b16 %v370
    %v1484 = vunpack.c.l.b16 %v371
    %v1485 = vunpack.c.h.b16 %v371
    %v1486 = vunpack.c.l.b16 %v372
    %v1487 = vunpack.c.h.b16 %v372
    %v1488 = vunpack.c.l.b16 %v373
    %v1489 = vunpack.c.h.b16 %v373
    %v1490 = vunpack.c.l.b16 %v374
    %v1491 = vunpack.c.h.b16 %v374
    %v1492 = vunpack.c.l.b16 %v375
    %v1493 = vunpack.c.h.b16 %v375
    %v1494 = vunpack.c.l.b16 %v376
    %v1495 = vunpack.c.h.b16 %v376
    %v1496 = vunpack.c.l.b16 %v377
    %v1497 = vunpack.c.h.b16 %v377
    %v1498 = vunpack.c.l.b16 %v378
    %v1499 = vunpack.c.h.b16 %v378
    %v1500 = vunpack.c.l.b16 %v379
    %v1501 = vunpack.c.h.b16 %v379
    %v1502 = vunpack.c.l.b16 %v380
    %v1503 = vunpack.c.h.b16 %v380
    %v1504 = vunpack.c.l.b16 %v381
    %v1505 = vunpack.c.h.b16 %v381
    %v1506 = vunpack.c.l.b16 %v382
    %v1507 = vunpack.c.h.b16 %v382
    %v1508 = vunpack.c.l.b16 %v383
    %v1509 = vunpack.c.h.b16 %v383
    %v1510 = vunpack.c.l.b16 %v384
    %v1511 = vunpack.c.h.b16 %v384
    %v1512 = vunpack.c.l.b16 %v385
    %v1513 = vunpack.c.h.b16 %v385
    %v1514 = vunpack.c.l.b16 %v386
    %v1515 = vunpack.c.h.b16 %v386
    %v1516 = vunpack.c.l.b16 %v387
    %v1517 = vunpack.c.h.b16 %v387
    %v1518 = vunpack.c.l.b16 %v388
    %v1519 = vunpack.c.h.b16 %v388
    %v1520 = vunpack.c.l.b16 %v389
    %v1521 = vunpack.c.h.b16 %v389
    %v1522 = vunpack.c.l.b16 %v390
    %v1523 = vunpack.c.h.b16 %v390
    %v1524 = vunpack.c.l.b16 %v391
    %v1525 = vunpack.c.h.b16 %v391
    %v1526 = vunpack.c.l.b16 %v392
    %v1527 = vunpack.c.h.b16 %v392
    %v1528 = vunpack.c.l.b16 %v393
    %v1529 = vunpack.c.h.b16 %v393
    %v1530 = vunpack.c.l.b16 %v394
    %v1531 = vunpack.c.h.b16 %v394
    %v1532 = vunpack.c.l.b16 %v395
    %v1533 = vunpack.c.h.b16 %v395
    %v1534 = vunpack.c.l.b16 %v396
    %v1535 = vunpack.c.h.b16 %v396
    %v1536 = vunpack.c.l.b16 %v397
    %v1537 = vunpack.c.h.b16 %v397
    %v1538 = vunpack.c.l.b16 %v398
    %v1539 = vunpack.c.h.b16 %v398
    %v1540 = vunpack.c.l.b16 %v399
    %v1541 = vunpack.c.h.b16 %v399
    %v1542 = vunpack.c.l.b16 %v400
    %v1543 = vunpack.c.h.b16 %v400
    %v1544 = vunpack.c.l.b16 %v401
    %v1545 = vunpack.c.h.b16 %v401
    %v1546 = vunpack.c.l.b16 %v402
    %v1547 = vunpack.c.h.b16 %v402
    %v1548 = vunpack.c.l.b16 %v403
    %v1549 = vunpack.c.h.b16 %v403
    %v1550 = vunpack.c.l.b16 %v404
    %v1551 = vunpack.c.h.b16 %v404
    %v1552 = vunpack.c.l.b16 %v405
    %v1553 = vunpack.c.h.b16 %v405
    %v1554 = vunpack.c.l.b16 %v406
    %v1555 = vunpack.c.h.b16 %v406
    %v1556 = vunpack.c.l.b16 %v407
    %v1557 = vunpack.c.h.b16 %v407
    %v1558 = vunpack.c.l.b16 %v408
    %v1559 = vunpack.c.h.b16 %v408
    %v1560 = vunpack.c.l.b16 %v409
    %v1561 = vunpack.c.h.b16 %v409
    %v1562 = vunpack.c.l.b16 %v410
    %v1563 = vunpack.c.h.b16 %v410
    %v1564 = vunpack.c.l.b16 %v411
    %v1565 = vunpack.c.h.b16 %v411
    %v1566 = vunpack.c.l.b16 %v412
    %v1567 = vunpack.c.h.b16 %v412
    %v1568 = vunpack.c.l.b16 %v413
    %v1569 = vunpack.c.h.b16 %v413
    %v1570 = vunpack.c.l.b16 %v414
    %v1571 = vunpack.c.h.b16 %v414
    %v1572 = vunpack.c.l.b16 %v415
    %v1573 = vunpack.c.h.b16 %v415
    %v1574 = vunpack.c.l.b16 %v416
    %v1575 = vunpack.c.h.b16 %v416
    %v1576 = vunpack.c.l.b16 %v417
    %v1577 = vunpack.c.h.b16 %v417
    %v1578 = vunpack.c.l.b16 %v418
    %v1579 = vunpack.c.h.b16 %v418
    %v1580 = vunpack.c.l.b16 %v419
    %v1581 = vunpack.c.h.b16 %v419
    %v1582 = vunpack.c.l.b16 %v420
    %v1583 = vunpack.c.h.b16 %v420
    %v1584 = vunpack.c.l.b16 %v421
    %v1585 = vunpack.c.h.b16 %v421
    %v1586 = vunpack.c.l.b16 %v422
    %v1587 = vunpack.c.h.b16 %v422
    %v1588 = vunpack.c.l.b16 %v423
    %v1589 = vunpack.c.h.b16 %v423
    %v1590 = vunpack.c.l.b16 %v424
    %v1591 = vunpack.c.h.b16 %v424
    %v1592 = vunpack.c.l.b16 %v425
    %v1593 = vunpack.c.h.b16 %v425
    %v1594 = vunpack.c.l.b16 %v426
    %v1595 = vunpack.c.h.b16 %v426
    %v1596 = vunpack.c.l.b16 %v427
    %v1597 = vunpack.c.h.b16 %v427
    %v1598 = vunpack.c.l.b16 %v428
    %v1599 = vunpack.c.h.b16 %v428
    %v1600 = vunpack.c.l.b16 %v429
    %v1601 = vunpack.c.h.b16 %v429
    %v1602 = vunpack.c.l.b16 %v430
    %v1603 = vunpack.c.h.b16 %v430
    %v1604 = vunpack.c.l.b16 %v431
    %v1605 = vunpack.c.h.b16 %v431
    %v1606 = vunpack.c.l.b16 %v432
    %v1607 = vunpack.c.h.b16 %v432
    %v1608 = vunpack.c.l.b16 %v433
    %v1609 = vunpack.c.h.b16 %v433
    %v1610 = vunpack.c.l.b16 %v434
    %v1611 = vunpack.c.h.b16 %v434
    %v1612 = vunpack.c.l.b16 %v435
    %v1613 = vunpack.c.h.b16 %v435
    %v1614 = vunpack.c.l.b16 %v436
    %v1615 = vunpack.c.h.b16 %v436
    %v1616 = vunpack.c.l.b16 %v437
    %v1617 = vunpack.c.h.b16 %v437
    %v1618 = vunpack.c.l.b16 %v438
    %v1619 = vunpack.c.h.b16 %v438
    %v1620 = vunpack.c.l.b16 %v439
    %v1621 = vunpack.c.h.b16 %v439
    %v1622 = vunpack.c.l.b16 %v440
    %v1623 = vunpack.c.h.b16 %v440
    %v1624 = vunpack.c.l.b16 %v441
    %v1625 = vunpack.c.h.b16 %v441
    %v1626 = vunpack.c.l.b16 %v442
    %v1627 = vunpack.c.h.b16 %v442
    %v1628 = vunpack.c.l.b16 %v443
    %v1629 = vunpack.c.h.b16 %v443
    %v1630 = vunpack.c.l.b16 %v444
    %v1631 = vunpack.c.h.b16 %v444
    %v1632 = vunpack.c.l.b16 %v445
    %v1633 = vunpack.c.h.b16 %v445
    %v1634 = vunpack.c.l.b16 %v446
    %v1635 = vunpack.c.h.b16 %v446
    %v1636 = vunpack.c.l.b16 %v447
    %v1637 = vunpack.c.h.b16 %v447
    %v1638 = vunpack.c.l.b16 %v448
    %v1639 = vunpack.c.h.b16 %v448
    %v1640 = vunpack.c.l.b16 %v449
    %v1641 = vunpack.c.h.b16 %v449
    %v1642 = vunpack.c.l.b16 %v450
    %v1643 = vunpack.c.h.b16 %v450
    %v1644 = vunpack.c.l.b16 %v451
    %v1645 = vunpack.c.h.b16 %v451
    %v1646 = vunpack.c.l.b16 %v452
    %v1647 = vunpack.c.h.b16 %v452
    %v1648 = vunpack.c.l.b16 %v453
    %v1649 = vunpack.c.h.b16 %v453
    %v1650 = vunpack.c.l.b16 %v454
    %v1651 = vunpack.c.h.b16 %v454
    %v1652 = vunpack.c.l.b16 %v455
    %v1653 = vunpack.c.h.b16 %v455
    %v1654 = vunpack.c.l.b16 %v456
    %v1655 = vunpack.c.h.b16 %v456
    %v1656 = vunpack.c.l.b16 %v457
    %v1657 = vunpack.c.h.b16 %v457
    %v1658 = vunpack.c.l.b16 %v458
    %v1659 = vunpack.c.h.b16 %v458
    %v1660 = vunpack.c.l.b16 %v459
    %v1661 = vunpack.c.h.b16 %v459
    %v1662 = vunpack.c.l.b16 %v460
    %v1663 = vunpack.c.h.b16 %v460
    %v1664 = vunpack.c.l.b16 %v461
    %v1665 = vunpack.c.h.b16 %v461
    %v1666 = vunpack.c.l.b16 %v462
    %v1667 = vunpack.c.h.b16 %v462
    %v1668 = vunpack.c.l.b16 %v463
    %v1669 = vunpack.c.h.b16 %v463
    %v1670 = vunpack.c.l.b16 %v464
    %v1671 = vunpack.c.h.b16 %v464
    %v1672 = vunpack.c.l.b16 %v465
    %v1673 = vunpack.c.h.b16 %v465
    %v1674 = vunpack.c.l.b16 %v466
    %v1675 = vunpack.c.h.b16 %v466
    %v1676 = vpack.c.b16 %v900, %v892
    %v1677 = vpack.c.b16 %v901, %v893
    %v1678 = vpack.c.b16 %v902, %v894
    %v1679 = vpack.c.b16 %v903, %v895
    %v1680 = vpack.c.b16 %v904, %v896
    %v1681 = vpack.c.b16 %v905, %v897
    %v1682 = vpack.c.b16 %v906, %v898
    %v1683 = vpack.c.b16 %v907, %v899
    %v1684 = vpack.c.b16 %v916, %v908
    %v1685 = vpack.c.b16 %v917, %v909
    %v1686 = vpack.c.b16 %v918, %v910
    %v1687 = vpack.c.b16 %v919, %v911
    %v1688 = vpack.c.b16 %v920, %v912
    %v1689 = vpack.c.b16 %v921, %v913
    %v1690 = vpack.c.b16 %v922, %v914
    %v1691 = vpack.c.b16 %v923, %v915
    %v1692 = vpack.c.b16 %v932, %v924
    %v1693 = vpack.c.b16 %v933, %v925
    %v1694 = vpack.c.b16 %v934, %v926
    %v1695 = vpack.c.b16 %v935, %v927
    %v1696 = vpack.c.b16 %v936, %v928
    %v1697 = vpack.c.b16 %v937, %v929
    %v1698 = vpack.c.b16 %v938, %v930
    %v1699 = vpack.c.b16 %v939, %v931
    %v1700 = vpack.c.b16 %v948, %v940
    %v1701 = vpack.c.b16 %v949, %v941
    %v1702 = vpack.c.b16 %v950, %v942
    %v1703 = vpack.c.b16 %v951, %v943
    %v1704 = vpack.c.b16 %v952, %v944
    %v1705 = vpack.c.b16 %v953, %v945
    %v1706 = vpack.c.b16 %v954, %v946
    %v1707 = vpack.c.b16 %v955, %v947
    %v1708 = vpack.c.b16 %v964, %v956
    %v1709 = vpack.c.b16 %v965, %v957
    %v1710 = vpack.c.b16 %v966, %v958
    %v1711 = vpack.c.b16 %v967, %v959
    %v1712 = vpack.c.b16 %v968, %v960
    %v1713 = vpack.c.b16 %v969, %v961
    %v1714 = vpack.c.b16 %v970, %v962
    %v1715 = vpack.c.b16 %v971, %v963
    %v1716 = vpack.c.b16 %v980, %v972
    %v1717 = vpack.c.b16 %v981, %v973
    %v1718 = vpack.c.b16 %v982, %v974
    %v1719 = vpack.c.b16 %v983, %v975
    %v1720 = vpack.c.b16 %v984, %v976
    %v1721 = vpack.c.b16 %v985, %v977
    %v1722 = vpack.c.b16 %v986, %v978
    %v1723 = vpack.c.b16 %v987, %v979
    %v1724 = vpack.c.b16 %v996, %v988
    %v1725 = vpack.c.b16 %v997, %v989
    %v1726 = vpack.c.b16 %v998, %v990
    %v1727 = vpack.c.b16 %v999, %v991
    %v1728 = vpack.c.b16 %v1000, %v992
    %v1729 = vpack.c.b16 %v1001, %v993
    %v1730 = vpack.c.b16 %v1002, %v994
    %v1731 = vpack.c.b16 %v1003, %v995
    %v1732 = vpack.c.b16 %v1012, %v1004
    %v1733 = vpack.c.b16 %v1013, %v1005
    %v1734 = vpack.c.b16 %v1014, %v1006
    %v1735 = vpack.c.b16 %v1015, %v1007
    %v1736 = vpack.c.b16 %v1016, %v1008
    %v1737 = vpack.c.b16 %v1017, %v1009
    %v1738 = vpack.c.b16 %v1018, %v1010
    %v1739 = vpack.c.b16 %v1019, %v1011
    %v1740 = vpack.c.b16 %v1028, %v1020
    %v1741 = vpack.c.b16 %v1029, %v1021
    %v1742 = vpack.c.b16 %v1030, %v1022
    %v1743 = vpack.c.b16 %v1031, %v1023
    %v1744 = vpack.c.b16 %v1032, %v1024
    %v1745 = vpack.c.b16 %v1033, %v1025
    %v1746 = vpack.c.b16 %v1034, %v1026
    %v1747 = vpack.c.b16 %v1035, %v1027
    %v1748 = vpack.c.b16 %v1044, %v1036
    %v1749 = vpack.c.b16 %v1045, %v1037
    %v1750 = vpack.c.b16 %v1046, %v1038
    %v1751 = vpack.c.b16 %v1047, %v1039
    %v1752 = vpack.c.b16 %v1048, %v1040
    %v1753 = vpack.c.b16 %v1049, %v1041
    %v1754 = vpack.c.b16 %v1050, %v1042
    %v1755 = vpack.c.b16 %v1051, %v1043
    %v1756 = vpack.c.b16 %v1060, %v1052
    %v1757 = vpack.c.b16 %v1061, %v1053
    %v1758 = vpack.c.b16 %v1062, %v1054
    %v1759 = vpack.c.b16 %v1063, %v1055
    %v1760 = vpack.c.b16 %v1064, %v1056
    %v1761 = vpack.c.b16 %v1065, %v1057
    %v1762 = vpack.c.b16 %v1066, %v1058
    %v1763 = vpack.c.b16 %v1067, %v1059
    %v1764 = vpack.c.b16 %v1076, %v1068
    %v1765 = vpack.c.b16 %v1077, %v1069
    %v1766 = vpack.c.b16 %v1078, %v1070
    %v1767 = vpack.c.b16 %v1079, %v1071
    %v1768 = vpack.c.b16 %v1080, %v1072
    %v1769 = vpack.c.b16 %v1081, %v1073
    %v1770 = vpack.c.b16 %v1082, %v1074
    %v1771 = vpack.c.b16 %v1083, %v1075
    %v1772 = vpack.c.b16 %v1092, %v1084
    %v1773 = vpack.c.b16 %v1093, %v1085
    %v1774 = vpack.c.b16 %v1094, %v1086
    %v1775 = vpack.c.b16 %v1095, %v1087
    %v1776 = vpack.c.b16 %v1096, %v1088
    %v1777 = vpack.c.b16 %v1097, %v1089
    %v1778 = vpack.c.b16 %v1098, %v1090
    %v1779 = vpack.c.b16 %v1099, %v1091
    %v1780 = vpack.c.b16 %v1108, %v1100
    %v1781 = vpack.c.b16 %v1109, %v1101
    %v1782 = vpack.c.b16 %v1110, %v1102
    %v1783 = vpack.c.b16 %v1111, %v1103
    %v1784 = vpack.c.b16 %v1112, %v1104
    %v1785 = vpack.c.b16 %v1113, %v1105
    %v1786 = vpack.c.b16 %v1114, %v1106
    %v1787 = vpack.c.b16 %v1115, %v1107
    %v1788 = vpack.c.b16 %v1124, %v1116
    %v1789 = vpack.c.b16 %v1125, %v1117
    %v1790 = vpack.c.b16 %v1126, %v1118
    %v1791 = vpack.c.b16 %v1127, %v1119
    %v1792 = vpack.c.b16 %v1128, %v1120
    %v1793 = vpack.c.b16 %v1129, %v1121
    %v1794 = vpack.c.b16 %v1130, %v1122
    %v1795 = vpack.c.b16 %v1131, %v1123
    %v1796 = vpack.c.b16 %v1140, %v1132
    %v1797 = vpack.c.b16 %v1141, %v1133
    %v1798 = vpack.c.b16 %v1142, %v1134
    %v1799 = vpack.c.b16 %v1143, %v1135
    %v1800 = vpack.c.b16 %v1144, %v1136
    %v1801 = vpack.c.b16 %v1145, %v1137
    %v1802 = vpack.c.b16 %v1146, %v1138
    %v1803 = vpack.c.b16 %v1147, %v1139
    %v1804 = vpack.c.b16 %v1156, %v1148
    %v1805 = vpack.c.b16 %v1157, %v1149
    %v1806 = vpack.c.b16 %v1158, %v1150
    %v1807 = vpack.c.b16 %v1159, %v1151
    %v1808 = vpack.c.b16 %v1160, %v1152
    %v1809 = vpack.c.b16 %v1161, %v1153
    %v1810 = vpack.c.b16 %v1162, %v1154
    %v1811 = vpack.c.b16 %v1163, %v1155
    %v1812 = vpack.c.b16 %v1172, %v1164
    %v1813 = vpack.c.b16 %v1173, %v1165
    %v1814 = vpack.c.b16 %v1174, %v1166
    %v1815 = vpack.c.b16 %v1175, %v1167
    %v1816 = vpack.c.b16 %v1176, %v1168
    %v1817 = vpack.c.b16 %v1177, %v1169
    %v1818 = vpack.c.b16 %v1178, %v1170
    %v1819 = vpack.c.b16 %v1179, %v1171
    %v1820 = vpack.c.b16 %v1188, %v1180
    %v1821 = vpack.c.b16 %v1189, %v1181
    %v1822 = vpack.c.b16 %v1190, %v1182
    %v1823 = vpack.c.b16 %v1191, %v1183
    %v1824 = vpack.c.b16 %v1192, %v1184
    %v1825 = vpack.c.b16 %v1193, %v1185
    %v1826 = vpack.c.b16 %v1194, %v1186
    %v1827 = vpack.c.b16 %v1195, %v1187
    %v1828 = vpack.c.b16 %v1204, %v1196
    %v1829 = vpack.c.b16 %v1205, %v1197
    %v1830 = vpack.c.b16 %v1206, %v1198
    %v1831 = vpack.c.b16 %v1207, %v1199
    %v1832 = vpack.c.b16 %v1208, %v1200
    %v1833 = vpack.c.b16 %v1209, %v1201
    %v1834 = vpack.c.b16 %v1210, %v1202
    %v1835 = vpack.c.b16 %v1211, %v1203
    %v1836 = vpack.c.b16 %v1220, %v1212
    %v1837 = vpack.c.b16 %v1221, %v1213
    %v1838 = vpack.c.b16 %v1222, %v1214
    %v1839 = vpack.c.b16 %v1223, %v1215
    %v1840 = vpack.c.b16 %v1224, %v1216
    %v1841 = vpack.c.b16 %v1225, %v1217
    %v1842 = vpack.c.b16 %v1226, %v1218
    %v1843 = vpack.c.b16 %v1227, %v1219
    %v1844 = vpack.c.b16 %v1236, %v1228
    %v1845 = vpack.c.b16 %v1237, %v1229
    %v1846 = vpack.c.b16 %v1238, %v1230
    %v1847 = vpack.c.b16 %v1239, %v1231
    %v1848 = vpack.c.b16 %v1240, %v1232
    %v1849 = vpack.c.b16 %v1241, %v1233
    %v1850 = vpack.c.b16 %v1242, %v1234
    %v1851 = vpack.c.b16 %v1243, %v1235
    %v1852 = vpack.c.b16 %v1252, %v1244
    %v1853 = vpack.c.b16 %v1253, %v1245
    %v1854 = vpack.c.b16 %v1254, %v1246
    %v1855 = vpack.c.b16 %v1255, %v1247
    %v1856 = vpack.c.b16 %v1256, %v1248
    %v1857 = vpack.c.b16 %v1257, %v1249
    %v1858 = vpack.c.b16 %v1258, %v1250
    %v1859 = vpack.c.b16 %v1259, %v1251
    %v1860 = vpack.c.b16 %v1268, %v1260
    %v1861 = vpack.c.b16 %v1269, %v1261
    %v1862 = vpack.c.b16 %v1270, %v1262
    %v1863 = vpack.c.b16 %v1271, %v1263
    %v1864 = vpack.c.b16 %v1272, %v1264
    %v1865 = vpack.c.b16 %v1273, %v1265
    %v1866 = vpack.c.b16 %v1274, %v1266
    %v1867 = vpack.c.b16 %v1275, %v1267
    %v1868 = vpack.c.b16 %v1284, %v1276
    %v1869 = vpack.c.b16 %v1285, %v1277
    %v1870 = vpack.c.b16 %v1286, %v1278
    %v1871 = vpack.c.b16 %v1287, %v1279
    %v1872 = vpack.c.b16 %v1288, %v1280
    %v1873 = vpack.c.b16 %v1289, %v1281
    %v1874 = vpack.c.b16 %v1290, %v1282
    %v1875 = vpack.c.b16 %v1291, %v1283
    %v1876 = vpack.c.b16 %v1300, %v1292
    %v1877 = vpack.c.b16 %v1301, %v1293
    %v1878 = vpack.c.b16 %v1302, %v1294
    %v1879 = vpack.c.b16 %v1303, %v1295
    %v1880 = vpack.c.b16 %v1304, %v1296
    %v1881 = vpack.c.b16 %v1305, %v1297
    %v1882 = vpack.c.b16 %v1306, %v1298
    %v1883 = vpack.c.b16 %v1307, %v1299
    %v1884 = vpack.c.b16 %v1316, %v1308
    %v1885 = vpack.c.b16 %v1317, %v1309
    %v1886 = vpack.c.b16 %v1318, %v1310
    %v1887 = vpack.c.b16 %v1319, %v1311
    %v1888 = vpack.c.b16 %v1320, %v1312
    %v1889 = vpack.c.b16 %v1321, %v1313
    %v1890 = vpack.c.b16 %v1322, %v1314
    %v1891 = vpack.c.b16 %v1323, %v1315
    %v1892 = vpack.c.b16 %v1332, %v1324
    %v1893 = vpack.c.b16 %v1333, %v1325
    %v1894 = vpack.c.b16 %v1334, %v1326
    %v1895 = vpack.c.b16 %v1335, %v1327
    %v1896 = vpack.c.b16 %v1336, %v1328
    %v1897 = vpack.c.b16 %v1337, %v1329
    %v1898 = vpack.c.b16 %v1338, %v1330
    %v1899 = vpack.c.b16 %v1339, %v1331
    %v1900 = vpack.c.b16 %v1348, %v1340
    %v1901 = vpack.c.b16 %v1349, %v1341
    %v1902 = vpack.c.b16 %v1350, %v1342
    %v1903 = vpack.c.b16 %v1351, %v1343
    %v1904 = vpack.c.b16 %v1352, %v1344
    %v1905 = vpack.c.b16 %v1353, %v1345
    %v1906 = vpack.c.b16 %v1354, %v1346
    %v1907 = vpack.c.b16 %v1355, %v1347
    %v1908 = vpack.c.b16 %v1364, %v1356
    %v1909 = vpack.c.b16 %v1365, %v1357
    %v1910 = vpack.c.b16 %v1366, %v1358
    %v1911 = vpack.c.b16 %v1367, %v1359
    %v1912 = vpack.c.b16 %v1368, %v1360
    %v1913 = vpack.c.b16 %v1369, %v1361
    %v1914 = vpack.c.b16 %v1370, %v1362
    %v1915 = vpack.c.b16 %v1371, %v1363
    %v1916 = vpack.c.b16 %v1380, %v1372
    %v1917 = vpack.c.b16 %v1381, %v1373
    %v1918 = vpack.c.b16 %v1382, %v1374
    %v1919 = vpack.c.b16 %v1383, %v1375
    %v1920 = vpack.c.b16 %v1384, %v1376
    %v1921 = vpack.c.b16 %v1385, %v1377
    %v1922 = vpack.c.b16 %v1386, %v1378
    %v1923 = vpack.c.b16 %v1387, %v1379
    %v1924 = vpack.c.b16 %v1396, %v1388
    %v1925 = vpack.c.b16 %v1397, %v1389
    %v1926 = vpack.c.b16 %v1398, %v1390
    %v1927 = vpack.c.b16 %v1399, %v1391
    %v1928 = vpack.c.b16 %v1400, %v1392
    %v1929 = vpack.c.b16 %v1401, %v1393
    %v1930 = vpack.c.b16 %v1402, %v1394
    %v1931 = vpack.c.b16 %v1403, %v1395
    %v1932 = vpack.c.b16 %v1412, %v1404
    %v1933 = vpack.c.b16 %v1413, %v1405
    %v1934 = vpack.c.b16 %v1414, %v1406
    %v1935 = vpack.c.b16 %v1415, %v1407
    %v1936 = vpack.c.b16 %v1416, %v1408
    %v1937 = vpack.c.b16 %v1417, %v1409
    %v1938 = vpack.c.b16 %v1418, %v1410
    %v1939 = vpack.c.b16 %v1419, %v1411
    %v1940 = vpack.c.b16 %v1428, %v1420
    %v1941 = vpack.c.b16 %v1429, %v1421
    %v1942 = vpack.c.b16 %v1430, %v1422
    %v1943 = vpack.c.b16 %v1431, %v1423
    %v1944 = vpack.c.b16 %v1432, %v1424
    %v1945 = vpack.c.b16 %v1433, %v1425
    %v1946 = vpack.c.b16 %v1434, %v1426
    %v1947 = vpack.c.b16 %v1435, %v1427
    %v1948 = vpack.c.b16 %v1444, %v1436
    %v1949 = vpack.c.b16 %v1445, %v1437
    %v1950 = vpack.c.b16 %v1446, %v1438
    %v1951 = vpack.c.b16 %v1447, %v1439
    %v1952 = vpack.c.b16 %v1448, %v1440
    %v1953 = vpack.c.b16 %v1449, %v1441
    %v1954 = vpack.c.b16 %v1450, %v1442
    %v1955 = vpack.c.b16 %v1451, %v1443
    %v1956 = vpack.c.b16 %v1460, %v1452
    %v1957 = vpack.c.b16 %v1461, %v1453
    %v1958 = vpack.c.b16 %v1462, %v1454
    %v1959 = vpack.c.b16 %v1463, %v1455
    %v1960 = vpack.c.b16 %v1464, %v1456
    %v1961 = vpack.c.b16 %v1465, %v1457
    %v1962 = vpack.c.b16 %v1466, %v1458
    %v1963 = vpack.c.b16 %v1467, %v1459
    %v1964 = vpack.c.b16 %v1476, %v1468
    %v1965 = vpack.c.b16 %v1477, %v1469
    %v1966 = vpack.c.b16 %v1478, %v1470
    %v1967 = vpack.c.b16 %v1479, %v1471
    %v1968 = vpack.c.b16 %v1480, %v1472
    %v1969 = vpack.c.b16 %v1481, %v1473
    %v1970 = vpack.c.b16 %v1482, %v1474
    %v1971 = vpack.c.b16 %v1483, %v1475
    %v1972 = vpack.c.b16 %v1492, %v1484
    %v1973 = vpack.c.b16 %v1493, %v1485
    %v1974 = vpack.c.b16 %v1494, %v1486
    %v1975 = vpack.c.b16 %v1495, %v1487
    %v1976 = vpack.c.b16 %v1496, %v1488
    %v1977 = vpack.c.b16 %v1497, %v1489
    %v1978 = vpack.c.b16 %v1498, %v1490
    %v1979 = vpack.c.b16 %v1499, %v1491
    %v1980 = vpack.c.b16 %v1508, %v1500
    %v1981 = vpack.c.b16 %v1509, %v1501
    %v1982 = vpack.c.b16 %v1510, %v1502
    %v1983 = vpack.c.b16 %v1511, %v1503
    %v1984 = vpack.c.b16 %v1512, %v1504
    %v1985 = vpack.c.b16 %v1513, %v1505
    %v1986 = vpack.c.b16 %v1514, %v1506
    %v1987 = vpack.c.b16 %v1515, %v1507
    %v1988 = vpack.c.b16 %v1524, %v1516
    %v1989 = vpack.c.b16 %v1525, %v1517
    %v1990 = vpack.c.b16 %v1526, %v1518
    %v1991 = vpack.c.b16 %v1527, %v1519
    %v1992 = vpack.c.b16 %v1528, %v1520
    %v1993 = vpack.c.b16 %v1529, %v1521
    %v1994 = vpack.c.b16 %v1530, %v1522
    %v1995 = vpack.c.b16 %v1531, %v1523
    %v1996 = vpack.c.b16 %v1540, %v1532
    %v1997 = vpack.c.b16 %v1541, %v1533
    %v1998 = vpack.c.b16 %v1542, %v1534
    %v1999 = vpack.c.b16 %v1543, %v1535
    %v2000 = vpack.c.b16 %v1544, %v1536
    %v2001 = vpack.c.b16 %v1545, %v1537
    %v2002 = vpack.c.b16 %v1546, %v1538
    %v2003 = vpack.c.b16 %v1547, %v1539
    %v2004 = vpack.c.b16 %v1556, %v1548
    %v2005 = vpack.c.b16 %v1557, %v1549
    %v2006 = vpack.c.b16 %v1558, %v1550
    %v2007 = vpack.c.b16 %v1559, %v1551
    %v2008 = vpack.c.b16 %v1560, %v1552
    %v2009 = vpack.c.b16 %v1561, %v1553
    %v2010 = vpack.c.b16 %v1562, %v1554
    %v2011 = vpack.c.b16 %v1563, %v1555
    %v2012 = vpack.c.b16 %v1572, %v1564
    %v2013 = vpack.c.b16 %v1573, %v1565
    %v2014 = vpack.c.b16 %v1574, %v1566
    %v2015 = vpack.c.b16 %v1575, %v1567
    %v2016 = vpack.c.b16 %v1576, %v1568
    %v2017 = vpack.c.b16 %v1577, %v1569
    %v2018 = vpack.c.b16 %v1578, %v1570
    %v2019 = vpack.c.b16 %v1579, %v1571
    %v2020 = vpack.c.b16 %v1588, %v1580
    %v2021 = vpack.c.b16 %v1589, %v1581
    %v2022 = vpack.c.b16 %v1590, %v1582
    %v2023 = vpack.c.b16 %v1591, %v1583
    %v2024 = vpack.c.b16 %v1592, %v1584
    %v2025 = vpack.c.b16 %v1593, %v1585
    %v2026 = vpack.c.b16 %v1594, %v1586
    %v2027 = vpack.c.b16 %v1595, %v1587
    %v2028 = vpack.c.b16 %v1604, %v1596
    %v2029 = vpack.c.b16 %v1605, %v1597
    %v2030 = vpack.c.b16 %v1606, %v1598
    %v2031 = vpack.c.b16 %v1607, %v1599
    %v2032 = vpack.c.b16 %v1608, %v1600
    %v2033 = vpack.c.b16 %v1609, %v1601
    %v2034 = vpack.c.b16 %v1610, %v1602
    %v2035 = vpack.c.b16 %v1611, %v1603
    %v2036 = vpack.c.b16 %v1620, %v1612
    %v2037 = vpack.c.b16 %v1621, %v1613
    %v2038 = vpack.c.b16 %v1622, %v1614
    %v2039 = vpack.c.b16 %v1623, %v1615
    %v2040 = vpack.c.b16 %v1624, %v1616
    %v2041 = vpack.c.b16 %v1625, %v1617
    %v2042 = vpack.c.b16 %v1626, %v1618
    %v2043 = vpack.c.b16 %v1627, %v1619
    %v2044 = vpack.c.b16 %v1636, %v1628
    %v2045 = vpack.c.b16 %v1637, %v1629
    %v2046 = vpack.c.b16 %v1638, %v1630
    %v2047 = vpack.c.b16 %v1639, %v1631
    %v2048 = vpack.c.b16 %v1640, %v1632
    %v2049 = vpack.c.b16 %v1641, %v1633
    %v2050 = vpack.c.b16 %v1642, %v1634
    %v2051 = vpack.c.b16 %v1643, %v1635
    %v2052 = vpack.c.b16 %v1652, %v1644
    %v2053 = vpack.c.b16 %v1653, %v1645
    %v2054 = vpack.c.b16 %v1654, %v1646
    %v2055 = vpack.c.b16 %v1655, %v1647
    %v2056 = vpack.c.b16 %v1656, %v1648
    %v2057 = vpack.c.b16 %v1657, %v1649
    %v2058 = vpack.c.b16 %v1658, %v1650
    %v2059 = vpack.c.b16 %v1659, %v1651
    %v2060 = vpack.c.b16 %v1668, %v1660
    %v2061 = vpack.c.b16 %v1669, %v1661
    %v2062 = vpack.c.b16 %v1670, %v1662
    %v2063 = vpack.c.b16 %v1671, %v1663
    %v2064 = vpack.c.b16 %v1672, %v1664
    %v2065 = vpack.c.b16 %v1673, %v1665
    %v2066 = vpack.c.b16 %v1674, %v1666
    %v2067 = vpack.c.b16 %v1675, %v1667
    %vm2460 = vcmask 130048
    %v2461 = vsel %vm2460, %v493, 0
    %2463 = vmatpush.bf16.msra.mxu0 %v1732
    %2464 = vmatpush.bf16.msra.mxu0 %v1724
    %2465 = vmatpush.bf16.msra.mxu0 %v1716
    %2466 = vmatpush.bf16.msra.mxu0 %v1708
    %2467 = vmatpush.bf16.msra.mxu0 %v1700
    %2468 = vmatpush.bf16.msra.mxu0 %v1692
    %2469 = vmatpush.bf16.msra.mxu0 %v1684
    %2470 = vmatpush.bf16.msra.mxu0 %v1676
    %2471 = vmatmul.bf16.gmra.mxu0 %v487
    %v2472 = vpop.f32.mrf.mxu0
    %v2473 = vadd.f32 %v469, %v2472
    %v2474 = vpop.f32.mrf.mxu0
    %2475 = vdwg.mxu0
    %2476 = vmatpush.bf16.msra.mxu0 %v1796
    %2477 = vmatpush.bf16.msra.mxu0 %v1788
    %2478 = vmatpush.bf16.msra.mxu0 %v1780
    %2479 = vmatpush.bf16.msra.mxu0 %v1772
    %2480 = vmatpush.bf16.msra.mxu0 %v1764
    %2481 = vmatpush.bf16.msra.mxu0 %v1756
    %2482 = vmatpush.bf16.msra.mxu0 %v1748
    %2483 = vmatpush.bf16.msra.mxu0 %v1740
    %2484 = vmatmul.bf16.gmra.mxu0 %v488
    %v2485 = vpop.f32.mrf.mxu0
    %v2486 = vadd.f32 %v2473, %v2485
    %v2487 = vpop.f32.mrf.mxu0
    %2488 = vdwg.mxu0
    %2489 = vmatpush.bf16.msra.mxu0 %v1860
    %2490 = vmatpush.bf16.msra.mxu0 %v1852
    %2491 = vmatpush.bf16.msra.mxu0 %v1844
    %2492 = vmatpush.bf16.msra.mxu0 %v1836
    %2493 = vmatpush.bf16.msra.mxu0 %v1828
    %2494 = vmatpush.bf16.msra.mxu0 %v1820
    %2495 = vmatpush.bf16.msra.mxu0 %v1812
    %2496 = vmatpush.bf16.msra.mxu0 %v1804
    %2497 = vmatmul.bf16.gmra.mxu0 %v489
    %v2498 = vpop.f32.mrf.mxu0
    %v2499 = vadd.f32 %v2486, %v2498
    %v2500 = vpop.f32.mrf.mxu0
    %2501 = vdwg.mxu0
    %2502 = vmatpush.bf16.msra.mxu0 %v1924
    %2503 = vmatpush.bf16.msra.mxu0 %v1916
    %2504 = vmatpush.bf16.msra.mxu0 %v1908
    %2505 = vmatpush.bf16.msra.mxu0 %v1900
    %2506 = vmatpush.bf16.msra.mxu0 %v1892
    %2507 = vmatpush.bf16.msra.mxu0 %v1884
    %2508 = vmatpush.bf16.msra.mxu0 %v1876
    %2509 = vmatpush.bf16.msra.mxu0 %v1868
    %2510 = vmatmul.bf16.gmra.mxu0 %v490
    %v2511 = vpop.f32.mrf.mxu0
    %v2512 = vadd.f32 %v2499, %v2511
    %v2513 = vpop.f32.mrf.mxu0
    %2514 = vdwg.mxu0
    %2515 = vmatpush.bf16.msra.mxu0 %v1988
    %2516 = vmatpush.bf16.msra.mxu0 %v1980
    %2517 = vmatpush.bf16.msra.mxu0 %v1972
    %2518 = vmatpush.bf16.msra.mxu0 %v1964
    %2519 = vmatpush.bf16.msra.mxu0 %v1956
    %2520 = vmatpush.bf16.msra.mxu0 %v1948
    %2521 = vmatpush.bf16.msra.mxu0 %v1940
    %2522 = vmatpush.bf16.msra.mxu0 %v1932
    %2523 = vmatmul.bf16.gmra.mxu0 %v491
    %v2524 = vpop.f32.mrf.mxu0
    %v2525 = vadd.f32 %v2512, %v2524
    %v2526 = vpop.f32.mrf.mxu0
    %2527 = vdwg.mxu0
    %2528 = vmatpush.bf16.msra.mxu0 %v2052
    %2529 = vmatpush.bf16.msra.mxu0 %v2044
    %2530 = vmatpush.bf16.msra.mxu0 %v2036
    %2531 = vmatpush.bf16.msra.mxu0 %v2028
    %2532 = vmatpush.bf16.msra.mxu0 %v2020
    %2533 = vmatpush.bf16.msra.mxu0 %v2012
    %2534 = vmatpush.bf16.msra.mxu0 %v2004
    %2535 = vmatpush.bf16.msra.mxu0 %v1996
    %2536 = vmatmul.bf16.gmra.mxu0 %v492
    %v2537 = vpop.f32.mrf.mxu0
    %v2538 = vadd.f32 %v2525, %v2537
    %v2539 = vpop.f32.mrf.mxu0
    %2540 = vdwg.mxu0
    %2541 = vmatpush.bf16.msra.mxu0 0
    %2542 = vmatpush.bf16.msra.mxu0 0
    %2543 = vmatpush.bf16.msra.mxu0 0
    %2544 = vmatpush.bf16.msra.mxu0 0
    %2545 = vmatpush.bf16.msra.mxu0 0
    %2546 = vmatpush.bf16.msra.mxu0 0
    %2547 = vmatpush.bf16.msra.mxu0 0
    %2548 = vmatpush.bf16.msra.mxu0 %v2060
    %2549 = vmatmul.bf16.gmra.mxu0 %v2461
    %v2550 = vpop.f32.mrf.mxu0
    %v2551 = vadd.f32 %v2538, %v2550
    %v2552 = vpop.f32.mrf.mxu0
    %2553 = vdwg.mxu0
    %2554 = vmatpush.bf16.msra.mxu0 %v1733
    %2555 = vmatpush.bf16.msra.mxu0 %v1725
    %2556 = vmatpush.bf16.msra.mxu0 %v1717
    %2557 = vmatpush.bf16.msra.mxu0 %v1709
    %2558 = vmatpush.bf16.msra.mxu0 %v1701
    %2559 = vmatpush.bf16.msra.mxu0 %v1693
    %2560 = vmatpush.bf16.msra.mxu0 %v1685
    %2561 = vmatpush.bf16.msra.mxu0 %v1677
    %2562 = vmatmul.bf16.gmra.mxu0 %v487
    %v2563 = vpop.f32.mrf.mxu0
    %v2564 = vadd.f32 %v470, %v2563
    %v2565 = vpop.f32.mrf.mxu0
    %2566 = vdwg.mxu0
    %2567 = vmatpush.bf16.msra.mxu0 %v1797
    %2568 = vmatpush.bf16.msra.mxu0 %v1789
    %2569 = vmatpush.bf16.msra.mxu0 %v1781
    %2570 = vmatpush.bf16.msra.mxu0 %v1773
    %2571 = vmatpush.bf16.msra.mxu0 %v1765
    %2572 = vmatpush.bf16.msra.mxu0 %v1757
    %2573 = vmatpush.bf16.msra.mxu0 %v1749
    %2574 = vmatpush.bf16.msra.mxu0 %v1741
    %2575 = vmatmul.bf16.gmra.mxu0 %v488
    %v2576 = vpop.f32.mrf.mxu0
    %v2577 = vadd.f32 %v2564, %v2576
    %v2578 = vpop.f32.mrf.mxu0
    %2579 = vdwg.mxu0
    %2580 = vmatpush.bf16.msra.mxu0 %v1861
    %2581 = vmatpush.bf16.msra.mxu0 %v1853
    %2582 = vmatpush.bf16.msra.mxu0 %v1845
    %2583 = vmatpush.bf16.msra.mxu0 %v1837
    %2584 = vmatpush.bf16.msra.mxu0 %v1829
    %2585 = vmatpush.bf16.msra.mxu0 %v1821
    %2586 = vmatpush.bf16.msra.mxu0 %v1813
    %2587 = vmatpush.bf16.msra.mxu0 %v1805
    %2588 = vmatmul.bf16.gmra.mxu0 %v489
    %v2589 = vpop.f32.mrf.mxu0
    %v2590 = vadd.f32 %v2577, %v2589
    %v2591 = vpop.f32.mrf.mxu0
    %2592 = vdwg.mxu0
    %2593 = vmatpush.bf16.msra.mxu0 %v1925
    %2594 = vmatpush.bf16.msra.mxu0 %v1917
    %2595 = vmatpush.bf16.msra.mxu0 %v1909
    %2596 = vmatpush.bf16.msra.mxu0 %v1901
    %2597 = vmatpush.bf16.msra.mxu0 %v1893
    %2598 = vmatpush.bf16.msra.mxu0 %v1885
    %2599 = vmatpush.bf16.msra.mxu0 %v1877
    %2600 = vmatpush.bf16.msra.mxu0 %v1869
    %2601 = vmatmul.bf16.gmra.mxu0 %v490
    %v2602 = vpop.f32.mrf.mxu0
    %v2603 = vadd.f32 %v2590, %v2602
    %v2604 = vpop.f32.mrf.mxu0
    %2605 = vdwg.mxu0
    %2606 = vmatpush.bf16.msra.mxu0 %v1989
    %2607 = vmatpush.bf16.msra.mxu0 %v1981
    %2608 = vmatpush.bf16.msra.mxu0 %v1973
    %2609 = vmatpush.bf16.msra.mxu0 %v1965
    %2610 = vmatpush.bf16.msra.mxu0 %v1957
    %2611 = vmatpush.bf16.msra.mxu0 %v1949
    %2612 = vmatpush.bf16.msra.mxu0 %v1941
    %2613 = vmatpush.bf16.msra.mxu0 %v1933
    %2614 = vmatmul.bf16.gmra.mxu0 %v491
    %v2615 = vpop.f32.mrf.mxu0
    %v2616 = vadd.f32 %v2603, %v2615
    %v2617 = vpop.f32.mrf.mxu0
    %2618 = vdwg.mxu0
    %2619 = vmatpush.bf16.msra.mxu0 %v2053
    %2620 = vmatpush.bf16.msra.mxu0 %v2045
    %2621 = vmatpush.bf16.msra.mxu0 %v2037
    %2622 = vmatpush.bf16.msra.mxu0 %v2029
    %2623 = vmatpush.bf16.msra.mxu0 %v2021
    %2624 = vmatpush.bf16.msra.mxu0 %v2013
    %2625 = vmatpush.bf16.msra.mxu0 %v2005
    %2626 = vmatpush.bf16.msra.mxu0 %v1997
    %2627 = vmatmul.bf16.gmra.mxu0 %v492
    %v2628 = vpop.f32.mrf.mxu0
    %v2629 = vadd.f32 %v2616, %v2628
    %v2630 = vpop.f32.mrf.mxu0
    %2631 = vdwg.mxu0
    %2632 = vmatpush.bf16.msra.mxu0 0
    %2633 = vmatpush.bf16.msra.mxu0 0
    %2634 = vmatpush.bf16.msra.mxu0 0
    %2635 = vmatpush.bf16.msra.mxu0 0
    %2636 = vmatpush.bf16.msra.mxu0 0
    %2637 = vmatpush.bf16.msra.mxu0 0
    %2638 = vmatpush.bf16.msra.mxu0 0
    %2639 = vmatpush.bf16.msra.mxu0 %v2061
    %2640 = vmatmul.bf16.gmra.mxu0 %v2461
    %v2641 = vpop.f32.mrf.mxu0
    %v2642 = vadd.f32 %v2629, %v2641
    %v2643 = vpop.f32.mrf.mxu0
    %2644 = vdwg.mxu0
    %2645 = vmatpush.bf16.msra.mxu0 %v1734
    %2646 = vmatpush.bf16.msra.mxu0 %v1726
    %2647 = vmatpush.bf16.msra.mxu0 %v1718
    %2648 = vmatpush.bf16.msra.mxu0 %v1710
    %2649 = vmatpush.bf16.msra.mxu0 %v1702
    %2650 = vmatpush.bf16.msra.mxu0 %v1694
    %2651 = vmatpush.bf16.msra.mxu0 %v1686
    %2652 = vmatpush.bf16.msra.mxu0 %v1678
    %2653 = vmatmul.bf16.gmra.mxu0 %v487
    %v2654 = vpop.f32.mrf.mxu0
    %v2655 = vadd.f32 %v471, %v2654
    %v2656 = vpop.f32.mrf.mxu0
    %2657 = vdwg.mxu0
    %2658 = vmatpush.bf16.msra.mxu0 %v1798
    %2659 = vmatpush.bf16.msra.mxu0 %v1790
    %2660 = vmatpush.bf16.msra.mxu0 %v1782
    %2661 = vmatpush.bf16.msra.mxu0 %v1774
    %2662 = vmatpush.bf16.msra.mxu0 %v1766
    %2663 = vmatpush.bf16.msra.mxu0 %v1758
    %2664 = vmatpush.bf16.msra.mxu0 %v1750
    %2665 = vmatpush.bf16.msra.mxu0 %v1742
    %2666 = vmatmul.bf16.gmra.mxu0 %v488
    %v2667 = vpop.f32.mrf.mxu0
    %v2668 = vadd.f32 %v2655, %v2667
    %v2669 = vpop.f32.mrf.mxu0
    %2670 = vdwg.mxu0
    %2671 = vmatpush.bf16.msra.mxu0 %v1862
    %2672 = vmatpush.bf16.msra.mxu0 %v1854
    %2673 = vmatpush.bf16.msra.mxu0 %v1846
    %2674 = vmatpush.bf16.msra.mxu0 %v1838
    %2675 = vmatpush.bf16.msra.mxu0 %v1830
    %2676 = vmatpush.bf16.msra.mxu0 %v1822
    %2677 = vmatpush.bf16.msra.mxu0 %v1814
    %2678 = vmatpush.bf16.msra.mxu0 %v1806
    %2679 = vmatmul.bf16.gmra.mxu0 %v489
    %v2680 = vpop.f32.mrf.mxu0
    %v2681 = vadd.f32 %v2668, %v2680
    %v2682 = vpop.f32.mrf.mxu0
    %2683 = vdwg.mxu0
    %2684 = vmatpush.bf16.msra.mxu0 %v1926
    %2685 = vmatpush.bf16.msra.mxu0 %v1918
    %2686 = vmatpush.bf16.msra.mxu0 %v1910
    %2687 = vmatpush.bf16.msra.mxu0 %v1902
    %2688 = vmatpush.bf16.msra.mxu0 %v1894
    %2689 = vmatpush.bf16.msra.mxu0 %v1886
    %2690 = vmatpush.bf16.msra.mxu0 %v1878
    %2691 = vmatpush.bf16.msra.mxu0 %v1870
    %2692 = vmatmul.bf16.gmra.mxu0 %v490
    %v2693 = vpop.f32.mrf.mxu0
    %v2694 = vadd.f32 %v2681, %v2693
    %v2695 = vpop.f32.mrf.mxu0
    %2696 = vdwg.mxu0
    %2697 = vmatpush.bf16.msra.mxu0 %v1990
    %2698 = vmatpush.bf16.msra.mxu0 %v1982
    %2699 = vmatpush.bf16.msra.mxu0 %v1974
    %2700 = vmatpush.bf16.msra.mxu0 %v1966
    %2701 = vmatpush.bf16.msra.mxu0 %v1958
    %2702 = vmatpush.bf16.msra.mxu0 %v1950
    %2703 = vmatpush.bf16.msra.mxu0 %v1942
    %2704 = vmatpush.bf16.msra.mxu0 %v1934
    %2705 = vmatmul.bf16.gmra.mxu0 %v491
    %v2706 = vpop.f32.mrf.mxu0
    %v2707 = vadd.f32 %v2694, %v2706
    %v2708 = vpop.f32.mrf.mxu0
    %2709 = vdwg.mxu0
    %2710 = vmatpush.bf16.msra.mxu0 %v2054
    %2711 = vmatpush.bf16.msra.mxu0 %v2046
    %2712 = vmatpush.bf16.msra.mxu0 %v2038
    %2713 = vmatpush.bf16.msra.mxu0 %v2030
    %2714 = vmatpush.bf16.msra.mxu0 %v2022
    %2715 = vmatpush.bf16.msra.mxu0 %v2014
    %2716 = vmatpush.bf16.msra.mxu0 %v2006
    %2717 = vmatpush.bf16.msra.mxu0 %v1998
    %2718 = vmatmul.bf16.gmra.mxu0 %v492
    %v2719 = vpop.f32.mrf.mxu0
    %v2720 = vadd.f32 %v2707, %v2719
    %v2721 = vpop.f32.mrf.mxu0
    %2722 = vdwg.mxu0
    %2723 = vmatpush.bf16.msra.mxu0 0
    %2724 = vmatpush.bf16.msra.mxu0 0
    %2725 = vmatpush.bf16.msra.mxu0 0
    %2726 = vmatpush.bf16.msra.mxu0 0
    %2727 = vmatpush.bf16.msra.mxu0 0
    %2728 = vmatpush.bf16.msra.mxu0 0
    %2729 = vmatpush.bf16.msra.mxu0 0
    %2730 = vmatpush.bf16.msra.mxu0 %v2062
    %2731 = vmatmul.bf16.gmra.mxu0 %v2461
    %v2732 = vpop.f32.mrf.mxu0
    %v2733 = vadd.f32 %v2720, %v2732
    %v2734 = vpop.f32.mrf.mxu0
    %2735 = vdwg.mxu0
    %2736 = vmatpush.bf16.msra.mxu0 %v1735
    %2737 = vmatpush.bf16.msra.mxu0 %v1727
    %2738 = vmatpush.bf16.msra.mxu0 %v1719
    %2739 = vmatpush.bf16.msra.mxu0 %v1711
    %2740 = vmatpush.bf16.msra.mxu0 %v1703
    %2741 = vmatpush.bf16.msra.mxu0 %v1695
    %2742 = vmatpush.bf16.msra.mxu0 %v1687
    %2743 = vmatpush.bf16.msra.mxu0 %v1679
    %2744 = vmatmul.bf16.gmra.mxu0 %v487
    %v2745 = vpop.f32.mrf.mxu0
    %v2746 = vadd.f32 %v472, %v2745
    %v2747 = vpop.f32.mrf.mxu0
    %2748 = vdwg.mxu0
    %2749 = vmatpush.bf16.msra.mxu0 %v1799
    %2750 = vmatpush.bf16.msra.mxu0 %v1791
    %2751 = vmatpush.bf16.msra.mxu0 %v1783
    %2752 = vmatpush.bf16.msra.mxu0 %v1775
    %2753 = vmatpush.bf16.msra.mxu0 %v1767
    %2754 = vmatpush.bf16.msra.mxu0 %v1759
    %2755 = vmatpush.bf16.msra.mxu0 %v1751
    %2756 = vmatpush.bf16.msra.mxu0 %v1743
    %2757 = vmatmul.bf16.gmra.mxu0 %v488
    %v2758 = vpop.f32.mrf.mxu0
    %v2759 = vadd.f32 %v2746, %v2758
    %v2760 = vpop.f32.mrf.mxu0
    %2761 = vdwg.mxu0
    %2762 = vmatpush.bf16.msra.mxu0 %v1863
    %2763 = vmatpush.bf16.msra.mxu0 %v1855
    %2764 = vmatpush.bf16.msra.mxu0 %v1847
    %2765 = vmatpush.bf16.msra.mxu0 %v1839
    %2766 = vmatpush.bf16.msra.mxu0 %v1831
    %2767 = vmatpush.bf16.msra.mxu0 %v1823
    %2768 = vmatpush.bf16.msra.mxu0 %v1815
    %2769 = vmatpush.bf16.msra.mxu0 %v1807
    %2770 = vmatmul.bf16.gmra.mxu0 %v489
    %v2771 = vpop.f32.mrf.mxu0
    %v2772 = vadd.f32 %v2759, %v2771
    %v2773 = vpop.f32.mrf.mxu0
    %2774 = vdwg.mxu0
    %2775 = vmatpush.bf16.msra.mxu0 %v1927
    %2776 = vmatpush.bf16.msra.mxu0 %v1919
    %2777 = vmatpush.bf16.msra.mxu0 %v1911
    %2778 = vmatpush.bf16.msra.mxu0 %v1903
    %2779 = vmatpush.bf16.msra.mxu0 %v1895
    %2780 = vmatpush.bf16.msra.mxu0 %v1887
    %2781 = vmatpush.bf16.msra.mxu0 %v1879
    %2782 = vmatpush.bf16.msra.mxu0 %v1871
    %2783 = vmatmul.bf16.gmra.mxu0 %v490
    %v2784 = vpop.f32.mrf.mxu0
    %v2785 = vadd.f32 %v2772, %v2784
    %v2786 = vpop.f32.mrf.mxu0
    %2787 = vdwg.mxu0
    %2788 = vmatpush.bf16.msra.mxu0 %v1991
    %2789 = vmatpush.bf16.msra.mxu0 %v1983
    %2790 = vmatpush.bf16.msra.mxu0 %v1975
    %2791 = vmatpush.bf16.msra.mxu0 %v1967
    %2792 = vmatpush.bf16.msra.mxu0 %v1959
    %2793 = vmatpush.bf16.msra.mxu0 %v1951
    %2794 = vmatpush.bf16.msra.mxu0 %v1943
    %2795 = vmatpush.bf16.msra.mxu0 %v1935
    %2796 = vmatmul.bf16.gmra.mxu0 %v491
    %v2797 = vpop.f32.mrf.mxu0
    %v2798 = vadd.f32 %v2785, %v2797
    %v2799 = vpop.f32.mrf.mxu0
    %2800 = vdwg.mxu0
    %2801 = vmatpush.bf16.msra.mxu0 %v2055
    %2802 = vmatpush.bf16.msra.mxu0 %v2047
    %2803 = vmatpush.bf16.msra.mxu0 %v2039
    %2804 = vmatpush.bf16.msra.mxu0 %v2031
    %2805 = vmatpush.bf16.msra.mxu0 %v2023
    %2806 = vmatpush.bf16.msra.mxu0 %v2015
    %2807 = vmatpush.bf16.msra.mxu0 %v2007
    %2808 = vmatpush.bf16.msra.mxu0 %v1999
    %2809 = vmatmul.bf16.gmra.mxu0 %v492
    %v2810 = vpop.f32.mrf.mxu0
    %v2811 = vadd.f32 %v2798, %v2810
    %v2812 = vpop.f32.mrf.mxu0
    %2813 = vdwg.mxu0
    %2814 = vmatpush.bf16.msra.mxu0 0
    %2815 = vmatpush.bf16.msra.mxu0 0
    %2816 = vmatpush.bf16.msra.mxu0 0
    %2817 = vmatpush.bf16.msra.mxu0 0
    %2818 = vmatpush.bf16.msra.mxu0 0
    %2819 = vmatpush.bf16.msra.mxu0 0
    %2820 = vmatpush.bf16.msra.mxu0 0
    %2821 = vmatpush.bf16.msra.mxu0 %v2063
    %2822 = vmatmul.bf16.gmra.mxu0 %v2461
    %v2823 = vpop.f32.mrf.mxu0
    %v2824 = vadd.f32 %v2811, %v2823
    %v2825 = vpop.f32.mrf.mxu0
    %2826 = vdwg.mxu0
    %2827 = vmatpush.bf16.msra.mxu0 %v1736
    %2828 = vmatpush.bf16.msra.mxu0 %v1728
    %2829 = vmatpush.bf16.msra.mxu0 %v1720
    %2830 = vmatpush.bf16.msra.mxu0 %v1712
    %2831 = vmatpush.bf16.msra.mxu0 %v1704
    %2832 = vmatpush.bf16.msra.mxu0 %v1696
    %2833 = vmatpush.bf16.msra.mxu0 %v1688
    %2834 = vmatpush.bf16.msra.mxu0 %v1680
    %2835 = vmatmul.bf16.gmra.mxu0 %v487
    %v2836 = vpop.f32.mrf.mxu0
    %v2837 = vadd.f32 %v473, %v2836
    %v2838 = vpop.f32.mrf.mxu0
    %2839 = vdwg.mxu0
    %2840 = vmatpush.bf16.msra.mxu0 %v1800
    %2841 = vmatpush.bf16.msra.mxu0 %v1792
    %2842 = vmatpush.bf16.msra.mxu0 %v1784
    %2843 = vmatpush.bf16.msra.mxu0 %v1776
    %2844 = vmatpush.bf16.msra.mxu0 %v1768
    %2845 = vmatpush.bf16.msra.mxu0 %v1760
    %2846 = vmatpush.bf16.msra.mxu0 %v1752
    %2847 = vmatpush.bf16.msra.mxu0 %v1744
    %2848 = vmatmul.bf16.gmra.mxu0 %v488
    %v2849 = vpop.f32.mrf.mxu0
    %v2850 = vadd.f32 %v2837, %v2849
    %v2851 = vpop.f32.mrf.mxu0
    %2852 = vdwg.mxu0
    %2853 = vmatpush.bf16.msra.mxu0 %v1864
    %2854 = vmatpush.bf16.msra.mxu0 %v1856
    %2855 = vmatpush.bf16.msra.mxu0 %v1848
    %2856 = vmatpush.bf16.msra.mxu0 %v1840
    %2857 = vmatpush.bf16.msra.mxu0 %v1832
    %2858 = vmatpush.bf16.msra.mxu0 %v1824
    %2859 = vmatpush.bf16.msra.mxu0 %v1816
    %2860 = vmatpush.bf16.msra.mxu0 %v1808
    %2861 = vmatmul.bf16.gmra.mxu0 %v489
    %v2862 = vpop.f32.mrf.mxu0
    %v2863 = vadd.f32 %v2850, %v2862
    %v2864 = vpop.f32.mrf.mxu0
    %2865 = vdwg.mxu0
    %2866 = vmatpush.bf16.msra.mxu0 %v1928
    %2867 = vmatpush.bf16.msra.mxu0 %v1920
    %2868 = vmatpush.bf16.msra.mxu0 %v1912
    %2869 = vmatpush.bf16.msra.mxu0 %v1904
    %2870 = vmatpush.bf16.msra.mxu0 %v1896
    %2871 = vmatpush.bf16.msra.mxu0 %v1888
    %2872 = vmatpush.bf16.msra.mxu0 %v1880
    %2873 = vmatpush.bf16.msra.mxu0 %v1872
    %2874 = vmatmul.bf16.gmra.mxu0 %v490
    %v2875 = vpop.f32.mrf.mxu0
    %v2876 = vadd.f32 %v2863, %v2875
    %v2877 = vpop.f32.mrf.mxu0
    %2878 = vdwg.mxu0
    %2879 = vmatpush.bf16.msra.mxu0 %v1992
    %2880 = vmatpush.bf16.msra.mxu0 %v1984
    %2881 = vmatpush.bf16.msra.mxu0 %v1976
    %2882 = vmatpush.bf16.msra.mxu0 %v1968
    %2883 = vmatpush.bf16.msra.mxu0 %v1960
    %2884 = vmatpush.bf16.msra.mxu0 %v1952
    %2885 = vmatpush.bf16.msra.mxu0 %v1944
    %2886 = vmatpush.bf16.msra.mxu0 %v1936
    %2887 = vmatmul.bf16.gmra.mxu0 %v491
    %v2888 = vpop.f32.mrf.mxu0
    %v2889 = vadd.f32 %v2876, %v2888
    %v2890 = vpop.f32.mrf.mxu0
    %2891 = vdwg.mxu0
    %2892 = vmatpush.bf16.msra.mxu0 %v2056
    %2893 = vmatpush.bf16.msra.mxu0 %v2048
    %2894 = vmatpush.bf16.msra.mxu0 %v2040
    %2895 = vmatpush.bf16.msra.mxu0 %v2032
    %2896 = vmatpush.bf16.msra.mxu0 %v2024
    %2897 = vmatpush.bf16.msra.mxu0 %v2016
    %2898 = vmatpush.bf16.msra.mxu0 %v2008
    %2899 = vmatpush.bf16.msra.mxu0 %v2000
    %2900 = vmatmul.bf16.gmra.mxu0 %v492
    %v2901 = vpop.f32.mrf.mxu0
    %v2902 = vadd.f32 %v2889, %v2901
    %v2903 = vpop.f32.mrf.mxu0
    %2904 = vdwg.mxu0
    %2905 = vmatpush.bf16.msra.mxu0 0
    %2906 = vmatpush.bf16.msra.mxu0 0
    %2907 = vmatpush.bf16.msra.mxu0 0
    %2908 = vmatpush.bf16.msra.mxu0 0
    %2909 = vmatpush.bf16.msra.mxu0 0
    %2910 = vmatpush.bf16.msra.mxu0 0
    %2911 = vmatpush.bf16.msra.mxu0 0
    %2912 = vmatpush.bf16.msra.mxu0 %v2064
    %2913 = vmatmul.bf16.gmra.mxu0 %v2461
    %v2914 = vpop.f32.mrf.mxu0
    %v2915 = vadd.f32 %v2902, %v2914
    %v2916 = vpop.f32.mrf.mxu0
    %2917 = vdwg.mxu0
    %2918 = vmatpush.bf16.msra.mxu0 %v1737
    %2919 = vmatpush.bf16.msra.mxu0 %v1729
    %2920 = vmatpush.bf16.msra.mxu0 %v1721
    %2921 = vmatpush.bf16.msra.mxu0 %v1713
    %2922 = vmatpush.bf16.msra.mxu0 %v1705
    %2923 = vmatpush.bf16.msra.mxu0 %v1697
    %2924 = vmatpush.bf16.msra.mxu0 %v1689
    %2925 = vmatpush.bf16.msra.mxu0 %v1681
    %2926 = vmatmul.bf16.gmra.mxu0 %v487
    %v2927 = vpop.f32.mrf.mxu0
    %v2928 = vadd.f32 %v474, %v2927
    %v2929 = vpop.f32.mrf.mxu0
    %2930 = vdwg.mxu0
    %2931 = vmatpush.bf16.msra.mxu0 %v1801
    %2932 = vmatpush.bf16.msra.mxu0 %v1793
    %2933 = vmatpush.bf16.msra.mxu0 %v1785
    %2934 = vmatpush.bf16.msra.mxu0 %v1777
    %2935 = vmatpush.bf16.msra.mxu0 %v1769
    %2936 = vmatpush.bf16.msra.mxu0 %v1761
    %2937 = vmatpush.bf16.msra.mxu0 %v1753
    %2938 = vmatpush.bf16.msra.mxu0 %v1745
    %2939 = vmatmul.bf16.gmra.mxu0 %v488
    %v2940 = vpop.f32.mrf.mxu0
    %v2941 = vadd.f32 %v2928, %v2940
    %v2942 = vpop.f32.mrf.mxu0
    %2943 = vdwg.mxu0
    %2944 = vmatpush.bf16.msra.mxu0 %v1865
    %2945 = vmatpush.bf16.msra.mxu0 %v1857
    %2946 = vmatpush.bf16.msra.mxu0 %v1849
    %2947 = vmatpush.bf16.msra.mxu0 %v1841
    %2948 = vmatpush.bf16.msra.mxu0 %v1833
    %2949 = vmatpush.bf16.msra.mxu0 %v1825
    %2950 = vmatpush.bf16.msra.mxu0 %v1817
    %2951 = vmatpush.bf16.msra.mxu0 %v1809
    %2952 = vmatmul.bf16.gmra.mxu0 %v489
    %v2953 = vpop.f32.mrf.mxu0
    %v2954 = vadd.f32 %v2941, %v2953
    %v2955 = vpop.f32.mrf.mxu0
    %2956 = vdwg.mxu0
    %2957 = vmatpush.bf16.msra.mxu0 %v1929
    %2958 = vmatpush.bf16.msra.mxu0 %v1921
    %2959 = vmatpush.bf16.msra.mxu0 %v1913
    %2960 = vmatpush.bf16.msra.mxu0 %v1905
    %2961 = vmatpush.bf16.msra.mxu0 %v1897
    %2962 = vmatpush.bf16.msra.mxu0 %v1889
    %2963 = vmatpush.bf16.msra.mxu0 %v1881
    %2964 = vmatpush.bf16.msra.mxu0 %v1873
    %2965 = vmatmul.bf16.gmra.mxu0 %v490
    %v2966 = vpop.f32.mrf.mxu0
    %v2967 = vadd.f32 %v2954, %v2966
    %v2968 = vpop.f32.mrf.mxu0
    %2969 = vdwg.mxu0
    %2970 = vmatpush.bf16.msra.mxu0 %v1993
    %2971 = vmatpush.bf16.msra.mxu0 %v1985
    %2972 = vmatpush.bf16.msra.mxu0 %v1977
    %2973 = vmatpush.bf16.msra.mxu0 %v1969
    %2974 = vmatpush.bf16.msra.mxu0 %v1961
    %2975 = vmatpush.bf16.msra.mxu0 %v1953
    %2976 = vmatpush.bf16.msra.mxu0 %v1945
    %2977 = vmatpush.bf16.msra.mxu0 %v1937
    %2978 = vmatmul.bf16.gmra.mxu0 %v491
    %v2979 = vpop.f32.mrf.mxu0
    %v2980 = vadd.f32 %v2967, %v2979
    %v2981 = vpop.f32.mrf.mxu0
    %2982 = vdwg.mxu0
    %2983 = vmatpush.bf16.msra.mxu0 %v2057
    %2984 = vmatpush.bf16.msra.mxu0 %v2049
    %2985 = vmatpush.bf16.msra.mxu0 %v2041
    %2986 = vmatpush.bf16.msra.mxu0 %v2033
    %2987 = vmatpush.bf16.msra.mxu0 %v2025
    %2988 = vmatpush.bf16.msra.mxu0 %v2017
    %2989 = vmatpush.bf16.msra.mxu0 %v2009
    %2990 = vmatpush.bf16.msra.mxu0 %v2001
    %2991 = vmatmul.bf16.gmra.mxu0 %v492
    %v2992 = vpop.f32.mrf.mxu0
    %v2993 = vadd.f32 %v2980, %v2992
    %v2994 = vpop.f32.mrf.mxu0
    %2995 = vdwg.mxu0
    %2996 = vmatpush.bf16.msra.mxu0 0
    %2997 = vmatpush.bf16.msra.mxu0 0
    %2998 = vmatpush.bf16.msra.mxu0 0
    %2999 = vmatpush.bf16.msra.mxu0 0
    %3000 = vmatpush.bf16.msra.mxu0 0
    %3001 = vmatpush.bf16.msra.mxu0 0
    %3002 = vmatpush.bf16.msra.mxu0 0
    %3003 = vmatpush.bf16.msra.mxu0 %v2065
    %3004 = vmatmul.bf16.gmra.mxu0 %v2461
    %v3005 = vpop.f32.mrf.mxu0
    %v3006 = vadd.f32 %v2993, %v3005
    %v3007 = vpop.f32.mrf.mxu0
    %3008 = vdwg.mxu0
    %3009 = vmatpush.bf16.msra.mxu0 %v1738
    %3010 = vmatpush.bf16.msra.mxu0 %v1730
    %3011 = vmatpush.bf16.msra.mxu0 %v1722
    %3012 = vmatpush.bf16.msra.mxu0 %v1714
    %3013 = vmatpush.bf16.msra.mxu0 %v1706
    %3014 = vmatpush.bf16.msra.mxu0 %v1698
    %3015 = vmatpush.bf16.msra.mxu0 %v1690
    %3016 = vmatpush.bf16.msra.mxu0 %v1682
    %3017 = vmatmul.bf16.gmra.mxu0 %v487
    %v3018 = vpop.f32.mrf.mxu0
    %v3019 = vadd.f32 %v475, %v3018
    %v3020 = vpop.f32.mrf.mxu0
    %3021 = vdwg.mxu0
    %3022 = vmatpush.bf16.msra.mxu0 %v1802
    %3023 = vmatpush.bf16.msra.mxu0 %v1794
    %3024 = vmatpush.bf16.msra.mxu0 %v1786
    %3025 = vmatpush.bf16.msra.mxu0 %v1778
    %3026 = vmatpush.bf16.msra.mxu0 %v1770
    %3027 = vmatpush.bf16.msra.mxu0 %v1762
    %3028 = vmatpush.bf16.msra.mxu0 %v1754
    %3029 = vmatpush.bf16.msra.mxu0 %v1746
    %3030 = vmatmul.bf16.gmra.mxu0 %v488
    %v3031 = vpop.f32.mrf.mxu0
    %v3032 = vadd.f32 %v3019, %v3031
    %v3033 = vpop.f32.mrf.mxu0
    %3034 = vdwg.mxu0
    %3035 = vmatpush.bf16.msra.mxu0 %v1866
    %3036 = vmatpush.bf16.msra.mxu0 %v1858
    %3037 = vmatpush.bf16.msra.mxu0 %v1850
    %3038 = vmatpush.bf16.msra.mxu0 %v1842
    %3039 = vmatpush.bf16.msra.mxu0 %v1834
    %3040 = vmatpush.bf16.msra.mxu0 %v1826
    %3041 = vmatpush.bf16.msra.mxu0 %v1818
    %3042 = vmatpush.bf16.msra.mxu0 %v1810
    %3043 = vmatmul.bf16.gmra.mxu0 %v489
    %v3044 = vpop.f32.mrf.mxu0
    %v3045 = vadd.f32 %v3032, %v3044
    %v3046 = vpop.f32.mrf.mxu0
    %3047 = vdwg.mxu0
    %3048 = vmatpush.bf16.msra.mxu0 %v1930
    %3049 = vmatpush.bf16.msra.mxu0 %v1922
    %3050 = vmatpush.bf16.msra.mxu0 %v1914
    %3051 = vmatpush.bf16.msra.mxu0 %v1906
    %3052 = vmatpush.bf16.msra.mxu0 %v1898
    %3053 = vmatpush.bf16.msra.mxu0 %v1890
    %3054 = vmatpush.bf16.msra.mxu0 %v1882
    %3055 = vmatpush.bf16.msra.mxu0 %v1874
    %3056 = vmatmul.bf16.gmra.mxu0 %v490
    %v3057 = vpop.f32.mrf.mxu0
    %v3058 = vadd.f32 %v3045, %v3057
    %v3059 = vpop.f32.mrf.mxu0
    %3060 = vdwg.mxu0
    %3061 = vmatpush.bf16.msra.mxu0 %v1994
    %3062 = vmatpush.bf16.msra.mxu0 %v1986
    %3063 = vmatpush.bf16.msra.mxu0 %v1978
    %3064 = vmatpush.bf16.msra.mxu0 %v1970
    %3065 = vmatpush.bf16.msra.mxu0 %v1962
    %3066 = vmatpush.bf16.msra.mxu0 %v1954
    %3067 = vmatpush.bf16.msra.mxu0 %v1946
    %3068 = vmatpush.bf16.msra.mxu0 %v1938
    %3069 = vmatmul.bf16.gmra.mxu0 %v491
    %v3070 = vpop.f32.mrf.mxu0
    %v3071 = vadd.f32 %v3058, %v3070
    %v3072 = vpop.f32.mrf.mxu0
    %3073 = vdwg.mxu0
    %3074 = vmatpush.bf16.msra.mxu0 %v2058
    %3075 = vmatpush.bf16.msra.mxu0 %v2050
    %3076 = vmatpush.bf16.msra.mxu0 %v2042
    %3077 = vmatpush.bf16.msra.mxu0 %v2034
    %3078 = vmatpush.bf16.msra.mxu0 %v2026
    %3079 = vmatpush.bf16.msra.mxu0 %v2018
    %3080 = vmatpush.bf16.msra.mxu0 %v2010
    %3081 = vmatpush.bf16.msra.mxu0 %v2002
    %3082 = vmatmul.bf16.gmra.mxu0 %v492
    %v3083 = vpop.f32.mrf.mxu0
    %v3084 = vadd.f32 %v3071, %v3083
    %v3085 = vpop.f32.mrf.mxu0
    %3086 = vdwg.mxu0
    %3087 = vmatpush.bf16.msra.mxu0 0
    %3088 = vmatpush.bf16.msra.mxu0 0
    %3089 = vmatpush.bf16.msra.mxu0 0
    %3090 = vmatpush.bf16.msra.mxu0 0
    %3091 = vmatpush.bf16.msra.mxu0 0
    %3092 = vmatpush.bf16.msra.mxu0 0
    %3093 = vmatpush.bf16.msra.mxu0 0
    %3094 = vmatpush.bf16.msra.mxu0 %v2066
    %3095 = vmatmul.bf16.gmra.mxu0 %v2461
    %v3096 = vpop.f32.mrf.mxu0
    %v3097 = vadd.f32 %v3084, %v3096
    %v3098 = vpop.f32.mrf.mxu0
    %3099 = vdwg.mxu0
    %3100 = vmatpush.bf16.msra.mxu0 %v1739
    %3101 = vmatpush.bf16.msra.mxu0 %v1731
    %3102 = vmatpush.bf16.msra.mxu0 %v1723
    %3103 = vmatpush.bf16.msra.mxu0 %v1715
    %3104 = vmatpush.bf16.msra.mxu0 %v1707
    %3105 = vmatpush.bf16.msra.mxu0 %v1699
    %3106 = vmatpush.bf16.msra.mxu0 %v1691
    %3107 = vmatpush.bf16.msra.mxu0 %v1683
    %3108 = vmatmul.bf16.gmra.mxu0 %v487
    %v3109 = vpop.f32.mrf.mxu0
    %v3110 = vadd.f32 %v476, %v3109
    %v3111 = vpop.f32.mrf.mxu0
    %3112 = vdwg.mxu0
    %3113 = vmatpush.bf16.msra.mxu0 %v1803
    %3114 = vmatpush.bf16.msra.mxu0 %v1795
    %3115 = vmatpush.bf16.msra.mxu0 %v1787
    %3116 = vmatpush.bf16.msra.mxu0 %v1779
    %3117 = vmatpush.bf16.msra.mxu0 %v1771
    %3118 = vmatpush.bf16.msra.mxu0 %v1763
    %3119 = vmatpush.bf16.msra.mxu0 %v1755
    %3120 = vmatpush.bf16.msra.mxu0 %v1747
    %3121 = vmatmul.bf16.gmra.mxu0 %v488
    %v3122 = vpop.f32.mrf.mxu0
    %v3123 = vadd.f32 %v3110, %v3122
    %v3124 = vpop.f32.mrf.mxu0
    %3125 = vdwg.mxu0
    %3126 = vmatpush.bf16.msra.mxu0 %v1867
    %3127 = vmatpush.bf16.msra.mxu0 %v1859
    %3128 = vmatpush.bf16.msra.mxu0 %v1851
    %3129 = vmatpush.bf16.msra.mxu0 %v1843
    %3130 = vmatpush.bf16.msra.mxu0 %v1835
    %3131 = vmatpush.bf16.msra.mxu0 %v1827
    %3132 = vmatpush.bf16.msra.mxu0 %v1819
    %3133 = vmatpush.bf16.msra.mxu0 %v1811
    %3134 = vmatmul.bf16.gmra.mxu0 %v489
    %v3135 = vpop.f32.mrf.mxu0
    %v3136 = vadd.f32 %v3123, %v3135
    %v3137 = vpop.f32.mrf.mxu0
    %3138 = vdwg.mxu0
    %3139 = vmatpush.bf16.msra.mxu0 %v1931
    %3140 = vmatpush.bf16.msra.mxu0 %v1923
    %3141 = vmatpush.bf16.msra.mxu0 %v1915
    %3142 = vmatpush.bf16.msra.mxu0 %v1907
    %3143 = vmatpush.bf16.msra.mxu0 %v1899
    %3144 = vmatpush.bf16.msra.mxu0 %v1891
    %3145 = vmatpush.bf16.msra.mxu0 %v1883
    %3146 = vmatpush.bf16.msra.mxu0 %v1875
    %3147 = vmatmul.bf16.gmra.mxu0 %v490
    %v3148 = vpop.f32.mrf.mxu0
    %v3149 = vadd.f32 %v3136, %v3148
    %v3150 = vpop.f32.mrf.mxu0
    %3151 = vdwg.mxu0
    %3152 = vmatpush.bf16.msra.mxu0 %v1995
    %3153 = vmatpush.bf16.msra.mxu0 %v1987
    %3154 = vmatpush.bf16.msra.mxu0 %v1979
    %3155 = vmatpush.bf16.msra.mxu0 %v1971
    %3156 = vmatpush.bf16.msra.mxu0 %v1963
    %3157 = vmatpush.bf16.msra.mxu0 %v1955
    %3158 = vmatpush.bf16.msra.mxu0 %v1947
    %3159 = vmatpush.bf16.msra.mxu0 %v1939
    %3160 = vmatmul.bf16.gmra.mxu0 %v491
    %v3161 = vpop.f32.mrf.mxu0
    %v3162 = vadd.f32 %v3149, %v3161
    %v3163 = vpop.f32.mrf.mxu0
    %3164 = vdwg.mxu0
    %3165 = vmatpush.bf16.msra.mxu0 %v2059
    %3166 = vmatpush.bf16.msra.mxu0 %v2051
    %3167 = vmatpush.bf16.msra.mxu0 %v2043
    %3168 = vmatpush.bf16.msra.mxu0 %v2035
    %3169 = vmatpush.bf16.msra.mxu0 %v2027
    %3170 = vmatpush.bf16.msra.mxu0 %v2019
    %3171 = vmatpush.bf16.msra.mxu0 %v2011
    %3172 = vmatpush.bf16.msra.mxu0 %v2003
    %3173 = vmatmul.bf16.gmra.mxu0 %v492
    %v3174 = vpop.f32.mrf.mxu0
    %v3175 = vadd.f32 %v3162, %v3174
    %v3176 = vpop.f32.mrf.mxu0
    %3177 = vdwg.mxu0
    %3178 = vmatpush.bf16.msra.mxu0 0
    %3179 = vmatpush.bf16.msra.mxu0 0
    %3180 = vmatpush.bf16.msra.mxu0 0
    %3181 = vmatpush.bf16.msra.mxu0 0
    %3182 = vmatpush.bf16.msra.mxu0 0
    %3183 = vmatpush.bf16.msra.mxu0 0
    %3184 = vmatpush.bf16.msra.mxu0 0
    %3185 = vmatpush.bf16.msra.mxu0 %v2067
    %3186 = vmatmul.bf16.gmra.mxu0 %v2461
    %v3187 = vpop.f32.mrf.mxu0
    %v3188 = vadd.f32 %v3175, %v3187
    %v3189 = vpop.f32.mrf.mxu0
    %3190 = vdwg.mxu0
    %s3191 = scalar_lea.vmem %s2, 1
    %v3192 = vld [vmem:[%s3191] ss:$4 sm:$0xff]
    %s3193 = scalar_lea.vmem %s2, 2
    %v3194 = vld [vmem:[%s3193] ss:$4 sm:$0xff]
    %s3195 = scalar_lea.vmem %s2, 3
    %v3196 = vld [vmem:[%s3195] ss:$4 sm:$0xff]
    %v3198 = vperm.slane %v3192, 0
    %v3199 = vperm.slane %v3192, 1
    %v3200 = vperm.slane %v3192, 2
    %v3201 = vperm.slane %v3192, 3
    %v3202 = vperm.slane %v3192, 4
    %v3203 = vperm.slane %v3192, 5
    %v3204 = vperm.slane %v3192, 6
    %v3205 = vperm.slane %v3192, 7
    %v3214 = vadd.f32 %v2551, %v3198
    %v3215 = vadd.f32 %v2642, %v3199
    %v3216 = vadd.f32 %v2733, %v3200
    %v3217 = vadd.f32 %v2824, %v3201
    %v3218 = vadd.f32 %v2915, %v3202
    %v3219 = vadd.f32 %v3006, %v3203
    %v3220 = vadd.f32 %v3097, %v3204
    %v3221 = vadd.f32 %v3188, %v3205
    %v3223 = vperm.slane %v3194, 0
    %v3224 = vperm.slane %v3194, 1
    %v3225 = vperm.slane %v3194, 2
    %v3226 = vperm.slane %v3194, 3
    %v3227 = vperm.slane %v3194, 4
    %v3228 = vperm.slane %v3194, 5
    %v3229 = vperm.slane %v3194, 6
    %v3230 = vperm.slane %v3194, 7
    %v3239 = vmul.f32 %v2551, %v3223
    %v3240 = vmul.f32 %v2642, %v3224
    %v3241 = vmul.f32 %v2733, %v3225
    %v3242 = vmul.f32 %v2824, %v3226
    %v3243 = vmul.f32 %v2915, %v3227
    %v3244 = vmul.f32 %v3006, %v3228
    %v3245 = vmul.f32 %v3097, %v3229
    %v3246 = vmul.f32 %v3188, %v3230
    %v3247 = vxor.u32 %v3239, 2147483648
    %v3248 = vxor.u32 %v3240, 2147483648
    %v3249 = vxor.u32 %v3241, 2147483648
    %v3250 = vxor.u32 %v3242, 2147483648
    %v3251 = vxor.u32 %v3243, 2147483648
    %v3252 = vxor.u32 %v3244, 2147483648
    %v3253 = vxor.u32 %v3245, 2147483648
    %v3254 = vxor.u32 %v3246, 2147483648
    %v3255 = vmul.f32 %v3247, 1.442695
    %v3256 = vpow.pop %v3255
    %v3257 = vmul.f32 %v3248, 1.442695
    %v3258 = vpow.pop %v3257
    %v3259 = vmul.f32 %v3249, 1.442695
    %v3260 = vpow.pop %v3259
    %v3261 = vmul.f32 %v3250, 1.442695
    %v3262 = vpow.pop %v3261
    %v3263 = vmul.f32 %v3251, 1.442695
    %v3264 = vpow.pop %v3263
    %v3265 = vmul.f32 %v3252, 1.442695
    %v3266 = vpow.pop %v3265
    %v3267 = vmul.f32 %v3253, 1.442695
    %v3268 = vpow.pop %v3267
    %v3269 = vmul.f32 %v3254, 1.442695
    %v3270 = vpow.pop %v3269
    %v3271 = vadd.f32 %v3256, 1.0
    %v3272 = vadd.f32 %v3258, 1.0
    %v3273 = vadd.f32 %v3260, 1.0
    %v3274 = vadd.f32 %v3262, 1.0
    %v3275 = vadd.f32 %v3264, 1.0
    %v3276 = vadd.f32 %v3266, 1.0
    %v3277 = vadd.f32 %v3268, 1.0
    %v3278 = vadd.f32 %v3270, 1.0
    %v3279 = vrcp.pop %v3271
    %v3280 = vmul.f32 %v3271, %v3279
    %v3281 = vsub.f32 1.0, %v3280
    %v3282 = vmul.f32 %v3279, %v3281
    %v3283 = vadd.f32 %v3279, %v3282
    %vm3284 = vweird.f32 %v3271
    %vm3285 = vweird.f32 %v3279
    %vm3286 = vmor %vm3284, %vm3285
    %v3287 = vsel %vm3286, %v3279, %v3283
    %v3288 = vand.u32 2147483647, %v3271
    %vm3289 = vcmp.eq.f32.partialorder %v3288, 8.507059e+37
    %v3290 = vand.u32 %v3271, 2147483648
    %v3291 = vor.u32 1.1754944e-38, %v3290
    %v3292 = vsel %vm3289, %v3291, %v3287
    %v3293 = vmul.f32 1.0, %v3292
    %v3294 = vrcp.pop %v3272
    %v3295 = vmul.f32 %v3272, %v3294
    %v3296 = vsub.f32 1.0, %v3295
    %v3297 = vmul.f32 %v3294, %v3296
    %v3298 = vadd.f32 %v3294, %v3297
    %vm3299 = vweird.f32 %v3272
    %vm3300 = vweird.f32 %v3294
    %vm3301 = vmor %vm3299, %vm3300
    %v3302 = vsel %vm3301, %v3294, %v3298
    %v3303 = vand.u32 2147483647, %v3272
    %vm3304 = vcmp.eq.f32.partialorder %v3303, 8.507059e+37
    %v3305 = vand.u32 %v3272, 2147483648
    %v3306 = vor.u32 1.1754944e-38, %v3305
    %v3307 = vsel %vm3304, %v3306, %v3302
    %v3308 = vmul.f32 1.0, %v3307
    %v3309 = vrcp.pop %v3273
    %v3310 = vmul.f32 %v3273, %v3309
    %v3311 = vsub.f32 1.0, %v3310
    %v3312 = vmul.f32 %v3309, %v3311
    %v3313 = vadd.f32 %v3309, %v3312
    %vm3314 = vweird.f32 %v3273
    %vm3315 = vweird.f32 %v3309
    %vm3316 = vmor %vm3314, %vm3315
    %v3317 = vsel %vm3316, %v3309, %v3313
    %v3318 = vand.u32 2147483647, %v3273
    %vm3319 = vcmp.eq.f32.partialorder %v3318, 8.507059e+37
    %v3320 = vand.u32 %v3273, 2147483648
    %v3321 = vor.u32 1.1754944e-38, %v3320
    %v3322 = vsel %vm3319, %v3321, %v3317
    %v3323 = vmul.f32 1.0, %v3322
    %v3324 = vrcp.pop %v3274
    %v3325 = vmul.f32 %v3274, %v3324
    %v3326 = vsub.f32 1.0, %v3325
    %v3327 = vmul.f32 %v3324, %v3326
    %v3328 = vadd.f32 %v3324, %v3327
    %vm3329 = vweird.f32 %v3274
    %vm3330 = vweird.f32 %v3324
    %vm3331 = vmor %vm3329, %vm3330
    %v3332 = vsel %vm3331, %v3324, %v3328
    %v3333 = vand.u32 2147483647, %v3274
    %vm3334 = vcmp.eq.f32.partialorder %v3333, 8.507059e+37
    %v3335 = vand.u32 %v3274, 2147483648
    %v3336 = vor.u32 1.1754944e-38, %v3335
    %v3337 = vsel %vm3334, %v3336, %v3332
    %v3338 = vmul.f32 1.0, %v3337
    %v3339 = vrcp.pop %v3275
    %v3340 = vmul.f32 %v3275, %v3339
    %v3341 = vsub.f32 1.0, %v3340
    %v3342 = vmul.f32 %v3339, %v3341
    %v3343 = vadd.f32 %v3339, %v3342
    %vm3344 = vweird.f32 %v3275
    %vm3345 = vweird.f32 %v3339
    %vm3346 = vmor %vm3344, %vm3345
    %v3347 = vsel %vm3346, %v3339, %v3343
    %v3348 = vand.u32 2147483647, %v3275
    %vm3349 = vcmp.eq.f32.partialorder %v3348, 8.507059e+37
    %v3350 = vand.u32 %v3275, 2147483648
    %v3351 = vor.u32 1.1754944e-38, %v3350
    %v3352 = vsel %vm3349, %v3351, %v3347
    %v3353 = vmul.f32 1.0, %v3352
    %v3354 = vrcp.pop %v3276
    %v3355 = vmul.f32 %v3276, %v3354
    %v3356 = vsub.f32 1.0, %v3355
    %v3357 = vmul.f32 %v3354, %v3356
    %v3358 = vadd.f32 %v3354, %v3357
    %vm3359 = vweird.f32 %v3276
    %vm3360 = vweird.f32 %v3354
    %vm3361 = vmor %vm3359, %vm3360
    %v3362 = vsel %vm3361, %v3354, %v3358
    %v3363 = vand.u32 2147483647, %v3276
    %vm3364 = vcmp.eq.f32.partialorder %v3363, 8.507059e+37
    %v3365 = vand.u32 %v3276, 2147483648
    %v3366 = vor.u32 1.1754944e-38, %v3365
    %v3367 = vsel %vm3364, %v3366, %v3362
    %v3368 = vmul.f32 1.0, %v3367
    %v3369 = vrcp.pop %v3277
    %v3370 = vmul.f32 %v3277, %v3369
    %v3371 = vsub.f32 1.0, %v3370
    %v3372 = vmul.f32 %v3369, %v3371
    %v3373 = vadd.f32 %v3369, %v3372
    %vm3374 = vweird.f32 %v3277
    %vm3375 = vweird.f32 %v3369
    %vm3376 = vmor %vm3374, %vm3375
    %v3377 = vsel %vm3376, %v3369, %v3373
    %v3378 = vand.u32 2147483647, %v3277
    %vm3379 = vcmp.eq.f32.partialorder %v3378, 8.507059e+37
    %v3380 = vand.u32 %v3277, 2147483648
    %v3381 = vor.u32 1.1754944e-38, %v3380
    %v3382 = vsel %vm3379, %v3381, %v3377
    %v3383 = vmul.f32 1.0, %v3382
    %v3384 = vrcp.pop %v3278
    %v3385 = vmul.f32 %v3278, %v3384
    %v3386 = vsub.f32 1.0, %v3385
    %v3387 = vmul.f32 %v3384, %v3386
    %v3388 = vadd.f32 %v3384, %v3387
    %vm3389 = vweird.f32 %v3278
    %vm3390 = vweird.f32 %v3384
    %vm3391 = vmor %vm3389, %vm3390
    %v3392 = vsel %vm3391, %v3384, %v3388
    %v3393 = vand.u32 2147483647, %v3278
    %vm3394 = vcmp.eq.f32.partialorder %v3393, 8.507059e+37
    %v3395 = vand.u32 %v3278, 2147483648
    %v3396 = vor.u32 1.1754944e-38, %v3395
    %v3397 = vsel %vm3394, %v3396, %v3392
    %v3398 = vmul.f32 1.0, %v3397
    %v3399 = vmul.f32 %v3214, %v3293
    %v3400 = vmul.f32 %v3215, %v3308
    %v3401 = vmul.f32 %v3216, %v3323
    %v3402 = vmul.f32 %v3217, %v3338
    %v3403 = vmul.f32 %v3218, %v3353
    %v3404 = vmul.f32 %v3219, %v3368
    %v3405 = vmul.f32 %v3220, %v3383
    %v3406 = vmul.f32 %v3221, %v3398
    %v3408 = vperm.slane %v3196, 0
    %v3409 = vperm.slane %v3196, 1
    %v3410 = vperm.slane %v3196, 2
    %v3411 = vperm.slane %v3196, 3
    %v3412 = vperm.slane %v3196, 4
    %v3413 = vperm.slane %v3196, 5
    %v3414 = vperm.slane %v3196, 6
    %v3415 = vperm.slane %v3196, 7
    %v3424 = vsub.f32 %v3399, %v3408
    %v3425 = vsub.f32 %v3400, %v3409
    %v3426 = vsub.f32 %v3401, %v3410
    %v3427 = vsub.f32 %v3402, %v3411
    %v3428 = vsub.f32 %v3403, %v3412
    %v3429 = vsub.f32 %v3404, %v3413
    %v3430 = vsub.f32 %v3405, %v3414
    %v3431 = vsub.f32 %v3406, %v3415
    %v3432 = vpack.c.bf16 %v3424, %v3424
    %v3433 = vpack.c.bf16 %v3425, %v3425
    %v3434 = vpack.c.bf16 %v3426, %v3426
    %v3435 = vpack.c.bf16 %v3427, %v3427
    %v3436 = vpack.c.bf16 %v3428, %v3428
    %v3437 = vpack.c.bf16 %v3429, %v3429
    %v3438 = vpack.c.bf16 %v3430, %v3430
    %v3439 = vpack.c.bf16 %v3431, %v3431
    %v3440 = vld [vmem:[%s3] sm:$0xff]
    %v3441 = vld [vmem:[%s3 + $0x8] sm:$0xff]
    %v3442 = vld [vmem:[%s3 + $0x10] sm:$0xff]
    %v3443 = vld [vmem:[%s3 + $0x18] sm:$0xff]
    %v3444 = vld [vmem:[%s3 + $0x20] sm:$0xff]
    %v3445 = vld [vmem:[%s3 + $0x28] sm:$0xff]
    %v3446 = vld [vmem:[%s3 + $0x30] sm:$0xff]
    %v3447 = vld [vmem:[%s3 + $0x38] sm:$0xff]
    %v3448 = vld [vmem:[%s3 + $0x40] sm:$0xff]
    %v3449 = vld [vmem:[%s3 + $0x48] sm:$0xff]
    %v3450 = vld [vmem:[%s3 + $0x50] sm:$0xff]
    %v3451 = vld [vmem:[%s3 + $0x58] sm:$0xff]
    %v3452 = vld [vmem:[%s3 + $0x60] sm:$0xff]
    %v3453 = vld [vmem:[%s3 + $0x68] sm:$0xff]
    %v3454 = vld [vmem:[%s3 + $0x70] sm:$0xff]
    %v3455 = vld [vmem:[%s3 + $0x78] sm:$0xff]
    %v3456 = vld [vmem:[%s3 + $0x80] sm:$0xff]
    %v3457 = vld [vmem:[%s3 + $0x88] sm:$0xff]
    %v3458 = vld [vmem:[%s3 + $0x90] sm:$0xff]
    %v3459 = vld [vmem:[%s3 + $0x98] sm:$0xff]
    %v3460 = vld [vmem:[%s3 + $0xa0] sm:$0xff]
    %v3461 = vld [vmem:[%s3 + $0xa8] sm:$0xff]
    %v3462 = vld [vmem:[%s3 + $0xb0] sm:$0xff]
    %v3463 = vld [vmem:[%s3 + $0xb8] sm:$0xff]
    %v3464 = vld [vmem:[%s3 + $0xc0] sm:$0xff]
    %v3465 = vld [vmem:[%s3 + $0xc8] sm:$0xff]
    %v3466 = vld [vmem:[%s3 + $0xd0] sm:$0xff]
    %v3467 = vld [vmem:[%s3 + $0xd8] sm:$0xff]
    %v3468 = vld [vmem:[%s3 + $0xe0] sm:$0xff]
    %v3469 = vld [vmem:[%s3 + $0xe8] sm:$0xff]
    %v3470 = vld [vmem:[%s3 + $0xf0] sm:$0xff]
    %v3471 = vld [vmem:[%s3 + $0xf8] sm:$0xff]
    %v3472 = vld [vmem:[%s3 + $0x100] sm:$0xff]
    %v3473 = vld [vmem:[%s3 + $0x108] sm:$0xff]
    %v3474 = vld [vmem:[%s3 + $0x110] sm:$0xff]
    %v3475 = vld [vmem:[%s3 + $0x118] sm:$0xff]
    %v3476 = vld [vmem:[%s3 + $0x120] sm:$0xff]
    %v3477 = vld [vmem:[%s3 + $0x128] sm:$0xff]
    %v3478 = vld [vmem:[%s3 + $0x130] sm:$0xff]
    %v3479 = vld [vmem:[%s3 + $0x138] sm:$0xff]
    %v3480 = vld [vmem:[%s3 + $0x140] sm:$0xff]
    %v3481 = vld [vmem:[%s3 + $0x148] sm:$0xff]
    %v3482 = vld [vmem:[%s3 + $0x150] sm:$0xff]
    %v3483 = vld [vmem:[%s3 + $0x158] sm:$0xff]
    %v3484 = vld [vmem:[%s3 + $0x160] sm:$0xff]
    %v3485 = vld [vmem:[%s3 + $0x168] sm:$0xff]
    %v3486 = vld [vmem:[%s3 + $0x170] sm:$0xff]
    %v3487 = vld [vmem:[%s3 + $0x178] sm:$0xff]
    %v3488 = vld [vmem:[%s3 + $0x180] sm:$0xff]
    %v3489 = vld [vmem:[%s3 + $0x188] sm:$0xff]
    %v3490 = vld [vmem:[%s3 + $0x190] sm:$0xff]
    %v3491 = vld [vmem:[%s3 + $0x198] sm:$0xff]
    %v3492 = vld [vmem:[%s3 + $0x1a0] sm:$0xff]
    %v3493 = vld [vmem:[%s3 + $0x1a8] sm:$0xff]
    %v3494 = vld [vmem:[%s3 + $0x1b0] sm:$0xff]
    %v3495 = vld [vmem:[%s3 + $0x1b8] sm:$0xff]
    %v3496 = vld [vmem:[%s3 + $0x1c0] sm:$0xff]
    %v3497 = vld [vmem:[%s3 + $0x1c8] sm:$0xff]
    %v3498 = vld [vmem:[%s3 + $0x1d0] sm:$0xff]
    %v3499 = vld [vmem:[%s3 + $0x1d8] sm:$0xff]
    %v3500 = vld [vmem:[%s3 + $0x1e0] sm:$0xff]
    %v3501 = vld [vmem:[%s3 + $0x1e8] sm:$0xff]
    %v3502 = vld [vmem:[%s3 + $0x1f0] sm:$0xff]
    %v3503 = vld [vmem:[%s3 + $0x1f8] sm:$0xff]
    %v3504 = vld [vmem:[%s3 + $0x200] sm:$0xff]
    %v3505 = vld [vmem:[%s3 + $0x208] sm:$0xff]
    %v3506 = vld [vmem:[%s3 + $0x210] sm:$0xff]
    %v3507 = vld [vmem:[%s3 + $0x218] sm:$0xff]
    %v3508 = vld [vmem:[%s3 + $0x220] sm:$0xff]
    %v3509 = vld [vmem:[%s3 + $0x228] sm:$0xff]
    %v3510 = vld [vmem:[%s3 + $0x230] sm:$0xff]
    %v3511 = vld [vmem:[%s3 + $0x238] sm:$0xff]
    %v3512 = vld [vmem:[%s3 + $0x240] sm:$0xff]
    %v3513 = vld [vmem:[%s3 + $0x248] sm:$0xff]
    %v3514 = vld [vmem:[%s3 + $0x250] sm:$0xff]
    %v3515 = vld [vmem:[%s3 + $0x258] sm:$0xff]
    %v3516 = vld [vmem:[%s3 + $0x260] sm:$0xff]
    %v3517 = vld [vmem:[%s3 + $0x268] sm:$0xff]
    %v3518 = vld [vmem:[%s3 + $0x270] sm:$0xff]
    %v3519 = vld [vmem:[%s3 + $0x278] sm:$0xff]
    %v3520 = vld [vmem:[%s3 + $0x280] sm:$0xff]
    %v3521 = vld [vmem:[%s3 + $0x288] sm:$0xff]
    %v3522 = vld [vmem:[%s3 + $0x290] sm:$0xff]
    %v3523 = vld [vmem:[%s3 + $0x298] sm:$0xff]
    %v3524 = vld [vmem:[%s3 + $0x2a0] sm:$0xff]
    %v3525 = vld [vmem:[%s3 + $0x2a8] sm:$0xff]
    %v3526 = vld [vmem:[%s3 + $0x2b0] sm:$0xff]
    %v3527 = vld [vmem:[%s3 + $0x2b8] sm:$0xff]
    %v3528 = vld [vmem:[%s3 + $0x2c0] sm:$0xff]
    %v3529 = vld [vmem:[%s3 + $0x2c8] sm:$0xff]
    %v3530 = vld [vmem:[%s3 + $0x2d0] sm:$0xff]
    %v3531 = vld [vmem:[%s3 + $0x2d8] sm:$0xff]
    %v3532 = vld [vmem:[%s3 + $0x2e0] sm:$0xff]
    %v3533 = vld [vmem:[%s3 + $0x2e8] sm:$0xff]
    %v3534 = vld [vmem:[%s3 + $0x2f0] sm:$0xff]
    %v3535 = vld [vmem:[%s3 + $0x2f8] sm:$0xff]
    %v3536 = vld [vmem:[%s3 + $0x300] sm:$0xff]
    %v3537 = vld [vmem:[%s3 + $0x308] sm:$0xff]
    %v3538 = vld [vmem:[%s3 + $0x310] sm:$0xff]
    %v3539 = vld [vmem:[%s3 + $0x318] sm:$0xff]
    %v3540 = vld [vmem:[%s3 + $0x320] sm:$0xff]
    %v3541 = vld [vmem:[%s3 + $0x328] sm:$0xff]
    %v3542 = vld [vmem:[%s3 + $0x330] sm:$0xff]
    %v3543 = vld [vmem:[%s3 + $0x338] sm:$0xff]
    %v3544 = vld [vmem:[%s3 + $0x340] sm:$0xff]
    %v3545 = vld [vmem:[%s3 + $0x348] sm:$0xff]
    %v3546 = vld [vmem:[%s3 + $0x350] sm:$0xff]
    %v3547 = vld [vmem:[%s3 + $0x358] sm:$0xff]
    %v3548 = vld [vmem:[%s3 + $0x360] sm:$0xff]
    %v3549 = vld [vmem:[%s3 + $0x368] sm:$0xff]
    %v3550 = vld [vmem:[%s3 + $0x370] sm:$0xff]
    %v3551 = vld [vmem:[%s3 + $0x378] sm:$0xff]
    %v3552 = vld [vmem:[%s3 + $0x380] sm:$0xff]
    %v3553 = vld [vmem:[%s3 + $0x388] sm:$0xff]
    %v3554 = vld [vmem:[%s3 + $0x390] sm:$0xff]
    %v3555 = vld [vmem:[%s3 + $0x398] sm:$0xff]
    %v3556 = vld [vmem:[%s3 + $0x3a0] sm:$0xff]
    %v3557 = vld [vmem:[%s3 + $0x3a8] sm:$0xff]
    %v3558 = vld [vmem:[%s3 + $0x3b0] sm:$0xff]
    %v3559 = vld [vmem:[%s3 + $0x3b8] sm:$0xff]
    %v3560 = vld [vmem:[%s3 + $0x3c0] sm:$0xff]
    %v3561 = vld [vmem:[%s3 + $0x3c8] sm:$0xff]
    %v3562 = vld [vmem:[%s3 + $0x3d0] sm:$0xff]
    %v3563 = vld [vmem:[%s3 + $0x3d8] sm:$0xff]
    %v3564 = vld [vmem:[%s3 + $0x3e0] sm:$0xff]
    %v3565 = vld [vmem:[%s3 + $0x3e8] sm:$0xff]
    %v3566 = vld [vmem:[%s3 + $0x3f0] sm:$0xff]
    %v3567 = vld [vmem:[%s3 + $0x3f8] sm:$0xff]
    %v3568 = vld [vmem:[%s3 + $0x400] sm:$0xff]
    %v3569 = vld [vmem:[%s3 + $0x408] sm:$0xff]
    %v3570 = vld [vmem:[%s3 + $0x410] sm:$0xff]
    %v3571 = vld [vmem:[%s3 + $0x418] sm:$0xff]
    %v3572 = vld [vmem:[%s3 + $0x420] sm:$0xff]
    %v3573 = vld [vmem:[%s3 + $0x428] sm:$0xff]
    %v3574 = vld [vmem:[%s3 + $0x430] sm:$0xff]
    %v3575 = vld [vmem:[%s3 + $0x438] sm:$0xff]
    %v3576 = vld [vmem:[%s3 + $0x440] sm:$0xff]
    %v3577 = vld [vmem:[%s3 + $0x448] sm:$0xff]
    %v3578 = vld [vmem:[%s3 + $0x450] sm:$0xff]
    %v3579 = vld [vmem:[%s3 + $0x458] sm:$0xff]
    %v3580 = vld [vmem:[%s3 + $0x460] sm:$0xff]
    %v3581 = vld [vmem:[%s3 + $0x468] sm:$0xff]
    %v3582 = vld [vmem:[%s3 + $0x470] sm:$0xff]
    %v3583 = vld [vmem:[%s3 + $0x478] sm:$0xff]
    %v3584 = vld [vmem:[%s3 + $0x480] sm:$0xff]
    %v3585 = vld [vmem:[%s3 + $0x488] sm:$0xff]
    %v3586 = vld [vmem:[%s3 + $0x490] sm:$0xff]
    %v3587 = vld [vmem:[%s3 + $0x498] sm:$0xff]
    %v3588 = vld [vmem:[%s3 + $0x4a0] sm:$0xff]
    %v3589 = vld [vmem:[%s3 + $0x4a8] sm:$0xff]
    %v3590 = vld [vmem:[%s3 + $0x4b0] sm:$0xff]
    %v3591 = vld [vmem:[%s3 + $0x4b8] sm:$0xff]
    %v3592 = vld [vmem:[%s3 + $0x4c0] sm:$0xff]
    %v3593 = vld [vmem:[%s3 + $0x4c8] sm:$0xff]
    %v3594 = vld [vmem:[%s3 + $0x4d0] sm:$0xff]
    %v3595 = vld [vmem:[%s3 + $0x4d8] sm:$0xff]
    %v3596 = vld [vmem:[%s3 + $0x4e0] sm:$0xff]
    %v3597 = vld [vmem:[%s3 + $0x4e8] sm:$0xff]
    %v3598 = vld [vmem:[%s3 + $0x4f0] sm:$0xff]
    %v3599 = vld [vmem:[%s3 + $0x4f8] sm:$0xff]
    %v3600 = vld [vmem:[%s3 + $0x500] sm:$0xff]
    %v3601 = vld [vmem:[%s3 + $0x508] sm:$0xff]
    %v3602 = vld [vmem:[%s3 + $0x510] sm:$0xff]
    %v3603 = vld [vmem:[%s3 + $0x518] sm:$0xff]
    %v3604 = vld [vmem:[%s3 + $0x520] sm:$0xff]
    %v3605 = vld [vmem:[%s3 + $0x528] sm:$0xff]
    %v3606 = vld [vmem:[%s3 + $0x530] sm:$0xff]
    %v3607 = vld [vmem:[%s3 + $0x538] sm:$0xff]
    %v3608 = vld [vmem:[%s3 + $0x540] sm:$0xff]
    %v3609 = vld [vmem:[%s3 + $0x548] sm:$0xff]
    %v3610 = vld [vmem:[%s3 + $0x550] sm:$0xff]
    %v3611 = vld [vmem:[%s3 + $0x558] sm:$0xff]
    %v3612 = vld [vmem:[%s3 + $0x560] sm:$0xff]
    %v3613 = vld [vmem:[%s3 + $0x568] sm:$0xff]
    %v3614 = vld [vmem:[%s3 + $0x570] sm:$0xff]
    %v3615 = vld [vmem:[%s3 + $0x578] sm:$0xff]
    %v3616 = vld [vmem:[%s3 + $0x580] sm:$0xff]
    %v3617 = vld [vmem:[%s3 + $0x588] sm:$0xff]
    %v3618 = vld [vmem:[%s3 + $0x590] sm:$0xff]
    %v3619 = vld [vmem:[%s3 + $0x598] sm:$0xff]
    %v3620 = vld [vmem:[%s3 + $0x5a0] sm:$0xff]
    %v3621 = vld [vmem:[%s3 + $0x5a8] sm:$0xff]
    %v3622 = vld [vmem:[%s3 + $0x5b0] sm:$0xff]
    %v3623 = vld [vmem:[%s3 + $0x5b8] sm:$0xff]
    %v3624 = vld [vmem:[%s3 + $0x5c0] sm:$0xff]
    %v3625 = vld [vmem:[%s3 + $0x5c8] sm:$0xff]
    %v3626 = vld [vmem:[%s3 + $0x5d0] sm:$0xff]
    %v3627 = vld [vmem:[%s3 + $0x5d8] sm:$0xff]
    %v3628 = vld [vmem:[%s3 + $0x5e0] sm:$0xff]
    %v3629 = vld [vmem:[%s3 + $0x5e8] sm:$0xff]
    %v3630 = vld [vmem:[%s3 + $0x5f0] sm:$0xff]
    %v3631 = vld [vmem:[%s3 + $0x5f8] sm:$0xff]
    %v3632 = vld [vmem:[%s3 + $0x600] sm:$0xff]
    %v3633 = vld [vmem:[%s3 + $0x608] sm:$0xff]
    %v3634 = vld [vmem:[%s3 + $0x610] sm:$0xff]
    %v3635 = vld [vmem:[%s3 + $0x618] sm:$0xff]
    %v3636 = vld [vmem:[%s3 + $0x620] sm:$0xff]
    %v3637 = vld [vmem:[%s3 + $0x628] sm:$0xff]
    %v3638 = vld [vmem:[%s3 + $0x630] sm:$0xff]
    %v3639 = vld [vmem:[%s3 + $0x638] sm:$0xff]
    %v3640 = vld [vmem:[%s3 + $0x640] sm:$0xff]
    %v3641 = vld [vmem:[%s3 + $0x648] sm:$0xff]
    %v3642 = vld [vmem:[%s3 + $0x650] sm:$0xff]
    %v3643 = vld [vmem:[%s3 + $0x658] sm:$0xff]
    %v3644 = vld [vmem:[%s3 + $0x660] sm:$0xff]
    %v3645 = vld [vmem:[%s3 + $0x668] sm:$0xff]
    %v3646 = vld [vmem:[%s3 + $0x670] sm:$0xff]
    %v3647 = vld [vmem:[%s3 + $0x678] sm:$0xff]
    %v3648 = vld [vmem:[%s3 + $0x680] sm:$0xff]
    %v3649 = vld [vmem:[%s3 + $0x688] sm:$0xff]
    %v3650 = vld [vmem:[%s3 + $0x690] sm:$0xff]
    %v3651 = vld [vmem:[%s3 + $0x698] sm:$0xff]
    %v3652 = vld [vmem:[%s3 + $0x6a0] sm:$0xff]
    %v3653 = vld [vmem:[%s3 + $0x6a8] sm:$0xff]
    %v3654 = vld [vmem:[%s3 + $0x6b0] sm:$0xff]
    %v3655 = vld [vmem:[%s3 + $0x6b8] sm:$0xff]
    %v3656 = vld [vmem:[%s3 + $0x6c0] sm:$0xff]
    %v3657 = vld [vmem:[%s3 + $0x6c8] sm:$0xff]
    %v3658 = vld [vmem:[%s3 + $0x6d0] sm:$0xff]
    %v3659 = vld [vmem:[%s3 + $0x6d8] sm:$0xff]
    %v3660 = vld [vmem:[%s3 + $0x6e0] sm:$0xff]
    %v3661 = vld [vmem:[%s3 + $0x6e8] sm:$0xff]
    %v3662 = vld [vmem:[%s3 + $0x6f0] sm:$0xff]
    %v3663 = vld [vmem:[%s3 + $0x6f8] sm:$0xff]
    %v3664 = vld [vmem:[%s3 + $0x700] sm:$0xff]
    %v3665 = vld [vmem:[%s3 + $0x708] sm:$0xff]
    %v3666 = vld [vmem:[%s3 + $0x710] sm:$0xff]
    %v3667 = vld [vmem:[%s3 + $0x718] sm:$0xff]
    %v3668 = vld [vmem:[%s3 + $0x720] sm:$0xff]
    %v3669 = vld [vmem:[%s3 + $0x728] sm:$0xff]
    %v3670 = vld [vmem:[%s3 + $0x730] sm:$0xff]
    %v3671 = vld [vmem:[%s3 + $0x738] sm:$0xff]
    %v3672 = vld [vmem:[%s3 + $0x740] sm:$0xff]
    %v3673 = vld [vmem:[%s3 + $0x748] sm:$0xff]
    %v3674 = vld [vmem:[%s3 + $0x750] sm:$0xff]
    %v3675 = vld [vmem:[%s3 + $0x758] sm:$0xff]
    %v3676 = vld [vmem:[%s3 + $0x760] sm:$0xff]
    %v3677 = vld [vmem:[%s3 + $0x768] sm:$0xff]
    %v3678 = vld [vmem:[%s3 + $0x770] sm:$0xff]
    %v3679 = vld [vmem:[%s3 + $0x778] sm:$0xff]
    %v3680 = vld [vmem:[%s3 + $0x780] sm:$0xff]
    %v3681 = vld [vmem:[%s3 + $0x788] sm:$0xff]
    %v3682 = vld [vmem:[%s3 + $0x790] sm:$0xff]
    %v3683 = vld [vmem:[%s3 + $0x798] sm:$0xff]
    %v3684 = vld [vmem:[%s3 + $0x7a0] sm:$0xff]
    %v3685 = vld [vmem:[%s3 + $0x7a8] sm:$0xff]
    %v3686 = vld [vmem:[%s3 + $0x7b0] sm:$0xff]
    %v3687 = vld [vmem:[%s3 + $0x7b8] sm:$0xff]
    %v3688 = vld [vmem:[%s3 + $0x7c0] sm:$0xff]
    %v3689 = vld [vmem:[%s3 + $0x7c8] sm:$0xff]
    %v3690 = vld [vmem:[%s3 + $0x7d0] sm:$0xff]
    %v3691 = vld [vmem:[%s3 + $0x7d8] sm:$0xff]
    %v3692 = vld [vmem:[%s3 + $0x7e0] sm:$0xff]
    %v3693 = vld [vmem:[%s3 + $0x7e8] sm:$0xff]
    %v3694 = vld [vmem:[%s3 + $0x7f0] sm:$0xff]
    %v3695 = vld [vmem:[%s3 + $0x7f8] sm:$0xff]
    %v3696 = vld [vmem:[%s4] ss:$4 sm:$0xf]
    %v3698 = vperm.slane %v3696, 0
    %v3699 = vperm.slane %v3696, 1
    %v3700 = vperm.slane %v3696, 2
    %v3701 = vperm.slane %v3696, 3
    %v3962 = vunpack.c.l.b16 %v3440
    %v3963 = vunpack.c.h.b16 %v3440
    %v3964 = vunpack.c.l.b16 %v3441
    %v3965 = vunpack.c.h.b16 %v3441
    %v3966 = vunpack.c.l.b16 %v3442
    %v3967 = vunpack.c.h.b16 %v3442
    %v3968 = vunpack.c.l.b16 %v3443
    %v3969 = vunpack.c.h.b16 %v3443
    %v3970 = vunpack.c.l.b16 %v3444
    %v3971 = vunpack.c.h.b16 %v3444
    %v3972 = vunpack.c.l.b16 %v3445
    %v3973 = vunpack.c.h.b16 %v3445
    %v3974 = vunpack.c.l.b16 %v3446
    %v3975 = vunpack.c.h.b16 %v3446
    %v3976 = vunpack.c.l.b16 %v3447
    %v3977 = vunpack.c.h.b16 %v3447
    %v3978 = vunpack.c.l.b16 %v3448
    %v3979 = vunpack.c.h.b16 %v3448
    %v3980 = vunpack.c.l.b16 %v3449
    %v3981 = vunpack.c.h.b16 %v3449
    %v3982 = vunpack.c.l.b16 %v3450
    %v3983 = vunpack.c.h.b16 %v3450
    %v3984 = vunpack.c.l.b16 %v3451
    %v3985 = vunpack.c.h.b16 %v3451
    %v3986 = vunpack.c.l.b16 %v3452
    %v3987 = vunpack.c.h.b16 %v3452
    %v3988 = vunpack.c.l.b16 %v3453
    %v3989 = vunpack.c.h.b16 %v3453
    %v3990 = vunpack.c.l.b16 %v3454
    %v3991 = vunpack.c.h.b16 %v3454
    %v3992 = vunpack.c.l.b16 %v3455
    %v3993 = vunpack.c.h.b16 %v3455
    %v3994 = vunpack.c.l.b16 %v3456
    %v3995 = vunpack.c.h.b16 %v3456
    %v3996 = vunpack.c.l.b16 %v3457
    %v3997 = vunpack.c.h.b16 %v3457
    %v3998 = vunpack.c.l.b16 %v3458
    %v3999 = vunpack.c.h.b16 %v3458
    %v4000 = vunpack.c.l.b16 %v3459
    %v4001 = vunpack.c.h.b16 %v3459
    %v4002 = vunpack.c.l.b16 %v3460
    %v4003 = vunpack.c.h.b16 %v3460
    %v4004 = vunpack.c.l.b16 %v3461
    %v4005 = vunpack.c.h.b16 %v3461
    %v4006 = vunpack.c.l.b16 %v3462
    %v4007 = vunpack.c.h.b16 %v3462
    %v4008 = vunpack.c.l.b16 %v3463
    %v4009 = vunpack.c.h.b16 %v3463
    %v4010 = vunpack.c.l.b16 %v3464
    %v4011 = vunpack.c.h.b16 %v3464
    %v4012 = vunpack.c.l.b16 %v3465
    %v4013 = vunpack.c.h.b16 %v3465
    %v4014 = vunpack.c.l.b16 %v3466
    %v4015 = vunpack.c.h.b16 %v3466
    %v4016 = vunpack.c.l.b16 %v3467
    %v4017 = vunpack.c.h.b16 %v3467
    %v4018 = vunpack.c.l.b16 %v3468
    %v4019 = vunpack.c.h.b16 %v3468
    %v4020 = vunpack.c.l.b16 %v3469
    %v4021 = vunpack.c.h.b16 %v3469
    %v4022 = vunpack.c.l.b16 %v3470
    %v4023 = vunpack.c.h.b16 %v3470
    %v4024 = vunpack.c.l.b16 %v3471
    %v4025 = vunpack.c.h.b16 %v3471
    %v4026 = vunpack.c.l.b16 %v3472
    %v4027 = vunpack.c.h.b16 %v3472
    %v4028 = vunpack.c.l.b16 %v3473
    %v4029 = vunpack.c.h.b16 %v3473
    %v4030 = vunpack.c.l.b16 %v3474
    %v4031 = vunpack.c.h.b16 %v3474
    %v4032 = vunpack.c.l.b16 %v3475
    %v4033 = vunpack.c.h.b16 %v3475
    %v4034 = vunpack.c.l.b16 %v3476
    %v4035 = vunpack.c.h.b16 %v3476
    %v4036 = vunpack.c.l.b16 %v3477
    %v4037 = vunpack.c.h.b16 %v3477
    %v4038 = vunpack.c.l.b16 %v3478
    %v4039 = vunpack.c.h.b16 %v3478
    %v4040 = vunpack.c.l.b16 %v3479
    %v4041 = vunpack.c.h.b16 %v3479
    %v4042 = vunpack.c.l.b16 %v3480
    %v4043 = vunpack.c.h.b16 %v3480
    %v4044 = vunpack.c.l.b16 %v3481
    %v4045 = vunpack.c.h.b16 %v3481
    %v4046 = vunpack.c.l.b16 %v3482
    %v4047 = vunpack.c.h.b16 %v3482
    %v4048 = vunpack.c.l.b16 %v3483
    %v4049 = vunpack.c.h.b16 %v3483
    %v4050 = vunpack.c.l.b16 %v3484
    %v4051 = vunpack.c.h.b16 %v3484
    %v4052 = vunpack.c.l.b16 %v3485
    %v4053 = vunpack.c.h.b16 %v3485
    %v4054 = vunpack.c.l.b16 %v3486
    %v4055 = vunpack.c.h.b16 %v3486
    %v4056 = vunpack.c.l.b16 %v3487
    %v4057 = vunpack.c.h.b16 %v3487
    %v4058 = vunpack.c.l.b16 %v3488
    %v4059 = vunpack.c.h.b16 %v3488
    %v4060 = vunpack.c.l.b16 %v3489
    %v4061 = vunpack.c.h.b16 %v3489
    %v4062 = vunpack.c.l.b16 %v3490
    %v4063 = vunpack.c.h.b16 %v3490
    %v4064 = vunpack.c.l.b16 %v3491
    %v4065 = vunpack.c.h.b16 %v3491
    %v4066 = vunpack.c.l.b16 %v3492
    %v4067 = vunpack.c.h.b16 %v3492
    %v4068 = vunpack.c.l.b16 %v3493
    %v4069 = vunpack.c.h.b16 %v3493
    %v4070 = vunpack.c.l.b16 %v3494
    %v4071 = vunpack.c.h.b16 %v3494
    %v4072 = vunpack.c.l.b16 %v3495
    %v4073 = vunpack.c.h.b16 %v3495
    %v4074 = vunpack.c.l.b16 %v3496
    %v4075 = vunpack.c.h.b16 %v3496
    %v4076 = vunpack.c.l.b16 %v3497
    %v4077 = vunpack.c.h.b16 %v3497
    %v4078 = vunpack.c.l.b16 %v3498
    %v4079 = vunpack.c.h.b16 %v3498
    %v4080 = vunpack.c.l.b16 %v3499
    %v4081 = vunpack.c.h.b16 %v3499
    %v4082 = vunpack.c.l.b16 %v3500
    %v4083 = vunpack.c.h.b16 %v3500
    %v4084 = vunpack.c.l.b16 %v3501
    %v4085 = vunpack.c.h.b16 %v3501
    %v4086 = vunpack.c.l.b16 %v3502
    %v4087 = vunpack.c.h.b16 %v3502
    %v4088 = vunpack.c.l.b16 %v3503
    %v4089 = vunpack.c.h.b16 %v3503
    %v4090 = vunpack.c.l.b16 %v3504
    %v4091 = vunpack.c.h.b16 %v3504
    %v4092 = vunpack.c.l.b16 %v3505
    %v4093 = vunpack.c.h.b16 %v3505
    %v4094 = vunpack.c.l.b16 %v3506
    %v4095 = vunpack.c.h.b16 %v3506
    %v4096 = vunpack.c.l.b16 %v3507
    %v4097 = vunpack.c.h.b16 %v3507
    %v4098 = vunpack.c.l.b16 %v3508
    %v4099 = vunpack.c.h.b16 %v3508
    %v4100 = vunpack.c.l.b16 %v3509
    %v4101 = vunpack.c.h.b16 %v3509
    %v4102 = vunpack.c.l.b16 %v3510
    %v4103 = vunpack.c.h.b16 %v3510
    %v4104 = vunpack.c.l.b16 %v3511
    %v4105 = vunpack.c.h.b16 %v3511
    %v4106 = vunpack.c.l.b16 %v3512
    %v4107 = vunpack.c.h.b16 %v3512
    %v4108 = vunpack.c.l.b16 %v3513
    %v4109 = vunpack.c.h.b16 %v3513
    %v4110 = vunpack.c.l.b16 %v3514
    %v4111 = vunpack.c.h.b16 %v3514
    %v4112 = vunpack.c.l.b16 %v3515
    %v4113 = vunpack.c.h.b16 %v3515
    %v4114 = vunpack.c.l.b16 %v3516
    %v4115 = vunpack.c.h.b16 %v3516
    %v4116 = vunpack.c.l.b16 %v3517
    %v4117 = vunpack.c.h.b16 %v3517
    %v4118 = vunpack.c.l.b16 %v3518
    %v4119 = vunpack.c.h.b16 %v3518
    %v4120 = vunpack.c.l.b16 %v3519
    %v4121 = vunpack.c.h.b16 %v3519
    %v4122 = vunpack.c.l.b16 %v3520
    %v4123 = vunpack.c.h.b16 %v3520
    %v4124 = vunpack.c.l.b16 %v3521
    %v4125 = vunpack.c.h.b16 %v3521
    %v4126 = vunpack.c.l.b16 %v3522
    %v4127 = vunpack.c.h.b16 %v3522
    %v4128 = vunpack.c.l.b16 %v3523
    %v4129 = vunpack.c.h.b16 %v3523
    %v4130 = vunpack.c.l.b16 %v3524
    %v4131 = vunpack.c.h.b16 %v3524
    %v4132 = vunpack.c.l.b16 %v3525
    %v4133 = vunpack.c.h.b16 %v3525
    %v4134 = vunpack.c.l.b16 %v3526
    %v4135 = vunpack.c.h.b16 %v3526
    %v4136 = vunpack.c.l.b16 %v3527
    %v4137 = vunpack.c.h.b16 %v3527
    %v4138 = vunpack.c.l.b16 %v3528
    %v4139 = vunpack.c.h.b16 %v3528
    %v4140 = vunpack.c.l.b16 %v3529
    %v4141 = vunpack.c.h.b16 %v3529
    %v4142 = vunpack.c.l.b16 %v3530
    %v4143 = vunpack.c.h.b16 %v3530
    %v4144 = vunpack.c.l.b16 %v3531
    %v4145 = vunpack.c.h.b16 %v3531
    %v4146 = vunpack.c.l.b16 %v3532
    %v4147 = vunpack.c.h.b16 %v3532
    %v4148 = vunpack.c.l.b16 %v3533
    %v4149 = vunpack.c.h.b16 %v3533
    %v4150 = vunpack.c.l.b16 %v3534
    %v4151 = vunpack.c.h.b16 %v3534
    %v4152 = vunpack.c.l.b16 %v3535
    %v4153 = vunpack.c.h.b16 %v3535
    %v4154 = vunpack.c.l.b16 %v3536
    %v4155 = vunpack.c.h.b16 %v3536
    %v4156 = vunpack.c.l.b16 %v3537
    %v4157 = vunpack.c.h.b16 %v3537
    %v4158 = vunpack.c.l.b16 %v3538
    %v4159 = vunpack.c.h.b16 %v3538
    %v4160 = vunpack.c.l.b16 %v3539
    %v4161 = vunpack.c.h.b16 %v3539
    %v4162 = vunpack.c.l.b16 %v3540
    %v4163 = vunpack.c.h.b16 %v3540
    %v4164 = vunpack.c.l.b16 %v3541
    %v4165 = vunpack.c.h.b16 %v3541
    %v4166 = vunpack.c.l.b16 %v3542
    %v4167 = vunpack.c.h.b16 %v3542
    %v4168 = vunpack.c.l.b16 %v3543
    %v4169 = vunpack.c.h.b16 %v3543
    %v4170 = vunpack.c.l.b16 %v3544
    %v4171 = vunpack.c.h.b16 %v3544
    %v4172 = vunpack.c.l.b16 %v3545
    %v4173 = vunpack.c.h.b16 %v3545
    %v4174 = vunpack.c.l.b16 %v3546
    %v4175 = vunpack.c.h.b16 %v3546
    %v4176 = vunpack.c.l.b16 %v3547
    %v4177 = vunpack.c.h.b16 %v3547
    %v4178 = vunpack.c.l.b16 %v3548
    %v4179 = vunpack.c.h.b16 %v3548
    %v4180 = vunpack.c.l.b16 %v3549
    %v4181 = vunpack.c.h.b16 %v3549
    %v4182 = vunpack.c.l.b16 %v3550
    %v4183 = vunpack.c.h.b16 %v3550
    %v4184 = vunpack.c.l.b16 %v3551
    %v4185 = vunpack.c.h.b16 %v3551
    %v4186 = vunpack.c.l.b16 %v3552
    %v4187 = vunpack.c.h.b16 %v3552
    %v4188 = vunpack.c.l.b16 %v3553
    %v4189 = vunpack.c.h.b16 %v3553
    %v4190 = vunpack.c.l.b16 %v3554
    %v4191 = vunpack.c.h.b16 %v3554
    %v4192 = vunpack.c.l.b16 %v3555
    %v4193 = vunpack.c.h.b16 %v3555
    %v4194 = vunpack.c.l.b16 %v3556
    %v4195 = vunpack.c.h.b16 %v3556
    %v4196 = vunpack.c.l.b16 %v3557
    %v4197 = vunpack.c.h.b16 %v3557
    %v4198 = vunpack.c.l.b16 %v3558
    %v4199 = vunpack.c.h.b16 %v3558
    %v4200 = vunpack.c.l.b16 %v3559
    %v4201 = vunpack.c.h.b16 %v3559
    %v4202 = vunpack.c.l.b16 %v3560
    %v4203 = vunpack.c.h.b16 %v3560
    %v4204 = vunpack.c.l.b16 %v3561
    %v4205 = vunpack.c.h.b16 %v3561
    %v4206 = vunpack.c.l.b16 %v3562
    %v4207 = vunpack.c.h.b16 %v3562
    %v4208 = vunpack.c.l.b16 %v3563
    %v4209 = vunpack.c.h.b16 %v3563
    %v4210 = vunpack.c.l.b16 %v3564
    %v4211 = vunpack.c.h.b16 %v3564
    %v4212 = vunpack.c.l.b16 %v3565
    %v4213 = vunpack.c.h.b16 %v3565
    %v4214 = vunpack.c.l.b16 %v3566
    %v4215 = vunpack.c.h.b16 %v3566
    %v4216 = vunpack.c.l.b16 %v3567
    %v4217 = vunpack.c.h.b16 %v3567
    %v4218 = vunpack.c.l.b16 %v3568
    %v4219 = vunpack.c.h.b16 %v3568
    %v4220 = vunpack.c.l.b16 %v3569
    %v4221 = vunpack.c.h.b16 %v3569
    %v4222 = vunpack.c.l.b16 %v3570
    %v4223 = vunpack.c.h.b16 %v3570
    %v4224 = vunpack.c.l.b16 %v3571
    %v4225 = vunpack.c.h.b16 %v3571
    %v4226 = vunpack.c.l.b16 %v3572
    %v4227 = vunpack.c.h.b16 %v3572
    %v4228 = vunpack.c.l.b16 %v3573
    %v4229 = vunpack.c.h.b16 %v3573
    %v4230 = vunpack.c.l.b16 %v3574
    %v4231 = vunpack.c.h.b16 %v3574
    %v4232 = vunpack.c.l.b16 %v3575
    %v4233 = vunpack.c.h.b16 %v3575
    %v4234 = vunpack.c.l.b16 %v3576
    %v4235 = vunpack.c.h.b16 %v3576
    %v4236 = vunpack.c.l.b16 %v3577
    %v4237 = vunpack.c.h.b16 %v3577
    %v4238 = vunpack.c.l.b16 %v3578
    %v4239 = vunpack.c.h.b16 %v3578
    %v4240 = vunpack.c.l.b16 %v3579
    %v4241 = vunpack.c.h.b16 %v3579
    %v4242 = vunpack.c.l.b16 %v3580
    %v4243 = vunpack.c.h.b16 %v3580
    %v4244 = vunpack.c.l.b16 %v3581
    %v4245 = vunpack.c.h.b16 %v3581
    %v4246 = vunpack.c.l.b16 %v3582
    %v4247 = vunpack.c.h.b16 %v3582
    %v4248 = vunpack.c.l.b16 %v3583
    %v4249 = vunpack.c.h.b16 %v3583
    %v4250 = vunpack.c.l.b16 %v3584
    %v4251 = vunpack.c.h.b16 %v3584
    %v4252 = vunpack.c.l.b16 %v3585
    %v4253 = vunpack.c.h.b16 %v3585
    %v4254 = vunpack.c.l.b16 %v3586
    %v4255 = vunpack.c.h.b16 %v3586
    %v4256 = vunpack.c.l.b16 %v3587
    %v4257 = vunpack.c.h.b16 %v3587
    %v4258 = vunpack.c.l.b16 %v3588
    %v4259 = vunpack.c.h.b16 %v3588
    %v4260 = vunpack.c.l.b16 %v3589
    %v4261 = vunpack.c.h.b16 %v3589
    %v4262 = vunpack.c.l.b16 %v3590
    %v4263 = vunpack.c.h.b16 %v3590
    %v4264 = vunpack.c.l.b16 %v3591
    %v4265 = vunpack.c.h.b16 %v3591
    %v4266 = vunpack.c.l.b16 %v3592
    %v4267 = vunpack.c.h.b16 %v3592
    %v4268 = vunpack.c.l.b16 %v3593
    %v4269 = vunpack.c.h.b16 %v3593
    %v4270 = vunpack.c.l.b16 %v3594
    %v4271 = vunpack.c.h.b16 %v3594
    %v4272 = vunpack.c.l.b16 %v3595
    %v4273 = vunpack.c.h.b16 %v3595
    %v4274 = vunpack.c.l.b16 %v3596
    %v4275 = vunpack.c.h.b16 %v3596
    %v4276 = vunpack.c.l.b16 %v3597
    %v4277 = vunpack.c.h.b16 %v3597
    %v4278 = vunpack.c.l.b16 %v3598
    %v4279 = vunpack.c.h.b16 %v3598
    %v4280 = vunpack.c.l.b16 %v3599
    %v4281 = vunpack.c.h.b16 %v3599
    %v4282 = vunpack.c.l.b16 %v3600
    %v4283 = vunpack.c.h.b16 %v3600
    %v4284 = vunpack.c.l.b16 %v3601
    %v4285 = vunpack.c.h.b16 %v3601
    %v4286 = vunpack.c.l.b16 %v3602
    %v4287 = vunpack.c.h.b16 %v3602
    %v4288 = vunpack.c.l.b16 %v3603
    %v4289 = vunpack.c.h.b16 %v3603
    %v4290 = vunpack.c.l.b16 %v3604
    %v4291 = vunpack.c.h.b16 %v3604
    %v4292 = vunpack.c.l.b16 %v3605
    %v4293 = vunpack.c.h.b16 %v3605
    %v4294 = vunpack.c.l.b16 %v3606
    %v4295 = vunpack.c.h.b16 %v3606
    %v4296 = vunpack.c.l.b16 %v3607
    %v4297 = vunpack.c.h.b16 %v3607
    %v4298 = vunpack.c.l.b16 %v3608
    %v4299 = vunpack.c.h.b16 %v3608
    %v4300 = vunpack.c.l.b16 %v3609
    %v4301 = vunpack.c.h.b16 %v3609
    %v4302 = vunpack.c.l.b16 %v3610
    %v4303 = vunpack.c.h.b16 %v3610
    %v4304 = vunpack.c.l.b16 %v3611
    %v4305 = vunpack.c.h.b16 %v3611
    %v4306 = vunpack.c.l.b16 %v3612
    %v4307 = vunpack.c.h.b16 %v3612
    %v4308 = vunpack.c.l.b16 %v3613
    %v4309 = vunpack.c.h.b16 %v3613
    %v4310 = vunpack.c.l.b16 %v3614
    %v4311 = vunpack.c.h.b16 %v3614
    %v4312 = vunpack.c.l.b16 %v3615
    %v4313 = vunpack.c.h.b16 %v3615
    %v4314 = vunpack.c.l.b16 %v3616
    %v4315 = vunpack.c.h.b16 %v3616
    %v4316 = vunpack.c.l.b16 %v3617
    %v4317 = vunpack.c.h.b16 %v3617
    %v4318 = vunpack.c.l.b16 %v3618
    %v4319 = vunpack.c.h.b16 %v3618
    %v4320 = vunpack.c.l.b16 %v3619
    %v4321 = vunpack.c.h.b16 %v3619
    %v4322 = vunpack.c.l.b16 %v3620
    %v4323 = vunpack.c.h.b16 %v3620
    %v4324 = vunpack.c.l.b16 %v3621
    %v4325 = vunpack.c.h.b16 %v3621
    %v4326 = vunpack.c.l.b16 %v3622
    %v4327 = vunpack.c.h.b16 %v3622
    %v4328 = vunpack.c.l.b16 %v3623
    %v4329 = vunpack.c.h.b16 %v3623
    %v4330 = vunpack.c.l.b16 %v3624
    %v4331 = vunpack.c.h.b16 %v3624
    %v4332 = vunpack.c.l.b16 %v3625
    %v4333 = vunpack.c.h.b16 %v3625
    %v4334 = vunpack.c.l.b16 %v3626
    %v4335 = vunpack.c.h.b16 %v3626
    %v4336 = vunpack.c.l.b16 %v3627
    %v4337 = vunpack.c.h.b16 %v3627
    %v4338 = vunpack.c.l.b16 %v3628
    %v4339 = vunpack.c.h.b16 %v3628
    %v4340 = vunpack.c.l.b16 %v3629
    %v4341 = vunpack.c.h.b16 %v3629
    %v4342 = vunpack.c.l.b16 %v3630
    %v4343 = vunpack.c.h.b16 %v3630
    %v4344 = vunpack.c.l.b16 %v3631
    %v4345 = vunpack.c.h.b16 %v3631
    %v4346 = vunpack.c.l.b16 %v3632
    %v4347 = vunpack.c.h.b16 %v3632
    %v4348 = vunpack.c.l.b16 %v3633
    %v4349 = vunpack.c.h.b16 %v3633
    %v4350 = vunpack.c.l.b16 %v3634
    %v4351 = vunpack.c.h.b16 %v3634
    %v4352 = vunpack.c.l.b16 %v3635
    %v4353 = vunpack.c.h.b16 %v3635
    %v4354 = vunpack.c.l.b16 %v3636
    %v4355 = vunpack.c.h.b16 %v3636
    %v4356 = vunpack.c.l.b16 %v3637
    %v4357 = vunpack.c.h.b16 %v3637
    %v4358 = vunpack.c.l.b16 %v3638
    %v4359 = vunpack.c.h.b16 %v3638
    %v4360 = vunpack.c.l.b16 %v3639
    %v4361 = vunpack.c.h.b16 %v3639
    %v4362 = vunpack.c.l.b16 %v3640
    %v4363 = vunpack.c.h.b16 %v3640
    %v4364 = vunpack.c.l.b16 %v3641
    %v4365 = vunpack.c.h.b16 %v3641
    %v4366 = vunpack.c.l.b16 %v3642
    %v4367 = vunpack.c.h.b16 %v3642
    %v4368 = vunpack.c.l.b16 %v3643
    %v4369 = vunpack.c.h.b16 %v3643
    %v4370 = vunpack.c.l.b16 %v3644
    %v4371 = vunpack.c.h.b16 %v3644
    %v4372 = vunpack.c.l.b16 %v3645
    %v4373 = vunpack.c.h.b16 %v3645
    %v4374 = vunpack.c.l.b16 %v3646
    %v4375 = vunpack.c.h.b16 %v3646
    %v4376 = vunpack.c.l.b16 %v3647
    %v4377 = vunpack.c.h.b16 %v3647
    %v4378 = vunpack.c.l.b16 %v3648
    %v4379 = vunpack.c.h.b16 %v3648
    %v4380 = vunpack.c.l.b16 %v3649
    %v4381 = vunpack.c.h.b16 %v3649
    %v4382 = vunpack.c.l.b16 %v3650
    %v4383 = vunpack.c.h.b16 %v3650
    %v4384 = vunpack.c.l.b16 %v3651
    %v4385 = vunpack.c.h.b16 %v3651
    %v4386 = vunpack.c.l.b16 %v3652
    %v4387 = vunpack.c.h.b16 %v3652
    %v4388 = vunpack.c.l.b16 %v3653
    %v4389 = vunpack.c.h.b16 %v3653
    %v4390 = vunpack.c.l.b16 %v3654
    %v4391 = vunpack.c.h.b16 %v3654
    %v4392 = vunpack.c.l.b16 %v3655
    %v4393 = vunpack.c.h.b16 %v3655
    %v4394 = vunpack.c.l.b16 %v3656
    %v4395 = vunpack.c.h.b16 %v3656
    %v4396 = vunpack.c.l.b16 %v3657
    %v4397 = vunpack.c.h.b16 %v3657
    %v4398 = vunpack.c.l.b16 %v3658
    %v4399 = vunpack.c.h.b16 %v3658
    %v4400 = vunpack.c.l.b16 %v3659
    %v4401 = vunpack.c.h.b16 %v3659
    %v4402 = vunpack.c.l.b16 %v3660
    %v4403 = vunpack.c.h.b16 %v3660
    %v4404 = vunpack.c.l.b16 %v3661
    %v4405 = vunpack.c.h.b16 %v3661
    %v4406 = vunpack.c.l.b16 %v3662
    %v4407 = vunpack.c.h.b16 %v3662
    %v4408 = vunpack.c.l.b16 %v3663
    %v4409 = vunpack.c.h.b16 %v3663
    %v4410 = vunpack.c.l.b16 %v3664
    %v4411 = vunpack.c.h.b16 %v3664
    %v4412 = vunpack.c.l.b16 %v3665
    %v4413 = vunpack.c.h.b16 %v3665
    %v4414 = vunpack.c.l.b16 %v3666
    %v4415 = vunpack.c.h.b16 %v3666
    %v4416 = vunpack.c.l.b16 %v3667
    %v4417 = vunpack.c.h.b16 %v3667
    %v4418 = vunpack.c.l.b16 %v3668
    %v4419 = vunpack.c.h.b16 %v3668
    %v4420 = vunpack.c.l.b16 %v3669
    %v4421 = vunpack.c.h.b16 %v3669
    %v4422 = vunpack.c.l.b16 %v3670
    %v4423 = vunpack.c.h.b16 %v3670
    %v4424 = vunpack.c.l.b16 %v3671
    %v4425 = vunpack.c.h.b16 %v3671
    %v4426 = vunpack.c.l.b16 %v3672
    %v4427 = vunpack.c.h.b16 %v3672
    %v4428 = vunpack.c.l.b16 %v3673
    %v4429 = vunpack.c.h.b16 %v3673
    %v4430 = vunpack.c.l.b16 %v3674
    %v4431 = vunpack.c.h.b16 %v3674
    %v4432 = vunpack.c.l.b16 %v3675
    %v4433 = vunpack.c.h.b16 %v3675
    %v4434 = vunpack.c.l.b16 %v3676
    %v4435 = vunpack.c.h.b16 %v3676
    %v4436 = vunpack.c.l.b16 %v3677
    %v4437 = vunpack.c.h.b16 %v3677
    %v4438 = vunpack.c.l.b16 %v3678
    %v4439 = vunpack.c.h.b16 %v3678
    %v4440 = vunpack.c.l.b16 %v3679
    %v4441 = vunpack.c.h.b16 %v3679
    %v4442 = vunpack.c.l.b16 %v3680
    %v4443 = vunpack.c.h.b16 %v3680
    %v4444 = vunpack.c.l.b16 %v3681
    %v4445 = vunpack.c.h.b16 %v3681
    %v4446 = vunpack.c.l.b16 %v3682
    %v4447 = vunpack.c.h.b16 %v3682
    %v4448 = vunpack.c.l.b16 %v3683
    %v4449 = vunpack.c.h.b16 %v3683
    %v4450 = vunpack.c.l.b16 %v3684
    %v4451 = vunpack.c.h.b16 %v3684
    %v4452 = vunpack.c.l.b16 %v3685
    %v4453 = vunpack.c.h.b16 %v3685
    %v4454 = vunpack.c.l.b16 %v3686
    %v4455 = vunpack.c.h.b16 %v3686
    %v4456 = vunpack.c.l.b16 %v3687
    %v4457 = vunpack.c.h.b16 %v3687
    %v4458 = vunpack.c.l.b16 %v3688
    %v4459 = vunpack.c.h.b16 %v3688
    %v4460 = vunpack.c.l.b16 %v3689
    %v4461 = vunpack.c.h.b16 %v3689
    %v4462 = vunpack.c.l.b16 %v3690
    %v4463 = vunpack.c.h.b16 %v3690
    %v4464 = vunpack.c.l.b16 %v3691
    %v4465 = vunpack.c.h.b16 %v3691
    %v4466 = vunpack.c.l.b16 %v3692
    %v4467 = vunpack.c.h.b16 %v3692
    %v4468 = vunpack.c.l.b16 %v3693
    %v4469 = vunpack.c.h.b16 %v3693
    %v4470 = vunpack.c.l.b16 %v3694
    %v4471 = vunpack.c.h.b16 %v3694
    %v4472 = vunpack.c.l.b16 %v3695
    %v4473 = vunpack.c.h.b16 %v3695
    %v4474 = vpack.c.b16 %v3966, %v3962
    %v4475 = vpack.c.b16 %v3967, %v3963
    %v4476 = vpack.c.b16 %v3968, %v3964
    %v4477 = vpack.c.b16 %v3969, %v3965
    %v4478 = vpack.c.b16 %v3974, %v3970
    %v4479 = vpack.c.b16 %v3975, %v3971
    %v4480 = vpack.c.b16 %v3976, %v3972
    %v4481 = vpack.c.b16 %v3977, %v3973
    %v4482 = vpack.c.b16 %v3982, %v3978
    %v4483 = vpack.c.b16 %v3983, %v3979
    %v4484 = vpack.c.b16 %v3984, %v3980
    %v4485 = vpack.c.b16 %v3985, %v3981
    %v4486 = vpack.c.b16 %v3990, %v3986
    %v4487 = vpack.c.b16 %v3991, %v3987
    %v4488 = vpack.c.b16 %v3992, %v3988
    %v4489 = vpack.c.b16 %v3993, %v3989
    %v4490 = vpack.c.b16 %v3998, %v3994
    %v4491 = vpack.c.b16 %v3999, %v3995
    %v4492 = vpack.c.b16 %v4000, %v3996
    %v4493 = vpack.c.b16 %v4001, %v3997
    %v4494 = vpack.c.b16 %v4006, %v4002
    %v4495 = vpack.c.b16 %v4007, %v4003
    %v4496 = vpack.c.b16 %v4008, %v4004
    %v4497 = vpack.c.b16 %v4009, %v4005
    %v4498 = vpack.c.b16 %v4014, %v4010
    %v4499 = vpack.c.b16 %v4015, %v4011
    %v4500 = vpack.c.b16 %v4016, %v4012
    %v4501 = vpack.c.b16 %v4017, %v4013
    %v4502 = vpack.c.b16 %v4022, %v4018
    %v4503 = vpack.c.b16 %v4023, %v4019
    %v4504 = vpack.c.b16 %v4024, %v4020
    %v4505 = vpack.c.b16 %v4025, %v4021
    %v4506 = vpack.c.b16 %v4030, %v4026
    %v4507 = vpack.c.b16 %v4031, %v4027
    %v4508 = vpack.c.b16 %v4032, %v4028
    %v4509 = vpack.c.b16 %v4033, %v4029
    %v4510 = vpack.c.b16 %v4038, %v4034
    %v4511 = vpack.c.b16 %v4039, %v4035
    %v4512 = vpack.c.b16 %v4040, %v4036
    %v4513 = vpack.c.b16 %v4041, %v4037
    %v4514 = vpack.c.b16 %v4046, %v4042
    %v4515 = vpack.c.b16 %v4047, %v4043
    %v4516 = vpack.c.b16 %v4048, %v4044
    %v4517 = vpack.c.b16 %v4049, %v4045
    %v4518 = vpack.c.b16 %v4054, %v4050
    %v4519 = vpack.c.b16 %v4055, %v4051
    %v4520 = vpack.c.b16 %v4056, %v4052
    %v4521 = vpack.c.b16 %v4057, %v4053
    %v4522 = vpack.c.b16 %v4062, %v4058
    %v4523 = vpack.c.b16 %v4063, %v4059
    %v4524 = vpack.c.b16 %v4064, %v4060
    %v4525 = vpack.c.b16 %v4065, %v4061
    %v4526 = vpack.c.b16 %v4070, %v4066
    %v4527 = vpack.c.b16 %v4071, %v4067
    %v4528 = vpack.c.b16 %v4072, %v4068
    %v4529 = vpack.c.b16 %v4073, %v4069
    %v4530 = vpack.c.b16 %v4078, %v4074
    %v4531 = vpack.c.b16 %v4079, %v4075
    %v4532 = vpack.c.b16 %v4080, %v4076
    %v4533 = vpack.c.b16 %v4081, %v4077
    %v4534 = vpack.c.b16 %v4086, %v4082
    %v4535 = vpack.c.b16 %v4087, %v4083
    %v4536 = vpack.c.b16 %v4088, %v4084
    %v4537 = vpack.c.b16 %v4089, %v4085
    %v4538 = vpack.c.b16 %v4094, %v4090
    %v4539 = vpack.c.b16 %v4095, %v4091
    %v4540 = vpack.c.b16 %v4096, %v4092
    %v4541 = vpack.c.b16 %v4097, %v4093
    %v4542 = vpack.c.b16 %v4102, %v4098
    %v4543 = vpack.c.b16 %v4103, %v4099
    %v4544 = vpack.c.b16 %v4104, %v4100
    %v4545 = vpack.c.b16 %v4105, %v4101
    %v4546 = vpack.c.b16 %v4110, %v4106
    %v4547 = vpack.c.b16 %v4111, %v4107
    %v4548 = vpack.c.b16 %v4112, %v4108
    %v4549 = vpack.c.b16 %v4113, %v4109
    %v4550 = vpack.c.b16 %v4118, %v4114
    %v4551 = vpack.c.b16 %v4119, %v4115
    %v4552 = vpack.c.b16 %v4120, %v4116
    %v4553 = vpack.c.b16 %v4121, %v4117
    %v4554 = vpack.c.b16 %v4126, %v4122
    %v4555 = vpack.c.b16 %v4127, %v4123
    %v4556 = vpack.c.b16 %v4128, %v4124
    %v4557 = vpack.c.b16 %v4129, %v4125
    %v4558 = vpack.c.b16 %v4134, %v4130
    %v4559 = vpack.c.b16 %v4135, %v4131
    %v4560 = vpack.c.b16 %v4136, %v4132
    %v4561 = vpack.c.b16 %v4137, %v4133
    %v4562 = vpack.c.b16 %v4142, %v4138
    %v4563 = vpack.c.b16 %v4143, %v4139
    %v4564 = vpack.c.b16 %v4144, %v4140
    %v4565 = vpack.c.b16 %v4145, %v4141
    %v4566 = vpack.c.b16 %v4150, %v4146
    %v4567 = vpack.c.b16 %v4151, %v4147
    %v4568 = vpack.c.b16 %v4152, %v4148
    %v4569 = vpack.c.b16 %v4153, %v4149
    %v4570 = vpack.c.b16 %v4158, %v4154
    %v4571 = vpack.c.b16 %v4159, %v4155
    %v4572 = vpack.c.b16 %v4160, %v4156
    %v4573 = vpack.c.b16 %v4161, %v4157
    %v4574 = vpack.c.b16 %v4166, %v4162
    %v4575 = vpack.c.b16 %v4167, %v4163
    %v4576 = vpack.c.b16 %v4168, %v4164
    %v4577 = vpack.c.b16 %v4169, %v4165
    %v4578 = vpack.c.b16 %v4174, %v4170
    %v4579 = vpack.c.b16 %v4175, %v4171
    %v4580 = vpack.c.b16 %v4176, %v4172
    %v4581 = vpack.c.b16 %v4177, %v4173
    %v4582 = vpack.c.b16 %v4182, %v4178
    %v4583 = vpack.c.b16 %v4183, %v4179
    %v4584 = vpack.c.b16 %v4184, %v4180
    %v4585 = vpack.c.b16 %v4185, %v4181
    %v4586 = vpack.c.b16 %v4190, %v4186
    %v4587 = vpack.c.b16 %v4191, %v4187
    %v4588 = vpack.c.b16 %v4192, %v4188
    %v4589 = vpack.c.b16 %v4193, %v4189
    %v4590 = vpack.c.b16 %v4198, %v4194
    %v4591 = vpack.c.b16 %v4199, %v4195
    %v4592 = vpack.c.b16 %v4200, %v4196
    %v4593 = vpack.c.b16 %v4201, %v4197
    %v4594 = vpack.c.b16 %v4206, %v4202
    %v4595 = vpack.c.b16 %v4207, %v4203
    %v4596 = vpack.c.b16 %v4208, %v4204
    %v4597 = vpack.c.b16 %v4209, %v4205
    %v4598 = vpack.c.b16 %v4214, %v4210
    %v4599 = vpack.c.b16 %v4215, %v4211
    %v4600 = vpack.c.b16 %v4216, %v4212
    %v4601 = vpack.c.b16 %v4217, %v4213
    %v4602 = vpack.c.b16 %v4222, %v4218
    %v4603 = vpack.c.b16 %v4223, %v4219
    %v4604 = vpack.c.b16 %v4224, %v4220
    %v4605 = vpack.c.b16 %v4225, %v4221
    %v4606 = vpack.c.b16 %v4230, %v4226
    %v4607 = vpack.c.b16 %v4231, %v4227
    %v4608 = vpack.c.b16 %v4232, %v4228
    %v4609 = vpack.c.b16 %v4233, %v4229
    %v4610 = vpack.c.b16 %v4238, %v4234
    %v4611 = vpack.c.b16 %v4239, %v4235
    %v4612 = vpack.c.b16 %v4240, %v4236
    %v4613 = vpack.c.b16 %v4241, %v4237
    %v4614 = vpack.c.b16 %v4246, %v4242
    %v4615 = vpack.c.b16 %v4247, %v4243
    %v4616 = vpack.c.b16 %v4248, %v4244
    %v4617 = vpack.c.b16 %v4249, %v4245
    %v4618 = vpack.c.b16 %v4254, %v4250
    %v4619 = vpack.c.b16 %v4255, %v4251
    %v4620 = vpack.c.b16 %v4256, %v4252
    %v4621 = vpack.c.b16 %v4257, %v4253
    %v4622 = vpack.c.b16 %v4262, %v4258
    %v4623 = vpack.c.b16 %v4263, %v4259
    %v4624 = vpack.c.b16 %v4264, %v4260
    %v4625 = vpack.c.b16 %v4265, %v4261
    %v4626 = vpack.c.b16 %v4270, %v4266
    %v4627 = vpack.c.b16 %v4271, %v4267
    %v4628 = vpack.c.b16 %v4272, %v4268
    %v4629 = vpack.c.b16 %v4273, %v4269
    %v4630 = vpack.c.b16 %v4278, %v4274
    %v4631 = vpack.c.b16 %v4279, %v4275
    %v4632 = vpack.c.b16 %v4280, %v4276
    %v4633 = vpack.c.b16 %v4281, %v4277
    %v4634 = vpack.c.b16 %v4286, %v4282
    %v4635 = vpack.c.b16 %v4287, %v4283
    %v4636 = vpack.c.b16 %v4288, %v4284
    %v4637 = vpack.c.b16 %v4289, %v4285
    %v4638 = vpack.c.b16 %v4294, %v4290
    %v4639 = vpack.c.b16 %v4295, %v4291
    %v4640 = vpack.c.b16 %v4296, %v4292
    %v4641 = vpack.c.b16 %v4297, %v4293
    %v4642 = vpack.c.b16 %v4302, %v4298
    %v4643 = vpack.c.b16 %v4303, %v4299
    %v4644 = vpack.c.b16 %v4304, %v4300
    %v4645 = vpack.c.b16 %v4305, %v4301
    %v4646 = vpack.c.b16 %v4310, %v4306
    %v4647 = vpack.c.b16 %v4311, %v4307
    %v4648 = vpack.c.b16 %v4312, %v4308
    %v4649 = vpack.c.b16 %v4313, %v4309
    %v4650 = vpack.c.b16 %v4318, %v4314
    %v4651 = vpack.c.b16 %v4319, %v4315
    %v4652 = vpack.c.b16 %v4320, %v4316
    %v4653 = vpack.c.b16 %v4321, %v4317
    %v4654 = vpack.c.b16 %v4326, %v4322
    %v4655 = vpack.c.b16 %v4327, %v4323
    %v4656 = vpack.c.b16 %v4328, %v4324
    %v4657 = vpack.c.b16 %v4329, %v4325
    %v4658 = vpack.c.b16 %v4334, %v4330
    %v4659 = vpack.c.b16 %v4335, %v4331
    %v4660 = vpack.c.b16 %v4336, %v4332
    %v4661 = vpack.c.b16 %v4337, %v4333
    %v4662 = vpack.c.b16 %v4342, %v4338
    %v4663 = vpack.c.b16 %v4343, %v4339
    %v4664 = vpack.c.b16 %v4344, %v4340
    %v4665 = vpack.c.b16 %v4345, %v4341
    %v4666 = vpack.c.b16 %v4350, %v4346
    %v4667 = vpack.c.b16 %v4351, %v4347
    %v4668 = vpack.c.b16 %v4352, %v4348
    %v4669 = vpack.c.b16 %v4353, %v4349
    %v4670 = vpack.c.b16 %v4358, %v4354
    %v4671 = vpack.c.b16 %v4359, %v4355
    %v4672 = vpack.c.b16 %v4360, %v4356
    %v4673 = vpack.c.b16 %v4361, %v4357
    %v4674 = vpack.c.b16 %v4366, %v4362
    %v4675 = vpack.c.b16 %v4367, %v4363
    %v4676 = vpack.c.b16 %v4368, %v4364
    %v4677 = vpack.c.b16 %v4369, %v4365
    %v4678 = vpack.c.b16 %v4374, %v4370
    %v4679 = vpack.c.b16 %v4375, %v4371
    %v4680 = vpack.c.b16 %v4376, %v4372
    %v4681 = vpack.c.b16 %v4377, %v4373
    %v4682 = vpack.c.b16 %v4382, %v4378
    %v4683 = vpack.c.b16 %v4383, %v4379
    %v4684 = vpack.c.b16 %v4384, %v4380
    %v4685 = vpack.c.b16 %v4385, %v4381
    %v4686 = vpack.c.b16 %v4390, %v4386
    %v4687 = vpack.c.b16 %v4391, %v4387
    %v4688 = vpack.c.b16 %v4392, %v4388
    %v4689 = vpack.c.b16 %v4393, %v4389
    %v4690 = vpack.c.b16 %v4398, %v4394
    %v4691 = vpack.c.b16 %v4399, %v4395
    %v4692 = vpack.c.b16 %v4400, %v4396
    %v4693 = vpack.c.b16 %v4401, %v4397
    %v4694 = vpack.c.b16 %v4406, %v4402
    %v4695 = vpack.c.b16 %v4407, %v4403
    %v4696 = vpack.c.b16 %v4408, %v4404
    %v4697 = vpack.c.b16 %v4409, %v4405
    %v4698 = vpack.c.b16 %v4414, %v4410
    %v4699 = vpack.c.b16 %v4415, %v4411
    %v4700 = vpack.c.b16 %v4416, %v4412
    %v4701 = vpack.c.b16 %v4417, %v4413
    %v4702 = vpack.c.b16 %v4422, %v4418
    %v4703 = vpack.c.b16 %v4423, %v4419
    %v4704 = vpack.c.b16 %v4424, %v4420
    %v4705 = vpack.c.b16 %v4425, %v4421
    %v4706 = vpack.c.b16 %v4430, %v4426
    %v4707 = vpack.c.b16 %v4431, %v4427
    %v4708 = vpack.c.b16 %v4432, %v4428
    %v4709 = vpack.c.b16 %v4433, %v4429
    %v4710 = vpack.c.b16 %v4438, %v4434
    %v4711 = vpack.c.b16 %v4439, %v4435
    %v4712 = vpack.c.b16 %v4440, %v4436
    %v4713 = vpack.c.b16 %v4441, %v4437
    %v4714 = vpack.c.b16 %v4446, %v4442
    %v4715 = vpack.c.b16 %v4447, %v4443
    %v4716 = vpack.c.b16 %v4448, %v4444
    %v4717 = vpack.c.b16 %v4449, %v4445
    %v4718 = vpack.c.b16 %v4454, %v4450
    %v4719 = vpack.c.b16 %v4455, %v4451
    %v4720 = vpack.c.b16 %v4456, %v4452
    %v4721 = vpack.c.b16 %v4457, %v4453
    %v4722 = vpack.c.b16 %v4462, %v4458
    %v4723 = vpack.c.b16 %v4463, %v4459
    %v4724 = vpack.c.b16 %v4464, %v4460
    %v4725 = vpack.c.b16 %v4465, %v4461
    %v4726 = vpack.c.b16 %v4470, %v4466
    %v4727 = vpack.c.b16 %v4471, %v4467
    %v4728 = vpack.c.b16 %v4472, %v4468
    %v4729 = vpack.c.b16 %v4473, %v4469
    %4986 = vmatpush.bf16.msra.mxu0 %v4502
    %4987 = vmatpush.bf16.msra.mxu0 %v4498
    %4988 = vmatpush.bf16.msra.mxu0 %v4494
    %4989 = vmatpush.bf16.msra.mxu0 %v4490
    %4990 = vmatpush.bf16.msra.mxu0 %v4486
    %4991 = vmatpush.bf16.msra.mxu0 %v4482
    %4992 = vmatpush.bf16.msra.mxu0 %v4478
    %4993 = vmatpush.bf16.msra.mxu0 %v4474
    %4994 = vmatmul.bf16.gmra.mxu0 %v3432
    %v4995 = vpop.f32.mrf.mxu0
    %v4996 = vadd.f32 %v3698, %v4995
    %v4997 = vpop.f32.mrf.mxu0
    %4998 = vdwg.mxu0
    %4999 = vmatpush.bf16.msra.mxu0 %v4534
    %5000 = vmatpush.bf16.msra.mxu0 %v4530
    %5001 = vmatpush.bf16.msra.mxu0 %v4526
    %5002 = vmatpush.bf16.msra.mxu0 %v4522
    %5003 = vmatpush.bf16.msra.mxu0 %v4518
    %5004 = vmatpush.bf16.msra.mxu0 %v4514
    %5005 = vmatpush.bf16.msra.mxu0 %v4510
    %5006 = vmatpush.bf16.msra.mxu0 %v4506
    %5007 = vmatmul.bf16.gmra.mxu0 %v3433
    %v5008 = vpop.f32.mrf.mxu0
    %v5009 = vadd.f32 %v4996, %v5008
    %v5010 = vpop.f32.mrf.mxu0
    %5011 = vdwg.mxu0
    %5012 = vmatpush.bf16.msra.mxu0 %v4566
    %5013 = vmatpush.bf16.msra.mxu0 %v4562
    %5014 = vmatpush.bf16.msra.mxu0 %v4558
    %5015 = vmatpush.bf16.msra.mxu0 %v4554
    %5016 = vmatpush.bf16.msra.mxu0 %v4550
    %5017 = vmatpush.bf16.msra.mxu0 %v4546
    %5018 = vmatpush.bf16.msra.mxu0 %v4542
    %5019 = vmatpush.bf16.msra.mxu0 %v4538
    %5020 = vmatmul.bf16.gmra.mxu0 %v3434
    %v5021 = vpop.f32.mrf.mxu0
    %v5022 = vadd.f32 %v5009, %v5021
    %v5023 = vpop.f32.mrf.mxu0
    %5024 = vdwg.mxu0
    %5025 = vmatpush.bf16.msra.mxu0 %v4598
    %5026 = vmatpush.bf16.msra.mxu0 %v4594
    %5027 = vmatpush.bf16.msra.mxu0 %v4590
    %5028 = vmatpush.bf16.msra.mxu0 %v4586
    %5029 = vmatpush.bf16.msra.mxu0 %v4582
    %5030 = vmatpush.bf16.msra.mxu0 %v4578
    %5031 = vmatpush.bf16.msra.mxu0 %v4574
    %5032 = vmatpush.bf16.msra.mxu0 %v4570
    %5033 = vmatmul.bf16.gmra.mxu0 %v3435
    %v5034 = vpop.f32.mrf.mxu0
    %v5035 = vadd.f32 %v5022, %v5034
    %v5036 = vpop.f32.mrf.mxu0
    %5037 = vdwg.mxu0
    %5038 = vmatpush.bf16.msra.mxu0 %v4630
    %5039 = vmatpush.bf16.msra.mxu0 %v4626
    %5040 = vmatpush.bf16.msra.mxu0 %v4622
    %5041 = vmatpush.bf16.msra.mxu0 %v4618
    %5042 = vmatpush.bf16.msra.mxu0 %v4614
    %5043 = vmatpush.bf16.msra.mxu0 %v4610
    %5044 = vmatpush.bf16.msra.mxu0 %v4606
    %5045 = vmatpush.bf16.msra.mxu0 %v4602
    %5046 = vmatmul.bf16.gmra.mxu0 %v3436
    %v5047 = vpop.f32.mrf.mxu0
    %v5048 = vadd.f32 %v5035, %v5047
    %v5049 = vpop.f32.mrf.mxu0
    %5050 = vdwg.mxu0
    %5051 = vmatpush.bf16.msra.mxu0 %v4662
    %5052 = vmatpush.bf16.msra.mxu0 %v4658
    %5053 = vmatpush.bf16.msra.mxu0 %v4654
    %5054 = vmatpush.bf16.msra.mxu0 %v4650
    %5055 = vmatpush.bf16.msra.mxu0 %v4646
    %5056 = vmatpush.bf16.msra.mxu0 %v4642
    %5057 = vmatpush.bf16.msra.mxu0 %v4638
    %5058 = vmatpush.bf16.msra.mxu0 %v4634
    %5059 = vmatmul.bf16.gmra.mxu0 %v3437
    %v5060 = vpop.f32.mrf.mxu0
    %v5061 = vadd.f32 %v5048, %v5060
    %v5062 = vpop.f32.mrf.mxu0
    %5063 = vdwg.mxu0
    %5064 = vmatpush.bf16.msra.mxu0 %v4694
    %5065 = vmatpush.bf16.msra.mxu0 %v4690
    %5066 = vmatpush.bf16.msra.mxu0 %v4686
    %5067 = vmatpush.bf16.msra.mxu0 %v4682
    %5068 = vmatpush.bf16.msra.mxu0 %v4678
    %5069 = vmatpush.bf16.msra.mxu0 %v4674
    %5070 = vmatpush.bf16.msra.mxu0 %v4670
    %5071 = vmatpush.bf16.msra.mxu0 %v4666
    %5072 = vmatmul.bf16.gmra.mxu0 %v3438
    %v5073 = vpop.f32.mrf.mxu0
    %v5074 = vadd.f32 %v5061, %v5073
    %v5075 = vpop.f32.mrf.mxu0
    %5076 = vdwg.mxu0
    %5077 = vmatpush.bf16.msra.mxu0 %v4726
    %5078 = vmatpush.bf16.msra.mxu0 %v4722
    %5079 = vmatpush.bf16.msra.mxu0 %v4718
    %5080 = vmatpush.bf16.msra.mxu0 %v4714
    %5081 = vmatpush.bf16.msra.mxu0 %v4710
    %5082 = vmatpush.bf16.msra.mxu0 %v4706
    %5083 = vmatpush.bf16.msra.mxu0 %v4702
    %5084 = vmatpush.bf16.msra.mxu0 %v4698
    %5085 = vmatmul.bf16.gmra.mxu0 %v3439
    %v5086 = vpop.f32.mrf.mxu0
    %v5087 = vadd.f32 %v5074, %v5086
    %v5088 = vpop.f32.mrf.mxu0
    %5089 = vdwg.mxu0
    %5090 = vmatpush.bf16.msra.mxu0 %v4503
    %5091 = vmatpush.bf16.msra.mxu0 %v4499
    %5092 = vmatpush.bf16.msra.mxu0 %v4495
    %5093 = vmatpush.bf16.msra.mxu0 %v4491
    %5094 = vmatpush.bf16.msra.mxu0 %v4487
    %5095 = vmatpush.bf16.msra.mxu0 %v4483
    %5096 = vmatpush.bf16.msra.mxu0 %v4479
    %5097 = vmatpush.bf16.msra.mxu0 %v4475
    %5098 = vmatmul.bf16.gmra.mxu0 %v3432
    %v5099 = vpop.f32.mrf.mxu0
    %v5100 = vadd.f32 %v3699, %v5099
    %v5101 = vpop.f32.mrf.mxu0
    %5102 = vdwg.mxu0
    %5103 = vmatpush.bf16.msra.mxu0 %v4535
    %5104 = vmatpush.bf16.msra.mxu0 %v4531
    %5105 = vmatpush.bf16.msra.mxu0 %v4527
    %5106 = vmatpush.bf16.msra.mxu0 %v4523
    %5107 = vmatpush.bf16.msra.mxu0 %v4519
    %5108 = vmatpush.bf16.msra.mxu0 %v4515
    %5109 = vmatpush.bf16.msra.mxu0 %v4511
    %5110 = vmatpush.bf16.msra.mxu0 %v4507
    %5111 = vmatmul.bf16.gmra.mxu0 %v3433
    %v5112 = vpop.f32.mrf.mxu0
    %v5113 = vadd.f32 %v5100, %v5112
    %v5114 = vpop.f32.mrf.mxu0
    %5115 = vdwg.mxu0
    %5116 = vmatpush.bf16.msra.mxu0 %v4567
    %5117 = vmatpush.bf16.msra.mxu0 %v4563
    %5118 = vmatpush.bf16.msra.mxu0 %v4559
    %5119 = vmatpush.bf16.msra.mxu0 %v4555
    %5120 = vmatpush.bf16.msra.mxu0 %v4551
    %5121 = vmatpush.bf16.msra.mxu0 %v4547
    %5122 = vmatpush.bf16.msra.mxu0 %v4543
    %5123 = vmatpush.bf16.msra.mxu0 %v4539
    %5124 = vmatmul.bf16.gmra.mxu0 %v3434
    %v5125 = vpop.f32.mrf.mxu0
    %v5126 = vadd.f32 %v5113, %v5125
    %v5127 = vpop.f32.mrf.mxu0
    %5128 = vdwg.mxu0
    %5129 = vmatpush.bf16.msra.mxu0 %v4599
    %5130 = vmatpush.bf16.msra.mxu0 %v4595
    %5131 = vmatpush.bf16.msra.mxu0 %v4591
    %5132 = vmatpush.bf16.msra.mxu0 %v4587
    %5133 = vmatpush.bf16.msra.mxu0 %v4583
    %5134 = vmatpush.bf16.msra.mxu0 %v4579
    %5135 = vmatpush.bf16.msra.mxu0 %v4575
    %5136 = vmatpush.bf16.msra.mxu0 %v4571
    %5137 = vmatmul.bf16.gmra.mxu0 %v3435
    %v5138 = vpop.f32.mrf.mxu0
    %v5139 = vadd.f32 %v5126, %v5138
    %v5140 = vpop.f32.mrf.mxu0
    %5141 = vdwg.mxu0
    %5142 = vmatpush.bf16.msra.mxu0 %v4631
    %5143 = vmatpush.bf16.msra.mxu0 %v4627
    %5144 = vmatpush.bf16.msra.mxu0 %v4623
    %5145 = vmatpush.bf16.msra.mxu0 %v4619
    %5146 = vmatpush.bf16.msra.mxu0 %v4615
    %5147 = vmatpush.bf16.msra.mxu0 %v4611
    %5148 = vmatpush.bf16.msra.mxu0 %v4607
    %5149 = vmatpush.bf16.msra.mxu0 %v4603
    %5150 = vmatmul.bf16.gmra.mxu0 %v3436
    %v5151 = vpop.f32.mrf.mxu0
    %v5152 = vadd.f32 %v5139, %v5151
    %v5153 = vpop.f32.mrf.mxu0
    %5154 = vdwg.mxu0
    %5155 = vmatpush.bf16.msra.mxu0 %v4663
    %5156 = vmatpush.bf16.msra.mxu0 %v4659
    %5157 = vmatpush.bf16.msra.mxu0 %v4655
    %5158 = vmatpush.bf16.msra.mxu0 %v4651
    %5159 = vmatpush.bf16.msra.mxu0 %v4647
    %5160 = vmatpush.bf16.msra.mxu0 %v4643
    %5161 = vmatpush.bf16.msra.mxu0 %v4639
    %5162 = vmatpush.bf16.msra.mxu0 %v4635
    %5163 = vmatmul.bf16.gmra.mxu0 %v3437
    %v5164 = vpop.f32.mrf.mxu0
    %v5165 = vadd.f32 %v5152, %v5164
    %v5166 = vpop.f32.mrf.mxu0
    %5167 = vdwg.mxu0
    %5168 = vmatpush.bf16.msra.mxu0 %v4695
    %5169 = vmatpush.bf16.msra.mxu0 %v4691
    %5170 = vmatpush.bf16.msra.mxu0 %v4687
    %5171 = vmatpush.bf16.msra.mxu0 %v4683
    %5172 = vmatpush.bf16.msra.mxu0 %v4679
    %5173 = vmatpush.bf16.msra.mxu0 %v4675
    %5174 = vmatpush.bf16.msra.mxu0 %v4671
    %5175 = vmatpush.bf16.msra.mxu0 %v4667
    %5176 = vmatmul.bf16.gmra.mxu0 %v3438
    %v5177 = vpop.f32.mrf.mxu0
    %v5178 = vadd.f32 %v5165, %v5177
    %v5179 = vpop.f32.mrf.mxu0
    %5180 = vdwg.mxu0
    %5181 = vmatpush.bf16.msra.mxu0 %v4727
    %5182 = vmatpush.bf16.msra.mxu0 %v4723
    %5183 = vmatpush.bf16.msra.mxu0 %v4719
    %5184 = vmatpush.bf16.msra.mxu0 %v4715
    %5185 = vmatpush.bf16.msra.mxu0 %v4711
    %5186 = vmatpush.bf16.msra.mxu0 %v4707
    %5187 = vmatpush.bf16.msra.mxu0 %v4703
    %5188 = vmatpush.bf16.msra.mxu0 %v4699
    %5189 = vmatmul.bf16.gmra.mxu0 %v3439
    %v5190 = vpop.f32.mrf.mxu0
    %v5191 = vadd.f32 %v5178, %v5190
    %v5192 = vpop.f32.mrf.mxu0
    %5193 = vdwg.mxu0
    %5194 = vmatpush.bf16.msra.mxu0 %v4504
    %5195 = vmatpush.bf16.msra.mxu0 %v4500
    %5196 = vmatpush.bf16.msra.mxu0 %v4496
    %5197 = vmatpush.bf16.msra.mxu0 %v4492
    %5198 = vmatpush.bf16.msra.mxu0 %v4488
    %5199 = vmatpush.bf16.msra.mxu0 %v4484
    %5200 = vmatpush.bf16.msra.mxu0 %v4480
    %5201 = vmatpush.bf16.msra.mxu0 %v4476
    %5202 = vmatmul.bf16.gmra.mxu0 %v3432
    %v5203 = vpop.f32.mrf.mxu0
    %v5204 = vadd.f32 %v3700, %v5203
    %v5205 = vpop.f32.mrf.mxu0
    %5206 = vdwg.mxu0
    %5207 = vmatpush.bf16.msra.mxu0 %v4536
    %5208 = vmatpush.bf16.msra.mxu0 %v4532
    %5209 = vmatpush.bf16.msra.mxu0 %v4528
    %5210 = vmatpush.bf16.msra.mxu0 %v4524
    %5211 = vmatpush.bf16.msra.mxu0 %v4520
    %5212 = vmatpush.bf16.msra.mxu0 %v4516
    %5213 = vmatpush.bf16.msra.mxu0 %v4512
    %5214 = vmatpush.bf16.msra.mxu0 %v4508
    %5215 = vmatmul.bf16.gmra.mxu0 %v3433
    %v5216 = vpop.f32.mrf.mxu0
    %v5217 = vadd.f32 %v5204, %v5216
    %v5218 = vpop.f32.mrf.mxu0
    %5219 = vdwg.mxu0
    %5220 = vmatpush.bf16.msra.mxu0 %v4568
    %5221 = vmatpush.bf16.msra.mxu0 %v4564
    %5222 = vmatpush.bf16.msra.mxu0 %v4560
    %5223 = vmatpush.bf16.msra.mxu0 %v4556
    %5224 = vmatpush.bf16.msra.mxu0 %v4552
    %5225 = vmatpush.bf16.msra.mxu0 %v4548
    %5226 = vmatpush.bf16.msra.mxu0 %v4544
    %5227 = vmatpush.bf16.msra.mxu0 %v4540
    %5228 = vmatmul.bf16.gmra.mxu0 %v3434
    %v5229 = vpop.f32.mrf.mxu0
    %v5230 = vadd.f32 %v5217, %v5229
    %v5231 = vpop.f32.mrf.mxu0
    %5232 = vdwg.mxu0
    %5233 = vmatpush.bf16.msra.mxu0 %v4600
    %5234 = vmatpush.bf16.msra.mxu0 %v4596
    %5235 = vmatpush.bf16.msra.mxu0 %v4592
    %5236 = vmatpush.bf16.msra.mxu0 %v4588
    %5237 = vmatpush.bf16.msra.mxu0 %v4584
    %5238 = vmatpush.bf16.msra.mxu0 %v4580
    %5239 = vmatpush.bf16.msra.mxu0 %v4576
    %5240 = vmatpush.bf16.msra.mxu0 %v4572
    %5241 = vmatmul.bf16.gmra.mxu0 %v3435
    %v5242 = vpop.f32.mrf.mxu0
    %v5243 = vadd.f32 %v5230, %v5242
    %v5244 = vpop.f32.mrf.mxu0
    %5245 = vdwg.mxu0
    %5246 = vmatpush.bf16.msra.mxu0 %v4632
    %5247 = vmatpush.bf16.msra.mxu0 %v4628
    %5248 = vmatpush.bf16.msra.mxu0 %v4624
    %5249 = vmatpush.bf16.msra.mxu0 %v4620
    %5250 = vmatpush.bf16.msra.mxu0 %v4616
    %5251 = vmatpush.bf16.msra.mxu0 %v4612
    %5252 = vmatpush.bf16.msra.mxu0 %v4608
    %5253 = vmatpush.bf16.msra.mxu0 %v4604
    %5254 = vmatmul.bf16.gmra.mxu0 %v3436
    %v5255 = vpop.f32.mrf.mxu0
    %v5256 = vadd.f32 %v5243, %v5255
    %v5257 = vpop.f32.mrf.mxu0
    %5258 = vdwg.mxu0
    %5259 = vmatpush.bf16.msra.mxu0 %v4664
    %5260 = vmatpush.bf16.msra.mxu0 %v4660
    %5261 = vmatpush.bf16.msra.mxu0 %v4656
    %5262 = vmatpush.bf16.msra.mxu0 %v4652
    %5263 = vmatpush.bf16.msra.mxu0 %v4648
    %5264 = vmatpush.bf16.msra.mxu0 %v4644
    %5265 = vmatpush.bf16.msra.mxu0 %v4640
    %5266 = vmatpush.bf16.msra.mxu0 %v4636
    %5267 = vmatmul.bf16.gmra.mxu0 %v3437
    %v5268 = vpop.f32.mrf.mxu0
    %v5269 = vadd.f32 %v5256, %v5268
    %v5270 = vpop.f32.mrf.mxu0
    %5271 = vdwg.mxu0
    %5272 = vmatpush.bf16.msra.mxu0 %v4696
    %5273 = vmatpush.bf16.msra.mxu0 %v4692
    %5274 = vmatpush.bf16.msra.mxu0 %v4688
    %5275 = vmatpush.bf16.msra.mxu0 %v4684
    %5276 = vmatpush.bf16.msra.mxu0 %v4680
    %5277 = vmatpush.bf16.msra.mxu0 %v4676
    %5278 = vmatpush.bf16.msra.mxu0 %v4672
    %5279 = vmatpush.bf16.msra.mxu0 %v4668
    %5280 = vmatmul.bf16.gmra.mxu0 %v3438
    %v5281 = vpop.f32.mrf.mxu0
    %v5282 = vadd.f32 %v5269, %v5281
    %v5283 = vpop.f32.mrf.mxu0
    %5284 = vdwg.mxu0
    %5285 = vmatpush.bf16.msra.mxu0 %v4728
    %5286 = vmatpush.bf16.msra.mxu0 %v4724
    %5287 = vmatpush.bf16.msra.mxu0 %v4720
    %5288 = vmatpush.bf16.msra.mxu0 %v4716
    %5289 = vmatpush.bf16.msra.mxu0 %v4712
    %5290 = vmatpush.bf16.msra.mxu0 %v4708
    %5291 = vmatpush.bf16.msra.mxu0 %v4704
    %5292 = vmatpush.bf16.msra.mxu0 %v4700
    %5293 = vmatmul.bf16.gmra.mxu0 %v3439
    %v5294 = vpop.f32.mrf.mxu0
    %v5295 = vadd.f32 %v5282, %v5294
    %v5296 = vpop.f32.mrf.mxu0
    %5297 = vdwg.mxu0
    %5298 = vmatpush.bf16.msra.mxu0 %v4505
    %5299 = vmatpush.bf16.msra.mxu0 %v4501
    %5300 = vmatpush.bf16.msra.mxu0 %v4497
    %5301 = vmatpush.bf16.msra.mxu0 %v4493
    %5302 = vmatpush.bf16.msra.mxu0 %v4489
    %5303 = vmatpush.bf16.msra.mxu0 %v4485
    %5304 = vmatpush.bf16.msra.mxu0 %v4481
    %5305 = vmatpush.bf16.msra.mxu0 %v4477
    %5306 = vmatmul.bf16.gmra.mxu0 %v3432
    %v5307 = vpop.f32.mrf.mxu0
    %v5308 = vadd.f32 %v3701, %v5307
    %v5309 = vpop.f32.mrf.mxu0
    %5310 = vdwg.mxu0
    %5311 = vmatpush.bf16.msra.mxu0 %v4537
    %5312 = vmatpush.bf16.msra.mxu0 %v4533
    %5313 = vmatpush.bf16.msra.mxu0 %v4529
    %5314 = vmatpush.bf16.msra.mxu0 %v4525
    %5315 = vmatpush.bf16.msra.mxu0 %v4521
    %5316 = vmatpush.bf16.msra.mxu0 %v4517
    %5317 = vmatpush.bf16.msra.mxu0 %v4513
    %5318 = vmatpush.bf16.msra.mxu0 %v4509
    %5319 = vmatmul.bf16.gmra.mxu0 %v3433
    %v5320 = vpop.f32.mrf.mxu0
    %v5321 = vadd.f32 %v5308, %v5320
    %v5322 = vpop.f32.mrf.mxu0
    %5323 = vdwg.mxu0
    %5324 = vmatpush.bf16.msra.mxu0 %v4569
    %5325 = vmatpush.bf16.msra.mxu0 %v4565
    %5326 = vmatpush.bf16.msra.mxu0 %v4561
    %5327 = vmatpush.bf16.msra.mxu0 %v4557
    %5328 = vmatpush.bf16.msra.mxu0 %v4553
    %5329 = vmatpush.bf16.msra.mxu0 %v4549
    %5330 = vmatpush.bf16.msra.mxu0 %v4545
    %5331 = vmatpush.bf16.msra.mxu0 %v4541
    %5332 = vmatmul.bf16.gmra.mxu0 %v3434
    %v5333 = vpop.f32.mrf.mxu0
    %v5334 = vadd.f32 %v5321, %v5333
    %v5335 = vpop.f32.mrf.mxu0
    %5336 = vdwg.mxu0
    %5337 = vmatpush.bf16.msra.mxu0 %v4601
    %5338 = vmatpush.bf16.msra.mxu0 %v4597
    %5339 = vmatpush.bf16.msra.mxu0 %v4593
    %5340 = vmatpush.bf16.msra.mxu0 %v4589
    %5341 = vmatpush.bf16.msra.mxu0 %v4585
    %5342 = vmatpush.bf16.msra.mxu0 %v4581
    %5343 = vmatpush.bf16.msra.mxu0 %v4577
    %5344 = vmatpush.bf16.msra.mxu0 %v4573
    %5345 = vmatmul.bf16.gmra.mxu0 %v3435
    %v5346 = vpop.f32.mrf.mxu0
    %v5347 = vadd.f32 %v5334, %v5346
    %v5348 = vpop.f32.mrf.mxu0
    %5349 = vdwg.mxu0
    %5350 = vmatpush.bf16.msra.mxu0 %v4633
    %5351 = vmatpush.bf16.msra.mxu0 %v4629
    %5352 = vmatpush.bf16.msra.mxu0 %v4625
    %5353 = vmatpush.bf16.msra.mxu0 %v4621
    %5354 = vmatpush.bf16.msra.mxu0 %v4617
    %5355 = vmatpush.bf16.msra.mxu0 %v4613
    %5356 = vmatpush.bf16.msra.mxu0 %v4609
    %5357 = vmatpush.bf16.msra.mxu0 %v4605
    %5358 = vmatmul.bf16.gmra.mxu0 %v3436
    %v5359 = vpop.f32.mrf.mxu0
    %v5360 = vadd.f32 %v5347, %v5359
    %v5361 = vpop.f32.mrf.mxu0
    %5362 = vdwg.mxu0
    %5363 = vmatpush.bf16.msra.mxu0 %v4665
    %5364 = vmatpush.bf16.msra.mxu0 %v4661
    %5365 = vmatpush.bf16.msra.mxu0 %v4657
    %5366 = vmatpush.bf16.msra.mxu0 %v4653
    %5367 = vmatpush.bf16.msra.mxu0 %v4649
    %5368 = vmatpush.bf16.msra.mxu0 %v4645
    %5369 = vmatpush.bf16.msra.mxu0 %v4641
    %5370 = vmatpush.bf16.msra.mxu0 %v4637
    %5371 = vmatmul.bf16.gmra.mxu0 %v3437
    %v5372 = vpop.f32.mrf.mxu0
    %v5373 = vadd.f32 %v5360, %v5372
    %v5374 = vpop.f32.mrf.mxu0
    %5375 = vdwg.mxu0
    %5376 = vmatpush.bf16.msra.mxu0 %v4697
    %5377 = vmatpush.bf16.msra.mxu0 %v4693
    %5378 = vmatpush.bf16.msra.mxu0 %v4689
    %5379 = vmatpush.bf16.msra.mxu0 %v4685
    %5380 = vmatpush.bf16.msra.mxu0 %v4681
    %5381 = vmatpush.bf16.msra.mxu0 %v4677
    %5382 = vmatpush.bf16.msra.mxu0 %v4673
    %5383 = vmatpush.bf16.msra.mxu0 %v4669
    %5384 = vmatmul.bf16.gmra.mxu0 %v3438
    %v5385 = vpop.f32.mrf.mxu0
    %v5386 = vadd.f32 %v5373, %v5385
    %v5387 = vpop.f32.mrf.mxu0
    %5388 = vdwg.mxu0
    %5389 = vmatpush.bf16.msra.mxu0 %v4729
    %5390 = vmatpush.bf16.msra.mxu0 %v4725
    %5391 = vmatpush.bf16.msra.mxu0 %v4721
    %5392 = vmatpush.bf16.msra.mxu0 %v4717
    %5393 = vmatpush.bf16.msra.mxu0 %v4713
    %5394 = vmatpush.bf16.msra.mxu0 %v4709
    %5395 = vmatpush.bf16.msra.mxu0 %v4705
    %5396 = vmatpush.bf16.msra.mxu0 %v4701
    %5397 = vmatmul.bf16.gmra.mxu0 %v3439
    %v5398 = vpop.f32.mrf.mxu0
    %v5399 = vadd.f32 %v5386, %v5398
    %v5400 = vpop.f32.mrf.mxu0
    %5401 = vdwg.mxu0
    %s5402 = scalar_lea.vmem %s4, 1
    %v5403 = vld [vmem:[%s5402] ss:$4 sm:$0xf]
    %s5404 = scalar_lea.vmem %s4, 2
    %v5405 = vld [vmem:[%s5404] ss:$4 sm:$0xf]
    %s5406 = scalar_lea.vmem %s4, 3
    %v5407 = vld [vmem:[%s5406] ss:$4 sm:$0xf]
    %v5409 = vperm.slane %v5403, 0
    %v5410 = vperm.slane %v5403, 1
    %v5411 = vperm.slane %v5403, 2
    %v5412 = vperm.slane %v5403, 3
    %v5417 = vadd.f32 %v5087, %v5409
    %v5418 = vadd.f32 %v5191, %v5410
    %v5419 = vadd.f32 %v5295, %v5411
    %v5420 = vadd.f32 %v5399, %v5412
    %v5422 = vperm.slane %v5405, 0
    %v5423 = vperm.slane %v5405, 1
    %v5424 = vperm.slane %v5405, 2
    %v5425 = vperm.slane %v5405, 3
    %v5430 = vmul.f32 %v5087, %v5422
    %v5431 = vmul.f32 %v5191, %v5423
    %v5432 = vmul.f32 %v5295, %v5424
    %v5433 = vmul.f32 %v5399, %v5425
    %v5434 = vxor.u32 %v5430, 2147483648
    %v5435 = vxor.u32 %v5431, 2147483648
    %v5436 = vxor.u32 %v5432, 2147483648
    %v5437 = vxor.u32 %v5433, 2147483648
    %v5438 = vmul.f32 %v5434, 1.442695
    %v5439 = vpow.pop %v5438
    %v5440 = vmul.f32 %v5435, 1.442695
    %v5441 = vpow.pop %v5440
    %v5442 = vmul.f32 %v5436, 1.442695
    %v5443 = vpow.pop %v5442
    %v5444 = vmul.f32 %v5437, 1.442695
    %v5445 = vpow.pop %v5444
    %v5446 = vadd.f32 %v5439, 1.0
    %v5447 = vadd.f32 %v5441, 1.0
    %v5448 = vadd.f32 %v5443, 1.0
    %v5449 = vadd.f32 %v5445, 1.0
    %v5450 = vrcp.pop %v5446
    %v5451 = vmul.f32 %v5446, %v5450
    %v5452 = vsub.f32 1.0, %v5451
    %v5453 = vmul.f32 %v5450, %v5452
    %v5454 = vadd.f32 %v5450, %v5453
    %vm5455 = vweird.f32 %v5446
    %vm5456 = vweird.f32 %v5450
    %vm5457 = vmor %vm5455, %vm5456
    %v5458 = vsel %vm5457, %v5450, %v5454
    %v5459 = vand.u32 2147483647, %v5446
    %vm5460 = vcmp.eq.f32.partialorder %v5459, 8.507059e+37
    %v5461 = vand.u32 %v5446, 2147483648
    %v5462 = vor.u32 1.1754944e-38, %v5461
    %v5463 = vsel %vm5460, %v5462, %v5458
    %v5464 = vmul.f32 1.0, %v5463
    %v5465 = vrcp.pop %v5447
    %v5466 = vmul.f32 %v5447, %v5465
    %v5467 = vsub.f32 1.0, %v5466
    %v5468 = vmul.f32 %v5465, %v5467
    %v5469 = vadd.f32 %v5465, %v5468
    %vm5470 = vweird.f32 %v5447
    %vm5471 = vweird.f32 %v5465
    %vm5472 = vmor %vm5470, %vm5471
    %v5473 = vsel %vm5472, %v5465, %v5469
    %v5474 = vand.u32 2147483647, %v5447
    %vm5475 = vcmp.eq.f32.partialorder %v5474, 8.507059e+37
    %v5476 = vand.u32 %v5447, 2147483648
    %v5477 = vor.u32 1.1754944e-38, %v5476
    %v5478 = vsel %vm5475, %v5477, %v5473
    %v5479 = vmul.f32 1.0, %v5478
    %v5480 = vrcp.pop %v5448
    %v5481 = vmul.f32 %v5448, %v5480
    %v5482 = vsub.f32 1.0, %v5481
    %v5483 = vmul.f32 %v5480, %v5482
    %v5484 = vadd.f32 %v5480, %v5483
    %vm5485 = vweird.f32 %v5448
    %vm5486 = vweird.f32 %v5480
    %vm5487 = vmor %vm5485, %vm5486
    %v5488 = vsel %vm5487, %v5480, %v5484
    %v5489 = vand.u32 2147483647, %v5448
    %vm5490 = vcmp.eq.f32.partialorder %v5489, 8.507059e+37
    %v5491 = vand.u32 %v5448, 2147483648
    %v5492 = vor.u32 1.1754944e-38, %v5491
    %v5493 = vsel %vm5490, %v5492, %v5488
    %v5494 = vmul.f32 1.0, %v5493
    %v5495 = vrcp.pop %v5449
    %v5496 = vmul.f32 %v5449, %v5495
    %v5497 = vsub.f32 1.0, %v5496
    %v5498 = vmul.f32 %v5495, %v5497
    %v5499 = vadd.f32 %v5495, %v5498
    %vm5500 = vweird.f32 %v5449
    %vm5501 = vweird.f32 %v5495
    %vm5502 = vmor %vm5500, %vm5501
    %v5503 = vsel %vm5502, %v5495, %v5499
    %v5504 = vand.u32 2147483647, %v5449
    %vm5505 = vcmp.eq.f32.partialorder %v5504, 8.507059e+37
    %v5506 = vand.u32 %v5449, 2147483648
    %v5507 = vor.u32 1.1754944e-38, %v5506
    %v5508 = vsel %vm5505, %v5507, %v5503
    %v5509 = vmul.f32 1.0, %v5508
    %v5510 = vmul.f32 %v5417, %v5464
    %v5511 = vmul.f32 %v5418, %v5479
    %v5512 = vmul.f32 %v5419, %v5494
    %v5513 = vmul.f32 %v5420, %v5509
    %v5515 = vperm.slane %v5407, 0
    %v5516 = vperm.slane %v5407, 1
    %v5517 = vperm.slane %v5407, 2
    %v5518 = vperm.slane %v5407, 3
    %v5523 = vsub.f32 %v5510, %v5515
    %v5524 = vsub.f32 %v5511, %v5516
    %v5525 = vsub.f32 %v5512, %v5517
    %v5526 = vsub.f32 %v5513, %v5518
    %v5527 = vpack.c.bf16 %v5523, %v5523
    %v5528 = vpack.c.bf16 %v5524, %v5524
    %v5529 = vpack.c.bf16 %v5525, %v5525
    %v5530 = vpack.c.bf16 %v5526, %v5526
    %v5531 = vld [vmem:[%s5] sm:$0xff]
    %v5532 = vld [vmem:[%s5 + $0x8] sm:$0xff]
    %v5533 = vld [vmem:[%s5 + $0x10] sm:$0xff]
    %v5534 = vld [vmem:[%s5 + $0x18] sm:$0xff]
    %v5535 = vld [vmem:[%s5 + $0x20] sm:$0xff]
    %v5536 = vld [vmem:[%s5 + $0x28] sm:$0xff]
    %v5537 = vld [vmem:[%s5 + $0x30] sm:$0xff]
    %v5538 = vld [vmem:[%s5 + $0x38] sm:$0xff]
    %v5539 = vld [vmem:[%s5 + $0x40] sm:$0xff]
    %v5540 = vld [vmem:[%s5 + $0x48] sm:$0xff]
    %v5541 = vld [vmem:[%s5 + $0x50] sm:$0xff]
    %v5542 = vld [vmem:[%s5 + $0x58] sm:$0xff]
    %v5543 = vld [vmem:[%s5 + $0x60] sm:$0xff]
    %v5544 = vld [vmem:[%s5 + $0x68] sm:$0xff]
    %v5545 = vld [vmem:[%s5 + $0x70] sm:$0xff]
    %v5546 = vld [vmem:[%s5 + $0x78] sm:$0xff]
    %v5547 = vld [vmem:[%s5 + $0x80] sm:$0xff]
    %v5548 = vld [vmem:[%s5 + $0x88] sm:$0xff]
    %v5549 = vld [vmem:[%s5 + $0x90] sm:$0xff]
    %v5550 = vld [vmem:[%s5 + $0x98] sm:$0xff]
    %v5551 = vld [vmem:[%s5 + $0xa0] sm:$0xff]
    %v5552 = vld [vmem:[%s5 + $0xa8] sm:$0xff]
    %v5553 = vld [vmem:[%s5 + $0xb0] sm:$0xff]
    %v5554 = vld [vmem:[%s5 + $0xb8] sm:$0xff]
    %v5555 = vld [vmem:[%s5 + $0xc0] sm:$0xff]
    %v5556 = vld [vmem:[%s5 + $0xc8] sm:$0xff]
    %v5557 = vld [vmem:[%s5 + $0xd0] sm:$0xff]
    %v5558 = vld [vmem:[%s5 + $0xd8] sm:$0xff]
    %v5559 = vld [vmem:[%s5 + $0xe0] sm:$0xff]
    %v5560 = vld [vmem:[%s5 + $0xe8] sm:$0xff]
    %v5561 = vld [vmem:[%s5 + $0xf0] sm:$0xff]
    %v5562 = vld [vmem:[%s5 + $0xf8] sm:$0xff]
    %v5563 = vld [vmem:[%s5 + $0x100] sm:$0xff]
    %v5564 = vld [vmem:[%s5 + $0x108] sm:$0xff]
    %v5565 = vld [vmem:[%s5 + $0x110] sm:$0xff]
    %v5566 = vld [vmem:[%s5 + $0x118] sm:$0xff]
    %v5567 = vld [vmem:[%s5 + $0x120] sm:$0xff]
    %v5568 = vld [vmem:[%s5 + $0x128] sm:$0xff]
    %v5569 = vld [vmem:[%s5 + $0x130] sm:$0xff]
    %v5570 = vld [vmem:[%s5 + $0x138] sm:$0xff]
    %v5571 = vld [vmem:[%s5 + $0x140] sm:$0xff]
    %v5572 = vld [vmem:[%s5 + $0x148] sm:$0xff]
    %v5573 = vld [vmem:[%s5 + $0x150] sm:$0xff]
    %v5574 = vld [vmem:[%s5 + $0x158] sm:$0xff]
    %v5575 = vld [vmem:[%s5 + $0x160] sm:$0xff]
    %v5576 = vld [vmem:[%s5 + $0x168] sm:$0xff]
    %v5577 = vld [vmem:[%s5 + $0x170] sm:$0xff]
    %v5578 = vld [vmem:[%s5 + $0x178] sm:$0xff]
    %v5579 = vld [vmem:[%s5 + $0x180] sm:$0xff]
    %v5580 = vld [vmem:[%s5 + $0x188] sm:$0xff]
    %v5581 = vld [vmem:[%s5 + $0x190] sm:$0xff]
    %v5582 = vld [vmem:[%s5 + $0x198] sm:$0xff]
    %v5583 = vld [vmem:[%s5 + $0x1a0] sm:$0xff]
    %v5584 = vld [vmem:[%s5 + $0x1a8] sm:$0xff]
    %v5585 = vld [vmem:[%s5 + $0x1b0] sm:$0xff]
    %v5586 = vld [vmem:[%s5 + $0x1b8] sm:$0xff]
    %v5587 = vld [vmem:[%s5 + $0x1c0] sm:$0xff]
    %v5588 = vld [vmem:[%s5 + $0x1c8] sm:$0xff]
    %v5589 = vld [vmem:[%s5 + $0x1d0] sm:$0xff]
    %v5590 = vld [vmem:[%s5 + $0x1d8] sm:$0xff]
    %v5591 = vld [vmem:[%s5 + $0x1e0] sm:$0xff]
    %v5592 = vld [vmem:[%s5 + $0x1e8] sm:$0xff]
    %v5593 = vld [vmem:[%s5 + $0x1f0] sm:$0xff]
    %v5594 = vld [vmem:[%s5 + $0x1f8] sm:$0xff]
    %v5595 = vld [vmem:[%s6] ss:$4 sm:$0x3]
    %v5597 = vperm.slane %v5595, 0
    %v5598 = vperm.slane %v5595, 1
    %v5665 = vunpack.c.l.b16 %v5531
    %v5666 = vunpack.c.h.b16 %v5531
    %v5667 = vunpack.c.l.b16 %v5532
    %v5668 = vunpack.c.h.b16 %v5532
    %v5669 = vunpack.c.l.b16 %v5533
    %v5670 = vunpack.c.h.b16 %v5533
    %v5671 = vunpack.c.l.b16 %v5534
    %v5672 = vunpack.c.h.b16 %v5534
    %v5673 = vunpack.c.l.b16 %v5535
    %v5674 = vunpack.c.h.b16 %v5535
    %v5675 = vunpack.c.l.b16 %v5536
    %v5676 = vunpack.c.h.b16 %v5536
    %v5677 = vunpack.c.l.b16 %v5537
    %v5678 = vunpack.c.h.b16 %v5537
    %v5679 = vunpack.c.l.b16 %v5538
    %v5680 = vunpack.c.h.b16 %v5538
    %v5681 = vunpack.c.l.b16 %v5539
    %v5682 = vunpack.c.h.b16 %v5539
    %v5683 = vunpack.c.l.b16 %v5540
    %v5684 = vunpack.c.h.b16 %v5540
    %v5685 = vunpack.c.l.b16 %v5541
    %v5686 = vunpack.c.h.b16 %v5541
    %v5687 = vunpack.c.l.b16 %v5542
    %v5688 = vunpack.c.h.b16 %v5542
    %v5689 = vunpack.c.l.b16 %v5543
    %v5690 = vunpack.c.h.b16 %v5543
    %v5691 = vunpack.c.l.b16 %v5544
    %v5692 = vunpack.c.h.b16 %v5544
    %v5693 = vunpack.c.l.b16 %v5545
    %v5694 = vunpack.c.h.b16 %v5545
    %v5695 = vunpack.c.l.b16 %v5546
    %v5696 = vunpack.c.h.b16 %v5546
    %v5697 = vunpack.c.l.b16 %v5547
    %v5698 = vunpack.c.h.b16 %v5547
    %v5699 = vunpack.c.l.b16 %v5548
    %v5700 = vunpack.c.h.b16 %v5548
    %v5701 = vunpack.c.l.b16 %v5549
    %v5702 = vunpack.c.h.b16 %v5549
    %v5703 = vunpack.c.l.b16 %v5550
    %v5704 = vunpack.c.h.b16 %v5550
    %v5705 = vunpack.c.l.b16 %v5551
    %v5706 = vunpack.c.h.b16 %v5551
    %v5707 = vunpack.c.l.b16 %v5552
    %v5708 = vunpack.c.h.b16 %v5552
    %v5709 = vunpack.c.l.b16 %v5553
    %v5710 = vunpack.c.h.b16 %v5553
    %v5711 = vunpack.c.l.b16 %v5554
    %v5712 = vunpack.c.h.b16 %v5554
    %v5713 = vunpack.c.l.b16 %v5555
    %v5714 = vunpack.c.h.b16 %v5555
    %v5715 = vunpack.c.l.b16 %v5556
    %v5716 = vunpack.c.h.b16 %v5556
    %v5717 = vunpack.c.l.b16 %v5557
    %v5718 = vunpack.c.h.b16 %v5557
    %v5719 = vunpack.c.l.b16 %v5558
    %v5720 = vunpack.c.h.b16 %v5558
    %v5721 = vunpack.c.l.b16 %v5559
    %v5722 = vunpack.c.h.b16 %v5559
    %v5723 = vunpack.c.l.b16 %v5560
    %v5724 = vunpack.c.h.b16 %v5560
    %v5725 = vunpack.c.l.b16 %v5561
    %v5726 = vunpack.c.h.b16 %v5561
    %v5727 = vunpack.c.l.b16 %v5562
    %v5728 = vunpack.c.h.b16 %v5562
    %v5729 = vunpack.c.l.b16 %v5563
    %v5730 = vunpack.c.h.b16 %v5563
    %v5731 = vunpack.c.l.b16 %v5564
    %v5732 = vunpack.c.h.b16 %v5564
    %v5733 = vunpack.c.l.b16 %v5565
    %v5734 = vunpack.c.h.b16 %v5565
    %v5735 = vunpack.c.l.b16 %v5566
    %v5736 = vunpack.c.h.b16 %v5566
    %v5737 = vunpack.c.l.b16 %v5567
    %v5738 = vunpack.c.h.b16 %v5567
    %v5739 = vunpack.c.l.b16 %v5568
    %v5740 = vunpack.c.h.b16 %v5568
    %v5741 = vunpack.c.l.b16 %v5569
    %v5742 = vunpack.c.h.b16 %v5569
    %v5743 = vunpack.c.l.b16 %v5570
    %v5744 = vunpack.c.h.b16 %v5570
    %v5745 = vunpack.c.l.b16 %v5571
    %v5746 = vunpack.c.h.b16 %v5571
    %v5747 = vunpack.c.l.b16 %v5572
    %v5748 = vunpack.c.h.b16 %v5572
    %v5749 = vunpack.c.l.b16 %v5573
    %v5750 = vunpack.c.h.b16 %v5573
    %v5751 = vunpack.c.l.b16 %v5574
    %v5752 = vunpack.c.h.b16 %v5574
    %v5753 = vunpack.c.l.b16 %v5575
    %v5754 = vunpack.c.h.b16 %v5575
    %v5755 = vunpack.c.l.b16 %v5576
    %v5756 = vunpack.c.h.b16 %v5576
    %v5757 = vunpack.c.l.b16 %v5577
    %v5758 = vunpack.c.h.b16 %v5577
    %v5759 = vunpack.c.l.b16 %v5578
    %v5760 = vunpack.c.h.b16 %v5578
    %v5761 = vunpack.c.l.b16 %v5579
    %v5762 = vunpack.c.h.b16 %v5579
    %v5763 = vunpack.c.l.b16 %v5580
    %v5764 = vunpack.c.h.b16 %v5580
    %v5765 = vunpack.c.l.b16 %v5581
    %v5766 = vunpack.c.h.b16 %v5581
    %v5767 = vunpack.c.l.b16 %v5582
    %v5768 = vunpack.c.h.b16 %v5582
    %v5769 = vunpack.c.l.b16 %v5583
    %v5770 = vunpack.c.h.b16 %v5583
    %v5771 = vunpack.c.l.b16 %v5584
    %v5772 = vunpack.c.h.b16 %v5584
    %v5773 = vunpack.c.l.b16 %v5585
    %v5774 = vunpack.c.h.b16 %v5585
    %v5775 = vunpack.c.l.b16 %v5586
    %v5776 = vunpack.c.h.b16 %v5586
    %v5777 = vunpack.c.l.b16 %v5587
    %v5778 = vunpack.c.h.b16 %v5587
    %v5779 = vunpack.c.l.b16 %v5588
    %v5780 = vunpack.c.h.b16 %v5588
    %v5781 = vunpack.c.l.b16 %v5589
    %v5782 = vunpack.c.h.b16 %v5589
    %v5783 = vunpack.c.l.b16 %v5590
    %v5784 = vunpack.c.h.b16 %v5590
    %v5785 = vunpack.c.l.b16 %v5591
    %v5786 = vunpack.c.h.b16 %v5591
    %v5787 = vunpack.c.l.b16 %v5592
    %v5788 = vunpack.c.h.b16 %v5592
    %v5789 = vunpack.c.l.b16 %v5593
    %v5790 = vunpack.c.h.b16 %v5593
    %v5791 = vunpack.c.l.b16 %v5594
    %v5792 = vunpack.c.h.b16 %v5594
    %v5793 = vpack.c.b16 %v5667, %v5665
    %v5794 = vpack.c.b16 %v5668, %v5666
    %v5795 = vpack.c.b16 %v5671, %v5669
    %v5796 = vpack.c.b16 %v5672, %v5670
    %v5797 = vpack.c.b16 %v5675, %v5673
    %v5798 = vpack.c.b16 %v5676, %v5674
    %v5799 = vpack.c.b16 %v5679, %v5677
    %v5800 = vpack.c.b16 %v5680, %v5678
    %v5801 = vpack.c.b16 %v5683, %v5681
    %v5802 = vpack.c.b16 %v5684, %v5682
    %v5803 = vpack.c.b16 %v5687, %v5685
    %v5804 = vpack.c.b16 %v5688, %v5686
    %v5805 = vpack.c.b16 %v5691, %v5689
    %v5806 = vpack.c.b16 %v5692, %v5690
    %v5807 = vpack.c.b16 %v5695, %v5693
    %v5808 = vpack.c.b16 %v5696, %v5694
    %v5809 = vpack.c.b16 %v5699, %v5697
    %v5810 = vpack.c.b16 %v5700, %v5698
    %v5811 = vpack.c.b16 %v5703, %v5701
    %v5812 = vpack.c.b16 %v5704, %v5702
    %v5813 = vpack.c.b16 %v5707, %v5705
    %v5814 = vpack.c.b16 %v5708, %v5706
    %v5815 = vpack.c.b16 %v5711, %v5709
    %v5816 = vpack.c.b16 %v5712, %v5710
    %v5817 = vpack.c.b16 %v5715, %v5713
    %v5818 = vpack.c.b16 %v5716, %v5714
    %v5819 = vpack.c.b16 %v5719, %v5717
    %v5820 = vpack.c.b16 %v5720, %v5718
    %v5821 = vpack.c.b16 %v5723, %v5721
    %v5822 = vpack.c.b16 %v5724, %v5722
    %v5823 = vpack.c.b16 %v5727, %v5725
    %v5824 = vpack.c.b16 %v5728, %v5726
    %v5825 = vpack.c.b16 %v5731, %v5729
    %v5826 = vpack.c.b16 %v5732, %v5730
    %v5827 = vpack.c.b16 %v5735, %v5733
    %v5828 = vpack.c.b16 %v5736, %v5734
    %v5829 = vpack.c.b16 %v5739, %v5737
    %v5830 = vpack.c.b16 %v5740, %v5738
    %v5831 = vpack.c.b16 %v5743, %v5741
    %v5832 = vpack.c.b16 %v5744, %v5742
    %v5833 = vpack.c.b16 %v5747, %v5745
    %v5834 = vpack.c.b16 %v5748, %v5746
    %v5835 = vpack.c.b16 %v5751, %v5749
    %v5836 = vpack.c.b16 %v5752, %v5750
    %v5837 = vpack.c.b16 %v5755, %v5753
    %v5838 = vpack.c.b16 %v5756, %v5754
    %v5839 = vpack.c.b16 %v5759, %v5757
    %v5840 = vpack.c.b16 %v5760, %v5758
    %v5841 = vpack.c.b16 %v5763, %v5761
    %v5842 = vpack.c.b16 %v5764, %v5762
    %v5843 = vpack.c.b16 %v5767, %v5765
    %v5844 = vpack.c.b16 %v5768, %v5766
    %v5845 = vpack.c.b16 %v5771, %v5769
    %v5846 = vpack.c.b16 %v5772, %v5770
    %v5847 = vpack.c.b16 %v5775, %v5773
    %v5848 = vpack.c.b16 %v5776, %v5774
    %v5849 = vpack.c.b16 %v5779, %v5777
    %v5850 = vpack.c.b16 %v5780, %v5778
    %v5851 = vpack.c.b16 %v5783, %v5781
    %v5852 = vpack.c.b16 %v5784, %v5782
    %v5853 = vpack.c.b16 %v5787, %v5785
    %v5854 = vpack.c.b16 %v5788, %v5786
    %v5855 = vpack.c.b16 %v5791, %v5789
    %v5856 = vpack.c.b16 %v5792, %v5790
    %5921 = vmatpush.bf16.msra.mxu0 %v5807
    %5922 = vmatpush.bf16.msra.mxu0 %v5805
    %5923 = vmatpush.bf16.msra.mxu0 %v5803
    %5924 = vmatpush.bf16.msra.mxu0 %v5801
    %5925 = vmatpush.bf16.msra.mxu0 %v5799
    %5926 = vmatpush.bf16.msra.mxu0 %v5797
    %5927 = vmatpush.bf16.msra.mxu0 %v5795
    %5928 = vmatpush.bf16.msra.mxu0 %v5793
    %5929 = vmatmul.bf16.gmra.mxu0 %v5527
    %v5930 = vpop.f32.mrf.mxu0
    %v5931 = vadd.f32 %v5597, %v5930
    %v5932 = vpop.f32.mrf.mxu0
    %5933 = vdwg.mxu0
    %5934 = vmatpush.bf16.msra.mxu0 %v5823
    %5935 = vmatpush.bf16.msra.mxu0 %v5821
    %5936 = vmatpush.bf16.msra.mxu0 %v5819
    %5937 = vmatpush.bf16.msra.mxu0 %v5817
    %5938 = vmatpush.bf16.msra.mxu0 %v5815
    %5939 = vmatpush.bf16.msra.mxu0 %v5813
    %5940 = vmatpush.bf16.msra.mxu0 %v5811
    %5941 = vmatpush.bf16.msra.mxu0 %v5809
    %5942 = vmatmul.bf16.gmra.mxu0 %v5528
    %v5943 = vpop.f32.mrf.mxu0
    %v5944 = vadd.f32 %v5931, %v5943
    %v5945 = vpop.f32.mrf.mxu0
    %5946 = vdwg.mxu0
    %5947 = vmatpush.bf16.msra.mxu0 %v5839
    %5948 = vmatpush.bf16.msra.mxu0 %v5837
    %5949 = vmatpush.bf16.msra.mxu0 %v5835
    %5950 = vmatpush.bf16.msra.mxu0 %v5833
    %5951 = vmatpush.bf16.msra.mxu0 %v5831
    %5952 = vmatpush.bf16.msra.mxu0 %v5829
    %5953 = vmatpush.bf16.msra.mxu0 %v5827
    %5954 = vmatpush.bf16.msra.mxu0 %v5825
    %5955 = vmatmul.bf16.gmra.mxu0 %v5529
    %v5956 = vpop.f32.mrf.mxu0
    %v5957 = vadd.f32 %v5944, %v5956
    %v5958 = vpop.f32.mrf.mxu0
    %5959 = vdwg.mxu0
    %5960 = vmatpush.bf16.msra.mxu0 %v5855
    %5961 = vmatpush.bf16.msra.mxu0 %v5853
    %5962 = vmatpush.bf16.msra.mxu0 %v5851
    %5963 = vmatpush.bf16.msra.mxu0 %v5849
    %5964 = vmatpush.bf16.msra.mxu0 %v5847
    %5965 = vmatpush.bf16.msra.mxu0 %v5845
    %5966 = vmatpush.bf16.msra.mxu0 %v5843
    %5967 = vmatpush.bf16.msra.mxu0 %v5841
    %5968 = vmatmul.bf16.gmra.mxu0 %v5530
    %v5969 = vpop.f32.mrf.mxu0
    %v5970 = vadd.f32 %v5957, %v5969
    %v5971 = vpop.f32.mrf.mxu0
    %5972 = vdwg.mxu0
    %5973 = vmatpush.bf16.msra.mxu0 %v5808
    %5974 = vmatpush.bf16.msra.mxu0 %v5806
    %5975 = vmatpush.bf16.msra.mxu0 %v5804
    %5976 = vmatpush.bf16.msra.mxu0 %v5802
    %5977 = vmatpush.bf16.msra.mxu0 %v5800
    %5978 = vmatpush.bf16.msra.mxu0 %v5798
    %5979 = vmatpush.bf16.msra.mxu0 %v5796
    %5980 = vmatpush.bf16.msra.mxu0 %v5794
    %5981 = vmatmul.bf16.gmra.mxu0 %v5527
    %v5982 = vpop.f32.mrf.mxu0
    %v5983 = vadd.f32 %v5598, %v5982
    %v5984 = vpop.f32.mrf.mxu0
    %5985 = vdwg.mxu0
    %5986 = vmatpush.bf16.msra.mxu0 %v5824
    %5987 = vmatpush.bf16.msra.mxu0 %v5822
    %5988 = vmatpush.bf16.msra.mxu0 %v5820
    %5989 = vmatpush.bf16.msra.mxu0 %v5818
    %5990 = vmatpush.bf16.msra.mxu0 %v5816
    %5991 = vmatpush.bf16.msra.mxu0 %v5814
    %5992 = vmatpush.bf16.msra.mxu0 %v5812
    %5993 = vmatpush.bf16.msra.mxu0 %v5810
    %5994 = vmatmul.bf16.gmra.mxu0 %v5528
    %v5995 = vpop.f32.mrf.mxu0
    %v5996 = vadd.f32 %v5983, %v5995
    %v5997 = vpop.f32.mrf.mxu0
    %5998 = vdwg.mxu0
    %5999 = vmatpush.bf16.msra.mxu0 %v5840
    %6000 = vmatpush.bf16.msra.mxu0 %v5838
    %6001 = vmatpush.bf16.msra.mxu0 %v5836
    %6002 = vmatpush.bf16.msra.mxu0 %v5834
    %6003 = vmatpush.bf16.msra.mxu0 %v5832
    %6004 = vmatpush.bf16.msra.mxu0 %v5830
    %6005 = vmatpush.bf16.msra.mxu0 %v5828
    %6006 = vmatpush.bf16.msra.mxu0 %v5826
    %6007 = vmatmul.bf16.gmra.mxu0 %v5529
    %v6008 = vpop.f32.mrf.mxu0
    %v6009 = vadd.f32 %v5996, %v6008
    %v6010 = vpop.f32.mrf.mxu0
    %6011 = vdwg.mxu0
    %6012 = vmatpush.bf16.msra.mxu0 %v5856
    %6013 = vmatpush.bf16.msra.mxu0 %v5854
    %6014 = vmatpush.bf16.msra.mxu0 %v5852
    %6015 = vmatpush.bf16.msra.mxu0 %v5850
    %6016 = vmatpush.bf16.msra.mxu0 %v5848
    %6017 = vmatpush.bf16.msra.mxu0 %v5846
    %6018 = vmatpush.bf16.msra.mxu0 %v5844
    %6019 = vmatpush.bf16.msra.mxu0 %v5842
    %6020 = vmatmul.bf16.gmra.mxu0 %v5530
    %v6021 = vpop.f32.mrf.mxu0
    %v6022 = vadd.f32 %v6009, %v6021
    %v6023 = vpop.f32.mrf.mxu0
    %6024 = vdwg.mxu0
    %s6025 = scalar_lea.vmem %s6, 1
    %v6026 = vld [vmem:[%s6025] ss:$4 sm:$0x3]
    %s6027 = scalar_lea.vmem %s6, 2
    %v6028 = vld [vmem:[%s6027] ss:$4 sm:$0x3]
    %s6029 = scalar_lea.vmem %s6, 3
    %v6030 = vld [vmem:[%s6029] ss:$4 sm:$0x3]
    %v6032 = vperm.slane %v6026, 0
    %v6033 = vperm.slane %v6026, 1
    %v6036 = vadd.f32 %v5970, %v6032
    %v6037 = vadd.f32 %v6022, %v6033
    %v6039 = vperm.slane %v6028, 0
    %v6040 = vperm.slane %v6028, 1
    %v6043 = vmul.f32 %v5970, %v6039
    %v6044 = vmul.f32 %v6022, %v6040
    %v6045 = vxor.u32 %v6043, 2147483648
    %v6046 = vxor.u32 %v6044, 2147483648
    %v6047 = vmul.f32 %v6045, 1.442695
    %v6048 = vpow.pop %v6047
    %v6049 = vmul.f32 %v6046, 1.442695
    %v6050 = vpow.pop %v6049
    %v6051 = vadd.f32 %v6048, 1.0
    %v6052 = vadd.f32 %v6050, 1.0
    %v6053 = vrcp.pop %v6051
    %v6054 = vmul.f32 %v6051, %v6053
    %v6055 = vsub.f32 1.0, %v6054
    %v6056 = vmul.f32 %v6053, %v6055
    %v6057 = vadd.f32 %v6053, %v6056
    %vm6058 = vweird.f32 %v6051
    %vm6059 = vweird.f32 %v6053
    %vm6060 = vmor %vm6058, %vm6059
    %v6061 = vsel %vm6060, %v6053, %v6057
    %v6062 = vand.u32 2147483647, %v6051
    %vm6063 = vcmp.eq.f32.partialorder %v6062, 8.507059e+37
    %v6064 = vand.u32 %v6051, 2147483648
    %v6065 = vor.u32 1.1754944e-38, %v6064
    %v6066 = vsel %vm6063, %v6065, %v6061
    %v6067 = vmul.f32 1.0, %v6066
    %v6068 = vrcp.pop %v6052
    %v6069 = vmul.f32 %v6052, %v6068
    %v6070 = vsub.f32 1.0, %v6069
    %v6071 = vmul.f32 %v6068, %v6070
    %v6072 = vadd.f32 %v6068, %v6071
    %vm6073 = vweird.f32 %v6052
    %vm6074 = vweird.f32 %v6068
    %vm6075 = vmor %vm6073, %vm6074
    %v6076 = vsel %vm6075, %v6068, %v6072
    %v6077 = vand.u32 2147483647, %v6052
    %vm6078 = vcmp.eq.f32.partialorder %v6077, 8.507059e+37
    %v6079 = vand.u32 %v6052, 2147483648
    %v6080 = vor.u32 1.1754944e-38, %v6079
    %v6081 = vsel %vm6078, %v6080, %v6076
    %v6082 = vmul.f32 1.0, %v6081
    %v6083 = vmul.f32 %v6036, %v6067
    %v6084 = vmul.f32 %v6037, %v6082
    %v6086 = vperm.slane %v6030, 0
    %v6087 = vperm.slane %v6030, 1
    %v6090 = vsub.f32 %v6083, %v6086
    %v6091 = vsub.f32 %v6084, %v6087
    %v6092 = vpack.c.bf16 %v6090, %v6090
    %v6093 = vpack.c.bf16 %v6091, %v6091
    %v6094 = vld [vmem:[%s7] sm:$0xf]
    %v6095 = vld [vmem:[%s7 + $0x4] sm:$0xf]
    %v6096 = vld [vmem:[%s7 + $0x8] sm:$0xf]
    %v6097 = vld [vmem:[%s7 + $0xc] sm:$0xf]
    %v6098 = vld [vmem:[%s7 + $0x10] sm:$0xf]
    %v6099 = vld [vmem:[%s7 + $0x14] sm:$0xf]
    %v6100 = vld [vmem:[%s7 + $0x18] sm:$0xf]
    %v6101 = vld [vmem:[%s7 + $0x1c] sm:$0xf]
    %v6102 = vld [vmem:[%s7 + $0x20] sm:$0xf]
    %v6103 = vld [vmem:[%s7 + $0x24] sm:$0xf]
    %v6104 = vld [vmem:[%s7 + $0x28] sm:$0xf]
    %v6105 = vld [vmem:[%s7 + $0x2c] sm:$0xf]
    %v6106 = vld [vmem:[%s7 + $0x30] sm:$0xf]
    %v6107 = vld [vmem:[%s7 + $0x34] sm:$0xf]
    %v6108 = vld [vmem:[%s7 + $0x38] sm:$0xf]
    %v6109 = vld [vmem:[%s7 + $0x3c] sm:$0xf]
    %v6110 = vld [vmem:[%s7 + $0x40] sm:$0xf]
    %v6111 = vld [vmem:[%s7 + $0x44] sm:$0xf]
    %v6112 = vld [vmem:[%s7 + $0x48] sm:$0xf]
    %v6113 = vld [vmem:[%s7 + $0x4c] sm:$0xf]
    %v6114 = vld [vmem:[%s7 + $0x50] sm:$0xf]
    %v6115 = vld [vmem:[%s7 + $0x54] sm:$0xf]
    %v6116 = vld [vmem:[%s7 + $0x58] sm:$0xf]
    %v6117 = vld [vmem:[%s7 + $0x5c] sm:$0xf]
    %v6118 = vld [vmem:[%s7 + $0x60] sm:$0xf]
    %v6119 = vld [vmem:[%s7 + $0x64] sm:$0xf]
    %v6120 = vld [vmem:[%s7 + $0x68] sm:$0xf]
    %v6121 = vld [vmem:[%s7 + $0x6c] sm:$0xf]
    %v6122 = vld [vmem:[%s7 + $0x70] sm:$0xf]
    %v6123 = vld [vmem:[%s7 + $0x74] sm:$0xf]
    %v6124 = vld [vmem:[%s7 + $0x78] sm:$0xf]
    %v6125 = vld [vmem:[%s7 + $0x7c] sm:$0xf]
    %v6126 = vld [vmem:[%s8] sm:$0x1]
    %v6127 = vperm.slane %v6126, 0
    %v6160 = vunpack.c.l.b16 %v6094
    %v6161 = vunpack.c.l.b16 %v6095
    %v6162 = vunpack.c.l.b16 %v6096
    %v6163 = vunpack.c.l.b16 %v6097
    %v6164 = vunpack.c.l.b16 %v6098
    %v6165 = vunpack.c.l.b16 %v6099
    %v6166 = vunpack.c.l.b16 %v6100
    %v6167 = vunpack.c.l.b16 %v6101
    %v6168 = vunpack.c.l.b16 %v6102
    %v6169 = vunpack.c.l.b16 %v6103
    %v6170 = vunpack.c.l.b16 %v6104
    %v6171 = vunpack.c.l.b16 %v6105
    %v6172 = vunpack.c.l.b16 %v6106
    %v6173 = vunpack.c.l.b16 %v6107
    %v6174 = vunpack.c.l.b16 %v6108
    %v6175 = vunpack.c.l.b16 %v6109
    %v6176 = vunpack.c.l.b16 %v6110
    %v6177 = vunpack.c.l.b16 %v6111
    %v6178 = vunpack.c.l.b16 %v6112
    %v6179 = vunpack.c.l.b16 %v6113
    %v6180 = vunpack.c.l.b16 %v6114
    %v6181 = vunpack.c.l.b16 %v6115
    %v6182 = vunpack.c.l.b16 %v6116
    %v6183 = vunpack.c.l.b16 %v6117
    %v6184 = vunpack.c.l.b16 %v6118
    %v6185 = vunpack.c.l.b16 %v6119
    %v6186 = vunpack.c.l.b16 %v6120
    %v6187 = vunpack.c.l.b16 %v6121
    %v6188 = vunpack.c.l.b16 %v6122
    %v6189 = vunpack.c.l.b16 %v6123
    %v6190 = vunpack.c.l.b16 %v6124
    %v6191 = vunpack.c.l.b16 %v6125
    %v6192 = vpack.c.b16 %v6161, %v6160
    %v6193 = vpack.c.b16 %v6163, %v6162
    %v6194 = vpack.c.b16 %v6165, %v6164
    %v6195 = vpack.c.b16 %v6167, %v6166
    %v6196 = vpack.c.b16 %v6169, %v6168
    %v6197 = vpack.c.b16 %v6171, %v6170
    %v6198 = vpack.c.b16 %v6173, %v6172
    %v6199 = vpack.c.b16 %v6175, %v6174
    %v6200 = vpack.c.b16 %v6177, %v6176
    %v6201 = vpack.c.b16 %v6179, %v6178
    %v6202 = vpack.c.b16 %v6181, %v6180
    %v6203 = vpack.c.b16 %v6183, %v6182
    %v6204 = vpack.c.b16 %v6185, %v6184
    %v6205 = vpack.c.b16 %v6187, %v6186
    %v6206 = vpack.c.b16 %v6189, %v6188
    %v6207 = vpack.c.b16 %v6191, %v6190
    %6224 = vmatpush.bf16.msra.mxu0 %v6199
    %6225 = vmatpush.bf16.msra.mxu0 %v6198
    %6226 = vmatpush.bf16.msra.mxu0 %v6197
    %6227 = vmatpush.bf16.msra.mxu0 %v6196
    %6228 = vmatpush.bf16.msra.mxu0 %v6195
    %6229 = vmatpush.bf16.msra.mxu0 %v6194
    %6230 = vmatpush.bf16.msra.mxu0 %v6193
    %6231 = vmatpush.bf16.msra.mxu0 %v6192
    %6232 = vmatmul.bf16.gmra.mxu0 %v6092
    %v6233 = vpop.f32.mrf.mxu0
    %v6234 = vadd.f32 %v6127, %v6233
    %v6235 = vpop.f32.mrf.mxu0
    %6236 = vdwg.mxu0
    %6237 = vmatpush.bf16.msra.mxu0 %v6207
    %6238 = vmatpush.bf16.msra.mxu0 %v6206
    %6239 = vmatpush.bf16.msra.mxu0 %v6205
    %6240 = vmatpush.bf16.msra.mxu0 %v6204
    %6241 = vmatpush.bf16.msra.mxu0 %v6203
    %6242 = vmatpush.bf16.msra.mxu0 %v6202
    %6243 = vmatpush.bf16.msra.mxu0 %v6201
    %6244 = vmatpush.bf16.msra.mxu0 %v6200
    %6245 = vmatmul.bf16.gmra.mxu0 %v6093
    %v6246 = vpop.f32.mrf.mxu0
    %v6247 = vadd.f32 %v6234, %v6246
    %v6248 = vpop.f32.mrf.mxu0
    %6249 = vdwg.mxu0
    %v6250 = vld [vmem:[%s8 + $0x1] sm:$0x1]
    %v6251 = vld [vmem:[%s8 + $0x2] sm:$0x1]
    %v6252 = vld [vmem:[%s8 + $0x3] sm:$0x1]
    %v6253 = vperm.slane %v6250, 0
    %v6254 = vadd.f32 %v6247, %v6253
    %v6255 = vperm.slane %v6251, 0
    %v6256 = vmul.f32 %v6247, %v6255
    %v6257 = vxor.u32 %v6256, 2147483648
    %v6258 = vmul.f32 %v6257, 1.442695
    %v6259 = vpow.pop %v6258
    %v6260 = vadd.f32 %v6259, 1.0
    %v6261 = vrcp.pop %v6260
    %v6262 = vmul.f32 %v6260, %v6261
    %v6263 = vsub.f32 1.0, %v6262
    %v6264 = vmul.f32 %v6261, %v6263
    %v6265 = vadd.f32 %v6261, %v6264
    %vm6266 = vweird.f32 %v6260
    %vm6267 = vweird.f32 %v6261
    %vm6268 = vmor %vm6266, %vm6267
    %v6269 = vsel %vm6268, %v6261, %v6265
    %v6270 = vand.u32 2147483647, %v6260
    %vm6271 = vcmp.eq.f32.partialorder %v6270, 8.507059e+37
    %v6272 = vand.u32 %v6260, 2147483648
    %v6273 = vor.u32 1.1754944e-38, %v6272
    %v6274 = vsel %vm6271, %v6273, %v6269
    %v6275 = vmul.f32 1.0, %v6274
    %v6276 = vmul.f32 %v6254, %v6275
    %v6277 = vperm.slane %v6252, 0
    %v6278 = vsub.f32 %v6276, %v6277
    %v6279 = vpack.c.bf16 %v6278, %v6278
    %v6280 = vld [vmem:[%s9] sm:$0xff]
    %v6281 = vld [vmem:[%s9 + $0x8] sm:$0xff]
    %v6282 = vld [vmem:[%s9 + $0x10] sm:$0xff]
    %v6283 = vld [vmem:[%s9 + $0x18] sm:$0xff]
    %v6284 = vld [vmem:[%s9 + $0x20] sm:$0xff]
    %v6285 = vld [vmem:[%s9 + $0x28] sm:$0xff]
    %v6286 = vld [vmem:[%s9 + $0x30] sm:$0xff]
    %v6287 = vld [vmem:[%s9 + $0x38] sm:$0xff]
    %v6288 = vld [vmem:[%s9 + $0x40] sm:$0xff]
    %v6289 = vld [vmem:[%s9 + $0x48] sm:$0xff]
    %v6290 = vld [vmem:[%s9 + $0x50] sm:$0xff]
    %v6291 = vld [vmem:[%s9 + $0x58] sm:$0xff]
    %v6292 = vld [vmem:[%s9 + $0x60] sm:$0xff]
    %v6293 = vld [vmem:[%s9 + $0x68] sm:$0xff]
    %v6294 = vld [vmem:[%s9 + $0x70] sm:$0xff]
    %v6295 = vld [vmem:[%s9 + $0x78] sm:$0xff]
    %v6296 = vld [vmem:[%s10] ss:$4 sm:$0x3]
    %v6298 = vperm.slane %v6296, 0
    %v6299 = vperm.slane %v6296, 1
    %v6318 = vunpack.c.l.b16 %v6280
    %v6319 = vunpack.c.h.b16 %v6280
    %v6320 = vunpack.c.l.b16 %v6281
    %v6321 = vunpack.c.h.b16 %v6281
    %v6322 = vunpack.c.l.b16 %v6282
    %v6323 = vunpack.c.h.b16 %v6282
    %v6324 = vunpack.c.l.b16 %v6283
    %v6325 = vunpack.c.h.b16 %v6283
    %v6326 = vunpack.c.l.b16 %v6284
    %v6327 = vunpack.c.h.b16 %v6284
    %v6328 = vunpack.c.l.b16 %v6285
    %v6329 = vunpack.c.h.b16 %v6285
    %v6330 = vunpack.c.l.b16 %v6286
    %v6331 = vunpack.c.h.b16 %v6286
    %v6332 = vunpack.c.l.b16 %v6287
    %v6333 = vunpack.c.h.b16 %v6287
    %v6334 = vunpack.c.l.b16 %v6288
    %v6335 = vunpack.c.h.b16 %v6288
    %v6336 = vunpack.c.l.b16 %v6289
    %v6337 = vunpack.c.h.b16 %v6289
    %v6338 = vunpack.c.l.b16 %v6290
    %v6339 = vunpack.c.h.b16 %v6290
    %v6340 = vunpack.c.l.b16 %v6291
    %v6341 = vunpack.c.h.b16 %v6291
    %v6342 = vunpack.c.l.b16 %v6292
    %v6343 = vunpack.c.h.b16 %v6292
    %v6344 = vunpack.c.l.b16 %v6293
    %v6345 = vunpack.c.h.b16 %v6293
    %v6346 = vunpack.c.l.b16 %v6294
    %v6347 = vunpack.c.h.b16 %v6294
    %v6348 = vunpack.c.l.b16 %v6295
    %v6349 = vunpack.c.h.b16 %v6295
    %v6350 = vpack.c.b16 %v6320, %v6318
    %v6351 = vpack.c.b16 %v6321, %v6319
    %v6352 = vpack.c.b16 %v6324, %v6322
    %v6353 = vpack.c.b16 %v6325, %v6323
    %v6354 = vpack.c.b16 %v6328, %v6326
    %v6355 = vpack.c.b16 %v6329, %v6327
    %v6356 = vpack.c.b16 %v6332, %v6330
    %v6357 = vpack.c.b16 %v6333, %v6331
    %v6358 = vpack.c.b16 %v6336, %v6334
    %v6359 = vpack.c.b16 %v6337, %v6335
    %v6360 = vpack.c.b16 %v6340, %v6338
    %v6361 = vpack.c.b16 %v6341, %v6339
    %v6362 = vpack.c.b16 %v6344, %v6342
    %v6363 = vpack.c.b16 %v6345, %v6343
    %v6364 = vpack.c.b16 %v6348, %v6346
    %v6365 = vpack.c.b16 %v6349, %v6347
    %6382 = vmatpush.bf16.msra.mxu0 %v6364
    %6383 = vmatpush.bf16.msra.mxu0 %v6362
    %6384 = vmatpush.bf16.msra.mxu0 %v6360
    %6385 = vmatpush.bf16.msra.mxu0 %v6358
    %6386 = vmatpush.bf16.msra.mxu0 %v6356
    %6387 = vmatpush.bf16.msra.mxu0 %v6354
    %6388 = vmatpush.bf16.msra.mxu0 %v6352
    %6389 = vmatpush.bf16.msra.mxu0 %v6350
    %6390 = vmatmul.bf16.gmra.mxu0 %v6279
    %v6391 = vpop.f32.mrf.mxu0
    %v6392 = vadd.f32 %v6298, %v6391
    %v6393 = vpop.f32.mrf.mxu0
    %6394 = vdwg.mxu0
    %6395 = vmatpush.bf16.msra.mxu0 %v6365
    %6396 = vmatpush.bf16.msra.mxu0 %v6363
    %6397 = vmatpush.bf16.msra.mxu0 %v6361
    %6398 = vmatpush.bf16.msra.mxu0 %v6359
    %6399 = vmatpush.bf16.msra.mxu0 %v6357
    %6400 = vmatpush.bf16.msra.mxu0 %v6355
    %6401 = vmatpush.bf16.msra.mxu0 %v6353
    %6402 = vmatpush.bf16.msra.mxu0 %v6351
    %6403 = vmatmul.bf16.gmra.mxu0 %v6279
    %v6404 = vpop.f32.mrf.mxu0
    %v6405 = vadd.f32 %v6299, %v6404
    %v6406 = vpop.f32.mrf.mxu0
    %6407 = vdwg.mxu0
    %s6408 = scalar_lea.vmem %s10, 1
    %v6409 = vld [vmem:[%s6408] ss:$4 sm:$0x3]
    %s6410 = scalar_lea.vmem %s10, 2
    %v6411 = vld [vmem:[%s6410] ss:$4 sm:$0x3]
    %s6412 = scalar_lea.vmem %s10, 3
    %v6413 = vld [vmem:[%s6412] ss:$4 sm:$0x3]
    %v6415 = vperm.slane %v6409, 0
    %v6416 = vperm.slane %v6409, 1
    %v6419 = vadd.f32 %v6392, %v6415
    %v6420 = vadd.f32 %v6405, %v6416
    %v6422 = vperm.slane %v6411, 0
    %v6423 = vperm.slane %v6411, 1
    %v6426 = vmul.f32 %v6392, %v6422
    %v6427 = vmul.f32 %v6405, %v6423
    %v6428 = vxor.u32 %v6426, 2147483648
    %v6429 = vxor.u32 %v6427, 2147483648
    %v6430 = vmul.f32 %v6428, 1.442695
    %v6431 = vpow.pop %v6430
    %v6432 = vmul.f32 %v6429, 1.442695
    %v6433 = vpow.pop %v6432
    %v6434 = vadd.f32 %v6431, 1.0
    %v6435 = vadd.f32 %v6433, 1.0
    %v6436 = vrcp.pop %v6434
    %v6437 = vmul.f32 %v6434, %v6436
    %v6438 = vsub.f32 1.0, %v6437
    %v6439 = vmul.f32 %v6436, %v6438
    %v6440 = vadd.f32 %v6436, %v6439
    %vm6441 = vweird.f32 %v6434
    %vm6442 = vweird.f32 %v6436
    %vm6443 = vmor %vm6441, %vm6442
    %v6444 = vsel %vm6443, %v6436, %v6440
    %v6445 = vand.u32 2147483647, %v6434
    %vm6446 = vcmp.eq.f32.partialorder %v6445, 8.507059e+37
    %v6447 = vand.u32 %v6434, 2147483648
    %v6448 = vor.u32 1.1754944e-38, %v6447
    %v6449 = vsel %vm6446, %v6448, %v6444
    %v6450 = vmul.f32 1.0, %v6449
    %v6451 = vrcp.pop %v6435
    %v6452 = vmul.f32 %v6435, %v6451
    %v6453 = vsub.f32 1.0, %v6452
    %v6454 = vmul.f32 %v6451, %v6453
    %v6455 = vadd.f32 %v6451, %v6454
    %vm6456 = vweird.f32 %v6435
    %vm6457 = vweird.f32 %v6451
    %vm6458 = vmor %vm6456, %vm6457
    %v6459 = vsel %vm6458, %v6451, %v6455
    %v6460 = vand.u32 2147483647, %v6435
    %vm6461 = vcmp.eq.f32.partialorder %v6460, 8.507059e+37
    %v6462 = vand.u32 %v6435, 2147483648
    %v6463 = vor.u32 1.1754944e-38, %v6462
    %v6464 = vsel %vm6461, %v6463, %v6459
    %v6465 = vmul.f32 1.0, %v6464
    %v6466 = vmul.f32 %v6419, %v6450
    %v6467 = vmul.f32 %v6420, %v6465
    %v6469 = vperm.slane %v6413, 0
    %v6470 = vperm.slane %v6413, 1
    %v6473 = vsub.f32 %v6466, %v6469
    %v6474 = vsub.f32 %v6467, %v6470
    %v6475 = vpack.c.bf16 %v6473, %v6473
    %v6476 = vpack.c.bf16 %v6474, %v6474
    %v6477 = vld [vmem:[%s11] sm:$0xff]
    %v6478 = vld [vmem:[%s11 + $0x8] sm:$0xff]
    %v6479 = vld [vmem:[%s11 + $0x10] sm:$0xff]
    %v6480 = vld [vmem:[%s11 + $0x18] sm:$0xff]
    %v6481 = vld [vmem:[%s11 + $0x20] sm:$0xff]
    %v6482 = vld [vmem:[%s11 + $0x28] sm:$0xff]
    %v6483 = vld [vmem:[%s11 + $0x30] sm:$0xff]
    %v6484 = vld [vmem:[%s11 + $0x38] sm:$0xff]
    %v6485 = vld [vmem:[%s11 + $0x40] sm:$0xff]
    %v6486 = vld [vmem:[%s11 + $0x48] sm:$0xff]
    %v6487 = vld [vmem:[%s11 + $0x50] sm:$0xff]
    %v6488 = vld [vmem:[%s11 + $0x58] sm:$0xff]
    %v6489 = vld [vmem:[%s11 + $0x60] sm:$0xff]
    %v6490 = vld [vmem:[%s11 + $0x68] sm:$0xff]
    %v6491 = vld [vmem:[%s11 + $0x70] sm:$0xff]
    %v6492 = vld [vmem:[%s11 + $0x78] sm:$0xff]
    %v6493 = vld [vmem:[%s11 + $0x80] sm:$0xff]
    %v6494 = vld [vmem:[%s11 + $0x88] sm:$0xff]
    %v6495 = vld [vmem:[%s11 + $0x90] sm:$0xff]
    %v6496 = vld [vmem:[%s11 + $0x98] sm:$0xff]
    %v6497 = vld [vmem:[%s11 + $0xa0] sm:$0xff]
    %v6498 = vld [vmem:[%s11 + $0xa8] sm:$0xff]
    %v6499 = vld [vmem:[%s11 + $0xb0] sm:$0xff]
    %v6500 = vld [vmem:[%s11 + $0xb8] sm:$0xff]
    %v6501 = vld [vmem:[%s11 + $0xc0] sm:$0xff]
    %v6502 = vld [vmem:[%s11 + $0xc8] sm:$0xff]
    %v6503 = vld [vmem:[%s11 + $0xd0] sm:$0xff]
    %v6504 = vld [vmem:[%s11 + $0xd8] sm:$0xff]
    %v6505 = vld [vmem:[%s11 + $0xe0] sm:$0xff]
    %v6506 = vld [vmem:[%s11 + $0xe8] sm:$0xff]
    %v6507 = vld [vmem:[%s11 + $0xf0] sm:$0xff]
    %v6508 = vld [vmem:[%s11 + $0xf8] sm:$0xff]
    %v6509 = vld [vmem:[%s11 + $0x100] sm:$0xff]
    %v6510 = vld [vmem:[%s11 + $0x108] sm:$0xff]
    %v6511 = vld [vmem:[%s11 + $0x110] sm:$0xff]
    %v6512 = vld [vmem:[%s11 + $0x118] sm:$0xff]
    %v6513 = vld [vmem:[%s11 + $0x120] sm:$0xff]
    %v6514 = vld [vmem:[%s11 + $0x128] sm:$0xff]
    %v6515 = vld [vmem:[%s11 + $0x130] sm:$0xff]
    %v6516 = vld [vmem:[%s11 + $0x138] sm:$0xff]
    %v6517 = vld [vmem:[%s11 + $0x140] sm:$0xff]
    %v6518 = vld [vmem:[%s11 + $0x148] sm:$0xff]
    %v6519 = vld [vmem:[%s11 + $0x150] sm:$0xff]
    %v6520 = vld [vmem:[%s11 + $0x158] sm:$0xff]
    %v6521 = vld [vmem:[%s11 + $0x160] sm:$0xff]
    %v6522 = vld [vmem:[%s11 + $0x168] sm:$0xff]
    %v6523 = vld [vmem:[%s11 + $0x170] sm:$0xff]
    %v6524 = vld [vmem:[%s11 + $0x178] sm:$0xff]
    %v6525 = vld [vmem:[%s11 + $0x180] sm:$0xff]
    %v6526 = vld [vmem:[%s11 + $0x188] sm:$0xff]
    %v6527 = vld [vmem:[%s11 + $0x190] sm:$0xff]
    %v6528 = vld [vmem:[%s11 + $0x198] sm:$0xff]
    %v6529 = vld [vmem:[%s11 + $0x1a0] sm:$0xff]
    %v6530 = vld [vmem:[%s11 + $0x1a8] sm:$0xff]
    %v6531 = vld [vmem:[%s11 + $0x1b0] sm:$0xff]
    %v6532 = vld [vmem:[%s11 + $0x1b8] sm:$0xff]
    %v6533 = vld [vmem:[%s11 + $0x1c0] sm:$0xff]
    %v6534 = vld [vmem:[%s11 + $0x1c8] sm:$0xff]
    %v6535 = vld [vmem:[%s11 + $0x1d0] sm:$0xff]
    %v6536 = vld [vmem:[%s11 + $0x1d8] sm:$0xff]
    %v6537 = vld [vmem:[%s11 + $0x1e0] sm:$0xff]
    %v6538 = vld [vmem:[%s11 + $0x1e8] sm:$0xff]
    %v6539 = vld [vmem:[%s11 + $0x1f0] sm:$0xff]
    %v6540 = vld [vmem:[%s11 + $0x1f8] sm:$0xff]
    %v6541 = vld [vmem:[%s12] ss:$4 sm:$0xf]
    %v6543 = vperm.slane %v6541, 0
    %v6544 = vperm.slane %v6541, 1
    %v6545 = vperm.slane %v6541, 2
    %v6546 = vperm.slane %v6541, 3
    %v6615 = vunpack.c.l.b16 %v6477
    %v6616 = vunpack.c.h.b16 %v6477
    %v6617 = vunpack.c.l.b16 %v6478
    %v6618 = vunpack.c.h.b16 %v6478
    %v6619 = vunpack.c.l.b16 %v6479
    %v6620 = vunpack.c.h.b16 %v6479
    %v6621 = vunpack.c.l.b16 %v6480
    %v6622 = vunpack.c.h.b16 %v6480
    %v6623 = vunpack.c.l.b16 %v6481
    %v6624 = vunpack.c.h.b16 %v6481
    %v6625 = vunpack.c.l.b16 %v6482
    %v6626 = vunpack.c.h.b16 %v6482
    %v6627 = vunpack.c.l.b16 %v6483
    %v6628 = vunpack.c.h.b16 %v6483
    %v6629 = vunpack.c.l.b16 %v6484
    %v6630 = vunpack.c.h.b16 %v6484
    %v6631 = vunpack.c.l.b16 %v6485
    %v6632 = vunpack.c.h.b16 %v6485
    %v6633 = vunpack.c.l.b16 %v6486
    %v6634 = vunpack.c.h.b16 %v6486
    %v6635 = vunpack.c.l.b16 %v6487
    %v6636 = vunpack.c.h.b16 %v6487
    %v6637 = vunpack.c.l.b16 %v6488
    %v6638 = vunpack.c.h.b16 %v6488
    %v6639 = vunpack.c.l.b16 %v6489
    %v6640 = vunpack.c.h.b16 %v6489
    %v6641 = vunpack.c.l.b16 %v6490
    %v6642 = vunpack.c.h.b16 %v6490
    %v6643 = vunpack.c.l.b16 %v6491
    %v6644 = vunpack.c.h.b16 %v6491
    %v6645 = vunpack.c.l.b16 %v6492
    %v6646 = vunpack.c.h.b16 %v6492
    %v6647 = vunpack.c.l.b16 %v6493
    %v6648 = vunpack.c.h.b16 %v6493
    %v6649 = vunpack.c.l.b16 %v6494
    %v6650 = vunpack.c.h.b16 %v6494
    %v6651 = vunpack.c.l.b16 %v6495
    %v6652 = vunpack.c.h.b16 %v6495
    %v6653 = vunpack.c.l.b16 %v6496
    %v6654 = vunpack.c.h.b16 %v6496
    %v6655 = vunpack.c.l.b16 %v6497
    %v6656 = vunpack.c.h.b16 %v6497
    %v6657 = vunpack.c.l.b16 %v6498
    %v6658 = vunpack.c.h.b16 %v6498
    %v6659 = vunpack.c.l.b16 %v6499
    %v6660 = vunpack.c.h.b16 %v6499
    %v6661 = vunpack.c.l.b16 %v6500
    %v6662 = vunpack.c.h.b16 %v6500
    %v6663 = vunpack.c.l.b16 %v6501
    %v6664 = vunpack.c.h.b16 %v6501
    %v6665 = vunpack.c.l.b16 %v6502
    %v6666 = vunpack.c.h.b16 %v6502
    %v6667 = vunpack.c.l.b16 %v6503
    %v6668 = vunpack.c.h.b16 %v6503
    %v6669 = vunpack.c.l.b16 %v6504
    %v6670 = vunpack.c.h.b16 %v6504
    %v6671 = vunpack.c.l.b16 %v6505
    %v6672 = vunpack.c.h.b16 %v6505
    %v6673 = vunpack.c.l.b16 %v6506
    %v6674 = vunpack.c.h.b16 %v6506
    %v6675 = vunpack.c.l.b16 %v6507
    %v6676 = vunpack.c.h.b16 %v6507
    %v6677 = vunpack.c.l.b16 %v6508
    %v6678 = vunpack.c.h.b16 %v6508
    %v6679 = vunpack.c.l.b16 %v6509
    %v6680 = vunpack.c.h.b16 %v6509
    %v6681 = vunpack.c.l.b16 %v6510
    %v6682 = vunpack.c.h.b16 %v6510
    %v6683 = vunpack.c.l.b16 %v6511
    %v6684 = vunpack.c.h.b16 %v6511
    %v6685 = vunpack.c.l.b16 %v6512
    %v6686 = vunpack.c.h.b16 %v6512
    %v6687 = vunpack.c.l.b16 %v6513
    %v6688 = vunpack.c.h.b16 %v6513
    %v6689 = vunpack.c.l.b16 %v6514
    %v6690 = vunpack.c.h.b16 %v6514
    %v6691 = vunpack.c.l.b16 %v6515
    %v6692 = vunpack.c.h.b16 %v6515
    %v6693 = vunpack.c.l.b16 %v6516
    %v6694 = vunpack.c.h.b16 %v6516
    %v6695 = vunpack.c.l.b16 %v6517
    %v6696 = vunpack.c.h.b16 %v6517
    %v6697 = vunpack.c.l.b16 %v6518
    %v6698 = vunpack.c.h.b16 %v6518
    %v6699 = vunpack.c.l.b16 %v6519
    %v6700 = vunpack.c.h.b16 %v6519
    %v6701 = vunpack.c.l.b16 %v6520
    %v6702 = vunpack.c.h.b16 %v6520
    %v6703 = vunpack.c.l.b16 %v6521
    %v6704 = vunpack.c.h.b16 %v6521
    %v6705 = vunpack.c.l.b16 %v6522
    %v6706 = vunpack.c.h.b16 %v6522
    %v6707 = vunpack.c.l.b16 %v6523
    %v6708 = vunpack.c.h.b16 %v6523
    %v6709 = vunpack.c.l.b16 %v6524
    %v6710 = vunpack.c.h.b16 %v6524
    %v6711 = vunpack.c.l.b16 %v6525
    %v6712 = vunpack.c.h.b16 %v6525
    %v6713 = vunpack.c.l.b16 %v6526
    %v6714 = vunpack.c.h.b16 %v6526
    %v6715 = vunpack.c.l.b16 %v6527
    %v6716 = vunpack.c.h.b16 %v6527
    %v6717 = vunpack.c.l.b16 %v6528
    %v6718 = vunpack.c.h.b16 %v6528
    %v6719 = vunpack.c.l.b16 %v6529
    %v6720 = vunpack.c.h.b16 %v6529
    %v6721 = vunpack.c.l.b16 %v6530
    %v6722 = vunpack.c.h.b16 %v6530
    %v6723 = vunpack.c.l.b16 %v6531
    %v6724 = vunpack.c.h.b16 %v6531
    %v6725 = vunpack.c.l.b16 %v6532
    %v6726 = vunpack.c.h.b16 %v6532
    %v6727 = vunpack.c.l.b16 %v6533
    %v6728 = vunpack.c.h.b16 %v6533
    %v6729 = vunpack.c.l.b16 %v6534
    %v6730 = vunpack.c.h.b16 %v6534
    %v6731 = vunpack.c.l.b16 %v6535
    %v6732 = vunpack.c.h.b16 %v6535
    %v6733 = vunpack.c.l.b16 %v6536
    %v6734 = vunpack.c.h.b16 %v6536
    %v6735 = vunpack.c.l.b16 %v6537
    %v6736 = vunpack.c.h.b16 %v6537
    %v6737 = vunpack.c.l.b16 %v6538
    %v6738 = vunpack.c.h.b16 %v6538
    %v6739 = vunpack.c.l.b16 %v6539
    %v6740 = vunpack.c.h.b16 %v6539
    %v6741 = vunpack.c.l.b16 %v6540
    %v6742 = vunpack.c.h.b16 %v6540
    %v6743 = vpack.c.b16 %v6619, %v6615
    %v6744 = vpack.c.b16 %v6620, %v6616
    %v6745 = vpack.c.b16 %v6621, %v6617
    %v6746 = vpack.c.b16 %v6622, %v6618
    %v6747 = vpack.c.b16 %v6627, %v6623
    %v6748 = vpack.c.b16 %v6628, %v6624
    %v6749 = vpack.c.b16 %v6629, %v6625
    %v6750 = vpack.c.b16 %v6630, %v6626
    %v6751 = vpack.c.b16 %v6635, %v6631
    %v6752 = vpack.c.b16 %v6636, %v6632
    %v6753 = vpack.c.b16 %v6637, %v6633
    %v6754 = vpack.c.b16 %v6638, %v6634
    %v6755 = vpack.c.b16 %v6643, %v6639
    %v6756 = vpack.c.b16 %v6644, %v6640
    %v6757 = vpack.c.b16 %v6645, %v6641
    %v6758 = vpack.c.b16 %v6646, %v6642
    %v6759 = vpack.c.b16 %v6651, %v6647
    %v6760 = vpack.c.b16 %v6652, %v6648
    %v6761 = vpack.c.b16 %v6653, %v6649
    %v6762 = vpack.c.b16 %v6654, %v6650
    %v6763 = vpack.c.b16 %v6659, %v6655
    %v6764 = vpack.c.b16 %v6660, %v6656
    %v6765 = vpack.c.b16 %v6661, %v6657
    %v6766 = vpack.c.b16 %v6662, %v6658
    %v6767 = vpack.c.b16 %v6667, %v6663
    %v6768 = vpack.c.b16 %v6668, %v6664
    %v6769 = vpack.c.b16 %v6669, %v6665
    %v6770 = vpack.c.b16 %v6670, %v6666
    %v6771 = vpack.c.b16 %v6675, %v6671
    %v6772 = vpack.c.b16 %v6676, %v6672
    %v6773 = vpack.c.b16 %v6677, %v6673
    %v6774 = vpack.c.b16 %v6678, %v6674
    %v6775 = vpack.c.b16 %v6683, %v6679
    %v6776 = vpack.c.b16 %v6684, %v6680
    %v6777 = vpack.c.b16 %v6685, %v6681
    %v6778 = vpack.c.b16 %v6686, %v6682
    %v6779 = vpack.c.b16 %v6691, %v6687
    %v6780 = vpack.c.b16 %v6692, %v6688
    %v6781 = vpack.c.b16 %v6693, %v6689
    %v6782 = vpack.c.b16 %v6694, %v6690
    %v6783 = vpack.c.b16 %v6699, %v6695
    %v6784 = vpack.c.b16 %v6700, %v6696
    %v6785 = vpack.c.b16 %v6701, %v6697
    %v6786 = vpack.c.b16 %v6702, %v6698
    %v6787 = vpack.c.b16 %v6707, %v6703
    %v6788 = vpack.c.b16 %v6708, %v6704
    %v6789 = vpack.c.b16 %v6709, %v6705
    %v6790 = vpack.c.b16 %v6710, %v6706
    %v6791 = vpack.c.b16 %v6715, %v6711
    %v6792 = vpack.c.b16 %v6716, %v6712
    %v6793 = vpack.c.b16 %v6717, %v6713
    %v6794 = vpack.c.b16 %v6718, %v6714
    %v6795 = vpack.c.b16 %v6723, %v6719
    %v6796 = vpack.c.b16 %v6724, %v6720
    %v6797 = vpack.c.b16 %v6725, %v6721
    %v6798 = vpack.c.b16 %v6726, %v6722
    %v6799 = vpack.c.b16 %v6731, %v6727
    %v6800 = vpack.c.b16 %v6732, %v6728
    %v6801 = vpack.c.b16 %v6733, %v6729
    %v6802 = vpack.c.b16 %v6734, %v6730
    %v6803 = vpack.c.b16 %v6739, %v6735
    %v6804 = vpack.c.b16 %v6740, %v6736
    %v6805 = vpack.c.b16 %v6741, %v6737
    %v6806 = vpack.c.b16 %v6742, %v6738
    %6871 = vmatpush.bf16.msra.mxu0 %v6771
    %6872 = vmatpush.bf16.msra.mxu0 %v6767
    %6873 = vmatpush.bf16.msra.mxu0 %v6763
    %6874 = vmatpush.bf16.msra.mxu0 %v6759
    %6875 = vmatpush.bf16.msra.mxu0 %v6755
    %6876 = vmatpush.bf16.msra.mxu0 %v6751
    %6877 = vmatpush.bf16.msra.mxu0 %v6747
    %6878 = vmatpush.bf16.msra.mxu0 %v6743
    %6879 = vmatmul.bf16.gmra.mxu0 %v6475
    %v6880 = vpop.f32.mrf.mxu0
    %v6881 = vadd.f32 %v6543, %v6880
    %v6882 = vpop.f32.mrf.mxu0
    %6883 = vdwg.mxu0
    %6884 = vmatpush.bf16.msra.mxu0 %v6803
    %6885 = vmatpush.bf16.msra.mxu0 %v6799
    %6886 = vmatpush.bf16.msra.mxu0 %v6795
    %6887 = vmatpush.bf16.msra.mxu0 %v6791
    %6888 = vmatpush.bf16.msra.mxu0 %v6787
    %6889 = vmatpush.bf16.msra.mxu0 %v6783
    %6890 = vmatpush.bf16.msra.mxu0 %v6779
    %6891 = vmatpush.bf16.msra.mxu0 %v6775
    %6892 = vmatmul.bf16.gmra.mxu0 %v6476
    %v6893 = vpop.f32.mrf.mxu0
    %v6894 = vadd.f32 %v6881, %v6893
    %v6895 = vpop.f32.mrf.mxu0
    %6896 = vdwg.mxu0
    %6897 = vmatpush.bf16.msra.mxu0 %v6772
    %6898 = vmatpush.bf16.msra.mxu0 %v6768
    %6899 = vmatpush.bf16.msra.mxu0 %v6764
    %6900 = vmatpush.bf16.msra.mxu0 %v6760
    %6901 = vmatpush.bf16.msra.mxu0 %v6756
    %6902 = vmatpush.bf16.msra.mxu0 %v6752
    %6903 = vmatpush.bf16.msra.mxu0 %v6748
    %6904 = vmatpush.bf16.msra.mxu0 %v6744
    %6905 = vmatmul.bf16.gmra.mxu0 %v6475
    %v6906 = vpop.f32.mrf.mxu0
    %v6907 = vadd.f32 %v6544, %v6906
    %v6908 = vpop.f32.mrf.mxu0
    %6909 = vdwg.mxu0
    %6910 = vmatpush.bf16.msra.mxu0 %v6804
    %6911 = vmatpush.bf16.msra.mxu0 %v6800
    %6912 = vmatpush.bf16.msra.mxu0 %v6796
    %6913 = vmatpush.bf16.msra.mxu0 %v6792
    %6914 = vmatpush.bf16.msra.mxu0 %v6788
    %6915 = vmatpush.bf16.msra.mxu0 %v6784
    %6916 = vmatpush.bf16.msra.mxu0 %v6780
    %6917 = vmatpush.bf16.msra.mxu0 %v6776
    %6918 = vmatmul.bf16.gmra.mxu0 %v6476
    %v6919 = vpop.f32.mrf.mxu0
    %v6920 = vadd.f32 %v6907, %v6919
    %v6921 = vpop.f32.mrf.mxu0
    %6922 = vdwg.mxu0
    %6923 = vmatpush.bf16.msra.mxu0 %v6773
    %6924 = vmatpush.bf16.msra.mxu0 %v6769
    %6925 = vmatpush.bf16.msra.mxu0 %v6765
    %6926 = vmatpush.bf16.msra.mxu0 %v6761
    %6927 = vmatpush.bf16.msra.mxu0 %v6757
    %6928 = vmatpush.bf16.msra.mxu0 %v6753
    %6929 = vmatpush.bf16.msra.mxu0 %v6749
    %6930 = vmatpush.bf16.msra.mxu0 %v6745
    %6931 = vmatmul.bf16.gmra.mxu0 %v6475
    %v6932 = vpop.f32.mrf.mxu0
    %v6933 = vadd.f32 %v6545, %v6932
    %v6934 = vpop.f32.mrf.mxu0
    %6935 = vdwg.mxu0
    %6936 = vmatpush.bf16.msra.mxu0 %v6805
    %6937 = vmatpush.bf16.msra.mxu0 %v6801
    %6938 = vmatpush.bf16.msra.mxu0 %v6797
    %6939 = vmatpush.bf16.msra.mxu0 %v6793
    %6940 = vmatpush.bf16.msra.mxu0 %v6789
    %6941 = vmatpush.bf16.msra.mxu0 %v6785
    %6942 = vmatpush.bf16.msra.mxu0 %v6781
    %6943 = vmatpush.bf16.msra.mxu0 %v6777
    %6944 = vmatmul.bf16.gmra.mxu0 %v6476
    %v6945 = vpop.f32.mrf.mxu0
    %v6946 = vadd.f32 %v6933, %v6945
    %v6947 = vpop.f32.mrf.mxu0
    %6948 = vdwg.mxu0
    %6949 = vmatpush.bf16.msra.mxu0 %v6774
    %6950 = vmatpush.bf16.msra.mxu0 %v6770
    %6951 = vmatpush.bf16.msra.mxu0 %v6766
    %6952 = vmatpush.bf16.msra.mxu0 %v6762
    %6953 = vmatpush.bf16.msra.mxu0 %v6758
    %6954 = vmatpush.bf16.msra.mxu0 %v6754
    %6955 = vmatpush.bf16.msra.mxu0 %v6750
    %6956 = vmatpush.bf16.msra.mxu0 %v6746
    %6957 = vmatmul.bf16.gmra.mxu0 %v6475
    %v6958 = vpop.f32.mrf.mxu0
    %v6959 = vadd.f32 %v6546, %v6958
    %v6960 = vpop.f32.mrf.mxu0
    %6961 = vdwg.mxu0
    %6962 = vmatpush.bf16.msra.mxu0 %v6806
    %6963 = vmatpush.bf16.msra.mxu0 %v6802
    %6964 = vmatpush.bf16.msra.mxu0 %v6798
    %6965 = vmatpush.bf16.msra.mxu0 %v6794
    %6966 = vmatpush.bf16.msra.mxu0 %v6790
    %6967 = vmatpush.bf16.msra.mxu0 %v6786
    %6968 = vmatpush.bf16.msra.mxu0 %v6782
    %6969 = vmatpush.bf16.msra.mxu0 %v6778
    %6970 = vmatmul.bf16.gmra.mxu0 %v6476
    %v6971 = vpop.f32.mrf.mxu0
    %v6972 = vadd.f32 %v6959, %v6971
    %v6973 = vpop.f32.mrf.mxu0
    %6974 = vdwg.mxu0
    %s6975 = scalar_lea.vmem %s12, 1
    %v6976 = vld [vmem:[%s6975] ss:$4 sm:$0xf]
    %s6977 = scalar_lea.vmem %s12, 2
    %v6978 = vld [vmem:[%s6977] ss:$4 sm:$0xf]
    %s6979 = scalar_lea.vmem %s12, 3
    %v6980 = vld [vmem:[%s6979] ss:$4 sm:$0xf]
    %v6982 = vperm.slane %v6976, 0
    %v6983 = vperm.slane %v6976, 1
    %v6984 = vperm.slane %v6976, 2
    %v6985 = vperm.slane %v6976, 3
    %v6990 = vadd.f32 %v6894, %v6982
    %v6991 = vadd.f32 %v6920, %v6983
    %v6992 = vadd.f32 %v6946, %v6984
    %v6993 = vadd.f32 %v6972, %v6985
    %v6995 = vperm.slane %v6978, 0
    %v6996 = vperm.slane %v6978, 1
    %v6997 = vperm.slane %v6978, 2
    %v6998 = vperm.slane %v6978, 3
    %v7003 = vmul.f32 %v6894, %v6995
    %v7004 = vmul.f32 %v6920, %v6996
    %v7005 = vmul.f32 %v6946, %v6997
    %v7006 = vmul.f32 %v6972, %v6998
    %v7007 = vxor.u32 %v7003, 2147483648
    %v7008 = vxor.u32 %v7004, 2147483648
    %v7009 = vxor.u32 %v7005, 2147483648
    %v7010 = vxor.u32 %v7006, 2147483648
    %v7011 = vmul.f32 %v7007, 1.442695
    %v7012 = vpow.pop %v7011
    %v7013 = vmul.f32 %v7008, 1.442695
    %v7014 = vpow.pop %v7013
    %v7015 = vmul.f32 %v7009, 1.442695
    %v7016 = vpow.pop %v7015
    %v7017 = vmul.f32 %v7010, 1.442695
    %v7018 = vpow.pop %v7017
    %v7019 = vadd.f32 %v7012, 1.0
    %v7020 = vadd.f32 %v7014, 1.0
    %v7021 = vadd.f32 %v7016, 1.0
    %v7022 = vadd.f32 %v7018, 1.0
    %v7023 = vrcp.pop %v7019
    %v7024 = vmul.f32 %v7019, %v7023
    %v7025 = vsub.f32 1.0, %v7024
    %v7026 = vmul.f32 %v7023, %v7025
    %v7027 = vadd.f32 %v7023, %v7026
    %vm7028 = vweird.f32 %v7019
    %vm7029 = vweird.f32 %v7023
    %vm7030 = vmor %vm7028, %vm7029
    %v7031 = vsel %vm7030, %v7023, %v7027
    %v7032 = vand.u32 2147483647, %v7019
    %vm7033 = vcmp.eq.f32.partialorder %v7032, 8.507059e+37
    %v7034 = vand.u32 %v7019, 2147483648
    %v7035 = vor.u32 1.1754944e-38, %v7034
    %v7036 = vsel %vm7033, %v7035, %v7031
    %v7037 = vmul.f32 1.0, %v7036
    %v7038 = vrcp.pop %v7020
    %v7039 = vmul.f32 %v7020, %v7038
    %v7040 = vsub.f32 1.0, %v7039
    %v7041 = vmul.f32 %v7038, %v7040
    %v7042 = vadd.f32 %v7038, %v7041
    %vm7043 = vweird.f32 %v7020
    %vm7044 = vweird.f32 %v7038
    %vm7045 = vmor %vm7043, %vm7044
    %v7046 = vsel %vm7045, %v7038, %v7042
    %v7047 = vand.u32 2147483647, %v7020
    %vm7048 = vcmp.eq.f32.partialorder %v7047, 8.507059e+37
    %v7049 = vand.u32 %v7020, 2147483648
    %v7050 = vor.u32 1.1754944e-38, %v7049
    %v7051 = vsel %vm7048, %v7050, %v7046
    %v7052 = vmul.f32 1.0, %v7051
    %v7053 = vrcp.pop %v7021
    %v7054 = vmul.f32 %v7021, %v7053
    %v7055 = vsub.f32 1.0, %v7054
    %v7056 = vmul.f32 %v7053, %v7055
    %v7057 = vadd.f32 %v7053, %v7056
    %vm7058 = vweird.f32 %v7021
    %vm7059 = vweird.f32 %v7053
    %vm7060 = vmor %vm7058, %vm7059
    %v7061 = vsel %vm7060, %v7053, %v7057
    %v7062 = vand.u32 2147483647, %v7021
    %vm7063 = vcmp.eq.f32.partialorder %v7062, 8.507059e+37
    %v7064 = vand.u32 %v7021, 2147483648
    %v7065 = vor.u32 1.1754944e-38, %v7064
    %v7066 = vsel %vm7063, %v7065, %v7061
    %v7067 = vmul.f32 1.0, %v7066
    %v7068 = vrcp.pop %v7022
    %v7069 = vmul.f32 %v7022, %v7068
    %v7070 = vsub.f32 1.0, %v7069
    %v7071 = vmul.f32 %v7068, %v7070
    %v7072 = vadd.f32 %v7068, %v7071
    %vm7073 = vweird.f32 %v7022
    %vm7074 = vweird.f32 %v7068
    %vm7075 = vmor %vm7073, %vm7074
    %v7076 = vsel %vm7075, %v7068, %v7072
    %v7077 = vand.u32 2147483647, %v7022
    %vm7078 = vcmp.eq.f32.partialorder %v7077, 8.507059e+37
    %v7079 = vand.u32 %v7022, 2147483648
    %v7080 = vor.u32 1.1754944e-38, %v7079
    %v7081 = vsel %vm7078, %v7080, %v7076
    %v7082 = vmul.f32 1.0, %v7081
    %v7083 = vmul.f32 %v6990, %v7037
    %v7084 = vmul.f32 %v6991, %v7052
    %v7085 = vmul.f32 %v6992, %v7067
    %v7086 = vmul.f32 %v6993, %v7082
    %v7088 = vperm.slane %v6980, 0
    %v7089 = vperm.slane %v6980, 1
    %v7090 = vperm.slane %v6980, 2
    %v7091 = vperm.slane %v6980, 3
    %v7096 = vsub.f32 %v7083, %v7088
    %v7097 = vsub.f32 %v7084, %v7089
    %v7098 = vsub.f32 %v7085, %v7090
    %v7099 = vsub.f32 %v7086, %v7091
    %v7100 = vpack.c.bf16 %v7096, %v7096
    %v7101 = vpack.c.bf16 %v7097, %v7097
    %v7102 = vpack.c.bf16 %v7098, %v7098
    %v7103 = vpack.c.bf16 %v7099, %v7099
    %v7104 = vld [vmem:[#allocation2] sm:$0xff]
    %v7105 = vld [vmem:[#allocation2 + $0x8] sm:$0xff]
    %v7106 = vld [vmem:[#allocation2 + $0x10] sm:$0xff]
    %v7107 = vld [vmem:[#allocation2 + $0x18] sm:$0xff]
    %v7108 = vld [vmem:[#allocation2 + $0x20] sm:$0xff]
    %v7109 = vld [vmem:[#allocation2 + $0x28] sm:$0xff]
    %v7110 = vld [vmem:[#allocation2 + $0x30] sm:$0xff]
    %v7111 = vld [vmem:[#allocation2 + $0x38] sm:$0xff]
    %v7112 = vld [vmem:[#allocation2 + $0x40] sm:$0xff]
    %v7113 = vld [vmem:[#allocation2 + $0x48] sm:$0xff]
    %v7114 = vld [vmem:[#allocation2 + $0x50] sm:$0xff]
    %v7115 = vld [vmem:[#allocation2 + $0x58] sm:$0xff]
    %v7116 = vld [vmem:[#allocation2 + $0x60] sm:$0xff]
    %v7117 = vld [vmem:[#allocation2 + $0x68] sm:$0xff]
    %v7118 = vld [vmem:[#allocation2 + $0x70] sm:$0xff]
    %v7119 = vld [vmem:[#allocation2 + $0x78] sm:$0xff]
    %v7120 = vld [vmem:[#allocation2 + $0x80] sm:$0xff]
    %v7121 = vld [vmem:[#allocation2 + $0x88] sm:$0xff]
    %v7122 = vld [vmem:[#allocation2 + $0x90] sm:$0xff]
    %v7123 = vld [vmem:[#allocation2 + $0x98] sm:$0xff]
    %v7124 = vld [vmem:[#allocation2 + $0xa0] sm:$0xff]
    %v7125 = vld [vmem:[#allocation2 + $0xa8] sm:$0xff]
    %v7126 = vld [vmem:[#allocation2 + $0xb0] sm:$0xff]
    %v7127 = vld [vmem:[#allocation2 + $0xb8] sm:$0xff]
    %v7128 = vld [vmem:[#allocation2 + $0xc0] sm:$0xff]
    %v7129 = vld [vmem:[#allocation2 + $0xc8] sm:$0xff]
    %v7130 = vld [vmem:[#allocation2 + $0xd0] sm:$0xff]
    %v7131 = vld [vmem:[#allocation2 + $0xd8] sm:$0xff]
    %v7132 = vld [vmem:[#allocation2 + $0xe0] sm:$0xff]
    %v7133 = vld [vmem:[#allocation2 + $0xe8] sm:$0xff]
    %v7134 = vld [vmem:[#allocation2 + $0xf0] sm:$0xff]
    %v7135 = vld [vmem:[#allocation2 + $0xf8] sm:$0xff]
    %v7136 = vld [vmem:[#allocation2 + $0x100] sm:$0xff]
    %v7137 = vld [vmem:[#allocation2 + $0x108] sm:$0xff]
    %v7138 = vld [vmem:[#allocation2 + $0x110] sm:$0xff]
    %v7139 = vld [vmem:[#allocation2 + $0x118] sm:$0xff]
    %v7140 = vld [vmem:[#allocation2 + $0x120] sm:$0xff]
    %v7141 = vld [vmem:[#allocation2 + $0x128] sm:$0xff]
    %v7142 = vld [vmem:[#allocation2 + $0x130] sm:$0xff]
    %v7143 = vld [vmem:[#allocation2 + $0x138] sm:$0xff]
    %v7144 = vld [vmem:[#allocation2 + $0x140] sm:$0xff]
    %v7145 = vld [vmem:[#allocation2 + $0x148] sm:$0xff]
    %v7146 = vld [vmem:[#allocation2 + $0x150] sm:$0xff]
    %v7147 = vld [vmem:[#allocation2 + $0x158] sm:$0xff]
    %v7148 = vld [vmem:[#allocation2 + $0x160] sm:$0xff]
    %v7149 = vld [vmem:[#allocation2 + $0x168] sm:$0xff]
    %v7150 = vld [vmem:[#allocation2 + $0x170] sm:$0xff]
    %v7151 = vld [vmem:[#allocation2 + $0x178] sm:$0xff]
    %v7152 = vld [vmem:[#allocation2 + $0x180] sm:$0xff]
    %v7153 = vld [vmem:[#allocation2 + $0x188] sm:$0xff]
    %v7154 = vld [vmem:[#allocation2 + $0x190] sm:$0xff]
    %v7155 = vld [vmem:[#allocation2 + $0x198] sm:$0xff]
    %v7156 = vld [vmem:[#allocation2 + $0x1a0] sm:$0xff]
    %v7157 = vld [vmem:[#allocation2 + $0x1a8] sm:$0xff]
    %v7158 = vld [vmem:[#allocation2 + $0x1b0] sm:$0xff]
    %v7159 = vld [vmem:[#allocation2 + $0x1b8] sm:$0xff]
    %v7160 = vld [vmem:[#allocation2 + $0x1c0] sm:$0xff]
    %v7161 = vld [vmem:[#allocation2 + $0x1c8] sm:$0xff]
    %v7162 = vld [vmem:[#allocation2 + $0x1d0] sm:$0xff]
    %v7163 = vld [vmem:[#allocation2 + $0x1d8] sm:$0xff]
    %v7164 = vld [vmem:[#allocation2 + $0x1e0] sm:$0xff]
    %v7165 = vld [vmem:[#allocation2 + $0x1e8] sm:$0xff]
    %v7166 = vld [vmem:[#allocation2 + $0x1f0] sm:$0xff]
    %v7167 = vld [vmem:[#allocation2 + $0x1f8] sm:$0xff]
    %v7168 = vld [vmem:[#allocation2 + $0x200] sm:$0xff]
    %v7169 = vld [vmem:[#allocation2 + $0x208] sm:$0xff]
    %v7170 = vld [vmem:[#allocation2 + $0x210] sm:$0xff]
    %v7171 = vld [vmem:[#allocation2 + $0x218] sm:$0xff]
    %v7172 = vld [vmem:[#allocation2 + $0x220] sm:$0xff]
    %v7173 = vld [vmem:[#allocation2 + $0x228] sm:$0xff]
    %v7174 = vld [vmem:[#allocation2 + $0x230] sm:$0xff]
    %v7175 = vld [vmem:[#allocation2 + $0x238] sm:$0xff]
    %v7176 = vld [vmem:[#allocation2 + $0x240] sm:$0xff]
    %v7177 = vld [vmem:[#allocation2 + $0x248] sm:$0xff]
    %v7178 = vld [vmem:[#allocation2 + $0x250] sm:$0xff]
    %v7179 = vld [vmem:[#allocation2 + $0x258] sm:$0xff]
    %v7180 = vld [vmem:[#allocation2 + $0x260] sm:$0xff]
    %v7181 = vld [vmem:[#allocation2 + $0x268] sm:$0xff]
    %v7182 = vld [vmem:[#allocation2 + $0x270] sm:$0xff]
    %v7183 = vld [vmem:[#allocation2 + $0x278] sm:$0xff]
    %v7184 = vld [vmem:[#allocation2 + $0x280] sm:$0xff]
    %v7185 = vld [vmem:[#allocation2 + $0x288] sm:$0xff]
    %v7186 = vld [vmem:[#allocation2 + $0x290] sm:$0xff]
    %v7187 = vld [vmem:[#allocation2 + $0x298] sm:$0xff]
    %v7188 = vld [vmem:[#allocation2 + $0x2a0] sm:$0xff]
    %v7189 = vld [vmem:[#allocation2 + $0x2a8] sm:$0xff]
    %v7190 = vld [vmem:[#allocation2 + $0x2b0] sm:$0xff]
    %v7191 = vld [vmem:[#allocation2 + $0x2b8] sm:$0xff]
    %v7192 = vld [vmem:[#allocation2 + $0x2c0] sm:$0xff]
    %v7193 = vld [vmem:[#allocation2 + $0x2c8] sm:$0xff]
    %v7194 = vld [vmem:[#allocation2 + $0x2d0] sm:$0xff]
    %v7195 = vld [vmem:[#allocation2 + $0x2d8] sm:$0xff]
    %v7196 = vld [vmem:[#allocation2 + $0x2e0] sm:$0xff]
    %v7197 = vld [vmem:[#allocation2 + $0x2e8] sm:$0xff]
    %v7198 = vld [vmem:[#allocation2 + $0x2f0] sm:$0xff]
    %v7199 = vld [vmem:[#allocation2 + $0x2f8] sm:$0xff]
    %v7200 = vld [vmem:[#allocation2 + $0x300] sm:$0xff]
    %v7201 = vld [vmem:[#allocation2 + $0x308] sm:$0xff]
    %v7202 = vld [vmem:[#allocation2 + $0x310] sm:$0xff]
    %v7203 = vld [vmem:[#allocation2 + $0x318] sm:$0xff]
    %v7204 = vld [vmem:[#allocation2 + $0x320] sm:$0xff]
    %v7205 = vld [vmem:[#allocation2 + $0x328] sm:$0xff]
    %v7206 = vld [vmem:[#allocation2 + $0x330] sm:$0xff]
    %v7207 = vld [vmem:[#allocation2 + $0x338] sm:$0xff]
    %v7208 = vld [vmem:[#allocation2 + $0x340] sm:$0xff]
    %v7209 = vld [vmem:[#allocation2 + $0x348] sm:$0xff]
    %v7210 = vld [vmem:[#allocation2 + $0x350] sm:$0xff]
    %v7211 = vld [vmem:[#allocation2 + $0x358] sm:$0xff]
    %v7212 = vld [vmem:[#allocation2 + $0x360] sm:$0xff]
    %v7213 = vld [vmem:[#allocation2 + $0x368] sm:$0xff]
    %v7214 = vld [vmem:[#allocation2 + $0x370] sm:$0xff]
    %v7215 = vld [vmem:[#allocation2 + $0x378] sm:$0xff]
    %v7216 = vld [vmem:[#allocation2 + $0x380] sm:$0xff]
    %v7217 = vld [vmem:[#allocation2 + $0x388] sm:$0xff]
    %v7218 = vld [vmem:[#allocation2 + $0x390] sm:$0xff]
    %v7219 = vld [vmem:[#allocation2 + $0x398] sm:$0xff]
    %v7220 = vld [vmem:[#allocation2 + $0x3a0] sm:$0xff]
    %v7221 = vld [vmem:[#allocation2 + $0x3a8] sm:$0xff]
    %v7222 = vld [vmem:[#allocation2 + $0x3b0] sm:$0xff]
    %v7223 = vld [vmem:[#allocation2 + $0x3b8] sm:$0xff]
    %v7224 = vld [vmem:[#allocation2 + $0x3c0] sm:$0xff]
    %v7225 = vld [vmem:[#allocation2 + $0x3c8] sm:$0xff]
    %v7226 = vld [vmem:[#allocation2 + $0x3d0] sm:$0xff]
    %v7227 = vld [vmem:[#allocation2 + $0x3d8] sm:$0xff]
    %v7228 = vld [vmem:[#allocation2 + $0x3e0] sm:$0xff]
    %v7229 = vld [vmem:[#allocation2 + $0x3e8] sm:$0xff]
    %v7230 = vld [vmem:[#allocation2 + $0x3f0] sm:$0xff]
    %v7231 = vld [vmem:[#allocation2 + $0x3f8] sm:$0xff]
    %v7232 = vld [vmem:[#allocation2 + $0x400] sm:$0xff]
    %v7233 = vld [vmem:[#allocation2 + $0x408] sm:$0xff]
    %v7234 = vld [vmem:[#allocation2 + $0x410] sm:$0xff]
    %v7235 = vld [vmem:[#allocation2 + $0x418] sm:$0xff]
    %v7236 = vld [vmem:[#allocation2 + $0x420] sm:$0xff]
    %v7237 = vld [vmem:[#allocation2 + $0x428] sm:$0xff]
    %v7238 = vld [vmem:[#allocation2 + $0x430] sm:$0xff]
    %v7239 = vld [vmem:[#allocation2 + $0x438] sm:$0xff]
    %v7240 = vld [vmem:[#allocation2 + $0x440] sm:$0xff]
    %v7241 = vld [vmem:[#allocation2 + $0x448] sm:$0xff]
    %v7242 = vld [vmem:[#allocation2 + $0x450] sm:$0xff]
    %v7243 = vld [vmem:[#allocation2 + $0x458] sm:$0xff]
    %v7244 = vld [vmem:[#allocation2 + $0x460] sm:$0xff]
    %v7245 = vld [vmem:[#allocation2 + $0x468] sm:$0xff]
    %v7246 = vld [vmem:[#allocation2 + $0x470] sm:$0xff]
    %v7247 = vld [vmem:[#allocation2 + $0x478] sm:$0xff]
    %v7248 = vld [vmem:[#allocation2 + $0x480] sm:$0xff]
    %v7249 = vld [vmem:[#allocation2 + $0x488] sm:$0xff]
    %v7250 = vld [vmem:[#allocation2 + $0x490] sm:$0xff]
    %v7251 = vld [vmem:[#allocation2 + $0x498] sm:$0xff]
    %v7252 = vld [vmem:[#allocation2 + $0x4a0] sm:$0xff]
    %v7253 = vld [vmem:[#allocation2 + $0x4a8] sm:$0xff]
    %v7254 = vld [vmem:[#allocation2 + $0x4b0] sm:$0xff]
    %v7255 = vld [vmem:[#allocation2 + $0x4b8] sm:$0xff]
    %v7256 = vld [vmem:[#allocation2 + $0x4c0] sm:$0xff]
    %v7257 = vld [vmem:[#allocation2 + $0x4c8] sm:$0xff]
    %v7258 = vld [vmem:[#allocation2 + $0x4d0] sm:$0xff]
    %v7259 = vld [vmem:[#allocation2 + $0x4d8] sm:$0xff]
    %v7260 = vld [vmem:[#allocation2 + $0x4e0] sm:$0xff]
    %v7261 = vld [vmem:[#allocation2 + $0x4e8] sm:$0xff]
    %v7262 = vld [vmem:[#allocation2 + $0x4f0] sm:$0xff]
    %v7263 = vld [vmem:[#allocation2 + $0x4f8] sm:$0xff]
    %v7264 = vld [vmem:[#allocation2 + $0x500] sm:$0xff]
    %v7265 = vld [vmem:[#allocation2 + $0x508] sm:$0xff]
    %v7266 = vld [vmem:[#allocation2 + $0x510] sm:$0xff]
    %v7267 = vld [vmem:[#allocation2 + $0x518] sm:$0xff]
    %v7268 = vld [vmem:[#allocation2 + $0x520] sm:$0xff]
    %v7269 = vld [vmem:[#allocation2 + $0x528] sm:$0xff]
    %v7270 = vld [vmem:[#allocation2 + $0x530] sm:$0xff]
    %v7271 = vld [vmem:[#allocation2 + $0x538] sm:$0xff]
    %v7272 = vld [vmem:[#allocation2 + $0x540] sm:$0xff]
    %v7273 = vld [vmem:[#allocation2 + $0x548] sm:$0xff]
    %v7274 = vld [vmem:[#allocation2 + $0x550] sm:$0xff]
    %v7275 = vld [vmem:[#allocation2 + $0x558] sm:$0xff]
    %v7276 = vld [vmem:[#allocation2 + $0x560] sm:$0xff]
    %v7277 = vld [vmem:[#allocation2 + $0x568] sm:$0xff]
    %v7278 = vld [vmem:[#allocation2 + $0x570] sm:$0xff]
    %v7279 = vld [vmem:[#allocation2 + $0x578] sm:$0xff]
    %v7280 = vld [vmem:[#allocation2 + $0x580] sm:$0xff]
    %v7281 = vld [vmem:[#allocation2 + $0x588] sm:$0xff]
    %v7282 = vld [vmem:[#allocation2 + $0x590] sm:$0xff]
    %v7283 = vld [vmem:[#allocation2 + $0x598] sm:$0xff]
    %v7284 = vld [vmem:[#allocation2 + $0x5a0] sm:$0xff]
    %v7285 = vld [vmem:[#allocation2 + $0x5a8] sm:$0xff]
    %v7286 = vld [vmem:[#allocation2 + $0x5b0] sm:$0xff]
    %v7287 = vld [vmem:[#allocation2 + $0x5b8] sm:$0xff]
    %v7288 = vld [vmem:[#allocation2 + $0x5c0] sm:$0xff]
    %v7289 = vld [vmem:[#allocation2 + $0x5c8] sm:$0xff]
    %v7290 = vld [vmem:[#allocation2 + $0x5d0] sm:$0xff]
    %v7291 = vld [vmem:[#allocation2 + $0x5d8] sm:$0xff]
    %v7292 = vld [vmem:[#allocation2 + $0x5e0] sm:$0xff]
    %v7293 = vld [vmem:[#allocation2 + $0x5e8] sm:$0xff]
    %v7294 = vld [vmem:[#allocation2 + $0x5f0] sm:$0xff]
    %v7295 = vld [vmem:[#allocation2 + $0x5f8] sm:$0xff]
    %v7296 = vld [vmem:[#allocation2 + $0x600] sm:$0xff]
    %v7297 = vld [vmem:[#allocation2 + $0x608] sm:$0xff]
    %v7298 = vld [vmem:[#allocation2 + $0x610] sm:$0xff]
    %v7299 = vld [vmem:[#allocation2 + $0x618] sm:$0xff]
    %v7300 = vld [vmem:[#allocation2 + $0x620] sm:$0xff]
    %v7301 = vld [vmem:[#allocation2 + $0x628] sm:$0xff]
    %v7302 = vld [vmem:[#allocation2 + $0x630] sm:$0xff]
    %v7303 = vld [vmem:[#allocation2 + $0x638] sm:$0xff]
    %v7304 = vld [vmem:[#allocation2 + $0x640] sm:$0xff]
    %v7305 = vld [vmem:[#allocation2 + $0x648] sm:$0xff]
    %v7306 = vld [vmem:[#allocation2 + $0x650] sm:$0xff]
    %v7307 = vld [vmem:[#allocation2 + $0x658] sm:$0xff]
    %v7308 = vld [vmem:[#allocation2 + $0x660] sm:$0xff]
    %v7309 = vld [vmem:[#allocation2 + $0x668] sm:$0xff]
    %v7310 = vld [vmem:[#allocation2 + $0x670] sm:$0xff]
    %v7311 = vld [vmem:[#allocation2 + $0x678] sm:$0xff]
    %v7312 = vld [vmem:[#allocation2 + $0x680] sm:$0xff]
    %v7313 = vld [vmem:[#allocation2 + $0x688] sm:$0xff]
    %v7314 = vld [vmem:[#allocation2 + $0x690] sm:$0xff]
    %v7315 = vld [vmem:[#allocation2 + $0x698] sm:$0xff]
    %v7316 = vld [vmem:[#allocation2 + $0x6a0] sm:$0xff]
    %v7317 = vld [vmem:[#allocation2 + $0x6a8] sm:$0xff]
    %v7318 = vld [vmem:[#allocation2 + $0x6b0] sm:$0xff]
    %v7319 = vld [vmem:[#allocation2 + $0x6b8] sm:$0xff]
    %v7320 = vld [vmem:[#allocation2 + $0x6c0] sm:$0xff]
    %v7321 = vld [vmem:[#allocation2 + $0x6c8] sm:$0xff]
    %v7322 = vld [vmem:[#allocation2 + $0x6d0] sm:$0xff]
    %v7323 = vld [vmem:[#allocation2 + $0x6d8] sm:$0xff]
    %v7324 = vld [vmem:[#allocation2 + $0x6e0] sm:$0xff]
    %v7325 = vld [vmem:[#allocation2 + $0x6e8] sm:$0xff]
    %v7326 = vld [vmem:[#allocation2 + $0x6f0] sm:$0xff]
    %v7327 = vld [vmem:[#allocation2 + $0x6f8] sm:$0xff]
    %v7328 = vld [vmem:[#allocation2 + $0x700] sm:$0xff]
    %v7329 = vld [vmem:[#allocation2 + $0x708] sm:$0xff]
    %v7330 = vld [vmem:[#allocation2 + $0x710] sm:$0xff]
    %v7331 = vld [vmem:[#allocation2 + $0x718] sm:$0xff]
    %v7332 = vld [vmem:[#allocation2 + $0x720] sm:$0xff]
    %v7333 = vld [vmem:[#allocation2 + $0x728] sm:$0xff]
    %v7334 = vld [vmem:[#allocation2 + $0x730] sm:$0xff]
    %v7335 = vld [vmem:[#allocation2 + $0x738] sm:$0xff]
    %v7336 = vld [vmem:[#allocation2 + $0x740] sm:$0xff]
    %v7337 = vld [vmem:[#allocation2 + $0x748] sm:$0xff]
    %v7338 = vld [vmem:[#allocation2 + $0x750] sm:$0xff]
    %v7339 = vld [vmem:[#allocation2 + $0x758] sm:$0xff]
    %v7340 = vld [vmem:[#allocation2 + $0x760] sm:$0xff]
    %v7341 = vld [vmem:[#allocation2 + $0x768] sm:$0xff]
    %v7342 = vld [vmem:[#allocation2 + $0x770] sm:$0xff]
    %v7343 = vld [vmem:[#allocation2 + $0x778] sm:$0xff]
    %v7344 = vld [vmem:[#allocation2 + $0x780] sm:$0xff]
    %v7345 = vld [vmem:[#allocation2 + $0x788] sm:$0xff]
    %v7346 = vld [vmem:[#allocation2 + $0x790] sm:$0xff]
    %v7347 = vld [vmem:[#allocation2 + $0x798] sm:$0xff]
    %v7348 = vld [vmem:[#allocation2 + $0x7a0] sm:$0xff]
    %v7349 = vld [vmem:[#allocation2 + $0x7a8] sm:$0xff]
    %v7350 = vld [vmem:[#allocation2 + $0x7b0] sm:$0xff]
    %v7351 = vld [vmem:[#allocation2 + $0x7b8] sm:$0xff]
    %v7352 = vld [vmem:[#allocation2 + $0x7c0] sm:$0xff]
    %v7353 = vld [vmem:[#allocation2 + $0x7c8] sm:$0xff]
    %v7354 = vld [vmem:[#allocation2 + $0x7d0] sm:$0xff]
    %v7355 = vld [vmem:[#allocation2 + $0x7d8] sm:$0xff]
    %v7356 = vld [vmem:[#allocation2 + $0x7e0] sm:$0xff]
    %v7357 = vld [vmem:[#allocation2 + $0x7e8] sm:$0xff]
    %v7358 = vld [vmem:[#allocation2 + $0x7f0] sm:$0xff]
    %v7359 = vld [vmem:[#allocation2 + $0x7f8] sm:$0xff]
    %v7360 = vld [vmem:[%s14] ss:$4 sm:$0xff]
    %v7362 = vperm.slane %v7360, 0
    %v7363 = vperm.slane %v7360, 1
    %v7364 = vperm.slane %v7360, 2
    %v7365 = vperm.slane %v7360, 3
    %v7366 = vperm.slane %v7360, 4
    %v7367 = vperm.slane %v7360, 5
    %v7368 = vperm.slane %v7360, 6
    %v7369 = vperm.slane %v7360, 7
    %v7634 = vunpack.c.l.b16 %v7104
    %v7635 = vunpack.c.h.b16 %v7104
    %v7636 = vunpack.c.l.b16 %v7105
    %v7637 = vunpack.c.h.b16 %v7105
    %v7638 = vunpack.c.l.b16 %v7106
    %v7639 = vunpack.c.h.b16 %v7106
    %v7640 = vunpack.c.l.b16 %v7107
    %v7641 = vunpack.c.h.b16 %v7107
    %v7642 = vunpack.c.l.b16 %v7108
    %v7643 = vunpack.c.h.b16 %v7108
    %v7644 = vunpack.c.l.b16 %v7109
    %v7645 = vunpack.c.h.b16 %v7109
    %v7646 = vunpack.c.l.b16 %v7110
    %v7647 = vunpack.c.h.b16 %v7110
    %v7648 = vunpack.c.l.b16 %v7111
    %v7649 = vunpack.c.h.b16 %v7111
    %v7650 = vunpack.c.l.b16 %v7112
    %v7651 = vunpack.c.h.b16 %v7112
    %v7652 = vunpack.c.l.b16 %v7113
    %v7653 = vunpack.c.h.b16 %v7113
    %v7654 = vunpack.c.l.b16 %v7114
    %v7655 = vunpack.c.h.b16 %v7114
    %v7656 = vunpack.c.l.b16 %v7115
    %v7657 = vunpack.c.h.b16 %v7115
    %v7658 = vunpack.c.l.b16 %v7116
    %v7659 = vunpack.c.h.b16 %v7116
    %v7660 = vunpack.c.l.b16 %v7117
    %v7661 = vunpack.c.h.b16 %v7117
    %v7662 = vunpack.c.l.b16 %v7118
    %v7663 = vunpack.c.h.b16 %v7118
    %v7664 = vunpack.c.l.b16 %v7119
    %v7665 = vunpack.c.h.b16 %v7119
    %v7666 = vunpack.c.l.b16 %v7120
    %v7667 = vunpack.c.h.b16 %v7120
    %v7668 = vunpack.c.l.b16 %v7121
    %v7669 = vunpack.c.h.b16 %v7121
    %v7670 = vunpack.c.l.b16 %v7122
    %v7671 = vunpack.c.h.b16 %v7122
    %v7672 = vunpack.c.l.b16 %v7123
    %v7673 = vunpack.c.h.b16 %v7123
    %v7674 = vunpack.c.l.b16 %v7124
    %v7675 = vunpack.c.h.b16 %v7124
    %v7676 = vunpack.c.l.b16 %v7125
    %v7677 = vunpack.c.h.b16 %v7125
    %v7678 = vunpack.c.l.b16 %v7126
    %v7679 = vunpack.c.h.b16 %v7126
    %v7680 = vunpack.c.l.b16 %v7127
    %v7681 = vunpack.c.h.b16 %v7127
    %v7682 = vunpack.c.l.b16 %v7128
    %v7683 = vunpack.c.h.b16 %v7128
    %v7684 = vunpack.c.l.b16 %v7129
    %v7685 = vunpack.c.h.b16 %v7129
    %v7686 = vunpack.c.l.b16 %v7130
    %v7687 = vunpack.c.h.b16 %v7130
    %v7688 = vunpack.c.l.b16 %v7131
    %v7689 = vunpack.c.h.b16 %v7131
    %v7690 = vunpack.c.l.b16 %v7132
    %v7691 = vunpack.c.h.b16 %v7132
    %v7692 = vunpack.c.l.b16 %v7133
    %v7693 = vunpack.c.h.b16 %v7133
    %v7694 = vunpack.c.l.b16 %v7134
    %v7695 = vunpack.c.h.b16 %v7134
    %v7696 = vunpack.c.l.b16 %v7135
    %v7697 = vunpack.c.h.b16 %v7135
    %v7698 = vunpack.c.l.b16 %v7136
    %v7699 = vunpack.c.h.b16 %v7136
    %v7700 = vunpack.c.l.b16 %v7137
    %v7701 = vunpack.c.h.b16 %v7137
    %v7702 = vunpack.c.l.b16 %v7138
    %v7703 = vunpack.c.h.b16 %v7138
    %v7704 = vunpack.c.l.b16 %v7139
    %v7705 = vunpack.c.h.b16 %v7139
    %v7706 = vunpack.c.l.b16 %v7140
    %v7707 = vunpack.c.h.b16 %v7140
    %v7708 = vunpack.c.l.b16 %v7141
    %v7709 = vunpack.c.h.b16 %v7141
    %v7710 = vunpack.c.l.b16 %v7142
    %v7711 = vunpack.c.h.b16 %v7142
    %v7712 = vunpack.c.l.b16 %v7143
    %v7713 = vunpack.c.h.b16 %v7143
    %v7714 = vunpack.c.l.b16 %v7144
    %v7715 = vunpack.c.h.b16 %v7144
    %v7716 = vunpack.c.l.b16 %v7145
    %v7717 = vunpack.c.h.b16 %v7145
    %v7718 = vunpack.c.l.b16 %v7146
    %v7719 = vunpack.c.h.b16 %v7146
    %v7720 = vunpack.c.l.b16 %v7147
    %v7721 = vunpack.c.h.b16 %v7147
    %v7722 = vunpack.c.l.b16 %v7148
    %v7723 = vunpack.c.h.b16 %v7148
    %v7724 = vunpack.c.l.b16 %v7149
    %v7725 = vunpack.c.h.b16 %v7149
    %v7726 = vunpack.c.l.b16 %v7150
    %v7727 = vunpack.c.h.b16 %v7150
    %v7728 = vunpack.c.l.b16 %v7151
    %v7729 = vunpack.c.h.b16 %v7151
    %v7730 = vunpack.c.l.b16 %v7152
    %v7731 = vunpack.c.h.b16 %v7152
    %v7732 = vunpack.c.l.b16 %v7153
    %v7733 = vunpack.c.h.b16 %v7153
    %v7734 = vunpack.c.l.b16 %v7154
    %v7735 = vunpack.c.h.b16 %v7154
    %v7736 = vunpack.c.l.b16 %v7155
    %v7737 = vunpack.c.h.b16 %v7155
    %v7738 = vunpack.c.l.b16 %v7156
    %v7739 = vunpack.c.h.b16 %v7156
    %v7740 = vunpack.c.l.b16 %v7157
    %v7741 = vunpack.c.h.b16 %v7157
    %v7742 = vunpack.c.l.b16 %v7158
    %v7743 = vunpack.c.h.b16 %v7158
    %v7744 = vunpack.c.l.b16 %v7159
    %v7745 = vunpack.c.h.b16 %v7159
    %v7746 = vunpack.c.l.b16 %v7160
    %v7747 = vunpack.c.h.b16 %v7160
    %v7748 = vunpack.c.l.b16 %v7161
    %v7749 = vunpack.c.h.b16 %v7161
    %v7750 = vunpack.c.l.b16 %v7162
    %v7751 = vunpack.c.h.b16 %v7162
    %v7752 = vunpack.c.l.b16 %v7163
    %v7753 = vunpack.c.h.b16 %v7163
    %v7754 = vunpack.c.l.b16 %v7164
    %v7755 = vunpack.c.h.b16 %v7164
    %v7756 = vunpack.c.l.b16 %v7165
    %v7757 = vunpack.c.h.b16 %v7165
    %v7758 = vunpack.c.l.b16 %v7166
    %v7759 = vunpack.c.h.b16 %v7166
    %v7760 = vunpack.c.l.b16 %v7167
    %v7761 = vunpack.c.h.b16 %v7167
    %v7762 = vunpack.c.l.b16 %v7168
    %v7763 = vunpack.c.h.b16 %v7168
    %v7764 = vunpack.c.l.b16 %v7169
    %v7765 = vunpack.c.h.b16 %v7169
    %v7766 = vunpack.c.l.b16 %v7170
    %v7767 = vunpack.c.h.b16 %v7170
    %v7768 = vunpack.c.l.b16 %v7171
    %v7769 = vunpack.c.h.b16 %v7171
    %v7770 = vunpack.c.l.b16 %v7172
    %v7771 = vunpack.c.h.b16 %v7172
    %v7772 = vunpack.c.l.b16 %v7173
    %v7773 = vunpack.c.h.b16 %v7173
    %v7774 = vunpack.c.l.b16 %v7174
    %v7775 = vunpack.c.h.b16 %v7174
    %v7776 = vunpack.c.l.b16 %v7175
    %v7777 = vunpack.c.h.b16 %v7175
    %v7778 = vunpack.c.l.b16 %v7176
    %v7779 = vunpack.c.h.b16 %v7176
    %v7780 = vunpack.c.l.b16 %v7177
    %v7781 = vunpack.c.h.b16 %v7177
    %v7782 = vunpack.c.l.b16 %v7178
    %v7783 = vunpack.c.h.b16 %v7178
    %v7784 = vunpack.c.l.b16 %v7179
    %v7785 = vunpack.c.h.b16 %v7179
    %v7786 = vunpack.c.l.b16 %v7180
    %v7787 = vunpack.c.h.b16 %v7180
    %v7788 = vunpack.c.l.b16 %v7181
    %v7789 = vunpack.c.h.b16 %v7181
    %v7790 = vunpack.c.l.b16 %v7182
    %v7791 = vunpack.c.h.b16 %v7182
    %v7792 = vunpack.c.l.b16 %v7183
    %v7793 = vunpack.c.h.b16 %v7183
    %v7794 = vunpack.c.l.b16 %v7184
    %v7795 = vunpack.c.h.b16 %v7184
    %v7796 = vunpack.c.l.b16 %v7185
    %v7797 = vunpack.c.h.b16 %v7185
    %v7798 = vunpack.c.l.b16 %v7186
    %v7799 = vunpack.c.h.b16 %v7186
    %v7800 = vunpack.c.l.b16 %v7187
    %v7801 = vunpack.c.h.b16 %v7187
    %v7802 = vunpack.c.l.b16 %v7188
    %v7803 = vunpack.c.h.b16 %v7188
    %v7804 = vunpack.c.l.b16 %v7189
    %v7805 = vunpack.c.h.b16 %v7189
    %v7806 = vunpack.c.l.b16 %v7190
    %v7807 = vunpack.c.h.b16 %v7190
    %v7808 = vunpack.c.l.b16 %v7191
    %v7809 = vunpack.c.h.b16 %v7191
    %v7810 = vunpack.c.l.b16 %v7192
    %v7811 = vunpack.c.h.b16 %v7192
    %v7812 = vunpack.c.l.b16 %v7193
    %v7813 = vunpack.c.h.b16 %v7193
    %v7814 = vunpack.c.l.b16 %v7194
    %v7815 = vunpack.c.h.b16 %v7194
    %v7816 = vunpack.c.l.b16 %v7195
    %v7817 = vunpack.c.h.b16 %v7195
    %v7818 = vunpack.c.l.b16 %v7196
    %v7819 = vunpack.c.h.b16 %v7196
    %v7820 = vunpack.c.l.b16 %v7197
    %v7821 = vunpack.c.h.b16 %v7197
    %v7822 = vunpack.c.l.b16 %v7198
    %v7823 = vunpack.c.h.b16 %v7198
    %v7824 = vunpack.c.l.b16 %v7199
    %v7825 = vunpack.c.h.b16 %v7199
    %v7826 = vunpack.c.l.b16 %v7200
    %v7827 = vunpack.c.h.b16 %v7200
    %v7828 = vunpack.c.l.b16 %v7201
    %v7829 = vunpack.c.h.b16 %v7201
    %v7830 = vunpack.c.l.b16 %v7202
    %v7831 = vunpack.c.h.b16 %v7202
    %v7832 = vunpack.c.l.b16 %v7203
    %v7833 = vunpack.c.h.b16 %v7203
    %v7834 = vunpack.c.l.b16 %v7204
    %v7835 = vunpack.c.h.b16 %v7204
    %v7836 = vunpack.c.l.b16 %v7205
    %v7837 = vunpack.c.h.b16 %v7205
    %v7838 = vunpack.c.l.b16 %v7206
    %v7839 = vunpack.c.h.b16 %v7206
    %v7840 = vunpack.c.l.b16 %v7207
    %v7841 = vunpack.c.h.b16 %v7207
    %v7842 = vunpack.c.l.b16 %v7208
    %v7843 = vunpack.c.h.b16 %v7208
    %v7844 = vunpack.c.l.b16 %v7209
    %v7845 = vunpack.c.h.b16 %v7209
    %v7846 = vunpack.c.l.b16 %v7210
    %v7847 = vunpack.c.h.b16 %v7210
    %v7848 = vunpack.c.l.b16 %v7211
    %v7849 = vunpack.c.h.b16 %v7211
    %v7850 = vunpack.c.l.b16 %v7212
    %v7851 = vunpack.c.h.b16 %v7212
    %v7852 = vunpack.c.l.b16 %v7213
    %v7853 = vunpack.c.h.b16 %v7213
    %v7854 = vunpack.c.l.b16 %v7214
    %v7855 = vunpack.c.h.b16 %v7214
    %v7856 = vunpack.c.l.b16 %v7215
    %v7857 = vunpack.c.h.b16 %v7215
    %v7858 = vunpack.c.l.b16 %v7216
    %v7859 = vunpack.c.h.b16 %v7216
    %v7860 = vunpack.c.l.b16 %v7217
    %v7861 = vunpack.c.h.b16 %v7217
    %v7862 = vunpack.c.l.b16 %v7218
    %v7863 = vunpack.c.h.b16 %v7218
    %v7864 = vunpack.c.l.b16 %v7219
    %v7865 = vunpack.c.h.b16 %v7219
    %v7866 = vunpack.c.l.b16 %v7220
    %v7867 = vunpack.c.h.b16 %v7220
    %v7868 = vunpack.c.l.b16 %v7221
    %v7869 = vunpack.c.h.b16 %v7221
    %v7870 = vunpack.c.l.b16 %v7222
    %v7871 = vunpack.c.h.b16 %v7222
    %v7872 = vunpack.c.l.b16 %v7223
    %v7873 = vunpack.c.h.b16 %v7223
    %v7874 = vunpack.c.l.b16 %v7224
    %v7875 = vunpack.c.h.b16 %v7224
    %v7876 = vunpack.c.l.b16 %v7225
    %v7877 = vunpack.c.h.b16 %v7225
    %v7878 = vunpack.c.l.b16 %v7226
    %v7879 = vunpack.c.h.b16 %v7226
    %v7880 = vunpack.c.l.b16 %v7227
    %v7881 = vunpack.c.h.b16 %v7227
    %v7882 = vunpack.c.l.b16 %v7228
    %v7883 = vunpack.c.h.b16 %v7228
    %v7884 = vunpack.c.l.b16 %v7229
    %v7885 = vunpack.c.h.b16 %v7229
    %v7886 = vunpack.c.l.b16 %v7230
    %v7887 = vunpack.c.h.b16 %v7230
    %v7888 = vunpack.c.l.b16 %v7231
    %v7889 = vunpack.c.h.b16 %v7231
    %v7890 = vunpack.c.l.b16 %v7232
    %v7891 = vunpack.c.h.b16 %v7232
    %v7892 = vunpack.c.l.b16 %v7233
    %v7893 = vunpack.c.h.b16 %v7233
    %v7894 = vunpack.c.l.b16 %v7234
    %v7895 = vunpack.c.h.b16 %v7234
    %v7896 = vunpack.c.l.b16 %v7235
    %v7897 = vunpack.c.h.b16 %v7235
    %v7898 = vunpack.c.l.b16 %v7236
    %v7899 = vunpack.c.h.b16 %v7236
    %v7900 = vunpack.c.l.b16 %v7237
    %v7901 = vunpack.c.h.b16 %v7237
    %v7902 = vunpack.c.l.b16 %v7238
    %v7903 = vunpack.c.h.b16 %v7238
    %v7904 = vunpack.c.l.b16 %v7239
    %v7905 = vunpack.c.h.b16 %v7239
    %v7906 = vunpack.c.l.b16 %v7240
    %v7907 = vunpack.c.h.b16 %v7240
    %v7908 = vunpack.c.l.b16 %v7241
    %v7909 = vunpack.c.h.b16 %v7241
    %v7910 = vunpack.c.l.b16 %v7242
    %v7911 = vunpack.c.h.b16 %v7242
    %v7912 = vunpack.c.l.b16 %v7243
    %v7913 = vunpack.c.h.b16 %v7243
    %v7914 = vunpack.c.l.b16 %v7244
    %v7915 = vunpack.c.h.b16 %v7244
    %v7916 = vunpack.c.l.b16 %v7245
    %v7917 = vunpack.c.h.b16 %v7245
    %v7918 = vunpack.c.l.b16 %v7246
    %v7919 = vunpack.c.h.b16 %v7246
    %v7920 = vunpack.c.l.b16 %v7247
    %v7921 = vunpack.c.h.b16 %v7247
    %v7922 = vunpack.c.l.b16 %v7248
    %v7923 = vunpack.c.h.b16 %v7248
    %v7924 = vunpack.c.l.b16 %v7249
    %v7925 = vunpack.c.h.b16 %v7249
    %v7926 = vunpack.c.l.b16 %v7250
    %v7927 = vunpack.c.h.b16 %v7250
    %v7928 = vunpack.c.l.b16 %v7251
    %v7929 = vunpack.c.h.b16 %v7251
    %v7930 = vunpack.c.l.b16 %v7252
    %v7931 = vunpack.c.h.b16 %v7252
    %v7932 = vunpack.c.l.b16 %v7253
    %v7933 = vunpack.c.h.b16 %v7253
    %v7934 = vunpack.c.l.b16 %v7254
    %v7935 = vunpack.c.h.b16 %v7254
    %v7936 = vunpack.c.l.b16 %v7255
    %v7937 = vunpack.c.h.b16 %v7255
    %v7938 = vunpack.c.l.b16 %v7256
    %v7939 = vunpack.c.h.b16 %v7256
    %v7940 = vunpack.c.l.b16 %v7257
    %v7941 = vunpack.c.h.b16 %v7257
    %v7942 = vunpack.c.l.b16 %v7258
    %v7943 = vunpack.c.h.b16 %v7258
    %v7944 = vunpack.c.l.b16 %v7259
    %v7945 = vunpack.c.h.b16 %v7259
    %v7946 = vunpack.c.l.b16 %v7260
    %v7947 = vunpack.c.h.b16 %v7260
    %v7948 = vunpack.c.l.b16 %v7261
    %v7949 = vunpack.c.h.b16 %v7261
    %v7950 = vunpack.c.l.b16 %v7262
    %v7951 = vunpack.c.h.b16 %v7262
    %v7952 = vunpack.c.l.b16 %v7263
    %v7953 = vunpack.c.h.b16 %v7263
    %v7954 = vunpack.c.l.b16 %v7264
    %v7955 = vunpack.c.h.b16 %v7264
    %v7956 = vunpack.c.l.b16 %v7265
    %v7957 = vunpack.c.h.b16 %v7265
    %v7958 = vunpack.c.l.b16 %v7266
    %v7959 = vunpack.c.h.b16 %v7266
    %v7960 = vunpack.c.l.b16 %v7267
    %v7961 = vunpack.c.h.b16 %v7267
    %v7962 = vunpack.c.l.b16 %v7268
    %v7963 = vunpack.c.h.b16 %v7268
    %v7964 = vunpack.c.l.b16 %v7269
    %v7965 = vunpack.c.h.b16 %v7269
    %v7966 = vunpack.c.l.b16 %v7270
    %v7967 = vunpack.c.h.b16 %v7270
    %v7968 = vunpack.c.l.b16 %v7271
    %v7969 = vunpack.c.h.b16 %v7271
    %v7970 = vunpack.c.l.b16 %v7272
    %v7971 = vunpack.c.h.b16 %v7272
    %v7972 = vunpack.c.l.b16 %v7273
    %v7973 = vunpack.c.h.b16 %v7273
    %v7974 = vunpack.c.l.b16 %v7274
    %v7975 = vunpack.c.h.b16 %v7274
    %v7976 = vunpack.c.l.b16 %v7275
    %v7977 = vunpack.c.h.b16 %v7275
    %v7978 = vunpack.c.l.b16 %v7276
    %v7979 = vunpack.c.h.b16 %v7276
    %v7980 = vunpack.c.l.b16 %v7277
    %v7981 = vunpack.c.h.b16 %v7277
    %v7982 = vunpack.c.l.b16 %v7278
    %v7983 = vunpack.c.h.b16 %v7278
    %v7984 = vunpack.c.l.b16 %v7279
    %v7985 = vunpack.c.h.b16 %v7279
    %v7986 = vunpack.c.l.b16 %v7280
    %v7987 = vunpack.c.h.b16 %v7280
    %v7988 = vunpack.c.l.b16 %v7281
    %v7989 = vunpack.c.h.b16 %v7281
    %v7990 = vunpack.c.l.b16 %v7282
    %v7991 = vunpack.c.h.b16 %v7282
    %v7992 = vunpack.c.l.b16 %v7283
    %v7993 = vunpack.c.h.b16 %v7283
    %v7994 = vunpack.c.l.b16 %v7284
    %v7995 = vunpack.c.h.b16 %v7284
    %v7996 = vunpack.c.l.b16 %v7285
    %v7997 = vunpack.c.h.b16 %v7285
    %v7998 = vunpack.c.l.b16 %v7286
    %v7999 = vunpack.c.h.b16 %v7286
    %v8000 = vunpack.c.l.b16 %v7287
    %v8001 = vunpack.c.h.b16 %v7287
    %v8002 = vunpack.c.l.b16 %v7288
    %v8003 = vunpack.c.h.b16 %v7288
    %v8004 = vunpack.c.l.b16 %v7289
    %v8005 = vunpack.c.h.b16 %v7289
    %v8006 = vunpack.c.l.b16 %v7290
    %v8007 = vunpack.c.h.b16 %v7290
    %v8008 = vunpack.c.l.b16 %v7291
    %v8009 = vunpack.c.h.b16 %v7291
    %v8010 = vunpack.c.l.b16 %v7292
    %v8011 = vunpack.c.h.b16 %v7292
    %v8012 = vunpack.c.l.b16 %v7293
    %v8013 = vunpack.c.h.b16 %v7293
    %v8014 = vunpack.c.l.b16 %v7294
    %v8015 = vunpack.c.h.b16 %v7294
    %v8016 = vunpack.c.l.b16 %v7295
    %v8017 = vunpack.c.h.b16 %v7295
    %v8018 = vunpack.c.l.b16 %v7296
    %v8019 = vunpack.c.h.b16 %v7296
    %v8020 = vunpack.c.l.b16 %v7297
    %v8021 = vunpack.c.h.b16 %v7297
    %v8022 = vunpack.c.l.b16 %v7298
    %v8023 = vunpack.c.h.b16 %v7298
    %v8024 = vunpack.c.l.b16 %v7299
    %v8025 = vunpack.c.h.b16 %v7299
    %v8026 = vunpack.c.l.b16 %v7300
    %v8027 = vunpack.c.h.b16 %v7300
    %v8028 = vunpack.c.l.b16 %v7301
    %v8029 = vunpack.c.h.b16 %v7301
    %v8030 = vunpack.c.l.b16 %v7302
    %v8031 = vunpack.c.h.b16 %v7302
    %v8032 = vunpack.c.l.b16 %v7303
    %v8033 = vunpack.c.h.b16 %v7303
    %v8034 = vunpack.c.l.b16 %v7304
    %v8035 = vunpack.c.h.b16 %v7304
    %v8036 = vunpack.c.l.b16 %v7305
    %v8037 = vunpack.c.h.b16 %v7305
    %v8038 = vunpack.c.l.b16 %v7306
    %v8039 = vunpack.c.h.b16 %v7306
    %v8040 = vunpack.c.l.b16 %v7307
    %v8041 = vunpack.c.h.b16 %v7307
    %v8042 = vunpack.c.l.b16 %v7308
    %v8043 = vunpack.c.h.b16 %v7308
    %v8044 = vunpack.c.l.b16 %v7309
    %v8045 = vunpack.c.h.b16 %v7309
    %v8046 = vunpack.c.l.b16 %v7310
    %v8047 = vunpack.c.h.b16 %v7310
    %v8048 = vunpack.c.l.b16 %v7311
    %v8049 = vunpack.c.h.b16 %v7311
    %v8050 = vunpack.c.l.b16 %v7312
    %v8051 = vunpack.c.h.b16 %v7312
    %v8052 = vunpack.c.l.b16 %v7313
    %v8053 = vunpack.c.h.b16 %v7313
    %v8054 = vunpack.c.l.b16 %v7314
    %v8055 = vunpack.c.h.b16 %v7314
    %v8056 = vunpack.c.l.b16 %v7315
    %v8057 = vunpack.c.h.b16 %v7315
    %v8058 = vunpack.c.l.b16 %v7316
    %v8059 = vunpack.c.h.b16 %v7316
    %v8060 = vunpack.c.l.b16 %v7317
    %v8061 = vunpack.c.h.b16 %v7317
    %v8062 = vunpack.c.l.b16 %v7318
    %v8063 = vunpack.c.h.b16 %v7318
    %v8064 = vunpack.c.l.b16 %v7319
    %v8065 = vunpack.c.h.b16 %v7319
    %v8066 = vunpack.c.l.b16 %v7320
    %v8067 = vunpack.c.h.b16 %v7320
    %v8068 = vunpack.c.l.b16 %v7321
    %v8069 = vunpack.c.h.b16 %v7321
    %v8070 = vunpack.c.l.b16 %v7322
    %v8071 = vunpack.c.h.b16 %v7322
    %v8072 = vunpack.c.l.b16 %v7323
    %v8073 = vunpack.c.h.b16 %v7323
    %v8074 = vunpack.c.l.b16 %v7324
    %v8075 = vunpack.c.h.b16 %v7324
    %v8076 = vunpack.c.l.b16 %v7325
    %v8077 = vunpack.c.h.b16 %v7325
    %v8078 = vunpack.c.l.b16 %v7326
    %v8079 = vunpack.c.h.b16 %v7326
    %v8080 = vunpack.c.l.b16 %v7327
    %v8081 = vunpack.c.h.b16 %v7327
    %v8082 = vunpack.c.l.b16 %v7328
    %v8083 = vunpack.c.h.b16 %v7328
    %v8084 = vunpack.c.l.b16 %v7329
    %v8085 = vunpack.c.h.b16 %v7329
    %v8086 = vunpack.c.l.b16 %v7330
    %v8087 = vunpack.c.h.b16 %v7330
    %v8088 = vunpack.c.l.b16 %v7331
    %v8089 = vunpack.c.h.b16 %v7331
    %v8090 = vunpack.c.l.b16 %v7332
    %v8091 = vunpack.c.h.b16 %v7332
    %v8092 = vunpack.c.l.b16 %v7333
    %v8093 = vunpack.c.h.b16 %v7333
    %v8094 = vunpack.c.l.b16 %v7334
    %v8095 = vunpack.c.h.b16 %v7334
    %v8096 = vunpack.c.l.b16 %v7335
    %v8097 = vunpack.c.h.b16 %v7335
    %v8098 = vunpack.c.l.b16 %v7336
    %v8099 = vunpack.c.h.b16 %v7336
    %v8100 = vunpack.c.l.b16 %v7337
    %v8101 = vunpack.c.h.b16 %v7337
    %v8102 = vunpack.c.l.b16 %v7338
    %v8103 = vunpack.c.h.b16 %v7338
    %v8104 = vunpack.c.l.b16 %v7339
    %v8105 = vunpack.c.h.b16 %v7339
    %v8106 = vunpack.c.l.b16 %v7340
    %v8107 = vunpack.c.h.b16 %v7340
    %v8108 = vunpack.c.l.b16 %v7341
    %v8109 = vunpack.c.h.b16 %v7341
    %v8110 = vunpack.c.l.b16 %v7342
    %v8111 = vunpack.c.h.b16 %v7342
    %v8112 = vunpack.c.l.b16 %v7343
    %v8113 = vunpack.c.h.b16 %v7343
    %v8114 = vunpack.c.l.b16 %v7344
    %v8115 = vunpack.c.h.b16 %v7344
    %v8116 = vunpack.c.l.b16 %v7345
    %v8117 = vunpack.c.h.b16 %v7345
    %v8118 = vunpack.c.l.b16 %v7346
    %v8119 = vunpack.c.h.b16 %v7346
    %v8120 = vunpack.c.l.b16 %v7347
    %v8121 = vunpack.c.h.b16 %v7347
    %v8122 = vunpack.c.l.b16 %v7348
    %v8123 = vunpack.c.h.b16 %v7348
    %v8124 = vunpack.c.l.b16 %v7349
    %v8125 = vunpack.c.h.b16 %v7349
    %v8126 = vunpack.c.l.b16 %v7350
    %v8127 = vunpack.c.h.b16 %v7350
    %v8128 = vunpack.c.l.b16 %v7351
    %v8129 = vunpack.c.h.b16 %v7351
    %v8130 = vunpack.c.l.b16 %v7352
    %v8131 = vunpack.c.h.b16 %v7352
    %v8132 = vunpack.c.l.b16 %v7353
    %v8133 = vunpack.c.h.b16 %v7353
    %v8134 = vunpack.c.l.b16 %v7354
    %v8135 = vunpack.c.h.b16 %v7354
    %v8136 = vunpack.c.l.b16 %v7355
    %v8137 = vunpack.c.h.b16 %v7355
    %v8138 = vunpack.c.l.b16 %v7356
    %v8139 = vunpack.c.h.b16 %v7356
    %v8140 = vunpack.c.l.b16 %v7357
    %v8141 = vunpack.c.h.b16 %v7357
    %v8142 = vunpack.c.l.b16 %v7358
    %v8143 = vunpack.c.h.b16 %v7358
    %v8144 = vunpack.c.l.b16 %v7359
    %v8145 = vunpack.c.h.b16 %v7359
    %v8146 = vpack.c.b16 %v7642, %v7634
    %v8147 = vpack.c.b16 %v7643, %v7635
    %v8148 = vpack.c.b16 %v7644, %v7636
    %v8149 = vpack.c.b16 %v7645, %v7637
    %v8150 = vpack.c.b16 %v7646, %v7638
    %v8151 = vpack.c.b16 %v7647, %v7639
    %v8152 = vpack.c.b16 %v7648, %v7640
    %v8153 = vpack.c.b16 %v7649, %v7641
    %v8154 = vpack.c.b16 %v7658, %v7650
    %v8155 = vpack.c.b16 %v7659, %v7651
    %v8156 = vpack.c.b16 %v7660, %v7652
    %v8157 = vpack.c.b16 %v7661, %v7653
    %v8158 = vpack.c.b16 %v7662, %v7654
    %v8159 = vpack.c.b16 %v7663, %v7655
    %v8160 = vpack.c.b16 %v7664, %v7656
    %v8161 = vpack.c.b16 %v7665, %v7657
    %v8162 = vpack.c.b16 %v7674, %v7666
    %v8163 = vpack.c.b16 %v7675, %v7667
    %v8164 = vpack.c.b16 %v7676, %v7668
    %v8165 = vpack.c.b16 %v7677, %v7669
    %v8166 = vpack.c.b16 %v7678, %v7670
    %v8167 = vpack.c.b16 %v7679, %v7671
    %v8168 = vpack.c.b16 %v7680, %v7672
    %v8169 = vpack.c.b16 %v7681, %v7673
    %v8170 = vpack.c.b16 %v7690, %v7682
    %v8171 = vpack.c.b16 %v7691, %v7683
    %v8172 = vpack.c.b16 %v7692, %v7684
    %v8173 = vpack.c.b16 %v7693, %v7685
    %v8174 = vpack.c.b16 %v7694, %v7686
    %v8175 = vpack.c.b16 %v7695, %v7687
    %v8176 = vpack.c.b16 %v7696, %v7688
    %v8177 = vpack.c.b16 %v7697, %v7689
    %v8178 = vpack.c.b16 %v7706, %v7698
    %v8179 = vpack.c.b16 %v7707, %v7699
    %v8180 = vpack.c.b16 %v7708, %v7700
    %v8181 = vpack.c.b16 %v7709, %v7701
    %v8182 = vpack.c.b16 %v7710, %v7702
    %v8183 = vpack.c.b16 %v7711, %v7703
    %v8184 = vpack.c.b16 %v7712, %v7704
    %v8185 = vpack.c.b16 %v7713, %v7705
    %v8186 = vpack.c.b16 %v7722, %v7714
    %v8187 = vpack.c.b16 %v7723, %v7715
    %v8188 = vpack.c.b16 %v7724, %v7716
    %v8189 = vpack.c.b16 %v7725, %v7717
    %v8190 = vpack.c.b16 %v7726, %v7718
    %v8191 = vpack.c.b16 %v7727, %v7719
    %v8192 = vpack.c.b16 %v7728, %v7720
    %v8193 = vpack.c.b16 %v7729, %v7721
    %v8194 = vpack.c.b16 %v7738, %v7730
    %v8195 = vpack.c.b16 %v7739, %v7731
    %v8196 = vpack.c.b16 %v7740, %v7732
    %v8197 = vpack.c.b16 %v7741, %v7733
    %v8198 = vpack.c.b16 %v7742, %v7734
    %v8199 = vpack.c.b16 %v7743, %v7735
    %v8200 = vpack.c.b16 %v7744, %v7736
    %v8201 = vpack.c.b16 %v7745, %v7737
    %v8202 = vpack.c.b16 %v7754, %v7746
    %v8203 = vpack.c.b16 %v7755, %v7747
    %v8204 = vpack.c.b16 %v7756, %v7748
    %v8205 = vpack.c.b16 %v7757, %v7749
    %v8206 = vpack.c.b16 %v7758, %v7750
    %v8207 = vpack.c.b16 %v7759, %v7751
    %v8208 = vpack.c.b16 %v7760, %v7752
    %v8209 = vpack.c.b16 %v7761, %v7753
    %v8210 = vpack.c.b16 %v7770, %v7762
    %v8211 = vpack.c.b16 %v7771, %v7763
    %v8212 = vpack.c.b16 %v7772, %v7764
    %v8213 = vpack.c.b16 %v7773, %v7765
    %v8214 = vpack.c.b16 %v7774, %v7766
    %v8215 = vpack.c.b16 %v7775, %v7767
    %v8216 = vpack.c.b16 %v7776, %v7768
    %v8217 = vpack.c.b16 %v7777, %v7769
    %v8218 = vpack.c.b16 %v7786, %v7778
    %v8219 = vpack.c.b16 %v7787, %v7779
    %v8220 = vpack.c.b16 %v7788, %v7780
    %v8221 = vpack.c.b16 %v7789, %v7781
    %v8222 = vpack.c.b16 %v7790, %v7782
    %v8223 = vpack.c.b16 %v7791, %v7783
    %v8224 = vpack.c.b16 %v7792, %v7784
    %v8225 = vpack.c.b16 %v7793, %v7785
    %v8226 = vpack.c.b16 %v7802, %v7794
    %v8227 = vpack.c.b16 %v7803, %v7795
    %v8228 = vpack.c.b16 %v7804, %v7796
    %v8229 = vpack.c.b16 %v7805, %v7797
    %v8230 = vpack.c.b16 %v7806, %v7798
    %v8231 = vpack.c.b16 %v7807, %v7799
    %v8232 = vpack.c.b16 %v7808, %v7800
    %v8233 = vpack.c.b16 %v7809, %v7801
    %v8234 = vpack.c.b16 %v7818, %v7810
    %v8235 = vpack.c.b16 %v7819, %v7811
    %v8236 = vpack.c.b16 %v7820, %v7812
    %v8237 = vpack.c.b16 %v7821, %v7813
    %v8238 = vpack.c.b16 %v7822, %v7814
    %v8239 = vpack.c.b16 %v7823, %v7815
    %v8240 = vpack.c.b16 %v7824, %v7816
    %v8241 = vpack.c.b16 %v7825, %v7817
    %v8242 = vpack.c.b16 %v7834, %v7826
    %v8243 = vpack.c.b16 %v7835, %v7827
    %v8244 = vpack.c.b16 %v7836, %v7828
    %v8245 = vpack.c.b16 %v7837, %v7829
    %v8246 = vpack.c.b16 %v7838, %v7830
    %v8247 = vpack.c.b16 %v7839, %v7831
    %v8248 = vpack.c.b16 %v7840, %v7832
    %v8249 = vpack.c.b16 %v7841, %v7833
    %v8250 = vpack.c.b16 %v7850, %v7842
    %v8251 = vpack.c.b16 %v7851, %v7843
    %v8252 = vpack.c.b16 %v7852, %v7844
    %v8253 = vpack.c.b16 %v7853, %v7845
    %v8254 = vpack.c.b16 %v7854, %v7846
    %v8255 = vpack.c.b16 %v7855, %v7847
    %v8256 = vpack.c.b16 %v7856, %v7848
    %v8257 = vpack.c.b16 %v7857, %v7849
    %v8258 = vpack.c.b16 %v7866, %v7858
    %v8259 = vpack.c.b16 %v7867, %v7859
    %v8260 = vpack.c.b16 %v7868, %v7860
    %v8261 = vpack.c.b16 %v7869, %v7861
    %v8262 = vpack.c.b16 %v7870, %v7862
    %v8263 = vpack.c.b16 %v7871, %v7863
    %v8264 = vpack.c.b16 %v7872, %v7864
    %v8265 = vpack.c.b16 %v7873, %v7865
    %v8266 = vpack.c.b16 %v7882, %v7874
    %v8267 = vpack.c.b16 %v7883, %v7875
    %v8268 = vpack.c.b16 %v7884, %v7876
    %v8269 = vpack.c.b16 %v7885, %v7877
    %v8270 = vpack.c.b16 %v7886, %v7878
    %v8271 = vpack.c.b16 %v7887, %v7879
    %v8272 = vpack.c.b16 %v7888, %v7880
    %v8273 = vpack.c.b16 %v7889, %v7881
    %v8274 = vpack.c.b16 %v7898, %v7890
    %v8275 = vpack.c.b16 %v7899, %v7891
    %v8276 = vpack.c.b16 %v7900, %v7892
    %v8277 = vpack.c.b16 %v7901, %v7893
    %v8278 = vpack.c.b16 %v7902, %v7894
    %v8279 = vpack.c.b16 %v7903, %v7895
    %v8280 = vpack.c.b16 %v7904, %v7896
    %v8281 = vpack.c.b16 %v7905, %v7897
    %v8282 = vpack.c.b16 %v7914, %v7906
    %v8283 = vpack.c.b16 %v7915, %v7907
    %v8284 = vpack.c.b16 %v7916, %v7908
    %v8285 = vpack.c.b16 %v7917, %v7909
    %v8286 = vpack.c.b16 %v7918, %v7910
    %v8287 = vpack.c.b16 %v7919, %v7911
    %v8288 = vpack.c.b16 %v7920, %v7912
    %v8289 = vpack.c.b16 %v7921, %v7913
    %v8290 = vpack.c.b16 %v7930, %v7922
    %v8291 = vpack.c.b16 %v7931, %v7923
    %v8292 = vpack.c.b16 %v7932, %v7924
    %v8293 = vpack.c.b16 %v7933, %v7925
    %v8294 = vpack.c.b16 %v7934, %v7926
    %v8295 = vpack.c.b16 %v7935, %v7927
    %v8296 = vpack.c.b16 %v7936, %v7928
    %v8297 = vpack.c.b16 %v7937, %v7929
    %v8298 = vpack.c.b16 %v7946, %v7938
    %v8299 = vpack.c.b16 %v7947, %v7939
    %v8300 = vpack.c.b16 %v7948, %v7940
    %v8301 = vpack.c.b16 %v7949, %v7941
    %v8302 = vpack.c.b16 %v7950, %v7942
    %v8303 = vpack.c.b16 %v7951, %v7943
    %v8304 = vpack.c.b16 %v7952, %v7944
    %v8305 = vpack.c.b16 %v7953, %v7945
    %v8306 = vpack.c.b16 %v7962, %v7954
    %v8307 = vpack.c.b16 %v7963, %v7955
    %v8308 = vpack.c.b16 %v7964, %v7956
    %v8309 = vpack.c.b16 %v7965, %v7957
    %v8310 = vpack.c.b16 %v7966, %v7958
    %v8311 = vpack.c.b16 %v7967, %v7959
    %v8312 = vpack.c.b16 %v7968, %v7960
    %v8313 = vpack.c.b16 %v7969, %v7961
    %v8314 = vpack.c.b16 %v7978, %v7970
    %v8315 = vpack.c.b16 %v7979, %v7971
    %v8316 = vpack.c.b16 %v7980, %v7972
    %v8317 = vpack.c.b16 %v7981, %v7973
    %v8318 = vpack.c.b16 %v7982, %v7974
    %v8319 = vpack.c.b16 %v7983, %v7975
    %v8320 = vpack.c.b16 %v7984, %v7976
    %v8321 = vpack.c.b16 %v7985, %v7977
    %v8322 = vpack.c.b16 %v7994, %v7986
    %v8323 = vpack.c.b16 %v7995, %v7987
    %v8324 = vpack.c.b16 %v7996, %v7988
    %v8325 = vpack.c.b16 %v7997, %v7989
    %v8326 = vpack.c.b16 %v7998, %v7990
    %v8327 = vpack.c.b16 %v7999, %v7991
    %v8328 = vpack.c.b16 %v8000, %v7992
    %v8329 = vpack.c.b16 %v8001, %v7993
    %v8330 = vpack.c.b16 %v8010, %v8002
    %v8331 = vpack.c.b16 %v8011, %v8003
    %v8332 = vpack.c.b16 %v8012, %v8004
    %v8333 = vpack.c.b16 %v8013, %v8005
    %v8334 = vpack.c.b16 %v8014, %v8006
    %v8335 = vpack.c.b16 %v8015, %v8007
    %v8336 = vpack.c.b16 %v8016, %v8008
    %v8337 = vpack.c.b16 %v8017, %v8009
    %v8338 = vpack.c.b16 %v8026, %v8018
    %v8339 = vpack.c.b16 %v8027, %v8019
    %v8340 = vpack.c.b16 %v8028, %v8020
    %v8341 = vpack.c.b16 %v8029, %v8021
    %v8342 = vpack.c.b16 %v8030, %v8022
    %v8343 = vpack.c.b16 %v8031, %v8023
    %v8344 = vpack.c.b16 %v8032, %v8024
    %v8345 = vpack.c.b16 %v8033, %v8025
    %v8346 = vpack.c.b16 %v8042, %v8034
    %v8347 = vpack.c.b16 %v8043, %v8035
    %v8348 = vpack.c.b16 %v8044, %v8036
    %v8349 = vpack.c.b16 %v8045, %v8037
    %v8350 = vpack.c.b16 %v8046, %v8038
    %v8351 = vpack.c.b16 %v8047, %v8039
    %v8352 = vpack.c.b16 %v8048, %v8040
    %v8353 = vpack.c.b16 %v8049, %v8041
    %v8354 = vpack.c.b16 %v8058, %v8050
    %v8355 = vpack.c.b16 %v8059, %v8051
    %v8356 = vpack.c.b16 %v8060, %v8052
    %v8357 = vpack.c.b16 %v8061, %v8053
    %v8358 = vpack.c.b16 %v8062, %v8054
    %v8359 = vpack.c.b16 %v8063, %v8055
    %v8360 = vpack.c.b16 %v8064, %v8056
    %v8361 = vpack.c.b16 %v8065, %v8057
    %v8362 = vpack.c.b16 %v8074, %v8066
    %v8363 = vpack.c.b16 %v8075, %v8067
    %v8364 = vpack.c.b16 %v8076, %v8068
    %v8365 = vpack.c.b16 %v8077, %v8069
    %v8366 = vpack.c.b16 %v8078, %v8070
    %v8367 = vpack.c.b16 %v8079, %v8071
    %v8368 = vpack.c.b16 %v8080, %v8072
    %v8369 = vpack.c.b16 %v8081, %v8073
    %v8370 = vpack.c.b16 %v8090, %v8082
    %v8371 = vpack.c.b16 %v8091, %v8083
    %v8372 = vpack.c.b16 %v8092, %v8084
    %v8373 = vpack.c.b16 %v8093, %v8085
    %v8374 = vpack.c.b16 %v8094, %v8086
    %v8375 = vpack.c.b16 %v8095, %v8087
    %v8376 = vpack.c.b16 %v8096, %v8088
    %v8377 = vpack.c.b16 %v8097, %v8089
    %v8378 = vpack.c.b16 %v8106, %v8098
    %v8379 = vpack.c.b16 %v8107, %v8099
    %v8380 = vpack.c.b16 %v8108, %v8100
    %v8381 = vpack.c.b16 %v8109, %v8101
    %v8382 = vpack.c.b16 %v8110, %v8102
    %v8383 = vpack.c.b16 %v8111, %v8103
    %v8384 = vpack.c.b16 %v8112, %v8104
    %v8385 = vpack.c.b16 %v8113, %v8105
    %v8386 = vpack.c.b16 %v8122, %v8114
    %v8387 = vpack.c.b16 %v8123, %v8115
    %v8388 = vpack.c.b16 %v8124, %v8116
    %v8389 = vpack.c.b16 %v8125, %v8117
    %v8390 = vpack.c.b16 %v8126, %v8118
    %v8391 = vpack.c.b16 %v8127, %v8119
    %v8392 = vpack.c.b16 %v8128, %v8120
    %v8393 = vpack.c.b16 %v8129, %v8121
    %v8394 = vpack.c.b16 %v8138, %v8130
    %v8395 = vpack.c.b16 %v8139, %v8131
    %v8396 = vpack.c.b16 %v8140, %v8132
    %v8397 = vpack.c.b16 %v8141, %v8133
    %v8398 = vpack.c.b16 %v8142, %v8134
    %v8399 = vpack.c.b16 %v8143, %v8135
    %v8400 = vpack.c.b16 %v8144, %v8136
    %v8401 = vpack.c.b16 %v8145, %v8137
    %8658 = vmatpush.bf16.msra.mxu0 %v8202
    %8659 = vmatpush.bf16.msra.mxu0 %v8194
    %8660 = vmatpush.bf16.msra.mxu0 %v8186
    %8661 = vmatpush.bf16.msra.mxu0 %v8178
    %8662 = vmatpush.bf16.msra.mxu0 %v8170
    %8663 = vmatpush.bf16.msra.mxu0 %v8162
    %8664 = vmatpush.bf16.msra.mxu0 %v8154
    %8665 = vmatpush.bf16.msra.mxu0 %v8146
    %8666 = vmatmul.bf16.gmra.mxu0 %v7100
    %v8667 = vpop.f32.mrf.mxu0
    %v8668 = vadd.f32 %v7362, %v8667
    %v8669 = vpop.f32.mrf.mxu0
    %8670 = vdwg.mxu0
    %8671 = vmatpush.bf16.msra.mxu0 %v8266
    %8672 = vmatpush.bf16.msra.mxu0 %v8258
    %8673 = vmatpush.bf16.msra.mxu0 %v8250
    %8674 = vmatpush.bf16.msra.mxu0 %v8242
    %8675 = vmatpush.bf16.msra.mxu0 %v8234
    %8676 = vmatpush.bf16.msra.mxu0 %v8226
    %8677 = vmatpush.bf16.msra.mxu0 %v8218
    %8678 = vmatpush.bf16.msra.mxu0 %v8210
    %8679 = vmatmul.bf16.gmra.mxu0 %v7101
    %v8680 = vpop.f32.mrf.mxu0
    %v8681 = vadd.f32 %v8668, %v8680
    %v8682 = vpop.f32.mrf.mxu0
    %8683 = vdwg.mxu0
    %8684 = vmatpush.bf16.msra.mxu0 %v8330
    %8685 = vmatpush.bf16.msra.mxu0 %v8322
    %8686 = vmatpush.bf16.msra.mxu0 %v8314
    %8687 = vmatpush.bf16.msra.mxu0 %v8306
    %8688 = vmatpush.bf16.msra.mxu0 %v8298
    %8689 = vmatpush.bf16.msra.mxu0 %v8290
    %8690 = vmatpush.bf16.msra.mxu0 %v8282
    %8691 = vmatpush.bf16.msra.mxu0 %v8274
    %8692 = vmatmul.bf16.gmra.mxu0 %v7102
    %v8693 = vpop.f32.mrf.mxu0
    %v8694 = vadd.f32 %v8681, %v8693
    %v8695 = vpop.f32.mrf.mxu0
    %8696 = vdwg.mxu0
    %8697 = vmatpush.bf16.msra.mxu0 %v8394
    %8698 = vmatpush.bf16.msra.mxu0 %v8386
    %8699 = vmatpush.bf16.msra.mxu0 %v8378
    %8700 = vmatpush.bf16.msra.mxu0 %v8370
    %8701 = vmatpush.bf16.msra.mxu0 %v8362
    %8702 = vmatpush.bf16.msra.mxu0 %v8354
    %8703 = vmatpush.bf16.msra.mxu0 %v8346
    %8704 = vmatpush.bf16.msra.mxu0 %v8338
    %8705 = vmatmul.bf16.gmra.mxu0 %v7103
    %v8706 = vpop.f32.mrf.mxu0
    %v8707 = vadd.f32 %v8694, %v8706
    %v8708 = vpop.f32.mrf.mxu0
    %8709 = vdwg.mxu0
    %8710 = vmatpush.bf16.msra.mxu0 %v8203
    %8711 = vmatpush.bf16.msra.mxu0 %v8195
    %8712 = vmatpush.bf16.msra.mxu0 %v8187
    %8713 = vmatpush.bf16.msra.mxu0 %v8179
    %8714 = vmatpush.bf16.msra.mxu0 %v8171
    %8715 = vmatpush.bf16.msra.mxu0 %v8163
    %8716 = vmatpush.bf16.msra.mxu0 %v8155
    %8717 = vmatpush.bf16.msra.mxu0 %v8147
    %8718 = vmatmul.bf16.gmra.mxu0 %v7100
    %v8719 = vpop.f32.mrf.mxu0
    %v8720 = vadd.f32 %v7363, %v8719
    %v8721 = vpop.f32.mrf.mxu0
    %8722 = vdwg.mxu0
    %8723 = vmatpush.bf16.msra.mxu0 %v8267
    %8724 = vmatpush.bf16.msra.mxu0 %v8259
    %8725 = vmatpush.bf16.msra.mxu0 %v8251
    %8726 = vmatpush.bf16.msra.mxu0 %v8243
    %8727 = vmatpush.bf16.msra.mxu0 %v8235
    %8728 = vmatpush.bf16.msra.mxu0 %v8227
    %8729 = vmatpush.bf16.msra.mxu0 %v8219
    %8730 = vmatpush.bf16.msra.mxu0 %v8211
    %8731 = vmatmul.bf16.gmra.mxu0 %v7101
    %v8732 = vpop.f32.mrf.mxu0
    %v8733 = vadd.f32 %v8720, %v8732
    %v8734 = vpop.f32.mrf.mxu0
    %8735 = vdwg.mxu0
    %8736 = vmatpush.bf16.msra.mxu0 %v8331
    %8737 = vmatpush.bf16.msra.mxu0 %v8323
    %8738 = vmatpush.bf16.msra.mxu0 %v8315
    %8739 = vmatpush.bf16.msra.mxu0 %v8307
    %8740 = vmatpush.bf16.msra.mxu0 %v8299
    %8741 = vmatpush.bf16.msra.mxu0 %v8291
    %8742 = vmatpush.bf16.msra.mxu0 %v8283
    %8743 = vmatpush.bf16.msra.mxu0 %v8275
    %8744 = vmatmul.bf16.gmra.mxu0 %v7102
    %v8745 = vpop.f32.mrf.mxu0
    %v8746 = vadd.f32 %v8733, %v8745
    %v8747 = vpop.f32.mrf.mxu0
    %8748 = vdwg.mxu0
    %8749 = vmatpush.bf16.msra.mxu0 %v8395
    %8750 = vmatpush.bf16.msra.mxu0 %v8387
    %8751 = vmatpush.bf16.msra.mxu0 %v8379
    %8752 = vmatpush.bf16.msra.mxu0 %v8371
    %8753 = vmatpush.bf16.msra.mxu0 %v8363
    %8754 = vmatpush.bf16.msra.mxu0 %v8355
    %8755 = vmatpush.bf16.msra.mxu0 %v8347
    %8756 = vmatpush.bf16.msra.mxu0 %v8339
    %8757 = vmatmul.bf16.gmra.mxu0 %v7103
    %v8758 = vpop.f32.mrf.mxu0
    %v8759 = vadd.f32 %v8746, %v8758
    %v8760 = vpop.f32.mrf.mxu0
    %8761 = vdwg.mxu0
    %8762 = vmatpush.bf16.msra.mxu0 %v8204
    %8763 = vmatpush.bf16.msra.mxu0 %v8196
    %8764 = vmatpush.bf16.msra.mxu0 %v8188
    %8765 = vmatpush.bf16.msra.mxu0 %v8180
    %8766 = vmatpush.bf16.msra.mxu0 %v8172
    %8767 = vmatpush.bf16.msra.mxu0 %v8164
    %8768 = vmatpush.bf16.msra.mxu0 %v8156
    %8769 = vmatpush.bf16.msra.mxu0 %v8148
    %8770 = vmatmul.bf16.gmra.mxu0 %v7100
    %v8771 = vpop.f32.mrf.mxu0
    %v8772 = vadd.f32 %v7364, %v8771
    %v8773 = vpop.f32.mrf.mxu0
    %8774 = vdwg.mxu0
    %8775 = vmatpush.bf16.msra.mxu0 %v8268
    %8776 = vmatpush.bf16.msra.mxu0 %v8260
    %8777 = vmatpush.bf16.msra.mxu0 %v8252
    %8778 = vmatpush.bf16.msra.mxu0 %v8244
    %8779 = vmatpush.bf16.msra.mxu0 %v8236
    %8780 = vmatpush.bf16.msra.mxu0 %v8228
    %8781 = vmatpush.bf16.msra.mxu0 %v8220
    %8782 = vmatpush.bf16.msra.mxu0 %v8212
    %8783 = vmatmul.bf16.gmra.mxu0 %v7101
    %v8784 = vpop.f32.mrf.mxu0
    %v8785 = vadd.f32 %v8772, %v8784
    %v8786 = vpop.f32.mrf.mxu0
    %8787 = vdwg.mxu0
    %8788 = vmatpush.bf16.msra.mxu0 %v8332
    %8789 = vmatpush.bf16.msra.mxu0 %v8324
    %8790 = vmatpush.bf16.msra.mxu0 %v8316
    %8791 = vmatpush.bf16.msra.mxu0 %v8308
    %8792 = vmatpush.bf16.msra.mxu0 %v8300
    %8793 = vmatpush.bf16.msra.mxu0 %v8292
    %8794 = vmatpush.bf16.msra.mxu0 %v8284
    %8795 = vmatpush.bf16.msra.mxu0 %v8276
    %8796 = vmatmul.bf16.gmra.mxu0 %v7102
    %v8797 = vpop.f32.mrf.mxu0
    %v8798 = vadd.f32 %v8785, %v8797
    %v8799 = vpop.f32.mrf.mxu0
    %8800 = vdwg.mxu0
    %8801 = vmatpush.bf16.msra.mxu0 %v8396
    %8802 = vmatpush.bf16.msra.mxu0 %v8388
    %8803 = vmatpush.bf16.msra.mxu0 %v8380
    %8804 = vmatpush.bf16.msra.mxu0 %v8372
    %8805 = vmatpush.bf16.msra.mxu0 %v8364
    %8806 = vmatpush.bf16.msra.mxu0 %v8356
    %8807 = vmatpush.bf16.msra.mxu0 %v8348
    %8808 = vmatpush.bf16.msra.mxu0 %v8340
    %8809 = vmatmul.bf16.gmra.mxu0 %v7103
    %v8810 = vpop.f32.mrf.mxu0
    %v8811 = vadd.f32 %v8798, %v8810
    %v8812 = vpop.f32.mrf.mxu0
    %8813 = vdwg.mxu0
    %8814 = vmatpush.bf16.msra.mxu0 %v8205
    %8815 = vmatpush.bf16.msra.mxu0 %v8197
    %8816 = vmatpush.bf16.msra.mxu0 %v8189
    %8817 = vmatpush.bf16.msra.mxu0 %v8181
    %8818 = vmatpush.bf16.msra.mxu0 %v8173
    %8819 = vmatpush.bf16.msra.mxu0 %v8165
    %8820 = vmatpush.bf16.msra.mxu0 %v8157
    %8821 = vmatpush.bf16.msra.mxu0 %v8149
    %8822 = vmatmul.bf16.gmra.mxu0 %v7100
    %v8823 = vpop.f32.mrf.mxu0
    %v8824 = vadd.f32 %v7365, %v8823
    %v8825 = vpop.f32.mrf.mxu0
    %8826 = vdwg.mxu0
    %8827 = vmatpush.bf16.msra.mxu0 %v8269
    %8828 = vmatpush.bf16.msra.mxu0 %v8261
    %8829 = vmatpush.bf16.msra.mxu0 %v8253
    %8830 = vmatpush.bf16.msra.mxu0 %v8245
    %8831 = vmatpush.bf16.msra.mxu0 %v8237
    %8832 = vmatpush.bf16.msra.mxu0 %v8229
    %8833 = vmatpush.bf16.msra.mxu0 %v8221
    %8834 = vmatpush.bf16.msra.mxu0 %v8213
    %8835 = vmatmul.bf16.gmra.mxu0 %v7101
    %v8836 = vpop.f32.mrf.mxu0
    %v8837 = vadd.f32 %v8824, %v8836
    %v8838 = vpop.f32.mrf.mxu0
    %8839 = vdwg.mxu0
    %8840 = vmatpush.bf16.msra.mxu0 %v8333
    %8841 = vmatpush.bf16.msra.mxu0 %v8325
    %8842 = vmatpush.bf16.msra.mxu0 %v8317
    %8843 = vmatpush.bf16.msra.mxu0 %v8309
    %8844 = vmatpush.bf16.msra.mxu0 %v8301
    %8845 = vmatpush.bf16.msra.mxu0 %v8293
    %8846 = vmatpush.bf16.msra.mxu0 %v8285
    %8847 = vmatpush.bf16.msra.mxu0 %v8277
    %8848 = vmatmul.bf16.gmra.mxu0 %v7102
    %v8849 = vpop.f32.mrf.mxu0
    %v8850 = vadd.f32 %v8837, %v8849
    %v8851 = vpop.f32.mrf.mxu0
    %8852 = vdwg.mxu0
    %8853 = vmatpush.bf16.msra.mxu0 %v8397
    %8854 = vmatpush.bf16.msra.mxu0 %v8389
    %8855 = vmatpush.bf16.msra.mxu0 %v8381
    %8856 = vmatpush.bf16.msra.mxu0 %v8373
    %8857 = vmatpush.bf16.msra.mxu0 %v8365
    %8858 = vmatpush.bf16.msra.mxu0 %v8357
    %8859 = vmatpush.bf16.msra.mxu0 %v8349
    %8860 = vmatpush.bf16.msra.mxu0 %v8341
    %8861 = vmatmul.bf16.gmra.mxu0 %v7103
    %v8862 = vpop.f32.mrf.mxu0
    %v8863 = vadd.f32 %v8850, %v8862
    %v8864 = vpop.f32.mrf.mxu0
    %8865 = vdwg.mxu0
    %8866 = vmatpush.bf16.msra.mxu0 %v8206
    %8867 = vmatpush.bf16.msra.mxu0 %v8198
    %8868 = vmatpush.bf16.msra.mxu0 %v8190
    %8869 = vmatpush.bf16.msra.mxu0 %v8182
    %8870 = vmatpush.bf16.msra.mxu0 %v8174
    %8871 = vmatpush.bf16.msra.mxu0 %v8166
    %8872 = vmatpush.bf16.msra.mxu0 %v8158
    %8873 = vmatpush.bf16.msra.mxu0 %v8150
    %8874 = vmatmul.bf16.gmra.mxu0 %v7100
    %v8875 = vpop.f32.mrf.mxu0
    %v8876 = vadd.f32 %v7366, %v8875
    %v8877 = vpop.f32.mrf.mxu0
    %8878 = vdwg.mxu0
    %8879 = vmatpush.bf16.msra.mxu0 %v8270
    %8880 = vmatpush.bf16.msra.mxu0 %v8262
    %8881 = vmatpush.bf16.msra.mxu0 %v8254
    %8882 = vmatpush.bf16.msra.mxu0 %v8246
    %8883 = vmatpush.bf16.msra.mxu0 %v8238
    %8884 = vmatpush.bf16.msra.mxu0 %v8230
    %8885 = vmatpush.bf16.msra.mxu0 %v8222
    %8886 = vmatpush.bf16.msra.mxu0 %v8214
    %8887 = vmatmul.bf16.gmra.mxu0 %v7101
    %v8888 = vpop.f32.mrf.mxu0
    %v8889 = vadd.f32 %v8876, %v8888
    %v8890 = vpop.f32.mrf.mxu0
    %8891 = vdwg.mxu0
    %8892 = vmatpush.bf16.msra.mxu0 %v8334
    %8893 = vmatpush.bf16.msra.mxu0 %v8326
    %8894 = vmatpush.bf16.msra.mxu0 %v8318
    %8895 = vmatpush.bf16.msra.mxu0 %v8310
    %8896 = vmatpush.bf16.msra.mxu0 %v8302
    %8897 = vmatpush.bf16.msra.mxu0 %v8294
    %8898 = vmatpush.bf16.msra.mxu0 %v8286
    %8899 = vmatpush.bf16.msra.mxu0 %v8278
    %8900 = vmatmul.bf16.gmra.mxu0 %v7102
    %v8901 = vpop.f32.mrf.mxu0
    %v8902 = vadd.f32 %v8889, %v8901
    %v8903 = vpop.f32.mrf.mxu0
    %8904 = vdwg.mxu0
    %8905 = vmatpush.bf16.msra.mxu0 %v8398
    %8906 = vmatpush.bf16.msra.mxu0 %v8390
    %8907 = vmatpush.bf16.msra.mxu0 %v8382
    %8908 = vmatpush.bf16.msra.mxu0 %v8374
    %8909 = vmatpush.bf16.msra.mxu0 %v8366
    %8910 = vmatpush.bf16.msra.mxu0 %v8358
    %8911 = vmatpush.bf16.msra.mxu0 %v8350
    %8912 = vmatpush.bf16.msra.mxu0 %v8342
    %8913 = vmatmul.bf16.gmra.mxu0 %v7103
    %v8914 = vpop.f32.mrf.mxu0
    %v8915 = vadd.f32 %v8902, %v8914
    %v8916 = vpop.f32.mrf.mxu0
    %8917 = vdwg.mxu0
    %8918 = vmatpush.bf16.msra.mxu0 %v8207
    %8919 = vmatpush.bf16.msra.mxu0 %v8199
    %8920 = vmatpush.bf16.msra.mxu0 %v8191
    %8921 = vmatpush.bf16.msra.mxu0 %v8183
    %8922 = vmatpush.bf16.msra.mxu0 %v8175
    %8923 = vmatpush.bf16.msra.mxu0 %v8167
    %8924 = vmatpush.bf16.msra.mxu0 %v8159
    %8925 = vmatpush.bf16.msra.mxu0 %v8151
    %8926 = vmatmul.bf16.gmra.mxu0 %v7100
    %v8927 = vpop.f32.mrf.mxu0
    %v8928 = vadd.f32 %v7367, %v8927
    %v8929 = vpop.f32.mrf.mxu0
    %8930 = vdwg.mxu0
    %8931 = vmatpush.bf16.msra.mxu0 %v8271
    %8932 = vmatpush.bf16.msra.mxu0 %v8263
    %8933 = vmatpush.bf16.msra.mxu0 %v8255
    %8934 = vmatpush.bf16.msra.mxu0 %v8247
    %8935 = vmatpush.bf16.msra.mxu0 %v8239
    %8936 = vmatpush.bf16.msra.mxu0 %v8231
    %8937 = vmatpush.bf16.msra.mxu0 %v8223
    %8938 = vmatpush.bf16.msra.mxu0 %v8215
    %8939 = vmatmul.bf16.gmra.mxu0 %v7101
    %v8940 = vpop.f32.mrf.mxu0
    %v8941 = vadd.f32 %v8928, %v8940
    %v8942 = vpop.f32.mrf.mxu0
    %8943 = vdwg.mxu0
    %8944 = vmatpush.bf16.msra.mxu0 %v8335
    %8945 = vmatpush.bf16.msra.mxu0 %v8327
    %8946 = vmatpush.bf16.msra.mxu0 %v8319
    %8947 = vmatpush.bf16.msra.mxu0 %v8311
    %8948 = vmatpush.bf16.msra.mxu0 %v8303
    %8949 = vmatpush.bf16.msra.mxu0 %v8295
    %8950 = vmatpush.bf16.msra.mxu0 %v8287
    %8951 = vmatpush.bf16.msra.mxu0 %v8279
    %8952 = vmatmul.bf16.gmra.mxu0 %v7102
    %v8953 = vpop.f32.mrf.mxu0
    %v8954 = vadd.f32 %v8941, %v8953
    %v8955 = vpop.f32.mrf.mxu0
    %8956 = vdwg.mxu0
    %8957 = vmatpush.bf16.msra.mxu0 %v8399
    %8958 = vmatpush.bf16.msra.mxu0 %v8391
    %8959 = vmatpush.bf16.msra.mxu0 %v8383
    %8960 = vmatpush.bf16.msra.mxu0 %v8375
    %8961 = vmatpush.bf16.msra.mxu0 %v8367
    %8962 = vmatpush.bf16.msra.mxu0 %v8359
    %8963 = vmatpush.bf16.msra.mxu0 %v8351
    %8964 = vmatpush.bf16.msra.mxu0 %v8343
    %8965 = vmatmul.bf16.gmra.mxu0 %v7103
    %v8966 = vpop.f32.mrf.mxu0
    %v8967 = vadd.f32 %v8954, %v8966
    %v8968 = vpop.f32.mrf.mxu0
    %8969 = vdwg.mxu0
    %8970 = vmatpush.bf16.msra.mxu0 %v8208
    %8971 = vmatpush.bf16.msra.mxu0 %v8200
    %8972 = vmatpush.bf16.msra.mxu0 %v8192
    %8973 = vmatpush.bf16.msra.mxu0 %v8184
    %8974 = vmatpush.bf16.msra.mxu0 %v8176
    %8975 = vmatpush.bf16.msra.mxu0 %v8168
    %8976 = vmatpush.bf16.msra.mxu0 %v8160
    %8977 = vmatpush.bf16.msra.mxu0 %v8152
    %8978 = vmatmul.bf16.gmra.mxu0 %v7100
    %v8979 = vpop.f32.mrf.mxu0
    %v8980 = vadd.f32 %v7368, %v8979
    %v8981 = vpop.f32.mrf.mxu0
    %8982 = vdwg.mxu0
    %8983 = vmatpush.bf16.msra.mxu0 %v8272
    %8984 = vmatpush.bf16.msra.mxu0 %v8264
    %8985 = vmatpush.bf16.msra.mxu0 %v8256
    %8986 = vmatpush.bf16.msra.mxu0 %v8248
    %8987 = vmatpush.bf16.msra.mxu0 %v8240
    %8988 = vmatpush.bf16.msra.mxu0 %v8232
    %8989 = vmatpush.bf16.msra.mxu0 %v8224
    %8990 = vmatpush.bf16.msra.mxu0 %v8216
    %8991 = vmatmul.bf16.gmra.mxu0 %v7101
    %v8992 = vpop.f32.mrf.mxu0
    %v8993 = vadd.f32 %v8980, %v8992
    %v8994 = vpop.f32.mrf.mxu0
    %8995 = vdwg.mxu0
    %8996 = vmatpush.bf16.msra.mxu0 %v8336
    %8997 = vmatpush.bf16.msra.mxu0 %v8328
    %8998 = vmatpush.bf16.msra.mxu0 %v8320
    %8999 = vmatpush.bf16.msra.mxu0 %v8312
    %9000 = vmatpush.bf16.msra.mxu0 %v8304
    %9001 = vmatpush.bf16.msra.mxu0 %v8296
    %9002 = vmatpush.bf16.msra.mxu0 %v8288
    %9003 = vmatpush.bf16.msra.mxu0 %v8280
    %9004 = vmatmul.bf16.gmra.mxu0 %v7102
    %v9005 = vpop.f32.mrf.mxu0
    %v9006 = vadd.f32 %v8993, %v9005
    %v9007 = vpop.f32.mrf.mxu0
    %9008 = vdwg.mxu0
    %9009 = vmatpush.bf16.msra.mxu0 %v8400
    %9010 = vmatpush.bf16.msra.mxu0 %v8392
    %9011 = vmatpush.bf16.msra.mxu0 %v8384
    %9012 = vmatpush.bf16.msra.mxu0 %v8376
    %9013 = vmatpush.bf16.msra.mxu0 %v8368
    %9014 = vmatpush.bf16.msra.mxu0 %v8360
    %9015 = vmatpush.bf16.msra.mxu0 %v8352
    %9016 = vmatpush.bf16.msra.mxu0 %v8344
    %9017 = vmatmul.bf16.gmra.mxu0 %v7103
    %v9018 = vpop.f32.mrf.mxu0
    %v9019 = vadd.f32 %v9006, %v9018
    %v9020 = vpop.f32.mrf.mxu0
    %9021 = vdwg.mxu0
    %9022 = vmatpush.bf16.msra.mxu0 %v8209
    %9023 = vmatpush.bf16.msra.mxu0 %v8201
    %9024 = vmatpush.bf16.msra.mxu0 %v8193
    %9025 = vmatpush.bf16.msra.mxu0 %v8185
    %9026 = vmatpush.bf16.msra.mxu0 %v8177
    %9027 = vmatpush.bf16.msra.mxu0 %v8169
    %9028 = vmatpush.bf16.msra.mxu0 %v8161
    %9029 = vmatpush.bf16.msra.mxu0 %v8153
    %9030 = vmatmul.bf16.gmra.mxu0 %v7100
    %v9031 = vpop.f32.mrf.mxu0
    %v9032 = vadd.f32 %v7369, %v9031
    %v9033 = vpop.f32.mrf.mxu0
    %9034 = vdwg.mxu0
    %9035 = vmatpush.bf16.msra.mxu0 %v8273
    %9036 = vmatpush.bf16.msra.mxu0 %v8265
    %9037 = vmatpush.bf16.msra.mxu0 %v8257
    %9038 = vmatpush.bf16.msra.mxu0 %v8249
    %9039 = vmatpush.bf16.msra.mxu0 %v8241
    %9040 = vmatpush.bf16.msra.mxu0 %v8233
    %9041 = vmatpush.bf16.msra.mxu0 %v8225
    %9042 = vmatpush.bf16.msra.mxu0 %v8217
    %9043 = vmatmul.bf16.gmra.mxu0 %v7101
    %v9044 = vpop.f32.mrf.mxu0
    %v9045 = vadd.f32 %v9032, %v9044
    %v9046 = vpop.f32.mrf.mxu0
    %9047 = vdwg.mxu0
    %9048 = vmatpush.bf16.msra.mxu0 %v8337
    %9049 = vmatpush.bf16.msra.mxu0 %v8329
    %9050 = vmatpush.bf16.msra.mxu0 %v8321
    %9051 = vmatpush.bf16.msra.mxu0 %v8313
    %9052 = vmatpush.bf16.msra.mxu0 %v8305
    %9053 = vmatpush.bf16.msra.mxu0 %v8297
    %9054 = vmatpush.bf16.msra.mxu0 %v8289
    %9055 = vmatpush.bf16.msra.mxu0 %v8281
    %9056 = vmatmul.bf16.gmra.mxu0 %v7102
    %v9057 = vpop.f32.mrf.mxu0
    %v9058 = vadd.f32 %v9045, %v9057
    %v9059 = vpop.f32.mrf.mxu0
    %9060 = vdwg.mxu0
    %9061 = vmatpush.bf16.msra.mxu0 %v8401
    %9062 = vmatpush.bf16.msra.mxu0 %v8393
    %9063 = vmatpush.bf16.msra.mxu0 %v8385
    %9064 = vmatpush.bf16.msra.mxu0 %v8377
    %9065 = vmatpush.bf16.msra.mxu0 %v8369
    %9066 = vmatpush.bf16.msra.mxu0 %v8361
    %9067 = vmatpush.bf16.msra.mxu0 %v8353
    %9068 = vmatpush.bf16.msra.mxu0 %v8345
    %9069 = vmatmul.bf16.gmra.mxu0 %v7103
    %v9070 = vpop.f32.mrf.mxu0
    %v9071 = vadd.f32 %v9058, %v9070
    %v9072 = vpop.f32.mrf.mxu0
    %9073 = vdwg.mxu0
    %s9074 = scalar_lea.vmem %s14, 1
    %v9075 = vld [vmem:[%s9074] ss:$4 sm:$0xff]
    %s9076 = scalar_lea.vmem %s14, 2
    %v9077 = vld [vmem:[%s9076] ss:$4 sm:$0xff]
    %s9078 = scalar_lea.vmem %s14, 3
    %v9079 = vld [vmem:[%s9078] ss:$4 sm:$0xff]
    %v9081 = vperm.slane %v9075, 0
    %v9082 = vperm.slane %v9075, 1
    %v9083 = vperm.slane %v9075, 2
    %v9084 = vperm.slane %v9075, 3
    %v9085 = vperm.slane %v9075, 4
    %v9086 = vperm.slane %v9075, 5
    %v9087 = vperm.slane %v9075, 6
    %v9088 = vperm.slane %v9075, 7
    %v9097 = vadd.f32 %v8707, %v9081
    %v9098 = vadd.f32 %v8759, %v9082
    %v9099 = vadd.f32 %v8811, %v9083
    %v9100 = vadd.f32 %v8863, %v9084
    %v9101 = vadd.f32 %v8915, %v9085
    %v9102 = vadd.f32 %v8967, %v9086
    %v9103 = vadd.f32 %v9019, %v9087
    %v9104 = vadd.f32 %v9071, %v9088
    %v9106 = vperm.slane %v9077, 0
    %v9107 = vperm.slane %v9077, 1
    %v9108 = vperm.slane %v9077, 2
    %v9109 = vperm.slane %v9077, 3
    %v9110 = vperm.slane %v9077, 4
    %v9111 = vperm.slane %v9077, 5
    %v9112 = vperm.slane %v9077, 6
    %v9113 = vperm.slane %v9077, 7
    %v9122 = vmul.f32 %v8707, %v9106
    %v9123 = vmul.f32 %v8759, %v9107
    %v9124 = vmul.f32 %v8811, %v9108
    %v9125 = vmul.f32 %v8863, %v9109
    %v9126 = vmul.f32 %v8915, %v9110
    %v9127 = vmul.f32 %v8967, %v9111
    %v9128 = vmul.f32 %v9019, %v9112
    %v9129 = vmul.f32 %v9071, %v9113
    %v9130 = vxor.u32 %v9122, 2147483648
    %v9131 = vxor.u32 %v9123, 2147483648
    %v9132 = vxor.u32 %v9124, 2147483648
    %v9133 = vxor.u32 %v9125, 2147483648
    %v9134 = vxor.u32 %v9126, 2147483648
    %v9135 = vxor.u32 %v9127, 2147483648
    %v9136 = vxor.u32 %v9128, 2147483648
    %v9137 = vxor.u32 %v9129, 2147483648
    %v9138 = vmul.f32 %v9130, 1.442695
    %v9139 = vpow.pop %v9138
    %v9140 = vmul.f32 %v9131, 1.442695
    %v9141 = vpow.pop %v9140
    %v9142 = vmul.f32 %v9132, 1.442695
    %v9143 = vpow.pop %v9142
    %v9144 = vmul.f32 %v9133, 1.442695
    %v9145 = vpow.pop %v9144
    %v9146 = vmul.f32 %v9134, 1.442695
    %v9147 = vpow.pop %v9146
    %v9148 = vmul.f32 %v9135, 1.442695
    %v9149 = vpow.pop %v9148
    %v9150 = vmul.f32 %v9136, 1.442695
    %v9151 = vpow.pop %v9150
    %v9152 = vmul.f32 %v9137, 1.442695
    %v9153 = vpow.pop %v9152
    %v9154 = vadd.f32 %v9139, 1.0
    %v9155 = vadd.f32 %v9141, 1.0
    %v9156 = vadd.f32 %v9143, 1.0
    %v9157 = vadd.f32 %v9145, 1.0
    %v9158 = vadd.f32 %v9147, 1.0
    %v9159 = vadd.f32 %v9149, 1.0
    %v9160 = vadd.f32 %v9151, 1.0
    %v9161 = vadd.f32 %v9153, 1.0
    %v9162 = vrcp.pop %v9154
    %v9163 = vmul.f32 %v9154, %v9162
    %v9164 = vsub.f32 1.0, %v9163
    %v9165 = vmul.f32 %v9162, %v9164
    %v9166 = vadd.f32 %v9162, %v9165
    %vm9167 = vweird.f32 %v9154
    %vm9168 = vweird.f32 %v9162
    %vm9169 = vmor %vm9167, %vm9168
    %v9170 = vsel %vm9169, %v9162, %v9166
    %v9171 = vand.u32 2147483647, %v9154
    %vm9172 = vcmp.eq.f32.partialorder %v9171, 8.507059e+37
    %v9173 = vand.u32 %v9154, 2147483648
    %v9174 = vor.u32 1.1754944e-38, %v9173
    %v9175 = vsel %vm9172, %v9174, %v9170
    %v9176 = vmul.f32 1.0, %v9175
    %v9177 = vrcp.pop %v9155
    %v9178 = vmul.f32 %v9155, %v9177
    %v9179 = vsub.f32 1.0, %v9178
    %v9180 = vmul.f32 %v9177, %v9179
    %v9181 = vadd.f32 %v9177, %v9180
    %vm9182 = vweird.f32 %v9155
    %vm9183 = vweird.f32 %v9177
    %vm9184 = vmor %vm9182, %vm9183
    %v9185 = vsel %vm9184, %v9177, %v9181
    %v9186 = vand.u32 2147483647, %v9155
    %vm9187 = vcmp.eq.f32.partialorder %v9186, 8.507059e+37
    %v9188 = vand.u32 %v9155, 2147483648
    %v9189 = vor.u32 1.1754944e-38, %v9188
    %v9190 = vsel %vm9187, %v9189, %v9185
    %v9191 = vmul.f32 1.0, %v9190
    %v9192 = vrcp.pop %v9156
    %v9193 = vmul.f32 %v9156, %v9192
    %v9194 = vsub.f32 1.0, %v9193
    %v9195 = vmul.f32 %v9192, %v9194
    %v9196 = vadd.f32 %v9192, %v9195
    %vm9197 = vweird.f32 %v9156
    %vm9198 = vweird.f32 %v9192
    %vm9199 = vmor %vm9197, %vm9198
    %v9200 = vsel %vm9199, %v9192, %v9196
    %v9201 = vand.u32 2147483647, %v9156
    %vm9202 = vcmp.eq.f32.partialorder %v9201, 8.507059e+37
    %v9203 = vand.u32 %v9156, 2147483648
    %v9204 = vor.u32 1.1754944e-38, %v9203
    %v9205 = vsel %vm9202, %v9204, %v9200
    %v9206 = vmul.f32 1.0, %v9205
    %v9207 = vrcp.pop %v9157
    %v9208 = vmul.f32 %v9157, %v9207
    %v9209 = vsub.f32 1.0, %v9208
    %v9210 = vmul.f32 %v9207, %v9209
    %v9211 = vadd.f32 %v9207, %v9210
    %vm9212 = vweird.f32 %v9157
    %vm9213 = vweird.f32 %v9207
    %vm9214 = vmor %vm9212, %vm9213
    %v9215 = vsel %vm9214, %v9207, %v9211
    %v9216 = vand.u32 2147483647, %v9157
    %vm9217 = vcmp.eq.f32.partialorder %v9216, 8.507059e+37
    %v9218 = vand.u32 %v9157, 2147483648
    %v9219 = vor.u32 1.1754944e-38, %v9218
    %v9220 = vsel %vm9217, %v9219, %v9215
    %v9221 = vmul.f32 1.0, %v9220
    %v9222 = vrcp.pop %v9158
    %v9223 = vmul.f32 %v9158, %v9222
    %v9224 = vsub.f32 1.0, %v9223
    %v9225 = vmul.f32 %v9222, %v9224
    %v9226 = vadd.f32 %v9222, %v9225
    %vm9227 = vweird.f32 %v9158
    %vm9228 = vweird.f32 %v9222
    %vm9229 = vmor %vm9227, %vm9228
    %v9230 = vsel %vm9229, %v9222, %v9226
    %v9231 = vand.u32 2147483647, %v9158
    %vm9232 = vcmp.eq.f32.partialorder %v9231, 8.507059e+37
    %v9233 = vand.u32 %v9158, 2147483648
    %v9234 = vor.u32 1.1754944e-38, %v9233
    %v9235 = vsel %vm9232, %v9234, %v9230
    %v9236 = vmul.f32 1.0, %v9235
    %v9237 = vrcp.pop %v9159
    %v9238 = vmul.f32 %v9159, %v9237
    %v9239 = vsub.f32 1.0, %v9238
    %v9240 = vmul.f32 %v9237, %v9239
    %v9241 = vadd.f32 %v9237, %v9240
    %vm9242 = vweird.f32 %v9159
    %vm9243 = vweird.f32 %v9237
    %vm9244 = vmor %vm9242, %vm9243
    %v9245 = vsel %vm9244, %v9237, %v9241
    %v9246 = vand.u32 2147483647, %v9159
    %vm9247 = vcmp.eq.f32.partialorder %v9246, 8.507059e+37
    %v9248 = vand.u32 %v9159, 2147483648
    %v9249 = vor.u32 1.1754944e-38, %v9248
    %v9250 = vsel %vm9247, %v9249, %v9245
    %v9251 = vmul.f32 1.0, %v9250
    %v9252 = vrcp.pop %v9160
    %v9253 = vmul.f32 %v9160, %v9252
    %v9254 = vsub.f32 1.0, %v9253
    %v9255 = vmul.f32 %v9252, %v9254
    %v9256 = vadd.f32 %v9252, %v9255
    %vm9257 = vweird.f32 %v9160
    %vm9258 = vweird.f32 %v9252
    %vm9259 = vmor %vm9257, %vm9258
    %v9260 = vsel %vm9259, %v9252, %v9256
    %v9261 = vand.u32 2147483647, %v9160
    %vm9262 = vcmp.eq.f32.partialorder %v9261, 8.507059e+37
    %v9263 = vand.u32 %v9160, 2147483648
    %v9264 = vor.u32 1.1754944e-38, %v9263
    %v9265 = vsel %vm9262, %v9264, %v9260
    %v9266 = vmul.f32 1.0, %v9265
    %v9267 = vrcp.pop %v9161
    %v9268 = vmul.f32 %v9161, %v9267
    %v9269 = vsub.f32 1.0, %v9268
    %v9270 = vmul.f32 %v9267, %v9269
    %v9271 = vadd.f32 %v9267, %v9270
    %vm9272 = vweird.f32 %v9161
    %vm9273 = vweird.f32 %v9267
    %vm9274 = vmor %vm9272, %vm9273
    %v9275 = vsel %vm9274, %v9267, %v9271
    %v9276 = vand.u32 2147483647, %v9161
    %vm9277 = vcmp.eq.f32.partialorder %v9276, 8.507059e+37
    %v9278 = vand.u32 %v9161, 2147483648
    %v9279 = vor.u32 1.1754944e-38, %v9278
    %v9280 = vsel %vm9277, %v9279, %v9275
    %v9281 = vmul.f32 1.0, %v9280
    %v9282 = vmul.f32 %v9097, %v9176
    %v9283 = vmul.f32 %v9098, %v9191
    %v9284 = vmul.f32 %v9099, %v9206
    %v9285 = vmul.f32 %v9100, %v9221
    %v9286 = vmul.f32 %v9101, %v9236
    %v9287 = vmul.f32 %v9102, %v9251
    %v9288 = vmul.f32 %v9103, %v9266
    %v9289 = vmul.f32 %v9104, %v9281
    %v9291 = vperm.slane %v9079, 0
    %v9292 = vperm.slane %v9079, 1
    %v9293 = vperm.slane %v9079, 2
    %v9294 = vperm.slane %v9079, 3
    %v9295 = vperm.slane %v9079, 4
    %v9296 = vperm.slane %v9079, 5
    %v9297 = vperm.slane %v9079, 6
    %v9298 = vperm.slane %v9079, 7
    %v9307 = vsub.f32 %v9282, %v9291
    %v9308 = vsub.f32 %v9283, %v9292
    %v9309 = vsub.f32 %v9284, %v9293
    %v9310 = vsub.f32 %v9285, %v9294
    %v9311 = vsub.f32 %v9286, %v9295
    %v9312 = vsub.f32 %v9287, %v9296
    %v9313 = vsub.f32 %v9288, %v9297
    %v9314 = vsub.f32 %v9289, %v9298
    %v9315 = vpack.c.bf16 %v9307, %v9307
    %v9316 = vpack.c.bf16 %v9308, %v9308
    %v9317 = vpack.c.bf16 %v9309, %v9309
    %v9318 = vpack.c.bf16 %v9310, %v9310
    %v9319 = vpack.c.bf16 %v9311, %v9311
    %v9320 = vpack.c.bf16 %v9312, %v9312
    %v9321 = vpack.c.bf16 %v9313, %v9313
    %v9322 = vpack.c.bf16 %v9314, %v9314
    %v9323 = vld [vmem:[%s15] sm:$0xff]
    %v9324 = vld [vmem:[%s15 + $0x8] sm:$0xff]
    %v9325 = vld [vmem:[%s15 + $0x10] sm:$0xff]
    %v9326 = vld [vmem:[%s15 + $0x18] sm:$0xf]
    %v9327 = vld [vmem:[%s15 + $0x1c] sm:$0xff]
    %v9328 = vld [vmem:[%s15 + $0x24] sm:$0xff]
    %v9329 = vld [vmem:[%s15 + $0x2c] sm:$0xff]
    %v9330 = vld [vmem:[%s15 + $0x34] sm:$0xf]
    %v9331 = vld [vmem:[%s15 + $0x38] sm:$0xff]
    %v9332 = vld [vmem:[%s15 + $0x40] sm:$0xff]
    %v9333 = vld [vmem:[%s15 + $0x48] sm:$0xff]
    %v9334 = vld [vmem:[%s15 + $0x50] sm:$0xf]
    %v9335 = vld [vmem:[%s15 + $0x54] sm:$0xff]
    %v9336 = vld [vmem:[%s15 + $0x5c] sm:$0xff]
    %v9337 = vld [vmem:[%s15 + $0x64] sm:$0xff]
    %v9338 = vld [vmem:[%s15 + $0x6c] sm:$0xf]
    %v9339 = vld [vmem:[%s15 + $0x70] sm:$0xff]
    %v9340 = vld [vmem:[%s15 + $0x78] sm:$0xff]
    %v9341 = vld [vmem:[%s15 + $0x80] sm:$0xff]
    %v9342 = vld [vmem:[%s15 + $0x88] sm:$0xf]
    %v9343 = vld [vmem:[%s15 + $0x8c] sm:$0xff]
    %v9344 = vld [vmem:[%s15 + $0x94] sm:$0xff]
    %v9345 = vld [vmem:[%s15 + $0x9c] sm:$0xff]
    %v9346 = vld [vmem:[%s15 + $0xa4] sm:$0xf]
    %v9347 = vld [vmem:[%s15 + $0xa8] sm:$0xff]
    %v9348 = vld [vmem:[%s15 + $0xb0] sm:$0xff]
    %v9349 = vld [vmem:[%s15 + $0xb8] sm:$0xff]
    %v9350 = vld [vmem:[%s15 + $0xc0] sm:$0xf]
    %v9351 = vld [vmem:[%s15 + $0xc4] sm:$0xff]
    %v9352 = vld [vmem:[%s15 + $0xcc] sm:$0xff]
    %v9353 = vld [vmem:[%s15 + $0xd4] sm:$0xff]
    %v9354 = vld [vmem:[%s15 + $0xdc] sm:$0xf]
    %v9355 = vld [vmem:[%s15 + $0xe0] sm:$0xff]
    %v9356 = vld [vmem:[%s15 + $0xe8] sm:$0xff]
    %v9357 = vld [vmem:[%s15 + $0xf0] sm:$0xff]
    %v9358 = vld [vmem:[%s15 + $0xf8] sm:$0xf]
    %v9359 = vld [vmem:[%s15 + $0xfc] sm:$0xff]
    %v9360 = vld [vmem:[%s15 + $0x104] sm:$0xff]
    %v9361 = vld [vmem:[%s15 + $0x10c] sm:$0xff]
    %v9362 = vld [vmem:[%s15 + $0x114] sm:$0xf]
    %v9363 = vld [vmem:[%s15 + $0x118] sm:$0xff]
    %v9364 = vld [vmem:[%s15 + $0x120] sm:$0xff]
    %v9365 = vld [vmem:[%s15 + $0x128] sm:$0xff]
    %v9366 = vld [vmem:[%s15 + $0x130] sm:$0xf]
    %v9367 = vld [vmem:[%s15 + $0x134] sm:$0xff]
    %v9368 = vld [vmem:[%s15 + $0x13c] sm:$0xff]
    %v9369 = vld [vmem:[%s15 + $0x144] sm:$0xff]
    %v9370 = vld [vmem:[%s15 + $0x14c] sm:$0xf]
    %v9371 = vld [vmem:[%s15 + $0x150] sm:$0xff]
    %v9372 = vld [vmem:[%s15 + $0x158] sm:$0xff]
    %v9373 = vld [vmem:[%s15 + $0x160] sm:$0xff]
    %v9374 = vld [vmem:[%s15 + $0x168] sm:$0xf]
    %v9375 = vld [vmem:[%s15 + $0x16c] sm:$0xff]
    %v9376 = vld [vmem:[%s15 + $0x174] sm:$0xff]
    %v9377 = vld [vmem:[%s15 + $0x17c] sm:$0xff]
    %v9378 = vld [vmem:[%s15 + $0x184] sm:$0xf]
    %v9379 = vld [vmem:[%s15 + $0x188] sm:$0xff]
    %v9380 = vld [vmem:[%s15 + $0x190] sm:$0xff]
    %v9381 = vld [vmem:[%s15 + $0x198] sm:$0xff]
    %v9382 = vld [vmem:[%s15 + $0x1a0] sm:$0xf]
    %v9383 = vld [vmem:[%s15 + $0x1a4] sm:$0xff]
    %v9384 = vld [vmem:[%s15 + $0x1ac] sm:$0xff]
    %v9385 = vld [vmem:[%s15 + $0x1b4] sm:$0xff]
    %v9386 = vld [vmem:[%s15 + $0x1bc] sm:$0xf]
    %v9387 = vld [vmem:[%s15 + $0x1c0] sm:$0xff]
    %v9388 = vld [vmem:[%s15 + $0x1c8] sm:$0xff]
    %v9389 = vld [vmem:[%s15 + $0x1d0] sm:$0xff]
    %v9390 = vld [vmem:[%s15 + $0x1d8] sm:$0xf]
    %v9391 = vld [vmem:[%s15 + $0x1dc] sm:$0xff]
    %v9392 = vld [vmem:[%s15 + $0x1e4] sm:$0xff]
    %v9393 = vld [vmem:[%s15 + $0x1ec] sm:$0xff]
    %v9394 = vld [vmem:[%s15 + $0x1f4] sm:$0xf]
    %v9395 = vld [vmem:[%s15 + $0x1f8] sm:$0xff]
    %v9396 = vld [vmem:[%s15 + $0x200] sm:$0xff]
    %v9397 = vld [vmem:[%s15 + $0x208] sm:$0xff]
    %v9398 = vld [vmem:[%s15 + $0x210] sm:$0xf]
    %v9399 = vld [vmem:[%s15 + $0x214] sm:$0xff]
    %v9400 = vld [vmem:[%s15 + $0x21c] sm:$0xff]
    %v9401 = vld [vmem:[%s15 + $0x224] sm:$0xff]
    %v9402 = vld [vmem:[%s15 + $0x22c] sm:$0xf]
    %v9403 = vld [vmem:[%s15 + $0x230] sm:$0xff]
    %v9404 = vld [vmem:[%s15 + $0x238] sm:$0xff]
    %v9405 = vld [vmem:[%s15 + $0x240] sm:$0xff]
    %v9406 = vld [vmem:[%s15 + $0x248] sm:$0xf]
    %v9407 = vld [vmem:[%s15 + $0x24c] sm:$0xff]
    %v9408 = vld [vmem:[%s15 + $0x254] sm:$0xff]
    %v9409 = vld [vmem:[%s15 + $0x25c] sm:$0xff]
    %v9410 = vld [vmem:[%s15 + $0x264] sm:$0xf]
    %v9411 = vld [vmem:[%s15 + $0x268] sm:$0xff]
    %v9412 = vld [vmem:[%s15 + $0x270] sm:$0xff]
    %v9413 = vld [vmem:[%s15 + $0x278] sm:$0xff]
    %v9414 = vld [vmem:[%s15 + $0x280] sm:$0xf]
    %v9415 = vld [vmem:[%s15 + $0x284] sm:$0xff]
    %v9416 = vld [vmem:[%s15 + $0x28c] sm:$0xff]
    %v9417 = vld [vmem:[%s15 + $0x294] sm:$0xff]
    %v9418 = vld [vmem:[%s15 + $0x29c] sm:$0xf]
    %v9419 = vld [vmem:[%s15 + $0x2a0] sm:$0xff]
    %v9420 = vld [vmem:[%s15 + $0x2a8] sm:$0xff]
    %v9421 = vld [vmem:[%s15 + $0x2b0] sm:$0xff]
    %v9422 = vld [vmem:[%s15 + $0x2b8] sm:$0xf]
    %v9423 = vld [vmem:[%s15 + $0x2bc] sm:$0xff]
    %v9424 = vld [vmem:[%s15 + $0x2c4] sm:$0xff]
    %v9425 = vld [vmem:[%s15 + $0x2cc] sm:$0xff]
    %v9426 = vld [vmem:[%s15 + $0x2d4] sm:$0xf]
    %v9427 = vld [vmem:[%s15 + $0x2d8] sm:$0xff]
    %v9428 = vld [vmem:[%s15 + $0x2e0] sm:$0xff]
    %v9429 = vld [vmem:[%s15 + $0x2e8] sm:$0xff]
    %v9430 = vld [vmem:[%s15 + $0x2f0] sm:$0xf]
    %v9431 = vld [vmem:[%s15 + $0x2f4] sm:$0xff]
    %v9432 = vld [vmem:[%s15 + $0x2fc] sm:$0xff]
    %v9433 = vld [vmem:[%s15 + $0x304] sm:$0xff]
    %v9434 = vld [vmem:[%s15 + $0x30c] sm:$0xf]
    %v9435 = vld [vmem:[%s15 + $0x310] sm:$0xff]
    %v9436 = vld [vmem:[%s15 + $0x318] sm:$0xff]
    %v9437 = vld [vmem:[%s15 + $0x320] sm:$0xff]
    %v9438 = vld [vmem:[%s15 + $0x328] sm:$0xf]
    %v9439 = vld [vmem:[%s15 + $0x32c] sm:$0xff]
    %v9440 = vld [vmem:[%s15 + $0x334] sm:$0xff]
    %v9441 = vld [vmem:[%s15 + $0x33c] sm:$0xff]
    %v9442 = vld [vmem:[%s15 + $0x344] sm:$0xf]
    %v9443 = vld [vmem:[%s15 + $0x348] sm:$0xff]
    %v9444 = vld [vmem:[%s15 + $0x350] sm:$0xff]
    %v9445 = vld [vmem:[%s15 + $0x358] sm:$0xff]
    %v9446 = vld [vmem:[%s15 + $0x360] sm:$0xf]
    %v9447 = vld [vmem:[%s15 + $0x364] sm:$0xff]
    %v9448 = vld [vmem:[%s15 + $0x36c] sm:$0xff]
    %v9449 = vld [vmem:[%s15 + $0x374] sm:$0xff]
    %v9450 = vld [vmem:[%s15 + $0x37c] sm:$0xf]
    %v9451 = vld [vmem:[%s15 + $0x380] sm:$0xff]
    %v9452 = vld [vmem:[%s15 + $0x388] sm:$0xff]
    %v9453 = vld [vmem:[%s15 + $0x390] sm:$0xff]
    %v9454 = vld [vmem:[%s15 + $0x398] sm:$0xf]
    %v9455 = vld [vmem:[%s15 + $0x39c] sm:$0xff]
    %v9456 = vld [vmem:[%s15 + $0x3a4] sm:$0xff]
    %v9457 = vld [vmem:[%s15 + $0x3ac] sm:$0xff]
    %v9458 = vld [vmem:[%s15 + $0x3b4] sm:$0xf]
    %v9459 = vld [vmem:[%s15 + $0x3b8] sm:$0xff]
    %v9460 = vld [vmem:[%s15 + $0x3c0] sm:$0xff]
    %v9461 = vld [vmem:[%s15 + $0x3c8] sm:$0xff]
    %v9462 = vld [vmem:[%s15 + $0x3d0] sm:$0xf]
    %v9463 = vld [vmem:[%s15 + $0x3d4] sm:$0xff]
    %v9464 = vld [vmem:[%s15 + $0x3dc] sm:$0xff]
    %v9465 = vld [vmem:[%s15 + $0x3e4] sm:$0xff]
    %v9466 = vld [vmem:[%s15 + $0x3ec] sm:$0xf]
    %v9467 = vld [vmem:[%s15 + $0x3f0] sm:$0xff]
    %v9468 = vld [vmem:[%s15 + $0x3f8] sm:$0xff]
    %v9469 = vld [vmem:[%s15 + $0x400] sm:$0xff]
    %v9470 = vld [vmem:[%s15 + $0x408] sm:$0xf]
    %v9471 = vld [vmem:[%s15 + $0x40c] sm:$0xff]
    %v9472 = vld [vmem:[%s15 + $0x414] sm:$0xff]
    %v9473 = vld [vmem:[%s15 + $0x41c] sm:$0xff]
    %v9474 = vld [vmem:[%s15 + $0x424] sm:$0xf]
    %v9475 = vld [vmem:[%s15 + $0x428] sm:$0xff]
    %v9476 = vld [vmem:[%s15 + $0x430] sm:$0xff]
    %v9477 = vld [vmem:[%s15 + $0x438] sm:$0xff]
    %v9478 = vld [vmem:[%s15 + $0x440] sm:$0xf]
    %v9479 = vld [vmem:[%s15 + $0x444] sm:$0xff]
    %v9480 = vld [vmem:[%s15 + $0x44c] sm:$0xff]
    %v9481 = vld [vmem:[%s15 + $0x454] sm:$0xff]
    %v9482 = vld [vmem:[%s15 + $0x45c] sm:$0xf]
    %v9483 = vld [vmem:[%s15 + $0x460] sm:$0xff]
    %v9484 = vld [vmem:[%s15 + $0x468] sm:$0xff]
    %v9485 = vld [vmem:[%s15 + $0x470] sm:$0xff]
    %v9486 = vld [vmem:[%s15 + $0x478] sm:$0xf]
    %v9487 = vld [vmem:[%s15 + $0x47c] sm:$0xff]
    %v9488 = vld [vmem:[%s15 + $0x484] sm:$0xff]
    %v9489 = vld [vmem:[%s15 + $0x48c] sm:$0xff]
    %v9490 = vld [vmem:[%s15 + $0x494] sm:$0xf]
    %v9491 = vld [vmem:[%s15 + $0x498] sm:$0xff]
    %v9492 = vld [vmem:[%s15 + $0x4a0] sm:$0xff]
    %v9493 = vld [vmem:[%s15 + $0x4a8] sm:$0xff]
    %v9494 = vld [vmem:[%s15 + $0x4b0] sm:$0xf]
    %v9495 = vld [vmem:[%s15 + $0x4b4] sm:$0xff]
    %v9496 = vld [vmem:[%s15 + $0x4bc] sm:$0xff]
    %v9497 = vld [vmem:[%s15 + $0x4c4] sm:$0xff]
    %v9498 = vld [vmem:[%s15 + $0x4cc] sm:$0xf]
    %v9499 = vld [vmem:[%s15 + $0x4d0] sm:$0xff]
    %v9500 = vld [vmem:[%s15 + $0x4d8] sm:$0xff]
    %v9501 = vld [vmem:[%s15 + $0x4e0] sm:$0xff]
    %v9502 = vld [vmem:[%s15 + $0x4e8] sm:$0xf]
    %v9503 = vld [vmem:[%s15 + $0x4ec] sm:$0xff]
    %v9504 = vld [vmem:[%s15 + $0x4f4] sm:$0xff]
    %v9505 = vld [vmem:[%s15 + $0x4fc] sm:$0xff]
    %v9506 = vld [vmem:[%s15 + $0x504] sm:$0xf]
    %v9507 = vld [vmem:[%s15 + $0x508] sm:$0xff]
    %v9508 = vld [vmem:[%s15 + $0x510] sm:$0xff]
    %v9509 = vld [vmem:[%s15 + $0x518] sm:$0xff]
    %v9510 = vld [vmem:[%s15 + $0x520] sm:$0xf]
    %v9511 = vld [vmem:[%s15 + $0x524] sm:$0xff]
    %v9512 = vld [vmem:[%s15 + $0x52c] sm:$0xff]
    %v9513 = vld [vmem:[%s15 + $0x534] sm:$0xff]
    %v9514 = vld [vmem:[%s15 + $0x53c] sm:$0xf]
    %v9515 = vld [vmem:[%s15 + $0x540] sm:$0xff]
    %v9516 = vld [vmem:[%s15 + $0x548] sm:$0xff]
    %v9517 = vld [vmem:[%s15 + $0x550] sm:$0xff]
    %v9518 = vld [vmem:[%s15 + $0x558] sm:$0xf]
    %v9519 = vld [vmem:[%s15 + $0x55c] sm:$0xff]
    %v9520 = vld [vmem:[%s15 + $0x564] sm:$0xff]
    %v9521 = vld [vmem:[%s15 + $0x56c] sm:$0xff]
    %v9522 = vld [vmem:[%s15 + $0x574] sm:$0xf]
    %v9523 = vld [vmem:[%s15 + $0x578] sm:$0xff]
    %v9524 = vld [vmem:[%s15 + $0x580] sm:$0xff]
    %v9525 = vld [vmem:[%s15 + $0x588] sm:$0xff]
    %v9526 = vld [vmem:[%s15 + $0x590] sm:$0xf]
    %v9527 = vld [vmem:[%s15 + $0x594] sm:$0xff]
    %v9528 = vld [vmem:[%s15 + $0x59c] sm:$0xff]
    %v9529 = vld [vmem:[%s15 + $0x5a4] sm:$0xff]
    %v9530 = vld [vmem:[%s15 + $0x5ac] sm:$0xf]
    %v9531 = vld [vmem:[%s15 + $0x5b0] sm:$0xff]
    %v9532 = vld [vmem:[%s15 + $0x5b8] sm:$0xff]
    %v9533 = vld [vmem:[%s15 + $0x5c0] sm:$0xff]
    %v9534 = vld [vmem:[%s15 + $0x5c8] sm:$0xf]
    %v9535 = vld [vmem:[%s15 + $0x5cc] sm:$0xff]
    %v9536 = vld [vmem:[%s15 + $0x5d4] sm:$0xff]
    %v9537 = vld [vmem:[%s15 + $0x5dc] sm:$0xff]
    %v9538 = vld [vmem:[%s15 + $0x5e4] sm:$0xf]
    %v9539 = vld [vmem:[%s15 + $0x5e8] sm:$0xff]
    %v9540 = vld [vmem:[%s15 + $0x5f0] sm:$0xff]
    %v9541 = vld [vmem:[%s15 + $0x5f8] sm:$0xff]
    %v9542 = vld [vmem:[%s15 + $0x600] sm:$0xf]
    %v9543 = vld [vmem:[%s15 + $0x604] sm:$0xff]
    %v9544 = vld [vmem:[%s15 + $0x60c] sm:$0xff]
    %v9545 = vld [vmem:[%s15 + $0x614] sm:$0xff]
    %v9546 = vld [vmem:[%s15 + $0x61c] sm:$0xf]
    %v9547 = vld [vmem:[%s15 + $0x620] sm:$0xff]
    %v9548 = vld [vmem:[%s15 + $0x628] sm:$0xff]
    %v9549 = vld [vmem:[%s15 + $0x630] sm:$0xff]
    %v9550 = vld [vmem:[%s15 + $0x638] sm:$0xf]
    %v9551 = vld [vmem:[%s15 + $0x63c] sm:$0xff]
    %v9552 = vld [vmem:[%s15 + $0x644] sm:$0xff]
    %v9553 = vld [vmem:[%s15 + $0x64c] sm:$0xff]
    %v9554 = vld [vmem:[%s15 + $0x654] sm:$0xf]
    %v9555 = vld [vmem:[%s15 + $0x658] sm:$0xff]
    %v9556 = vld [vmem:[%s15 + $0x660] sm:$0xff]
    %v9557 = vld [vmem:[%s15 + $0x668] sm:$0xff]
    %v9558 = vld [vmem:[%s15 + $0x670] sm:$0xf]
    %v9559 = vld [vmem:[%s15 + $0x674] sm:$0xff]
    %v9560 = vld [vmem:[%s15 + $0x67c] sm:$0xff]
    %v9561 = vld [vmem:[%s15 + $0x684] sm:$0xff]
    %v9562 = vld [vmem:[%s15 + $0x68c] sm:$0xf]
    %v9563 = vld [vmem:[%s15 + $0x690] sm:$0xff]
    %v9564 = vld [vmem:[%s15 + $0x698] sm:$0xff]
    %v9565 = vld [vmem:[%s15 + $0x6a0] sm:$0xff]
    %v9566 = vld [vmem:[%s15 + $0x6a8] sm:$0xf]
    %v9567 = vld [vmem:[%s15 + $0x6ac] sm:$0xff]
    %v9568 = vld [vmem:[%s15 + $0x6b4] sm:$0xff]
    %v9569 = vld [vmem:[%s15 + $0x6bc] sm:$0xff]
    %v9570 = vld [vmem:[%s15 + $0x6c4] sm:$0xf]
    %v9571 = vld [vmem:[%s15 + $0x6c8] sm:$0xff]
    %v9572 = vld [vmem:[%s15 + $0x6d0] sm:$0xff]
    %v9573 = vld [vmem:[%s15 + $0x6d8] sm:$0xff]
    %v9574 = vld [vmem:[%s15 + $0x6e0] sm:$0xf]
    %v9575 = vld [vmem:[%s15 + $0x6e4] sm:$0xff]
    %v9576 = vld [vmem:[%s15 + $0x6ec] sm:$0xff]
    %v9577 = vld [vmem:[%s15 + $0x6f4] sm:$0xff]
    %v9578 = vld [vmem:[%s15 + $0x6fc] sm:$0xf]
    %v9579 = vld [vmem:[%s15 + $0x700] sm:$0xff]
    %v9580 = vld [vmem:[%s15 + $0x708] sm:$0xff]
    %v9581 = vld [vmem:[%s15 + $0x710] sm:$0xff]
    %v9582 = vld [vmem:[%s15 + $0x718] sm:$0xf]
    %v9583 = vld [vmem:[%s15 + $0x71c] sm:$0xff]
    %v9584 = vld [vmem:[%s15 + $0x724] sm:$0xff]
    %v9585 = vld [vmem:[%s15 + $0x72c] sm:$0xff]
    %v9586 = vld [vmem:[%s15 + $0x734] sm:$0xf]
    %v9587 = vld [vmem:[%s15 + $0x738] sm:$0xff]
    %v9588 = vld [vmem:[%s15 + $0x740] sm:$0xff]
    %v9589 = vld [vmem:[%s15 + $0x748] sm:$0xff]
    %v9590 = vld [vmem:[%s15 + $0x750] sm:$0xf]
    %v9591 = vld [vmem:[%s15 + $0x754] sm:$0xff]
    %v9592 = vld [vmem:[%s15 + $0x75c] sm:$0xff]
    %v9593 = vld [vmem:[%s15 + $0x764] sm:$0xff]
    %v9594 = vld [vmem:[%s15 + $0x76c] sm:$0xf]
    %v9595 = vld [vmem:[%s15 + $0x770] sm:$0xff]
    %v9596 = vld [vmem:[%s15 + $0x778] sm:$0xff]
    %v9597 = vld [vmem:[%s15 + $0x780] sm:$0xff]
    %v9598 = vld [vmem:[%s15 + $0x788] sm:$0xf]
    %v9599 = vld [vmem:[%s15 + $0x78c] sm:$0xff]
    %v9600 = vld [vmem:[%s15 + $0x794] sm:$0xff]
    %v9601 = vld [vmem:[%s15 + $0x79c] sm:$0xff]
    %v9602 = vld [vmem:[%s15 + $0x7a4] sm:$0xf]
    %v9603 = vld [vmem:[%s15 + $0x7a8] sm:$0xff]
    %v9604 = vld [vmem:[%s15 + $0x7b0] sm:$0xff]
    %v9605 = vld [vmem:[%s15 + $0x7b8] sm:$0xff]
    %v9606 = vld [vmem:[%s15 + $0x7c0] sm:$0xf]
    %v9607 = vld [vmem:[%s15 + $0x7c4] sm:$0xff]
    %v9608 = vld [vmem:[%s15 + $0x7cc] sm:$0xff]
    %v9609 = vld [vmem:[%s15 + $0x7d4] sm:$0xff]
    %v9610 = vld [vmem:[%s15 + $0x7dc] sm:$0xf]
    %v9611 = vld [vmem:[%s15 + $0x7e0] sm:$0xff]
    %v9612 = vld [vmem:[%s15 + $0x7e8] sm:$0xff]
    %v9613 = vld [vmem:[%s15 + $0x7f0] sm:$0xff]
    %v9614 = vld [vmem:[%s15 + $0x7f8] sm:$0xf]
    %v9615 = vld [vmem:[%s15 + $0x7fc] sm:$0xff]
    %v9616 = vld [vmem:[%s15 + $0x804] sm:$0xff]
    %v9617 = vld [vmem:[%s15 + $0x80c] sm:$0xff]
    %v9618 = vld [vmem:[%s15 + $0x814] sm:$0xf]
    %v9619 = vld [vmem:[%s15 + $0x818] sm:$0xff]
    %v9620 = vld [vmem:[%s15 + $0x820] sm:$0xff]
    %v9621 = vld [vmem:[%s15 + $0x828] sm:$0xff]
    %v9622 = vld [vmem:[%s15 + $0x830] sm:$0xf]
    %v9623 = vld [vmem:[%s15 + $0x834] sm:$0xff]
    %v9624 = vld [vmem:[%s15 + $0x83c] sm:$0xff]
    %v9625 = vld [vmem:[%s15 + $0x844] sm:$0xff]
    %v9626 = vld [vmem:[%s15 + $0x84c] sm:$0xf]
    %v9627 = vld [vmem:[%s15 + $0x850] sm:$0xff]
    %v9628 = vld [vmem:[%s15 + $0x858] sm:$0xff]
    %v9629 = vld [vmem:[%s15 + $0x860] sm:$0xff]
    %v9630 = vld [vmem:[%s15 + $0x868] sm:$0xf]
    %v9631 = vld [vmem:[%s15 + $0x86c] sm:$0xff]
    %v9632 = vld [vmem:[%s15 + $0x874] sm:$0xff]
    %v9633 = vld [vmem:[%s15 + $0x87c] sm:$0xff]
    %v9634 = vld [vmem:[%s15 + $0x884] sm:$0xf]
    %v9635 = vld [vmem:[%s15 + $0x888] sm:$0xff]
    %v9636 = vld [vmem:[%s15 + $0x890] sm:$0xff]
    %v9637 = vld [vmem:[%s15 + $0x898] sm:$0xff]
    %v9638 = vld [vmem:[%s15 + $0x8a0] sm:$0xf]
    %v9639 = vld [vmem:[%s15 + $0x8a4] sm:$0xff]
    %v9640 = vld [vmem:[%s15 + $0x8ac] sm:$0xff]
    %v9641 = vld [vmem:[%s15 + $0x8b4] sm:$0xff]
    %v9642 = vld [vmem:[%s15 + $0x8bc] sm:$0xf]
    %v9643 = vld [vmem:[%s15 + $0x8c0] sm:$0xff]
    %v9644 = vld [vmem:[%s15 + $0x8c8] sm:$0xff]
    %v9645 = vld [vmem:[%s15 + $0x8d0] sm:$0xff]
    %v9646 = vld [vmem:[%s15 + $0x8d8] sm:$0xf]
    %v9647 = vld [vmem:[%s15 + $0x8dc] sm:$0xff]
    %v9648 = vld [vmem:[%s15 + $0x8e4] sm:$0xff]
    %v9649 = vld [vmem:[%s15 + $0x8ec] sm:$0xff]
    %v9650 = vld [vmem:[%s15 + $0x8f4] sm:$0xf]
    %v9651 = vld [vmem:[%s15 + $0x8f8] sm:$0xff]
    %v9652 = vld [vmem:[%s15 + $0x900] sm:$0xff]
    %v9653 = vld [vmem:[%s15 + $0x908] sm:$0xff]
    %v9654 = vld [vmem:[%s15 + $0x910] sm:$0xf]
    %v9655 = vld [vmem:[%s15 + $0x914] sm:$0xff]
    %v9656 = vld [vmem:[%s15 + $0x91c] sm:$0xff]
    %v9657 = vld [vmem:[%s15 + $0x924] sm:$0xff]
    %v9658 = vld [vmem:[%s15 + $0x92c] sm:$0xf]
    %v9659 = vld [vmem:[%s15 + $0x930] sm:$0xff]
    %v9660 = vld [vmem:[%s15 + $0x938] sm:$0xff]
    %v9661 = vld [vmem:[%s15 + $0x940] sm:$0xff]
    %v9662 = vld [vmem:[%s15 + $0x948] sm:$0xf]
    %v9663 = vld [vmem:[%s15 + $0x94c] sm:$0xff]
    %v9664 = vld [vmem:[%s15 + $0x954] sm:$0xff]
    %v9665 = vld [vmem:[%s15 + $0x95c] sm:$0xff]
    %v9666 = vld [vmem:[%s15 + $0x964] sm:$0xf]
    %v9667 = vld [vmem:[%s15 + $0x968] sm:$0xff]
    %v9668 = vld [vmem:[%s15 + $0x970] sm:$0xff]
    %v9669 = vld [vmem:[%s15 + $0x978] sm:$0xff]
    %v9670 = vld [vmem:[%s15 + $0x980] sm:$0xf]
    %v9671 = vld [vmem:[%s15 + $0x984] sm:$0xff]
    %v9672 = vld [vmem:[%s15 + $0x98c] sm:$0xff]
    %v9673 = vld [vmem:[%s15 + $0x994] sm:$0xff]
    %v9674 = vld [vmem:[%s15 + $0x99c] sm:$0xf]
    %v9675 = vld [vmem:[%s15 + $0x9a0] sm:$0xff]
    %v9676 = vld [vmem:[%s15 + $0x9a8] sm:$0xff]
    %v9677 = vld [vmem:[%s15 + $0x9b0] sm:$0xff]
    %v9678 = vld [vmem:[%s15 + $0x9b8] sm:$0xf]
    %v9679 = vld [vmem:[%s15 + $0x9bc] sm:$0xff]
    %v9680 = vld [vmem:[%s15 + $0x9c4] sm:$0xff]
    %v9681 = vld [vmem:[%s15 + $0x9cc] sm:$0xff]
    %v9682 = vld [vmem:[%s15 + $0x9d4] sm:$0xf]
    %v9683 = vld [vmem:[%s15 + $0x9d8] sm:$0xff]
    %v9684 = vld [vmem:[%s15 + $0x9e0] sm:$0xff]
    %v9685 = vld [vmem:[%s15 + $0x9e8] sm:$0xff]
    %v9686 = vld [vmem:[%s15 + $0x9f0] sm:$0xf]
    %v9687 = vld [vmem:[%s15 + $0x9f4] sm:$0xff]
    %v9688 = vld [vmem:[%s15 + $0x9fc] sm:$0xff]
    %v9689 = vld [vmem:[%s15 + $0xa04] sm:$0xff]
    %v9690 = vld [vmem:[%s15 + $0xa0c] sm:$0xf]
    %v9691 = vld [vmem:[%s15 + $0xa10] sm:$0xff]
    %v9692 = vld [vmem:[%s15 + $0xa18] sm:$0xff]
    %v9693 = vld [vmem:[%s15 + $0xa20] sm:$0xff]
    %v9694 = vld [vmem:[%s15 + $0xa28] sm:$0xf]
    %v9695 = vld [vmem:[%s15 + $0xa2c] sm:$0xff]
    %v9696 = vld [vmem:[%s15 + $0xa34] sm:$0xff]
    %v9697 = vld [vmem:[%s15 + $0xa3c] sm:$0xff]
    %v9698 = vld [vmem:[%s15 + $0xa44] sm:$0xf]
    %v9699 = vld [vmem:[%s15 + $0xa48] sm:$0xff]
    %v9700 = vld [vmem:[%s15 + $0xa50] sm:$0xff]
    %v9701 = vld [vmem:[%s15 + $0xa58] sm:$0xff]
    %v9702 = vld [vmem:[%s15 + $0xa60] sm:$0xf]
    %v9703 = vld [vmem:[%s15 + $0xa64] sm:$0xff]
    %v9704 = vld [vmem:[%s15 + $0xa6c] sm:$0xff]
    %v9705 = vld [vmem:[%s15 + $0xa74] sm:$0xff]
    %v9706 = vld [vmem:[%s15 + $0xa7c] sm:$0xf]
    %v9707 = vld [vmem:[%s15 + $0xa80] sm:$0xff]
    %v9708 = vld [vmem:[%s15 + $0xa88] sm:$0xff]
    %v9709 = vld [vmem:[%s15 + $0xa90] sm:$0xff]
    %v9710 = vld [vmem:[%s15 + $0xa98] sm:$0xf]
    %v9711 = vld [vmem:[%s15 + $0xa9c] sm:$0xff]
    %v9712 = vld [vmem:[%s15 + $0xaa4] sm:$0xff]
    %v9713 = vld [vmem:[%s15 + $0xaac] sm:$0xff]
    %v9714 = vld [vmem:[%s15 + $0xab4] sm:$0xf]
    %v9715 = vld [vmem:[%s15 + $0xab8] sm:$0xff]
    %v9716 = vld [vmem:[%s15 + $0xac0] sm:$0xff]
    %v9717 = vld [vmem:[%s15 + $0xac8] sm:$0xff]
    %v9718 = vld [vmem:[%s15 + $0xad0] sm:$0xf]
    %v9719 = vld [vmem:[%s15 + $0xad4] sm:$0xff]
    %v9720 = vld [vmem:[%s15 + $0xadc] sm:$0xff]
    %v9721 = vld [vmem:[%s15 + $0xae4] sm:$0xff]
    %v9722 = vld [vmem:[%s15 + $0xaec] sm:$0xf]
    %v9723 = vld [vmem:[%s15 + $0xaf0] sm:$0xff]
    %v9724 = vld [vmem:[%s15 + $0xaf8] sm:$0xff]
    %v9725 = vld [vmem:[%s15 + $0xb00] sm:$0xff]
    %v9726 = vld [vmem:[%s15 + $0xb08] sm:$0xf]
    %v9727 = vld [vmem:[%s15 + $0xb0c] sm:$0xff]
    %v9728 = vld [vmem:[%s15 + $0xb14] sm:$0xff]
    %v9729 = vld [vmem:[%s15 + $0xb1c] sm:$0xff]
    %v9730 = vld [vmem:[%s15 + $0xb24] sm:$0xf]
    %v9731 = vld [vmem:[%s15 + $0xb28] sm:$0xff]
    %v9732 = vld [vmem:[%s15 + $0xb30] sm:$0xff]
    %v9733 = vld [vmem:[%s15 + $0xb38] sm:$0xff]
    %v9734 = vld [vmem:[%s15 + $0xb40] sm:$0xf]
    %v9735 = vld [vmem:[%s15 + $0xb44] sm:$0xff]
    %v9736 = vld [vmem:[%s15 + $0xb4c] sm:$0xff]
    %v9737 = vld [vmem:[%s15 + $0xb54] sm:$0xff]
    %v9738 = vld [vmem:[%s15 + $0xb5c] sm:$0xf]
    %v9739 = vld [vmem:[%s15 + $0xb60] sm:$0xff]
    %v9740 = vld [vmem:[%s15 + $0xb68] sm:$0xff]
    %v9741 = vld [vmem:[%s15 + $0xb70] sm:$0xff]
    %v9742 = vld [vmem:[%s15 + $0xb78] sm:$0xf]
    %v9743 = vld [vmem:[%s15 + $0xb7c] sm:$0xff]
    %v9744 = vld [vmem:[%s15 + $0xb84] sm:$0xff]
    %v9745 = vld [vmem:[%s15 + $0xb8c] sm:$0xff]
    %v9746 = vld [vmem:[%s15 + $0xb94] sm:$0xf]
    %v9747 = vld [vmem:[%s15 + $0xb98] sm:$0xff]
    %v9748 = vld [vmem:[%s15 + $0xba0] sm:$0xff]
    %v9749 = vld [vmem:[%s15 + $0xba8] sm:$0xff]
    %v9750 = vld [vmem:[%s15 + $0xbb0] sm:$0xf]
    %v9751 = vld [vmem:[%s15 + $0xbb4] sm:$0xff]
    %v9752 = vld [vmem:[%s15 + $0xbbc] sm:$0xff]
    %v9753 = vld [vmem:[%s15 + $0xbc4] sm:$0xff]
    %v9754 = vld [vmem:[%s15 + $0xbcc] sm:$0xf]
    %v9755 = vld [vmem:[%s15 + $0xbd0] sm:$0xff]
    %v9756 = vld [vmem:[%s15 + $0xbd8] sm:$0xff]
    %v9757 = vld [vmem:[%s15 + $0xbe0] sm:$0xff]
    %v9758 = vld [vmem:[%s15 + $0xbe8] sm:$0xf]
    %v9759 = vld [vmem:[%s15 + $0xbec] sm:$0xff]
    %v9760 = vld [vmem:[%s15 + $0xbf4] sm:$0xff]
    %v9761 = vld [vmem:[%s15 + $0xbfc] sm:$0xff]
    %v9762 = vld [vmem:[%s15 + $0xc04] sm:$0xf]
    %v9763 = vld [vmem:[%s15 + $0xc08] sm:$0xff]
    %v9764 = vld [vmem:[%s15 + $0xc10] sm:$0xff]
    %v9765 = vld [vmem:[%s15 + $0xc18] sm:$0xff]
    %v9766 = vld [vmem:[%s15 + $0xc20] sm:$0xf]
    %v9767 = vld [vmem:[%s15 + $0xc24] sm:$0xff]
    %v9768 = vld [vmem:[%s15 + $0xc2c] sm:$0xff]
    %v9769 = vld [vmem:[%s15 + $0xc34] sm:$0xff]
    %v9770 = vld [vmem:[%s15 + $0xc3c] sm:$0xf]
    %v9771 = vld [vmem:[%s15 + $0xc40] sm:$0xff]
    %v9772 = vld [vmem:[%s15 + $0xc48] sm:$0xff]
    %v9773 = vld [vmem:[%s15 + $0xc50] sm:$0xff]
    %v9774 = vld [vmem:[%s15 + $0xc58] sm:$0xf]
    %v9775 = vld [vmem:[%s15 + $0xc5c] sm:$0xff]
    %v9776 = vld [vmem:[%s15 + $0xc64] sm:$0xff]
    %v9777 = vld [vmem:[%s15 + $0xc6c] sm:$0xff]
    %v9778 = vld [vmem:[%s15 + $0xc74] sm:$0xf]
    %v9779 = vld [vmem:[%s15 + $0xc78] sm:$0xff]
    %v9780 = vld [vmem:[%s15 + $0xc80] sm:$0xff]
    %v9781 = vld [vmem:[%s15 + $0xc88] sm:$0xff]
    %v9782 = vld [vmem:[%s15 + $0xc90] sm:$0xf]
    %v9783 = vld [vmem:[%s15 + $0xc94] sm:$0xff]
    %v9784 = vld [vmem:[%s15 + $0xc9c] sm:$0xff]
    %v9785 = vld [vmem:[%s15 + $0xca4] sm:$0xff]
    %v9786 = vld [vmem:[%s15 + $0xcac] sm:$0xf]
    %v9787 = vld [vmem:[%s15 + $0xcb0] sm:$0xff]
    %v9788 = vld [vmem:[%s15 + $0xcb8] sm:$0xff]
    %v9789 = vld [vmem:[%s15 + $0xcc0] sm:$0xff]
    %v9790 = vld [vmem:[%s15 + $0xcc8] sm:$0xf]
    %v9791 = vld [vmem:[%s15 + $0xccc] sm:$0xff]
    %v9792 = vld [vmem:[%s15 + $0xcd4] sm:$0xff]
    %v9793 = vld [vmem:[%s15 + $0xcdc] sm:$0xff]
    %v9794 = vld [vmem:[%s15 + $0xce4] sm:$0xf]
    %v9795 = vld [vmem:[%s15 + $0xce8] sm:$0xff]
    %v9796 = vld [vmem:[%s15 + $0xcf0] sm:$0xff]
    %v9797 = vld [vmem:[%s15 + $0xcf8] sm:$0xff]
    %v9798 = vld [vmem:[%s15 + $0xd00] sm:$0xf]
    %v9799 = vld [vmem:[%s15 + $0xd04] sm:$0xff]
    %v9800 = vld [vmem:[%s15 + $0xd0c] sm:$0xff]
    %v9801 = vld [vmem:[%s15 + $0xd14] sm:$0xff]
    %v9802 = vld [vmem:[%s15 + $0xd1c] sm:$0xf]
    %v9803 = vld [vmem:[%s15 + $0xd20] sm:$0xff]
    %v9804 = vld [vmem:[%s15 + $0xd28] sm:$0xff]
    %v9805 = vld [vmem:[%s15 + $0xd30] sm:$0xff]
    %v9806 = vld [vmem:[%s15 + $0xd38] sm:$0xf]
    %v9807 = vld [vmem:[%s15 + $0xd3c] sm:$0xff]
    %v9808 = vld [vmem:[%s15 + $0xd44] sm:$0xff]
    %v9809 = vld [vmem:[%s15 + $0xd4c] sm:$0xff]
    %v9810 = vld [vmem:[%s15 + $0xd54] sm:$0xf]
    %v9811 = vld [vmem:[%s15 + $0xd58] sm:$0xff]
    %v9812 = vld [vmem:[%s15 + $0xd60] sm:$0xff]
    %v9813 = vld [vmem:[%s15 + $0xd68] sm:$0xff]
    %v9814 = vld [vmem:[%s15 + $0xd70] sm:$0xf]
    %v9815 = vld [vmem:[%s15 + $0xd74] sm:$0xff]
    %v9816 = vld [vmem:[%s15 + $0xd7c] sm:$0xff]
    %v9817 = vld [vmem:[%s15 + $0xd84] sm:$0xff]
    %v9818 = vld [vmem:[%s15 + $0xd8c] sm:$0xf]
    %v9819 = vld [vmem:[%s15 + $0xd90] sm:$0xff]
    %v9820 = vld [vmem:[%s15 + $0xd98] sm:$0xff]
    %v9821 = vld [vmem:[%s15 + $0xda0] sm:$0xff]
    %v9822 = vld [vmem:[%s15 + $0xda8] sm:$0xf]
    %v9823 = vld [vmem:[%s15 + $0xdac] sm:$0xff]
    %v9824 = vld [vmem:[%s15 + $0xdb4] sm:$0xff]
    %v9825 = vld [vmem:[%s15 + $0xdbc] sm:$0xff]
    %v9826 = vld [vmem:[%s15 + $0xdc4] sm:$0xf]
    %v9827 = vld [vmem:[%s15 + $0xdc8] sm:$0xff]
    %v9828 = vld [vmem:[%s15 + $0xdd0] sm:$0xff]
    %v9829 = vld [vmem:[%s15 + $0xdd8] sm:$0xff]
    %v9830 = vld [vmem:[%s15 + $0xde0] sm:$0xf]
    %v9831 = vld [vmem:[%s15 + $0xde4] sm:$0xff]
    %v9832 = vld [vmem:[%s15 + $0xdec] sm:$0xff]
    %v9833 = vld [vmem:[%s15 + $0xdf4] sm:$0xff]
    %v9834 = vld [vmem:[%s15 + $0xdfc] sm:$0xf]
    %v9835 = vld [vmem:[%s16] ss:$4 sm:$0x7f]
    %v9837 = vperm.slane %v9835, 0
    %v9838 = vperm.slane %v9835, 1
    %v9839 = vperm.slane %v9835, 2
    %v9840 = vperm.slane %v9835, 3
    %v9841 = vperm.slane %v9835, 4
    %v9842 = vperm.slane %v9835, 5
    %v9843 = vperm.slane %v9835, 6
    %v10363 = vunpack.c.l.b16 %v9323
    %v10364 = vunpack.c.h.b16 %v9323
    %v10365 = vunpack.c.l.b16 %v9324
    %v10366 = vunpack.c.h.b16 %v9324
    %v10367 = vunpack.c.l.b16 %v9325
    %v10368 = vunpack.c.h.b16 %v9325
    %v10369 = vunpack.c.l.b16 %v9326
    %v10370 = vunpack.c.l.b16 %v9327
    %v10371 = vunpack.c.h.b16 %v9327
    %v10372 = vunpack.c.l.b16 %v9328
    %v10373 = vunpack.c.h.b16 %v9328
    %v10374 = vunpack.c.l.b16 %v9329
    %v10375 = vunpack.c.h.b16 %v9329
    %v10376 = vunpack.c.l.b16 %v9330
    %v10377 = vunpack.c.l.b16 %v9331
    %v10378 = vunpack.c.h.b16 %v9331
    %v10379 = vunpack.c.l.b16 %v9332
    %v10380 = vunpack.c.h.b16 %v9332
    %v10381 = vunpack.c.l.b16 %v9333
    %v10382 = vunpack.c.h.b16 %v9333
    %v10383 = vunpack.c.l.b16 %v9334
    %v10384 = vunpack.c.l.b16 %v9335
    %v10385 = vunpack.c.h.b16 %v9335
    %v10386 = vunpack.c.l.b16 %v9336
    %v10387 = vunpack.c.h.b16 %v9336
    %v10388 = vunpack.c.l.b16 %v9337
    %v10389 = vunpack.c.h.b16 %v9337
    %v10390 = vunpack.c.l.b16 %v9338
    %v10391 = vunpack.c.l.b16 %v9339
    %v10392 = vunpack.c.h.b16 %v9339
    %v10393 = vunpack.c.l.b16 %v9340
    %v10394 = vunpack.c.h.b16 %v9340
    %v10395 = vunpack.c.l.b16 %v9341
    %v10396 = vunpack.c.h.b16 %v9341
    %v10397 = vunpack.c.l.b16 %v9342
    %v10398 = vunpack.c.l.b16 %v9343
    %v10399 = vunpack.c.h.b16 %v9343
    %v10400 = vunpack.c.l.b16 %v9344
    %v10401 = vunpack.c.h.b16 %v9344
    %v10402 = vunpack.c.l.b16 %v9345
    %v10403 = vunpack.c.h.b16 %v9345
    %v10404 = vunpack.c.l.b16 %v9346
    %v10405 = vunpack.c.l.b16 %v9347
    %v10406 = vunpack.c.h.b16 %v9347
    %v10407 = vunpack.c.l.b16 %v9348
    %v10408 = vunpack.c.h.b16 %v9348
    %v10409 = vunpack.c.l.b16 %v9349
    %v10410 = vunpack.c.h.b16 %v9349
    %v10411 = vunpack.c.l.b16 %v9350
    %v10412 = vunpack.c.l.b16 %v9351
    %v10413 = vunpack.c.h.b16 %v9351
    %v10414 = vunpack.c.l.b16 %v9352
    %v10415 = vunpack.c.h.b16 %v9352
    %v10416 = vunpack.c.l.b16 %v9353
    %v10417 = vunpack.c.h.b16 %v9353
    %v10418 = vunpack.c.l.b16 %v9354
    %v10419 = vunpack.c.l.b16 %v9355
    %v10420 = vunpack.c.h.b16 %v9355
    %v10421 = vunpack.c.l.b16 %v9356
    %v10422 = vunpack.c.h.b16 %v9356
    %v10423 = vunpack.c.l.b16 %v9357
    %v10424 = vunpack.c.h.b16 %v9357
    %v10425 = vunpack.c.l.b16 %v9358
    %v10426 = vunpack.c.l.b16 %v9359
    %v10427 = vunpack.c.h.b16 %v9359
    %v10428 = vunpack.c.l.b16 %v9360
    %v10429 = vunpack.c.h.b16 %v9360
    %v10430 = vunpack.c.l.b16 %v9361
    %v10431 = vunpack.c.h.b16 %v9361
    %v10432 = vunpack.c.l.b16 %v9362
    %v10433 = vunpack.c.l.b16 %v9363
    %v10434 = vunpack.c.h.b16 %v9363
    %v10435 = vunpack.c.l.b16 %v9364
    %v10436 = vunpack.c.h.b16 %v9364
    %v10437 = vunpack.c.l.b16 %v9365
    %v10438 = vunpack.c.h.b16 %v9365
    %v10439 = vunpack.c.l.b16 %v9366
    %v10440 = vunpack.c.l.b16 %v9367
    %v10441 = vunpack.c.h.b16 %v9367
    %v10442 = vunpack.c.l.b16 %v9368
    %v10443 = vunpack.c.h.b16 %v9368
    %v10444 = vunpack.c.l.b16 %v9369
    %v10445 = vunpack.c.h.b16 %v9369
    %v10446 = vunpack.c.l.b16 %v9370
    %v10447 = vunpack.c.l.b16 %v9371
    %v10448 = vunpack.c.h.b16 %v9371
    %v10449 = vunpack.c.l.b16 %v9372
    %v10450 = vunpack.c.h.b16 %v9372
    %v10451 = vunpack.c.l.b16 %v9373
    %v10452 = vunpack.c.h.b16 %v9373
    %v10453 = vunpack.c.l.b16 %v9374
    %v10454 = vunpack.c.l.b16 %v9375
    %v10455 = vunpack.c.h.b16 %v9375
    %v10456 = vunpack.c.l.b16 %v9376
    %v10457 = vunpack.c.h.b16 %v9376
    %v10458 = vunpack.c.l.b16 %v9377
    %v10459 = vunpack.c.h.b16 %v9377
    %v10460 = vunpack.c.l.b16 %v9378
    %v10461 = vunpack.c.l.b16 %v9379
    %v10462 = vunpack.c.h.b16 %v9379
    %v10463 = vunpack.c.l.b16 %v9380
    %v10464 = vunpack.c.h.b16 %v9380
    %v10465 = vunpack.c.l.b16 %v9381
    %v10466 = vunpack.c.h.b16 %v9381
    %v10467 = vunpack.c.l.b16 %v9382
    %v10468 = vunpack.c.l.b16 %v9383
    %v10469 = vunpack.c.h.b16 %v9383
    %v10470 = vunpack.c.l.b16 %v9384
    %v10471 = vunpack.c.h.b16 %v9384
    %v10472 = vunpack.c.l.b16 %v9385
    %v10473 = vunpack.c.h.b16 %v9385
    %v10474 = vunpack.c.l.b16 %v9386
    %v10475 = vunpack.c.l.b16 %v9387
    %v10476 = vunpack.c.h.b16 %v9387
    %v10477 = vunpack.c.l.b16 %v9388
    %v10478 = vunpack.c.h.b16 %v9388
    %v10479 = vunpack.c.l.b16 %v9389
    %v10480 = vunpack.c.h.b16 %v9389
    %v10481 = vunpack.c.l.b16 %v9390
    %v10482 = vunpack.c.l.b16 %v9391
    %v10483 = vunpack.c.h.b16 %v9391
    %v10484 = vunpack.c.l.b16 %v9392
    %v10485 = vunpack.c.h.b16 %v9392
    %v10486 = vunpack.c.l.b16 %v9393
    %v10487 = vunpack.c.h.b16 %v9393
    %v10488 = vunpack.c.l.b16 %v9394
    %v10489 = vunpack.c.l.b16 %v9395
    %v10490 = vunpack.c.h.b16 %v9395
    %v10491 = vunpack.c.l.b16 %v9396
    %v10492 = vunpack.c.h.b16 %v9396
    %v10493 = vunpack.c.l.b16 %v9397
    %v10494 = vunpack.c.h.b16 %v9397
    %v10495 = vunpack.c.l.b16 %v9398
    %v10496 = vunpack.c.l.b16 %v9399
    %v10497 = vunpack.c.h.b16 %v9399
    %v10498 = vunpack.c.l.b16 %v9400
    %v10499 = vunpack.c.h.b16 %v9400
    %v10500 = vunpack.c.l.b16 %v9401
    %v10501 = vunpack.c.h.b16 %v9401
    %v10502 = vunpack.c.l.b16 %v9402
    %v10503 = vunpack.c.l.b16 %v9403
    %v10504 = vunpack.c.h.b16 %v9403
    %v10505 = vunpack.c.l.b16 %v9404
    %v10506 = vunpack.c.h.b16 %v9404
    %v10507 = vunpack.c.l.b16 %v9405
    %v10508 = vunpack.c.h.b16 %v9405
    %v10509 = vunpack.c.l.b16 %v9406
    %v10510 = vunpack.c.l.b16 %v9407
    %v10511 = vunpack.c.h.b16 %v9407
    %v10512 = vunpack.c.l.b16 %v9408
    %v10513 = vunpack.c.h.b16 %v9408
    %v10514 = vunpack.c.l.b16 %v9409
    %v10515 = vunpack.c.h.b16 %v9409
    %v10516 = vunpack.c.l.b16 %v9410
    %v10517 = vunpack.c.l.b16 %v9411
    %v10518 = vunpack.c.h.b16 %v9411
    %v10519 = vunpack.c.l.b16 %v9412
    %v10520 = vunpack.c.h.b16 %v9412
    %v10521 = vunpack.c.l.b16 %v9413
    %v10522 = vunpack.c.h.b16 %v9413
    %v10523 = vunpack.c.l.b16 %v9414
    %v10524 = vunpack.c.l.b16 %v9415
    %v10525 = vunpack.c.h.b16 %v9415
    %v10526 = vunpack.c.l.b16 %v9416
    %v10527 = vunpack.c.h.b16 %v9416
    %v10528 = vunpack.c.l.b16 %v9417
    %v10529 = vunpack.c.h.b16 %v9417
    %v10530 = vunpack.c.l.b16 %v9418
    %v10531 = vunpack.c.l.b16 %v9419
    %v10532 = vunpack.c.h.b16 %v9419
    %v10533 = vunpack.c.l.b16 %v9420
    %v10534 = vunpack.c.h.b16 %v9420
    %v10535 = vunpack.c.l.b16 %v9421
    %v10536 = vunpack.c.h.b16 %v9421
    %v10537 = vunpack.c.l.b16 %v9422
    %v10538 = vunpack.c.l.b16 %v9423
    %v10539 = vunpack.c.h.b16 %v9423
    %v10540 = vunpack.c.l.b16 %v9424
    %v10541 = vunpack.c.h.b16 %v9424
    %v10542 = vunpack.c.l.b16 %v9425
    %v10543 = vunpack.c.h.b16 %v9425
    %v10544 = vunpack.c.l.b16 %v9426
    %v10545 = vunpack.c.l.b16 %v9427
    %v10546 = vunpack.c.h.b16 %v9427
    %v10547 = vunpack.c.l.b16 %v9428
    %v10548 = vunpack.c.h.b16 %v9428
    %v10549 = vunpack.c.l.b16 %v9429
    %v10550 = vunpack.c.h.b16 %v9429
    %v10551 = vunpack.c.l.b16 %v9430
    %v10552 = vunpack.c.l.b16 %v9431
    %v10553 = vunpack.c.h.b16 %v9431
    %v10554 = vunpack.c.l.b16 %v9432
    %v10555 = vunpack.c.h.b16 %v9432
    %v10556 = vunpack.c.l.b16 %v9433
    %v10557 = vunpack.c.h.b16 %v9433
    %v10558 = vunpack.c.l.b16 %v9434
    %v10559 = vunpack.c.l.b16 %v9435
    %v10560 = vunpack.c.h.b16 %v9435
    %v10561 = vunpack.c.l.b16 %v9436
    %v10562 = vunpack.c.h.b16 %v9436
    %v10563 = vunpack.c.l.b16 %v9437
    %v10564 = vunpack.c.h.b16 %v9437
    %v10565 = vunpack.c.l.b16 %v9438
    %v10566 = vunpack.c.l.b16 %v9439
    %v10567 = vunpack.c.h.b16 %v9439
    %v10568 = vunpack.c.l.b16 %v9440
    %v10569 = vunpack.c.h.b16 %v9440
    %v10570 = vunpack.c.l.b16 %v9441
    %v10571 = vunpack.c.h.b16 %v9441
    %v10572 = vunpack.c.l.b16 %v9442
    %v10573 = vunpack.c.l.b16 %v9443
    %v10574 = vunpack.c.h.b16 %v9443
    %v10575 = vunpack.c.l.b16 %v9444
    %v10576 = vunpack.c.h.b16 %v9444
    %v10577 = vunpack.c.l.b16 %v9445
    %v10578 = vunpack.c.h.b16 %v9445
    %v10579 = vunpack.c.l.b16 %v9446
    %v10580 = vunpack.c.l.b16 %v9447
    %v10581 = vunpack.c.h.b16 %v9447
    %v10582 = vunpack.c.l.b16 %v9448
    %v10583 = vunpack.c.h.b16 %v9448
    %v10584 = vunpack.c.l.b16 %v9449
    %v10585 = vunpack.c.h.b16 %v9449
    %v10586 = vunpack.c.l.b16 %v9450
    %v10587 = vunpack.c.l.b16 %v9451
    %v10588 = vunpack.c.h.b16 %v9451
    %v10589 = vunpack.c.l.b16 %v9452
    %v10590 = vunpack.c.h.b16 %v9452
    %v10591 = vunpack.c.l.b16 %v9453
    %v10592 = vunpack.c.h.b16 %v9453
    %v10593 = vunpack.c.l.b16 %v9454
    %v10594 = vunpack.c.l.b16 %v9455
    %v10595 = vunpack.c.h.b16 %v9455
    %v10596 = vunpack.c.l.b16 %v9456
    %v10597 = vunpack.c.h.b16 %v9456
    %v10598 = vunpack.c.l.b16 %v9457
    %v10599 = vunpack.c.h.b16 %v9457
    %v10600 = vunpack.c.l.b16 %v9458
    %v10601 = vunpack.c.l.b16 %v9459
    %v10602 = vunpack.c.h.b16 %v9459
    %v10603 = vunpack.c.l.b16 %v9460
    %v10604 = vunpack.c.h.b16 %v9460
    %v10605 = vunpack.c.l.b16 %v9461
    %v10606 = vunpack.c.h.b16 %v9461
    %v10607 = vunpack.c.l.b16 %v9462
    %v10608 = vunpack.c.l.b16 %v9463
    %v10609 = vunpack.c.h.b16 %v9463
    %v10610 = vunpack.c.l.b16 %v9464
    %v10611 = vunpack.c.h.b16 %v9464
    %v10612 = vunpack.c.l.b16 %v9465
    %v10613 = vunpack.c.h.b16 %v9465
    %v10614 = vunpack.c.l.b16 %v9466
    %v10615 = vunpack.c.l.b16 %v9467
    %v10616 = vunpack.c.h.b16 %v9467
    %v10617 = vunpack.c.l.b16 %v9468
    %v10618 = vunpack.c.h.b16 %v9468
    %v10619 = vunpack.c.l.b16 %v9469
    %v10620 = vunpack.c.h.b16 %v9469
    %v10621 = vunpack.c.l.b16 %v9470
    %v10622 = vunpack.c.l.b16 %v9471
    %v10623 = vunpack.c.h.b16 %v9471
    %v10624 = vunpack.c.l.b16 %v9472
    %v10625 = vunpack.c.h.b16 %v9472
    %v10626 = vunpack.c.l.b16 %v9473
    %v10627 = vunpack.c.h.b16 %v9473
    %v10628 = vunpack.c.l.b16 %v9474
    %v10629 = vunpack.c.l.b16 %v9475
    %v10630 = vunpack.c.h.b16 %v9475
    %v10631 = vunpack.c.l.b16 %v9476
    %v10632 = vunpack.c.h.b16 %v9476
    %v10633 = vunpack.c.l.b16 %v9477
    %v10634 = vunpack.c.h.b16 %v9477
    %v10635 = vunpack.c.l.b16 %v9478
    %v10636 = vunpack.c.l.b16 %v9479
    %v10637 = vunpack.c.h.b16 %v9479
    %v10638 = vunpack.c.l.b16 %v9480
    %v10639 = vunpack.c.h.b16 %v9480
    %v10640 = vunpack.c.l.b16 %v9481
    %v10641 = vunpack.c.h.b16 %v9481
    %v10642 = vunpack.c.l.b16 %v9482
    %v10643 = vunpack.c.l.b16 %v9483
    %v10644 = vunpack.c.h.b16 %v9483
    %v10645 = vunpack.c.l.b16 %v9484
    %v10646 = vunpack.c.h.b16 %v9484
    %v10647 = vunpack.c.l.b16 %v9485
    %v10648 = vunpack.c.h.b16 %v9485
    %v10649 = vunpack.c.l.b16 %v9486
    %v10650 = vunpack.c.l.b16 %v9487
    %v10651 = vunpack.c.h.b16 %v9487
    %v10652 = vunpack.c.l.b16 %v9488
    %v10653 = vunpack.c.h.b16 %v9488
    %v10654 = vunpack.c.l.b16 %v9489
    %v10655 = vunpack.c.h.b16 %v9489
    %v10656 = vunpack.c.l.b16 %v9490
    %v10657 = vunpack.c.l.b16 %v9491
    %v10658 = vunpack.c.h.b16 %v9491
    %v10659 = vunpack.c.l.b16 %v9492
    %v10660 = vunpack.c.h.b16 %v9492
    %v10661 = vunpack.c.l.b16 %v9493
    %v10662 = vunpack.c.h.b16 %v9493
    %v10663 = vunpack.c.l.b16 %v9494
    %v10664 = vunpack.c.l.b16 %v9495
    %v10665 = vunpack.c.h.b16 %v9495
    %v10666 = vunpack.c.l.b16 %v9496
    %v10667 = vunpack.c.h.b16 %v9496
    %v10668 = vunpack.c.l.b16 %v9497
    %v10669 = vunpack.c.h.b16 %v9497
    %v10670 = vunpack.c.l.b16 %v9498
    %v10671 = vunpack.c.l.b16 %v9499
    %v10672 = vunpack.c.h.b16 %v9499
    %v10673 = vunpack.c.l.b16 %v9500
    %v10674 = vunpack.c.h.b16 %v9500
    %v10675 = vunpack.c.l.b16 %v9501
    %v10676 = vunpack.c.h.b16 %v9501
    %v10677 = vunpack.c.l.b16 %v9502
    %v10678 = vunpack.c.l.b16 %v9503
    %v10679 = vunpack.c.h.b16 %v9503
    %v10680 = vunpack.c.l.b16 %v9504
    %v10681 = vunpack.c.h.b16 %v9504
    %v10682 = vunpack.c.l.b16 %v9505
    %v10683 = vunpack.c.h.b16 %v9505
    %v10684 = vunpack.c.l.b16 %v9506
    %v10685 = vunpack.c.l.b16 %v9507
    %v10686 = vunpack.c.h.b16 %v9507
    %v10687 = vunpack.c.l.b16 %v9508
    %v10688 = vunpack.c.h.b16 %v9508
    %v10689 = vunpack.c.l.b16 %v9509
    %v10690 = vunpack.c.h.b16 %v9509
    %v10691 = vunpack.c.l.b16 %v9510
    %v10692 = vunpack.c.l.b16 %v9511
    %v10693 = vunpack.c.h.b16 %v9511
    %v10694 = vunpack.c.l.b16 %v9512
    %v10695 = vunpack.c.h.b16 %v9512
    %v10696 = vunpack.c.l.b16 %v9513
    %v10697 = vunpack.c.h.b16 %v9513
    %v10698 = vunpack.c.l.b16 %v9514
    %v10699 = vunpack.c.l.b16 %v9515
    %v10700 = vunpack.c.h.b16 %v9515
    %v10701 = vunpack.c.l.b16 %v9516
    %v10702 = vunpack.c.h.b16 %v9516
    %v10703 = vunpack.c.l.b16 %v9517
    %v10704 = vunpack.c.h.b16 %v9517
    %v10705 = vunpack.c.l.b16 %v9518
    %v10706 = vunpack.c.l.b16 %v9519
    %v10707 = vunpack.c.h.b16 %v9519
    %v10708 = vunpack.c.l.b16 %v9520
    %v10709 = vunpack.c.h.b16 %v9520
    %v10710 = vunpack.c.l.b16 %v9521
    %v10711 = vunpack.c.h.b16 %v9521
    %v10712 = vunpack.c.l.b16 %v9522
    %v10713 = vunpack.c.l.b16 %v9523
    %v10714 = vunpack.c.h.b16 %v9523
    %v10715 = vunpack.c.l.b16 %v9524
    %v10716 = vunpack.c.h.b16 %v9524
    %v10717 = vunpack.c.l.b16 %v9525
    %v10718 = vunpack.c.h.b16 %v9525
    %v10719 = vunpack.c.l.b16 %v9526
    %v10720 = vunpack.c.l.b16 %v9527
    %v10721 = vunpack.c.h.b16 %v9527
    %v10722 = vunpack.c.l.b16 %v9528
    %v10723 = vunpack.c.h.b16 %v9528
    %v10724 = vunpack.c.l.b16 %v9529
    %v10725 = vunpack.c.h.b16 %v9529
    %v10726 = vunpack.c.l.b16 %v9530
    %v10727 = vunpack.c.l.b16 %v9531
    %v10728 = vunpack.c.h.b16 %v9531
    %v10729 = vunpack.c.l.b16 %v9532
    %v10730 = vunpack.c.h.b16 %v9532
    %v10731 = vunpack.c.l.b16 %v9533
    %v10732 = vunpack.c.h.b16 %v9533
    %v10733 = vunpack.c.l.b16 %v9534
    %v10734 = vunpack.c.l.b16 %v9535
    %v10735 = vunpack.c.h.b16 %v9535
    %v10736 = vunpack.c.l.b16 %v9536
    %v10737 = vunpack.c.h.b16 %v9536
    %v10738 = vunpack.c.l.b16 %v9537
    %v10739 = vunpack.c.h.b16 %v9537
    %v10740 = vunpack.c.l.b16 %v9538
    %v10741 = vunpack.c.l.b16 %v9539
    %v10742 = vunpack.c.h.b16 %v9539
    %v10743 = vunpack.c.l.b16 %v9540
    %v10744 = vunpack.c.h.b16 %v9540
    %v10745 = vunpack.c.l.b16 %v9541
    %v10746 = vunpack.c.h.b16 %v9541
    %v10747 = vunpack.c.l.b16 %v9542
    %v10748 = vunpack.c.l.b16 %v9543
    %v10749 = vunpack.c.h.b16 %v9543
    %v10750 = vunpack.c.l.b16 %v9544
    %v10751 = vunpack.c.h.b16 %v9544
    %v10752 = vunpack.c.l.b16 %v9545
    %v10753 = vunpack.c.h.b16 %v9545
    %v10754 = vunpack.c.l.b16 %v9546
    %v10755 = vunpack.c.l.b16 %v9547
    %v10756 = vunpack.c.h.b16 %v9547
    %v10757 = vunpack.c.l.b16 %v9548
    %v10758 = vunpack.c.h.b16 %v9548
    %v10759 = vunpack.c.l.b16 %v9549
    %v10760 = vunpack.c.h.b16 %v9549
    %v10761 = vunpack.c.l.b16 %v9550
    %v10762 = vunpack.c.l.b16 %v9551
    %v10763 = vunpack.c.h.b16 %v9551
    %v10764 = vunpack.c.l.b16 %v9552
    %v10765 = vunpack.c.h.b16 %v9552
    %v10766 = vunpack.c.l.b16 %v9553
    %v10767 = vunpack.c.h.b16 %v9553
    %v10768 = vunpack.c.l.b16 %v9554
    %v10769 = vunpack.c.l.b16 %v9555
    %v10770 = vunpack.c.h.b16 %v9555
    %v10771 = vunpack.c.l.b16 %v9556
    %v10772 = vunpack.c.h.b16 %v9556
    %v10773 = vunpack.c.l.b16 %v9557
    %v10774 = vunpack.c.h.b16 %v9557
    %v10775 = vunpack.c.l.b16 %v9558
    %v10776 = vunpack.c.l.b16 %v9559
    %v10777 = vunpack.c.h.b16 %v9559
    %v10778 = vunpack.c.l.b16 %v9560
    %v10779 = vunpack.c.h.b16 %v9560
    %v10780 = vunpack.c.l.b16 %v9561
    %v10781 = vunpack.c.h.b16 %v9561
    %v10782 = vunpack.c.l.b16 %v9562
    %v10783 = vunpack.c.l.b16 %v9563
    %v10784 = vunpack.c.h.b16 %v9563
    %v10785 = vunpack.c.l.b16 %v9564
    %v10786 = vunpack.c.h.b16 %v9564
    %v10787 = vunpack.c.l.b16 %v9565
    %v10788 = vunpack.c.h.b16 %v9565
    %v10789 = vunpack.c.l.b16 %v9566
    %v10790 = vunpack.c.l.b16 %v9567
    %v10791 = vunpack.c.h.b16 %v9567
    %v10792 = vunpack.c.l.b16 %v9568
    %v10793 = vunpack.c.h.b16 %v9568
    %v10794 = vunpack.c.l.b16 %v9569
    %v10795 = vunpack.c.h.b16 %v9569
    %v10796 = vunpack.c.l.b16 %v9570
    %v10797 = vunpack.c.l.b16 %v9571
    %v10798 = vunpack.c.h.b16 %v9571
    %v10799 = vunpack.c.l.b16 %v9572
    %v10800 = vunpack.c.h.b16 %v9572
    %v10801 = vunpack.c.l.b16 %v9573
    %v10802 = vunpack.c.h.b16 %v9573
    %v10803 = vunpack.c.l.b16 %v9574
    %v10804 = vunpack.c.l.b16 %v9575
    %v10805 = vunpack.c.h.b16 %v9575
    %v10806 = vunpack.c.l.b16 %v9576
    %v10807 = vunpack.c.h.b16 %v9576
    %v10808 = vunpack.c.l.b16 %v9577
    %v10809 = vunpack.c.h.b16 %v9577
    %v10810 = vunpack.c.l.b16 %v9578
    %v10811 = vunpack.c.l.b16 %v9579
    %v10812 = vunpack.c.h.b16 %v9579
    %v10813 = vunpack.c.l.b16 %v9580
    %v10814 = vunpack.c.h.b16 %v9580
    %v10815 = vunpack.c.l.b16 %v9581
    %v10816 = vunpack.c.h.b16 %v9581
    %v10817 = vunpack.c.l.b16 %v9582
    %v10818 = vunpack.c.l.b16 %v9583
    %v10819 = vunpack.c.h.b16 %v9583
    %v10820 = vunpack.c.l.b16 %v9584
    %v10821 = vunpack.c.h.b16 %v9584
    %v10822 = vunpack.c.l.b16 %v9585
    %v10823 = vunpack.c.h.b16 %v9585
    %v10824 = vunpack.c.l.b16 %v9586
    %v10825 = vunpack.c.l.b16 %v9587
    %v10826 = vunpack.c.h.b16 %v9587
    %v10827 = vunpack.c.l.b16 %v9588
    %v10828 = vunpack.c.h.b16 %v9588
    %v10829 = vunpack.c.l.b16 %v9589
    %v10830 = vunpack.c.h.b16 %v9589
    %v10831 = vunpack.c.l.b16 %v9590
    %v10832 = vunpack.c.l.b16 %v9591
    %v10833 = vunpack.c.h.b16 %v9591
    %v10834 = vunpack.c.l.b16 %v9592
    %v10835 = vunpack.c.h.b16 %v9592
    %v10836 = vunpack.c.l.b16 %v9593
    %v10837 = vunpack.c.h.b16 %v9593
    %v10838 = vunpack.c.l.b16 %v9594
    %v10839 = vunpack.c.l.b16 %v9595
    %v10840 = vunpack.c.h.b16 %v9595
    %v10841 = vunpack.c.l.b16 %v9596
    %v10842 = vunpack.c.h.b16 %v9596
    %v10843 = vunpack.c.l.b16 %v9597
    %v10844 = vunpack.c.h.b16 %v9597
    %v10845 = vunpack.c.l.b16 %v9598
    %v10846 = vunpack.c.l.b16 %v9599
    %v10847 = vunpack.c.h.b16 %v9599
    %v10848 = vunpack.c.l.b16 %v9600
    %v10849 = vunpack.c.h.b16 %v9600
    %v10850 = vunpack.c.l.b16 %v9601
    %v10851 = vunpack.c.h.b16 %v9601
    %v10852 = vunpack.c.l.b16 %v9602
    %v10853 = vunpack.c.l.b16 %v9603
    %v10854 = vunpack.c.h.b16 %v9603
    %v10855 = vunpack.c.l.b16 %v9604
    %v10856 = vunpack.c.h.b16 %v9604
    %v10857 = vunpack.c.l.b16 %v9605
    %v10858 = vunpack.c.h.b16 %v9605
    %v10859 = vunpack.c.l.b16 %v9606
    %v10860 = vunpack.c.l.b16 %v9607
    %v10861 = vunpack.c.h.b16 %v9607
    %v10862 = vunpack.c.l.b16 %v9608
    %v10863 = vunpack.c.h.b16 %v9608
    %v10864 = vunpack.c.l.b16 %v9609
    %v10865 = vunpack.c.h.b16 %v9609
    %v10866 = vunpack.c.l.b16 %v9610
    %v10867 = vunpack.c.l.b16 %v9611
    %v10868 = vunpack.c.h.b16 %v9611
    %v10869 = vunpack.c.l.b16 %v9612
    %v10870 = vunpack.c.h.b16 %v9612
    %v10871 = vunpack.c.l.b16 %v9613
    %v10872 = vunpack.c.h.b16 %v9613
    %v10873 = vunpack.c.l.b16 %v9614
    %v10874 = vunpack.c.l.b16 %v9615
    %v10875 = vunpack.c.h.b16 %v9615
    %v10876 = vunpack.c.l.b16 %v9616
    %v10877 = vunpack.c.h.b16 %v9616
    %v10878 = vunpack.c.l.b16 %v9617
    %v10879 = vunpack.c.h.b16 %v9617
    %v10880 = vunpack.c.l.b16 %v9618
    %v10881 = vunpack.c.l.b16 %v9619
    %v10882 = vunpack.c.h.b16 %v9619
    %v10883 = vunpack.c.l.b16 %v9620
    %v10884 = vunpack.c.h.b16 %v9620
    %v10885 = vunpack.c.l.b16 %v9621
    %v10886 = vunpack.c.h.b16 %v9621
    %v10887 = vunpack.c.l.b16 %v9622
    %v10888 = vunpack.c.l.b16 %v9623
    %v10889 = vunpack.c.h.b16 %v9623
    %v10890 = vunpack.c.l.b16 %v9624
    %v10891 = vunpack.c.h.b16 %v9624
    %v10892 = vunpack.c.l.b16 %v9625
    %v10893 = vunpack.c.h.b16 %v9625
    %v10894 = vunpack.c.l.b16 %v9626
    %v10895 = vunpack.c.l.b16 %v9627
    %v10896 = vunpack.c.h.b16 %v9627
    %v10897 = vunpack.c.l.b16 %v9628
    %v10898 = vunpack.c.h.b16 %v9628
    %v10899 = vunpack.c.l.b16 %v9629
    %v10900 = vunpack.c.h.b16 %v9629
    %v10901 = vunpack.c.l.b16 %v9630
    %v10902 = vunpack.c.l.b16 %v9631
    %v10903 = vunpack.c.h.b16 %v9631
    %v10904 = vunpack.c.l.b16 %v9632
    %v10905 = vunpack.c.h.b16 %v9632
    %v10906 = vunpack.c.l.b16 %v9633
    %v10907 = vunpack.c.h.b16 %v9633
    %v10908 = vunpack.c.l.b16 %v9634
    %v10909 = vunpack.c.l.b16 %v9635
    %v10910 = vunpack.c.h.b16 %v9635
    %v10911 = vunpack.c.l.b16 %v9636
    %v10912 = vunpack.c.h.b16 %v9636
    %v10913 = vunpack.c.l.b16 %v9637
    %v10914 = vunpack.c.h.b16 %v9637
    %v10915 = vunpack.c.l.b16 %v9638
    %v10916 = vunpack.c.l.b16 %v9639
    %v10917 = vunpack.c.h.b16 %v9639
    %v10918 = vunpack.c.l.b16 %v9640
    %v10919 = vunpack.c.h.b16 %v9640
    %v10920 = vunpack.c.l.b16 %v9641
    %v10921 = vunpack.c.h.b16 %v9641
    %v10922 = vunpack.c.l.b16 %v9642
    %v10923 = vunpack.c.l.b16 %v9643
    %v10924 = vunpack.c.h.b16 %v9643
    %v10925 = vunpack.c.l.b16 %v9644
    %v10926 = vunpack.c.h.b16 %v9644
    %v10927 = vunpack.c.l.b16 %v9645
    %v10928 = vunpack.c.h.b16 %v9645
    %v10929 = vunpack.c.l.b16 %v9646
    %v10930 = vunpack.c.l.b16 %v9647
    %v10931 = vunpack.c.h.b16 %v9647
    %v10932 = vunpack.c.l.b16 %v9648
    %v10933 = vunpack.c.h.b16 %v9648
    %v10934 = vunpack.c.l.b16 %v9649
    %v10935 = vunpack.c.h.b16 %v9649
    %v10936 = vunpack.c.l.b16 %v9650
    %v10937 = vunpack.c.l.b16 %v9651
    %v10938 = vunpack.c.h.b16 %v9651
    %v10939 = vunpack.c.l.b16 %v9652
    %v10940 = vunpack.c.h.b16 %v9652
    %v10941 = vunpack.c.l.b16 %v9653
    %v10942 = vunpack.c.h.b16 %v9653
    %v10943 = vunpack.c.l.b16 %v9654
    %v10944 = vunpack.c.l.b16 %v9655
    %v10945 = vunpack.c.h.b16 %v9655
    %v10946 = vunpack.c.l.b16 %v9656
    %v10947 = vunpack.c.h.b16 %v9656
    %v10948 = vunpack.c.l.b16 %v9657
    %v10949 = vunpack.c.h.b16 %v9657
    %v10950 = vunpack.c.l.b16 %v9658
    %v10951 = vunpack.c.l.b16 %v9659
    %v10952 = vunpack.c.h.b16 %v9659
    %v10953 = vunpack.c.l.b16 %v9660
    %v10954 = vunpack.c.h.b16 %v9660
    %v10955 = vunpack.c.l.b16 %v9661
    %v10956 = vunpack.c.h.b16 %v9661
    %v10957 = vunpack.c.l.b16 %v9662
    %v10958 = vunpack.c.l.b16 %v9663
    %v10959 = vunpack.c.h.b16 %v9663
    %v10960 = vunpack.c.l.b16 %v9664
    %v10961 = vunpack.c.h.b16 %v9664
    %v10962 = vunpack.c.l.b16 %v9665
    %v10963 = vunpack.c.h.b16 %v9665
    %v10964 = vunpack.c.l.b16 %v9666
    %v10965 = vunpack.c.l.b16 %v9667
    %v10966 = vunpack.c.h.b16 %v9667
    %v10967 = vunpack.c.l.b16 %v9668
    %v10968 = vunpack.c.h.b16 %v9668
    %v10969 = vunpack.c.l.b16 %v9669
    %v10970 = vunpack.c.h.b16 %v9669
    %v10971 = vunpack.c.l.b16 %v9670
    %v10972 = vunpack.c.l.b16 %v9671
    %v10973 = vunpack.c.h.b16 %v9671
    %v10974 = vunpack.c.l.b16 %v9672
    %v10975 = vunpack.c.h.b16 %v9672
    %v10976 = vunpack.c.l.b16 %v9673
    %v10977 = vunpack.c.h.b16 %v9673
    %v10978 = vunpack.c.l.b16 %v9674
    %v10979 = vunpack.c.l.b16 %v9675
    %v10980 = vunpack.c.h.b16 %v9675
    %v10981 = vunpack.c.l.b16 %v9676
    %v10982 = vunpack.c.h.b16 %v9676
    %v10983 = vunpack.c.l.b16 %v9677
    %v10984 = vunpack.c.h.b16 %v9677
    %v10985 = vunpack.c.l.b16 %v9678
    %v10986 = vunpack.c.l.b16 %v9679
    %v10987 = vunpack.c.h.b16 %v9679
    %v10988 = vunpack.c.l.b16 %v9680
    %v10989 = vunpack.c.h.b16 %v9680
    %v10990 = vunpack.c.l.b16 %v9681
    %v10991 = vunpack.c.h.b16 %v9681
    %v10992 = vunpack.c.l.b16 %v9682
    %v10993 = vunpack.c.l.b16 %v9683
    %v10994 = vunpack.c.h.b16 %v9683
    %v10995 = vunpack.c.l.b16 %v9684
    %v10996 = vunpack.c.h.b16 %v9684
    %v10997 = vunpack.c.l.b16 %v9685
    %v10998 = vunpack.c.h.b16 %v9685
    %v10999 = vunpack.c.l.b16 %v9686
    %v11000 = vunpack.c.l.b16 %v9687
    %v11001 = vunpack.c.h.b16 %v9687
    %v11002 = vunpack.c.l.b16 %v9688
    %v11003 = vunpack.c.h.b16 %v9688
    %v11004 = vunpack.c.l.b16 %v9689
    %v11005 = vunpack.c.h.b16 %v9689
    %v11006 = vunpack.c.l.b16 %v9690
    %v11007 = vunpack.c.l.b16 %v9691
    %v11008 = vunpack.c.h.b16 %v9691
    %v11009 = vunpack.c.l.b16 %v9692
    %v11010 = vunpack.c.h.b16 %v9692
    %v11011 = vunpack.c.l.b16 %v9693
    %v11012 = vunpack.c.h.b16 %v9693
    %v11013 = vunpack.c.l.b16 %v9694
    %v11014 = vunpack.c.l.b16 %v9695
    %v11015 = vunpack.c.h.b16 %v9695
    %v11016 = vunpack.c.l.b16 %v9696
    %v11017 = vunpack.c.h.b16 %v9696
    %v11018 = vunpack.c.l.b16 %v9697
    %v11019 = vunpack.c.h.b16 %v9697
    %v11020 = vunpack.c.l.b16 %v9698
    %v11021 = vunpack.c.l.b16 %v9699
    %v11022 = vunpack.c.h.b16 %v9699
    %v11023 = vunpack.c.l.b16 %v9700
    %v11024 = vunpack.c.h.b16 %v9700
    %v11025 = vunpack.c.l.b16 %v9701
    %v11026 = vunpack.c.h.b16 %v9701
    %v11027 = vunpack.c.l.b16 %v9702
    %v11028 = vunpack.c.l.b16 %v9703
    %v11029 = vunpack.c.h.b16 %v9703
    %v11030 = vunpack.c.l.b16 %v9704
    %v11031 = vunpack.c.h.b16 %v9704
    %v11032 = vunpack.c.l.b16 %v9705
    %v11033 = vunpack.c.h.b16 %v9705
    %v11034 = vunpack.c.l.b16 %v9706
    %v11035 = vunpack.c.l.b16 %v9707
    %v11036 = vunpack.c.h.b16 %v9707
    %v11037 = vunpack.c.l.b16 %v9708
    %v11038 = vunpack.c.h.b16 %v9708
    %v11039 = vunpack.c.l.b16 %v9709
    %v11040 = vunpack.c.h.b16 %v9709
    %v11041 = vunpack.c.l.b16 %v9710
    %v11042 = vunpack.c.l.b16 %v9711
    %v11043 = vunpack.c.h.b16 %v9711
    %v11044 = vunpack.c.l.b16 %v9712
    %v11045 = vunpack.c.h.b16 %v9712
    %v11046 = vunpack.c.l.b16 %v9713
    %v11047 = vunpack.c.h.b16 %v9713
    %v11048 = vunpack.c.l.b16 %v9714
    %v11049 = vunpack.c.l.b16 %v9715
    %v11050 = vunpack.c.h.b16 %v9715
    %v11051 = vunpack.c.l.b16 %v9716
    %v11052 = vunpack.c.h.b16 %v9716
    %v11053 = vunpack.c.l.b16 %v9717
    %v11054 = vunpack.c.h.b16 %v9717
    %v11055 = vunpack.c.l.b16 %v9718
    %v11056 = vunpack.c.l.b16 %v9719
    %v11057 = vunpack.c.h.b16 %v9719
    %v11058 = vunpack.c.l.b16 %v9720
    %v11059 = vunpack.c.h.b16 %v9720
    %v11060 = vunpack.c.l.b16 %v9721
    %v11061 = vunpack.c.h.b16 %v9721
    %v11062 = vunpack.c.l.b16 %v9722
    %v11063 = vunpack.c.l.b16 %v9723
    %v11064 = vunpack.c.h.b16 %v9723
    %v11065 = vunpack.c.l.b16 %v9724
    %v11066 = vunpack.c.h.b16 %v9724
    %v11067 = vunpack.c.l.b16 %v9725
    %v11068 = vunpack.c.h.b16 %v9725
    %v11069 = vunpack.c.l.b16 %v9726
    %v11070 = vunpack.c.l.b16 %v9727
    %v11071 = vunpack.c.h.b16 %v9727
    %v11072 = vunpack.c.l.b16 %v9728
    %v11073 = vunpack.c.h.b16 %v9728
    %v11074 = vunpack.c.l.b16 %v9729
    %v11075 = vunpack.c.h.b16 %v9729
    %v11076 = vunpack.c.l.b16 %v9730
    %v11077 = vunpack.c.l.b16 %v9731
    %v11078 = vunpack.c.h.b16 %v9731
    %v11079 = vunpack.c.l.b16 %v9732
    %v11080 = vunpack.c.h.b16 %v9732
    %v11081 = vunpack.c.l.b16 %v9733
    %v11082 = vunpack.c.h.b16 %v9733
    %v11083 = vunpack.c.l.b16 %v9734
    %v11084 = vunpack.c.l.b16 %v9735
    %v11085 = vunpack.c.h.b16 %v9735
    %v11086 = vunpack.c.l.b16 %v9736
    %v11087 = vunpack.c.h.b16 %v9736
    %v11088 = vunpack.c.l.b16 %v9737
    %v11089 = vunpack.c.h.b16 %v9737
    %v11090 = vunpack.c.l.b16 %v9738
    %v11091 = vunpack.c.l.b16 %v9739
    %v11092 = vunpack.c.h.b16 %v9739
    %v11093 = vunpack.c.l.b16 %v9740
    %v11094 = vunpack.c.h.b16 %v9740
    %v11095 = vunpack.c.l.b16 %v9741
    %v11096 = vunpack.c.h.b16 %v9741
    %v11097 = vunpack.c.l.b16 %v9742
    %v11098 = vunpack.c.l.b16 %v9743
    %v11099 = vunpack.c.h.b16 %v9743
    %v11100 = vunpack.c.l.b16 %v9744
    %v11101 = vunpack.c.h.b16 %v9744
    %v11102 = vunpack.c.l.b16 %v9745
    %v11103 = vunpack.c.h.b16 %v9745
    %v11104 = vunpack.c.l.b16 %v9746
    %v11105 = vunpack.c.l.b16 %v9747
    %v11106 = vunpack.c.h.b16 %v9747
    %v11107 = vunpack.c.l.b16 %v9748
    %v11108 = vunpack.c.h.b16 %v9748
    %v11109 = vunpack.c.l.b16 %v9749
    %v11110 = vunpack.c.h.b16 %v9749
    %v11111 = vunpack.c.l.b16 %v9750
    %v11112 = vunpack.c.l.b16 %v9751
    %v11113 = vunpack.c.h.b16 %v9751
    %v11114 = vunpack.c.l.b16 %v9752
    %v11115 = vunpack.c.h.b16 %v9752
    %v11116 = vunpack.c.l.b16 %v9753
    %v11117 = vunpack.c.h.b16 %v9753
    %v11118 = vunpack.c.l.b16 %v9754
    %v11119 = vunpack.c.l.b16 %v9755
    %v11120 = vunpack.c.h.b16 %v9755
    %v11121 = vunpack.c.l.b16 %v9756
    %v11122 = vunpack.c.h.b16 %v9756
    %v11123 = vunpack.c.l.b16 %v9757
    %v11124 = vunpack.c.h.b16 %v9757
    %v11125 = vunpack.c.l.b16 %v9758
    %v11126 = vunpack.c.l.b16 %v9759
    %v11127 = vunpack.c.h.b16 %v9759
    %v11128 = vunpack.c.l.b16 %v9760
    %v11129 = vunpack.c.h.b16 %v9760
    %v11130 = vunpack.c.l.b16 %v9761
    %v11131 = vunpack.c.h.b16 %v9761
    %v11132 = vunpack.c.l.b16 %v9762
    %v11133 = vunpack.c.l.b16 %v9763
    %v11134 = vunpack.c.h.b16 %v9763
    %v11135 = vunpack.c.l.b16 %v9764
    %v11136 = vunpack.c.h.b16 %v9764
    %v11137 = vunpack.c.l.b16 %v9765
    %v11138 = vunpack.c.h.b16 %v9765
    %v11139 = vunpack.c.l.b16 %v9766
    %v11140 = vunpack.c.l.b16 %v9767
    %v11141 = vunpack.c.h.b16 %v9767
    %v11142 = vunpack.c.l.b16 %v9768
    %v11143 = vunpack.c.h.b16 %v9768
    %v11144 = vunpack.c.l.b16 %v9769
    %v11145 = vunpack.c.h.b16 %v9769
    %v11146 = vunpack.c.l.b16 %v9770
    %v11147 = vunpack.c.l.b16 %v9771
    %v11148 = vunpack.c.h.b16 %v9771
    %v11149 = vunpack.c.l.b16 %v9772
    %v11150 = vunpack.c.h.b16 %v9772
    %v11151 = vunpack.c.l.b16 %v9773
    %v11152 = vunpack.c.h.b16 %v9773
    %v11153 = vunpack.c.l.b16 %v9774
    %v11154 = vunpack.c.l.b16 %v9775
    %v11155 = vunpack.c.h.b16 %v9775
    %v11156 = vunpack.c.l.b16 %v9776
    %v11157 = vunpack.c.h.b16 %v9776
    %v11158 = vunpack.c.l.b16 %v9777
    %v11159 = vunpack.c.h.b16 %v9777
    %v11160 = vunpack.c.l.b16 %v9778
    %v11161 = vunpack.c.l.b16 %v9779
    %v11162 = vunpack.c.h.b16 %v9779
    %v11163 = vunpack.c.l.b16 %v9780
    %v11164 = vunpack.c.h.b16 %v9780
    %v11165 = vunpack.c.l.b16 %v9781
    %v11166 = vunpack.c.h.b16 %v9781
    %v11167 = vunpack.c.l.b16 %v9782
    %v11168 = vunpack.c.l.b16 %v9783
    %v11169 = vunpack.c.h.b16 %v9783
    %v11170 = vunpack.c.l.b16 %v9784
    %v11171 = vunpack.c.h.b16 %v9784
    %v11172 = vunpack.c.l.b16 %v9785
    %v11173 = vunpack.c.h.b16 %v9785
    %v11174 = vunpack.c.l.b16 %v9786
    %v11175 = vunpack.c.l.b16 %v9787
    %v11176 = vunpack.c.h.b16 %v9787
    %v11177 = vunpack.c.l.b16 %v9788
    %v11178 = vunpack.c.h.b16 %v9788
    %v11179 = vunpack.c.l.b16 %v9789
    %v11180 = vunpack.c.h.b16 %v9789
    %v11181 = vunpack.c.l.b16 %v9790
    %v11182 = vunpack.c.l.b16 %v9791
    %v11183 = vunpack.c.h.b16 %v9791
    %v11184 = vunpack.c.l.b16 %v9792
    %v11185 = vunpack.c.h.b16 %v9792
    %v11186 = vunpack.c.l.b16 %v9793
    %v11187 = vunpack.c.h.b16 %v9793
    %v11188 = vunpack.c.l.b16 %v9794
    %v11189 = vunpack.c.l.b16 %v9795
    %v11190 = vunpack.c.h.b16 %v9795
    %v11191 = vunpack.c.l.b16 %v9796
    %v11192 = vunpack.c.h.b16 %v9796
    %v11193 = vunpack.c.l.b16 %v9797
    %v11194 = vunpack.c.h.b16 %v9797
    %v11195 = vunpack.c.l.b16 %v9798
    %v11196 = vunpack.c.l.b16 %v9799
    %v11197 = vunpack.c.h.b16 %v9799
    %v11198 = vunpack.c.l.b16 %v9800
    %v11199 = vunpack.c.h.b16 %v9800
    %v11200 = vunpack.c.l.b16 %v9801
    %v11201 = vunpack.c.h.b16 %v9801
    %v11202 = vunpack.c.l.b16 %v9802
    %v11203 = vunpack.c.l.b16 %v9803
    %v11204 = vunpack.c.h.b16 %v9803
    %v11205 = vunpack.c.l.b16 %v9804
    %v11206 = vunpack.c.h.b16 %v9804
    %v11207 = vunpack.c.l.b16 %v9805
    %v11208 = vunpack.c.h.b16 %v9805
    %v11209 = vunpack.c.l.b16 %v9806
    %v11210 = vunpack.c.l.b16 %v9807
    %v11211 = vunpack.c.h.b16 %v9807
    %v11212 = vunpack.c.l.b16 %v9808
    %v11213 = vunpack.c.h.b16 %v9808
    %v11214 = vunpack.c.l.b16 %v9809
    %v11215 = vunpack.c.h.b16 %v9809
    %v11216 = vunpack.c.l.b16 %v9810
    %v11217 = vunpack.c.l.b16 %v9811
    %v11218 = vunpack.c.h.b16 %v9811
    %v11219 = vunpack.c.l.b16 %v9812
    %v11220 = vunpack.c.h.b16 %v9812
    %v11221 = vunpack.c.l.b16 %v9813
    %v11222 = vunpack.c.h.b16 %v9813
    %v11223 = vunpack.c.l.b16 %v9814
    %v11224 = vunpack.c.l.b16 %v9815
    %v11225 = vunpack.c.h.b16 %v9815
    %v11226 = vunpack.c.l.b16 %v9816
    %v11227 = vunpack.c.h.b16 %v9816
    %v11228 = vunpack.c.l.b16 %v9817
    %v11229 = vunpack.c.h.b16 %v9817
    %v11230 = vunpack.c.l.b16 %v9818
    %v11231 = vunpack.c.l.b16 %v9819
    %v11232 = vunpack.c.h.b16 %v9819
    %v11233 = vunpack.c.l.b16 %v9820
    %v11234 = vunpack.c.h.b16 %v9820
    %v11235 = vunpack.c.l.b16 %v9821
    %v11236 = vunpack.c.h.b16 %v9821
    %v11237 = vunpack.c.l.b16 %v9822
    %v11238 = vunpack.c.l.b16 %v9823
    %v11239 = vunpack.c.h.b16 %v9823
    %v11240 = vunpack.c.l.b16 %v9824
    %v11241 = vunpack.c.h.b16 %v9824
    %v11242 = vunpack.c.l.b16 %v9825
    %v11243 = vunpack.c.h.b16 %v9825
    %v11244 = vunpack.c.l.b16 %v9826
    %v11245 = vunpack.c.l.b16 %v9827
    %v11246 = vunpack.c.h.b16 %v9827
    %v11247 = vunpack.c.l.b16 %v9828
    %v11248 = vunpack.c.h.b16 %v9828
    %v11249 = vunpack.c.l.b16 %v9829
    %v11250 = vunpack.c.h.b16 %v9829
    %v11251 = vunpack.c.l.b16 %v9830
    %v11252 = vunpack.c.l.b16 %v9831
    %v11253 = vunpack.c.h.b16 %v9831
    %v11254 = vunpack.c.l.b16 %v9832
    %v11255 = vunpack.c.h.b16 %v9832
    %v11256 = vunpack.c.l.b16 %v9833
    %v11257 = vunpack.c.h.b16 %v9833
    %v11258 = vunpack.c.l.b16 %v9834
    %v11259 = vpack.c.b16 %v10370, %v10363
    %v11260 = vpack.c.b16 %v10371, %v10364
    %v11261 = vpack.c.b16 %v10372, %v10365
    %v11262 = vpack.c.b16 %v10373, %v10366
    %v11263 = vpack.c.b16 %v10374, %v10367
    %v11264 = vpack.c.b16 %v10375, %v10368
    %v11265 = vpack.c.b16 %v10376, %v10369
    %v11266 = vpack.c.b16 %v10384, %v10377
    %v11267 = vpack.c.b16 %v10385, %v10378
    %v11268 = vpack.c.b16 %v10386, %v10379
    %v11269 = vpack.c.b16 %v10387, %v10380
    %v11270 = vpack.c.b16 %v10388, %v10381
    %v11271 = vpack.c.b16 %v10389, %v10382
    %v11272 = vpack.c.b16 %v10390, %v10383
    %v11273 = vpack.c.b16 %v10398, %v10391
    %v11274 = vpack.c.b16 %v10399, %v10392
    %v11275 = vpack.c.b16 %v10400, %v10393
    %v11276 = vpack.c.b16 %v10401, %v10394
    %v11277 = vpack.c.b16 %v10402, %v10395
    %v11278 = vpack.c.b16 %v10403, %v10396
    %v11279 = vpack.c.b16 %v10404, %v10397
    %v11280 = vpack.c.b16 %v10412, %v10405
    %v11281 = vpack.c.b16 %v10413, %v10406
    %v11282 = vpack.c.b16 %v10414, %v10407
    %v11283 = vpack.c.b16 %v10415, %v10408
    %v11284 = vpack.c.b16 %v10416, %v10409
    %v11285 = vpack.c.b16 %v10417, %v10410
    %v11286 = vpack.c.b16 %v10418, %v10411
    %v11287 = vpack.c.b16 %v10426, %v10419
    %v11288 = vpack.c.b16 %v10427, %v10420
    %v11289 = vpack.c.b16 %v10428, %v10421
    %v11290 = vpack.c.b16 %v10429, %v10422
    %v11291 = vpack.c.b16 %v10430, %v10423
    %v11292 = vpack.c.b16 %v10431, %v10424
    %v11293 = vpack.c.b16 %v10432, %v10425
    %v11294 = vpack.c.b16 %v10440, %v10433
    %v11295 = vpack.c.b16 %v10441, %v10434
    %v11296 = vpack.c.b16 %v10442, %v10435
    %v11297 = vpack.c.b16 %v10443, %v10436
    %v11298 = vpack.c.b16 %v10444, %v10437
    %v11299 = vpack.c.b16 %v10445, %v10438
    %v11300 = vpack.c.b16 %v10446, %v10439
    %v11301 = vpack.c.b16 %v10454, %v10447
    %v11302 = vpack.c.b16 %v10455, %v10448
    %v11303 = vpack.c.b16 %v10456, %v10449
    %v11304 = vpack.c.b16 %v10457, %v10450
    %v11305 = vpack.c.b16 %v10458, %v10451
    %v11306 = vpack.c.b16 %v10459, %v10452
    %v11307 = vpack.c.b16 %v10460, %v10453
    %v11308 = vpack.c.b16 %v10468, %v10461
    %v11309 = vpack.c.b16 %v10469, %v10462
    %v11310 = vpack.c.b16 %v10470, %v10463
    %v11311 = vpack.c.b16 %v10471, %v10464
    %v11312 = vpack.c.b16 %v10472, %v10465
    %v11313 = vpack.c.b16 %v10473, %v10466
    %v11314 = vpack.c.b16 %v10474, %v10467
    %v11315 = vpack.c.b16 %v10482, %v10475
    %v11316 = vpack.c.b16 %v10483, %v10476
    %v11317 = vpack.c.b16 %v10484, %v10477
    %v11318 = vpack.c.b16 %v10485, %v10478
    %v11319 = vpack.c.b16 %v10486, %v10479
    %v11320 = vpack.c.b16 %v10487, %v10480
    %v11321 = vpack.c.b16 %v10488, %v10481
    %v11322 = vpack.c.b16 %v10496, %v10489
    %v11323 = vpack.c.b16 %v10497, %v10490
    %v11324 = vpack.c.b16 %v10498, %v10491
    %v11325 = vpack.c.b16 %v10499, %v10492
    %v11326 = vpack.c.b16 %v10500, %v10493
    %v11327 = vpack.c.b16 %v10501, %v10494
    %v11328 = vpack.c.b16 %v10502, %v10495
    %v11329 = vpack.c.b16 %v10510, %v10503
    %v11330 = vpack.c.b16 %v10511, %v10504
    %v11331 = vpack.c.b16 %v10512, %v10505
    %v11332 = vpack.c.b16 %v10513, %v10506
    %v11333 = vpack.c.b16 %v10514, %v10507
    %v11334 = vpack.c.b16 %v10515, %v10508
    %v11335 = vpack.c.b16 %v10516, %v10509
    %v11336 = vpack.c.b16 %v10524, %v10517
    %v11337 = vpack.c.b16 %v10525, %v10518
    %v11338 = vpack.c.b16 %v10526, %v10519
    %v11339 = vpack.c.b16 %v10527, %v10520
    %v11340 = vpack.c.b16 %v10528, %v10521
    %v11341 = vpack.c.b16 %v10529, %v10522
    %v11342 = vpack.c.b16 %v10530, %v10523
    %v11343 = vpack.c.b16 %v10538, %v10531
    %v11344 = vpack.c.b16 %v10539, %v10532
    %v11345 = vpack.c.b16 %v10540, %v10533
    %v11346 = vpack.c.b16 %v10541, %v10534
    %v11347 = vpack.c.b16 %v10542, %v10535
    %v11348 = vpack.c.b16 %v10543, %v10536
    %v11349 = vpack.c.b16 %v10544, %v10537
    %v11350 = vpack.c.b16 %v10552, %v10545
    %v11351 = vpack.c.b16 %v10553, %v10546
    %v11352 = vpack.c.b16 %v10554, %v10547
    %v11353 = vpack.c.b16 %v10555, %v10548
    %v11354 = vpack.c.b16 %v10556, %v10549
    %v11355 = vpack.c.b16 %v10557, %v10550
    %v11356 = vpack.c.b16 %v10558, %v10551
    %v11357 = vpack.c.b16 %v10566, %v10559
    %v11358 = vpack.c.b16 %v10567, %v10560
    %v11359 = vpack.c.b16 %v10568, %v10561
    %v11360 = vpack.c.b16 %v10569, %v10562
    %v11361 = vpack.c.b16 %v10570, %v10563
    %v11362 = vpack.c.b16 %v10571, %v10564
    %v11363 = vpack.c.b16 %v10572, %v10565
    %v11364 = vpack.c.b16 %v10580, %v10573
    %v11365 = vpack.c.b16 %v10581, %v10574
    %v11366 = vpack.c.b16 %v10582, %v10575
    %v11367 = vpack.c.b16 %v10583, %v10576
    %v11368 = vpack.c.b16 %v10584, %v10577
    %v11369 = vpack.c.b16 %v10585, %v10578
    %v11370 = vpack.c.b16 %v10586, %v10579
    %v11371 = vpack.c.b16 %v10594, %v10587
    %v11372 = vpack.c.b16 %v10595, %v10588
    %v11373 = vpack.c.b16 %v10596, %v10589
    %v11374 = vpack.c.b16 %v10597, %v10590
    %v11375 = vpack.c.b16 %v10598, %v10591
    %v11376 = vpack.c.b16 %v10599, %v10592
    %v11377 = vpack.c.b16 %v10600, %v10593
    %v11378 = vpack.c.b16 %v10608, %v10601
    %v11379 = vpack.c.b16 %v10609, %v10602
    %v11380 = vpack.c.b16 %v10610, %v10603
    %v11381 = vpack.c.b16 %v10611, %v10604
    %v11382 = vpack.c.b16 %v10612, %v10605
    %v11383 = vpack.c.b16 %v10613, %v10606
    %v11384 = vpack.c.b16 %v10614, %v10607
    %v11385 = vpack.c.b16 %v10622, %v10615
    %v11386 = vpack.c.b16 %v10623, %v10616
    %v11387 = vpack.c.b16 %v10624, %v10617
    %v11388 = vpack.c.b16 %v10625, %v10618
    %v11389 = vpack.c.b16 %v10626, %v10619
    %v11390 = vpack.c.b16 %v10627, %v10620
    %v11391 = vpack.c.b16 %v10628, %v10621
    %v11392 = vpack.c.b16 %v10636, %v10629
    %v11393 = vpack.c.b16 %v10637, %v10630
    %v11394 = vpack.c.b16 %v10638, %v10631
    %v11395 = vpack.c.b16 %v10639, %v10632
    %v11396 = vpack.c.b16 %v10640, %v10633
    %v11397 = vpack.c.b16 %v10641, %v10634
    %v11398 = vpack.c.b16 %v10642, %v10635
    %v11399 = vpack.c.b16 %v10650, %v10643
    %v11400 = vpack.c.b16 %v10651, %v10644
    %v11401 = vpack.c.b16 %v10652, %v10645
    %v11402 = vpack.c.b16 %v10653, %v10646
    %v11403 = vpack.c.b16 %v10654, %v10647
    %v11404 = vpack.c.b16 %v10655, %v10648
    %v11405 = vpack.c.b16 %v10656, %v10649
    %v11406 = vpack.c.b16 %v10664, %v10657
    %v11407 = vpack.c.b16 %v10665, %v10658
    %v11408 = vpack.c.b16 %v10666, %v10659
    %v11409 = vpack.c.b16 %v10667, %v10660
    %v11410 = vpack.c.b16 %v10668, %v10661
    %v11411 = vpack.c.b16 %v10669, %v10662
    %v11412 = vpack.c.b16 %v10670, %v10663
    %v11413 = vpack.c.b16 %v10678, %v10671
    %v11414 = vpack.c.b16 %v10679, %v10672
    %v11415 = vpack.c.b16 %v10680, %v10673
    %v11416 = vpack.c.b16 %v10681, %v10674
    %v11417 = vpack.c.b16 %v10682, %v10675
    %v11418 = vpack.c.b16 %v10683, %v10676
    %v11419 = vpack.c.b16 %v10684, %v10677
    %v11420 = vpack.c.b16 %v10692, %v10685
    %v11421 = vpack.c.b16 %v10693, %v10686
    %v11422 = vpack.c.b16 %v10694, %v10687
    %v11423 = vpack.c.b16 %v10695, %v10688
    %v11424 = vpack.c.b16 %v10696, %v10689
    %v11425 = vpack.c.b16 %v10697, %v10690
    %v11426 = vpack.c.b16 %v10698, %v10691
    %v11427 = vpack.c.b16 %v10706, %v10699
    %v11428 = vpack.c.b16 %v10707, %v10700
    %v11429 = vpack.c.b16 %v10708, %v10701
    %v11430 = vpack.c.b16 %v10709, %v10702
    %v11431 = vpack.c.b16 %v10710, %v10703
    %v11432 = vpack.c.b16 %v10711, %v10704
    %v11433 = vpack.c.b16 %v10712, %v10705
    %v11434 = vpack.c.b16 %v10720, %v10713
    %v11435 = vpack.c.b16 %v10721, %v10714
    %v11436 = vpack.c.b16 %v10722, %v10715
    %v11437 = vpack.c.b16 %v10723, %v10716
    %v11438 = vpack.c.b16 %v10724, %v10717
    %v11439 = vpack.c.b16 %v10725, %v10718
    %v11440 = vpack.c.b16 %v10726, %v10719
    %v11441 = vpack.c.b16 %v10734, %v10727
    %v11442 = vpack.c.b16 %v10735, %v10728
    %v11443 = vpack.c.b16 %v10736, %v10729
    %v11444 = vpack.c.b16 %v10737, %v10730
    %v11445 = vpack.c.b16 %v10738, %v10731
    %v11446 = vpack.c.b16 %v10739, %v10732
    %v11447 = vpack.c.b16 %v10740, %v10733
    %v11448 = vpack.c.b16 %v10748, %v10741
    %v11449 = vpack.c.b16 %v10749, %v10742
    %v11450 = vpack.c.b16 %v10750, %v10743
    %v11451 = vpack.c.b16 %v10751, %v10744
    %v11452 = vpack.c.b16 %v10752, %v10745
    %v11453 = vpack.c.b16 %v10753, %v10746
    %v11454 = vpack.c.b16 %v10754, %v10747
    %v11455 = vpack.c.b16 %v10762, %v10755
    %v11456 = vpack.c.b16 %v10763, %v10756
    %v11457 = vpack.c.b16 %v10764, %v10757
    %v11458 = vpack.c.b16 %v10765, %v10758
    %v11459 = vpack.c.b16 %v10766, %v10759
    %v11460 = vpack.c.b16 %v10767, %v10760
    %v11461 = vpack.c.b16 %v10768, %v10761
    %v11462 = vpack.c.b16 %v10776, %v10769
    %v11463 = vpack.c.b16 %v10777, %v10770
    %v11464 = vpack.c.b16 %v10778, %v10771
    %v11465 = vpack.c.b16 %v10779, %v10772
    %v11466 = vpack.c.b16 %v10780, %v10773
    %v11467 = vpack.c.b16 %v10781, %v10774
    %v11468 = vpack.c.b16 %v10782, %v10775
    %v11469 = vpack.c.b16 %v10790, %v10783
    %v11470 = vpack.c.b16 %v10791, %v10784
    %v11471 = vpack.c.b16 %v10792, %v10785
    %v11472 = vpack.c.b16 %v10793, %v10786
    %v11473 = vpack.c.b16 %v10794, %v10787
    %v11474 = vpack.c.b16 %v10795, %v10788
    %v11475 = vpack.c.b16 %v10796, %v10789
    %v11476 = vpack.c.b16 %v10804, %v10797
    %v11477 = vpack.c.b16 %v10805, %v10798
    %v11478 = vpack.c.b16 %v10806, %v10799
    %v11479 = vpack.c.b16 %v10807, %v10800
    %v11480 = vpack.c.b16 %v10808, %v10801
    %v11481 = vpack.c.b16 %v10809, %v10802
    %v11482 = vpack.c.b16 %v10810, %v10803
    %v11483 = vpack.c.b16 %v10818, %v10811
    %v11484 = vpack.c.b16 %v10819, %v10812
    %v11485 = vpack.c.b16 %v10820, %v10813
    %v11486 = vpack.c.b16 %v10821, %v10814
    %v11487 = vpack.c.b16 %v10822, %v10815
    %v11488 = vpack.c.b16 %v10823, %v10816
    %v11489 = vpack.c.b16 %v10824, %v10817
    %v11490 = vpack.c.b16 %v10832, %v10825
    %v11491 = vpack.c.b16 %v10833, %v10826
    %v11492 = vpack.c.b16 %v10834, %v10827
    %v11493 = vpack.c.b16 %v10835, %v10828
    %v11494 = vpack.c.b16 %v10836, %v10829
    %v11495 = vpack.c.b16 %v10837, %v10830
    %v11496 = vpack.c.b16 %v10838, %v10831
    %v11497 = vpack.c.b16 %v10846, %v10839
    %v11498 = vpack.c.b16 %v10847, %v10840
    %v11499 = vpack.c.b16 %v10848, %v10841
    %v11500 = vpack.c.b16 %v10849, %v10842
    %v11501 = vpack.c.b16 %v10850, %v10843
    %v11502 = vpack.c.b16 %v10851, %v10844
    %v11503 = vpack.c.b16 %v10852, %v10845
    %v11504 = vpack.c.b16 %v10860, %v10853
    %v11505 = vpack.c.b16 %v10861, %v10854
    %v11506 = vpack.c.b16 %v10862, %v10855
    %v11507 = vpack.c.b16 %v10863, %v10856
    %v11508 = vpack.c.b16 %v10864, %v10857
    %v11509 = vpack.c.b16 %v10865, %v10858
    %v11510 = vpack.c.b16 %v10866, %v10859
    %v11511 = vpack.c.b16 %v10874, %v10867
    %v11512 = vpack.c.b16 %v10875, %v10868
    %v11513 = vpack.c.b16 %v10876, %v10869
    %v11514 = vpack.c.b16 %v10877, %v10870
    %v11515 = vpack.c.b16 %v10878, %v10871
    %v11516 = vpack.c.b16 %v10879, %v10872
    %v11517 = vpack.c.b16 %v10880, %v10873
    %v11518 = vpack.c.b16 %v10888, %v10881
    %v11519 = vpack.c.b16 %v10889, %v10882
    %v11520 = vpack.c.b16 %v10890, %v10883
    %v11521 = vpack.c.b16 %v10891, %v10884
    %v11522 = vpack.c.b16 %v10892, %v10885
    %v11523 = vpack.c.b16 %v10893, %v10886
    %v11524 = vpack.c.b16 %v10894, %v10887
    %v11525 = vpack.c.b16 %v10902, %v10895
    %v11526 = vpack.c.b16 %v10903, %v10896
    %v11527 = vpack.c.b16 %v10904, %v10897
    %v11528 = vpack.c.b16 %v10905, %v10898
    %v11529 = vpack.c.b16 %v10906, %v10899
    %v11530 = vpack.c.b16 %v10907, %v10900
    %v11531 = vpack.c.b16 %v10908, %v10901
    %v11532 = vpack.c.b16 %v10916, %v10909
    %v11533 = vpack.c.b16 %v10917, %v10910
    %v11534 = vpack.c.b16 %v10918, %v10911
    %v11535 = vpack.c.b16 %v10919, %v10912
    %v11536 = vpack.c.b16 %v10920, %v10913
    %v11537 = vpack.c.b16 %v10921, %v10914
    %v11538 = vpack.c.b16 %v10922, %v10915
    %v11539 = vpack.c.b16 %v10930, %v10923
    %v11540 = vpack.c.b16 %v10931, %v10924
    %v11541 = vpack.c.b16 %v10932, %v10925
    %v11542 = vpack.c.b16 %v10933, %v10926
    %v11543 = vpack.c.b16 %v10934, %v10927
    %v11544 = vpack.c.b16 %v10935, %v10928
    %v11545 = vpack.c.b16 %v10936, %v10929
    %v11546 = vpack.c.b16 %v10944, %v10937
    %v11547 = vpack.c.b16 %v10945, %v10938
    %v11548 = vpack.c.b16 %v10946, %v10939
    %v11549 = vpack.c.b16 %v10947, %v10940
    %v11550 = vpack.c.b16 %v10948, %v10941
    %v11551 = vpack.c.b16 %v10949, %v10942
    %v11552 = vpack.c.b16 %v10950, %v10943
    %v11553 = vpack.c.b16 %v10958, %v10951
    %v11554 = vpack.c.b16 %v10959, %v10952
    %v11555 = vpack.c.b16 %v10960, %v10953
    %v11556 = vpack.c.b16 %v10961, %v10954
    %v11557 = vpack.c.b16 %v10962, %v10955
    %v11558 = vpack.c.b16 %v10963, %v10956
    %v11559 = vpack.c.b16 %v10964, %v10957
    %v11560 = vpack.c.b16 %v10972, %v10965
    %v11561 = vpack.c.b16 %v10973, %v10966
    %v11562 = vpack.c.b16 %v10974, %v10967
    %v11563 = vpack.c.b16 %v10975, %v10968
    %v11564 = vpack.c.b16 %v10976, %v10969
    %v11565 = vpack.c.b16 %v10977, %v10970
    %v11566 = vpack.c.b16 %v10978, %v10971
    %v11567 = vpack.c.b16 %v10986, %v10979
    %v11568 = vpack.c.b16 %v10987, %v10980
    %v11569 = vpack.c.b16 %v10988, %v10981
    %v11570 = vpack.c.b16 %v10989, %v10982
    %v11571 = vpack.c.b16 %v10990, %v10983
    %v11572 = vpack.c.b16 %v10991, %v10984
    %v11573 = vpack.c.b16 %v10992, %v10985
    %v11574 = vpack.c.b16 %v11000, %v10993
    %v11575 = vpack.c.b16 %v11001, %v10994
    %v11576 = vpack.c.b16 %v11002, %v10995
    %v11577 = vpack.c.b16 %v11003, %v10996
    %v11578 = vpack.c.b16 %v11004, %v10997
    %v11579 = vpack.c.b16 %v11005, %v10998
    %v11580 = vpack.c.b16 %v11006, %v10999
    %v11581 = vpack.c.b16 %v11014, %v11007
    %v11582 = vpack.c.b16 %v11015, %v11008
    %v11583 = vpack.c.b16 %v11016, %v11009
    %v11584 = vpack.c.b16 %v11017, %v11010
    %v11585 = vpack.c.b16 %v11018, %v11011
    %v11586 = vpack.c.b16 %v11019, %v11012
    %v11587 = vpack.c.b16 %v11020, %v11013
    %v11588 = vpack.c.b16 %v11028, %v11021
    %v11589 = vpack.c.b16 %v11029, %v11022
    %v11590 = vpack.c.b16 %v11030, %v11023
    %v11591 = vpack.c.b16 %v11031, %v11024
    %v11592 = vpack.c.b16 %v11032, %v11025
    %v11593 = vpack.c.b16 %v11033, %v11026
    %v11594 = vpack.c.b16 %v11034, %v11027
    %v11595 = vpack.c.b16 %v11042, %v11035
    %v11596 = vpack.c.b16 %v11043, %v11036
    %v11597 = vpack.c.b16 %v11044, %v11037
    %v11598 = vpack.c.b16 %v11045, %v11038
    %v11599 = vpack.c.b16 %v11046, %v11039
    %v11600 = vpack.c.b16 %v11047, %v11040
    %v11601 = vpack.c.b16 %v11048, %v11041
    %v11602 = vpack.c.b16 %v11056, %v11049
    %v11603 = vpack.c.b16 %v11057, %v11050
    %v11604 = vpack.c.b16 %v11058, %v11051
    %v11605 = vpack.c.b16 %v11059, %v11052
    %v11606 = vpack.c.b16 %v11060, %v11053
    %v11607 = vpack.c.b16 %v11061, %v11054
    %v11608 = vpack.c.b16 %v11062, %v11055
    %v11609 = vpack.c.b16 %v11070, %v11063
    %v11610 = vpack.c.b16 %v11071, %v11064
    %v11611 = vpack.c.b16 %v11072, %v11065
    %v11612 = vpack.c.b16 %v11073, %v11066
    %v11613 = vpack.c.b16 %v11074, %v11067
    %v11614 = vpack.c.b16 %v11075, %v11068
    %v11615 = vpack.c.b16 %v11076, %v11069
    %v11616 = vpack.c.b16 %v11084, %v11077
    %v11617 = vpack.c.b16 %v11085, %v11078
    %v11618 = vpack.c.b16 %v11086, %v11079
    %v11619 = vpack.c.b16 %v11087, %v11080
    %v11620 = vpack.c.b16 %v11088, %v11081
    %v11621 = vpack.c.b16 %v11089, %v11082
    %v11622 = vpack.c.b16 %v11090, %v11083
    %v11623 = vpack.c.b16 %v11098, %v11091
    %v11624 = vpack.c.b16 %v11099, %v11092
    %v11625 = vpack.c.b16 %v11100, %v11093
    %v11626 = vpack.c.b16 %v11101, %v11094
    %v11627 = vpack.c.b16 %v11102, %v11095
    %v11628 = vpack.c.b16 %v11103, %v11096
    %v11629 = vpack.c.b16 %v11104, %v11097
    %v11630 = vpack.c.b16 %v11112, %v11105
    %v11631 = vpack.c.b16 %v11113, %v11106
    %v11632 = vpack.c.b16 %v11114, %v11107
    %v11633 = vpack.c.b16 %v11115, %v11108
    %v11634 = vpack.c.b16 %v11116, %v11109
    %v11635 = vpack.c.b16 %v11117, %v11110
    %v11636 = vpack.c.b16 %v11118, %v11111
    %v11637 = vpack.c.b16 %v11126, %v11119
    %v11638 = vpack.c.b16 %v11127, %v11120
    %v11639 = vpack.c.b16 %v11128, %v11121
    %v11640 = vpack.c.b16 %v11129, %v11122
    %v11641 = vpack.c.b16 %v11130, %v11123
    %v11642 = vpack.c.b16 %v11131, %v11124
    %v11643 = vpack.c.b16 %v11132, %v11125
    %v11644 = vpack.c.b16 %v11140, %v11133
    %v11645 = vpack.c.b16 %v11141, %v11134
    %v11646 = vpack.c.b16 %v11142, %v11135
    %v11647 = vpack.c.b16 %v11143, %v11136
    %v11648 = vpack.c.b16 %v11144, %v11137
    %v11649 = vpack.c.b16 %v11145, %v11138
    %v11650 = vpack.c.b16 %v11146, %v11139
    %v11651 = vpack.c.b16 %v11154, %v11147
    %v11652 = vpack.c.b16 %v11155, %v11148
    %v11653 = vpack.c.b16 %v11156, %v11149
    %v11654 = vpack.c.b16 %v11157, %v11150
    %v11655 = vpack.c.b16 %v11158, %v11151
    %v11656 = vpack.c.b16 %v11159, %v11152
    %v11657 = vpack.c.b16 %v11160, %v11153
    %v11658 = vpack.c.b16 %v11168, %v11161
    %v11659 = vpack.c.b16 %v11169, %v11162
    %v11660 = vpack.c.b16 %v11170, %v11163
    %v11661 = vpack.c.b16 %v11171, %v11164
    %v11662 = vpack.c.b16 %v11172, %v11165
    %v11663 = vpack.c.b16 %v11173, %v11166
    %v11664 = vpack.c.b16 %v11174, %v11167
    %v11665 = vpack.c.b16 %v11182, %v11175
    %v11666 = vpack.c.b16 %v11183, %v11176
    %v11667 = vpack.c.b16 %v11184, %v11177
    %v11668 = vpack.c.b16 %v11185, %v11178
    %v11669 = vpack.c.b16 %v11186, %v11179
    %v11670 = vpack.c.b16 %v11187, %v11180
    %v11671 = vpack.c.b16 %v11188, %v11181
    %v11672 = vpack.c.b16 %v11196, %v11189
    %v11673 = vpack.c.b16 %v11197, %v11190
    %v11674 = vpack.c.b16 %v11198, %v11191
    %v11675 = vpack.c.b16 %v11199, %v11192
    %v11676 = vpack.c.b16 %v11200, %v11193
    %v11677 = vpack.c.b16 %v11201, %v11194
    %v11678 = vpack.c.b16 %v11202, %v11195
    %v11679 = vpack.c.b16 %v11210, %v11203
    %v11680 = vpack.c.b16 %v11211, %v11204
    %v11681 = vpack.c.b16 %v11212, %v11205
    %v11682 = vpack.c.b16 %v11213, %v11206
    %v11683 = vpack.c.b16 %v11214, %v11207
    %v11684 = vpack.c.b16 %v11215, %v11208
    %v11685 = vpack.c.b16 %v11216, %v11209
    %v11686 = vpack.c.b16 %v11224, %v11217
    %v11687 = vpack.c.b16 %v11225, %v11218
    %v11688 = vpack.c.b16 %v11226, %v11219
    %v11689 = vpack.c.b16 %v11227, %v11220
    %v11690 = vpack.c.b16 %v11228, %v11221
    %v11691 = vpack.c.b16 %v11229, %v11222
    %v11692 = vpack.c.b16 %v11230, %v11223
    %v11693 = vpack.c.b16 %v11238, %v11231
    %v11694 = vpack.c.b16 %v11239, %v11232
    %v11695 = vpack.c.b16 %v11240, %v11233
    %v11696 = vpack.c.b16 %v11241, %v11234
    %v11697 = vpack.c.b16 %v11242, %v11235
    %v11698 = vpack.c.b16 %v11243, %v11236
    %v11699 = vpack.c.b16 %v11244, %v11237
    %v11700 = vpack.c.b16 %v11252, %v11245
    %v11701 = vpack.c.b16 %v11253, %v11246
    %v11702 = vpack.c.b16 %v11254, %v11247
    %v11703 = vpack.c.b16 %v11255, %v11248
    %v11704 = vpack.c.b16 %v11256, %v11249
    %v11705 = vpack.c.b16 %v11257, %v11250
    %v11706 = vpack.c.b16 %v11258, %v11251
    %12155 = vmatpush.bf16.msra.mxu0 %v11308
    %12156 = vmatpush.bf16.msra.mxu0 %v11301
    %12157 = vmatpush.bf16.msra.mxu0 %v11294
    %12158 = vmatpush.bf16.msra.mxu0 %v11287
    %12159 = vmatpush.bf16.msra.mxu0 %v11280
    %12160 = vmatpush.bf16.msra.mxu0 %v11273
    %12161 = vmatpush.bf16.msra.mxu0 %v11266
    %12162 = vmatpush.bf16.msra.mxu0 %v11259
    %12163 = vmatmul.bf16.gmra.mxu0 %v9315
    %v12164 = vpop.f32.mrf.mxu0
    %v12165 = vadd.f32 %v9837, %v12164
    %v12166 = vpop.f32.mrf.mxu0
    %12167 = vdwg.mxu0
    %12168 = vmatpush.bf16.msra.mxu0 %v11364
    %12169 = vmatpush.bf16.msra.mxu0 %v11357
    %12170 = vmatpush.bf16.msra.mxu0 %v11350
    %12171 = vmatpush.bf16.msra.mxu0 %v11343
    %12172 = vmatpush.bf16.msra.mxu0 %v11336
    %12173 = vmatpush.bf16.msra.mxu0 %v11329
    %12174 = vmatpush.bf16.msra.mxu0 %v11322
    %12175 = vmatpush.bf16.msra.mxu0 %v11315
    %12176 = vmatmul.bf16.gmra.mxu0 %v9316
    %v12177 = vpop.f32.mrf.mxu0
    %v12178 = vadd.f32 %v12165, %v12177
    %v12179 = vpop.f32.mrf.mxu0
    %12180 = vdwg.mxu0
    %12181 = vmatpush.bf16.msra.mxu0 %v11420
    %12182 = vmatpush.bf16.msra.mxu0 %v11413
    %12183 = vmatpush.bf16.msra.mxu0 %v11406
    %12184 = vmatpush.bf16.msra.mxu0 %v11399
    %12185 = vmatpush.bf16.msra.mxu0 %v11392
    %12186 = vmatpush.bf16.msra.mxu0 %v11385
    %12187 = vmatpush.bf16.msra.mxu0 %v11378
    %12188 = vmatpush.bf16.msra.mxu0 %v11371
    %12189 = vmatmul.bf16.gmra.mxu0 %v9317
    %v12190 = vpop.f32.mrf.mxu0
    %v12191 = vadd.f32 %v12178, %v12190
    %v12192 = vpop.f32.mrf.mxu0
    %12193 = vdwg.mxu0
    %12194 = vmatpush.bf16.msra.mxu0 %v11476
    %12195 = vmatpush.bf16.msra.mxu0 %v11469
    %12196 = vmatpush.bf16.msra.mxu0 %v11462
    %12197 = vmatpush.bf16.msra.mxu0 %v11455
    %12198 = vmatpush.bf16.msra.mxu0 %v11448
    %12199 = vmatpush.bf16.msra.mxu0 %v11441
    %12200 = vmatpush.bf16.msra.mxu0 %v11434
    %12201 = vmatpush.bf16.msra.mxu0 %v11427
    %12202 = vmatmul.bf16.gmra.mxu0 %v9318
    %v12203 = vpop.f32.mrf.mxu0
    %v12204 = vadd.f32 %v12191, %v12203
    %v12205 = vpop.f32.mrf.mxu0
    %12206 = vdwg.mxu0
    %12207 = vmatpush.bf16.msra.mxu0 %v11532
    %12208 = vmatpush.bf16.msra.mxu0 %v11525
    %12209 = vmatpush.bf16.msra.mxu0 %v11518
    %12210 = vmatpush.bf16.msra.mxu0 %v11511
    %12211 = vmatpush.bf16.msra.mxu0 %v11504
    %12212 = vmatpush.bf16.msra.mxu0 %v11497
    %12213 = vmatpush.bf16.msra.mxu0 %v11490
    %12214 = vmatpush.bf16.msra.mxu0 %v11483
    %12215 = vmatmul.bf16.gmra.mxu0 %v9319
    %v12216 = vpop.f32.mrf.mxu0
    %v12217 = vadd.f32 %v12204, %v12216
    %v12218 = vpop.f32.mrf.mxu0
    %12219 = vdwg.mxu0
    %12220 = vmatpush.bf16.msra.mxu0 %v11588
    %12221 = vmatpush.bf16.msra.mxu0 %v11581
    %12222 = vmatpush.bf16.msra.mxu0 %v11574
    %12223 = vmatpush.bf16.msra.mxu0 %v11567
    %12224 = vmatpush.bf16.msra.mxu0 %v11560
    %12225 = vmatpush.bf16.msra.mxu0 %v11553
    %12226 = vmatpush.bf16.msra.mxu0 %v11546
    %12227 = vmatpush.bf16.msra.mxu0 %v11539
    %12228 = vmatmul.bf16.gmra.mxu0 %v9320
    %v12229 = vpop.f32.mrf.mxu0
    %v12230 = vadd.f32 %v12217, %v12229
    %v12231 = vpop.f32.mrf.mxu0
    %12232 = vdwg.mxu0
    %12233 = vmatpush.bf16.msra.mxu0 %v11644
    %12234 = vmatpush.bf16.msra.mxu0 %v11637
    %12235 = vmatpush.bf16.msra.mxu0 %v11630
    %12236 = vmatpush.bf16.msra.mxu0 %v11623
    %12237 = vmatpush.bf16.msra.mxu0 %v11616
    %12238 = vmatpush.bf16.msra.mxu0 %v11609
    %12239 = vmatpush.bf16.msra.mxu0 %v11602
    %12240 = vmatpush.bf16.msra.mxu0 %v11595
    %12241 = vmatmul.bf16.gmra.mxu0 %v9321
    %v12242 = vpop.f32.mrf.mxu0
    %v12243 = vadd.f32 %v12230, %v12242
    %v12244 = vpop.f32.mrf.mxu0
    %12245 = vdwg.mxu0
    %12246 = vmatpush.bf16.msra.mxu0 %v11700
    %12247 = vmatpush.bf16.msra.mxu0 %v11693
    %12248 = vmatpush.bf16.msra.mxu0 %v11686
    %12249 = vmatpush.bf16.msra.mxu0 %v11679
    %12250 = vmatpush.bf16.msra.mxu0 %v11672
    %12251 = vmatpush.bf16.msra.mxu0 %v11665
    %12252 = vmatpush.bf16.msra.mxu0 %v11658
    %12253 = vmatpush.bf16.msra.mxu0 %v11651
    %12254 = vmatmul.bf16.gmra.mxu0 %v9322
    %v12255 = vpop.f32.mrf.mxu0
    %v12256 = vadd.f32 %v12243, %v12255
    %v12257 = vpop.f32.mrf.mxu0
    %12258 = vdwg.mxu0
    %12259 = vmatpush.bf16.msra.mxu0 %v11309
    %12260 = vmatpush.bf16.msra.mxu0 %v11302
    %12261 = vmatpush.bf16.msra.mxu0 %v11295
    %12262 = vmatpush.bf16.msra.mxu0 %v11288
    %12263 = vmatpush.bf16.msra.mxu0 %v11281
    %12264 = vmatpush.bf16.msra.mxu0 %v11274
    %12265 = vmatpush.bf16.msra.mxu0 %v11267
    %12266 = vmatpush.bf16.msra.mxu0 %v11260
    %12267 = vmatmul.bf16.gmra.mxu0 %v9315
    %v12268 = vpop.f32.mrf.mxu0
    %v12269 = vadd.f32 %v9838, %v12268
    %v12270 = vpop.f32.mrf.mxu0
    %12271 = vdwg.mxu0
    %12272 = vmatpush.bf16.msra.mxu0 %v11365
    %12273 = vmatpush.bf16.msra.mxu0 %v11358
    %12274 = vmatpush.bf16.msra.mxu0 %v11351
    %12275 = vmatpush.bf16.msra.mxu0 %v11344
    %12276 = vmatpush.bf16.msra.mxu0 %v11337
    %12277 = vmatpush.bf16.msra.mxu0 %v11330
    %12278 = vmatpush.bf16.msra.mxu0 %v11323
    %12279 = vmatpush.bf16.msra.mxu0 %v11316
    %12280 = vmatmul.bf16.gmra.mxu0 %v9316
    %v12281 = vpop.f32.mrf.mxu0
    %v12282 = vadd.f32 %v12269, %v12281
    %v12283 = vpop.f32.mrf.mxu0
    %12284 = vdwg.mxu0
    %12285 = vmatpush.bf16.msra.mxu0 %v11421
    %12286 = vmatpush.bf16.msra.mxu0 %v11414
    %12287 = vmatpush.bf16.msra.mxu0 %v11407
    %12288 = vmatpush.bf16.msra.mxu0 %v11400
    %12289 = vmatpush.bf16.msra.mxu0 %v11393
    %12290 = vmatpush.bf16.msra.mxu0 %v11386
    %12291 = vmatpush.bf16.msra.mxu0 %v11379
    %12292 = vmatpush.bf16.msra.mxu0 %v11372
    %12293 = vmatmul.bf16.gmra.mxu0 %v9317
    %v12294 = vpop.f32.mrf.mxu0
    %v12295 = vadd.f32 %v12282, %v12294
    %v12296 = vpop.f32.mrf.mxu0
    %12297 = vdwg.mxu0
    %12298 = vmatpush.bf16.msra.mxu0 %v11477
    %12299 = vmatpush.bf16.msra.mxu0 %v11470
    %12300 = vmatpush.bf16.msra.mxu0 %v11463
    %12301 = vmatpush.bf16.msra.mxu0 %v11456
    %12302 = vmatpush.bf16.msra.mxu0 %v11449
    %12303 = vmatpush.bf16.msra.mxu0 %v11442
    %12304 = vmatpush.bf16.msra.mxu0 %v11435
    %12305 = vmatpush.bf16.msra.mxu0 %v11428
    %12306 = vmatmul.bf16.gmra.mxu0 %v9318
    %v12307 = vpop.f32.mrf.mxu0
    %v12308 = vadd.f32 %v12295, %v12307
    %v12309 = vpop.f32.mrf.mxu0
    %12310 = vdwg.mxu0
    %12311 = vmatpush.bf16.msra.mxu0 %v11533
    %12312 = vmatpush.bf16.msra.mxu0 %v11526
    %12313 = vmatpush.bf16.msra.mxu0 %v11519
    %12314 = vmatpush.bf16.msra.mxu0 %v11512
    %12315 = vmatpush.bf16.msra.mxu0 %v11505
    %12316 = vmatpush.bf16.msra.mxu0 %v11498
    %12317 = vmatpush.bf16.msra.mxu0 %v11491
    %12318 = vmatpush.bf16.msra.mxu0 %v11484
    %12319 = vmatmul.bf16.gmra.mxu0 %v9319
    %v12320 = vpop.f32.mrf.mxu0
    %v12321 = vadd.f32 %v12308, %v12320
    %v12322 = vpop.f32.mrf.mxu0
    %12323 = vdwg.mxu0
    %12324 = vmatpush.bf16.msra.mxu0 %v11589
    %12325 = vmatpush.bf16.msra.mxu0 %v11582
    %12326 = vmatpush.bf16.msra.mxu0 %v11575
    %12327 = vmatpush.bf16.msra.mxu0 %v11568
    %12328 = vmatpush.bf16.msra.mxu0 %v11561
    %12329 = vmatpush.bf16.msra.mxu0 %v11554
    %12330 = vmatpush.bf16.msra.mxu0 %v11547
    %12331 = vmatpush.bf16.msra.mxu0 %v11540
    %12332 = vmatmul.bf16.gmra.mxu0 %v9320
    %v12333 = vpop.f32.mrf.mxu0
    %v12334 = vadd.f32 %v12321, %v12333
    %v12335 = vpop.f32.mrf.mxu0
    %12336 = vdwg.mxu0
    %12337 = vmatpush.bf16.msra.mxu0 %v11645
    %12338 = vmatpush.bf16.msra.mxu0 %v11638
    %12339 = vmatpush.bf16.msra.mxu0 %v11631
    %12340 = vmatpush.bf16.msra.mxu0 %v11624
    %12341 = vmatpush.bf16.msra.mxu0 %v11617
    %12342 = vmatpush.bf16.msra.mxu0 %v11610
    %12343 = vmatpush.bf16.msra.mxu0 %v11603
    %12344 = vmatpush.bf16.msra.mxu0 %v11596
    %12345 = vmatmul.bf16.gmra.mxu0 %v9321
    %v12346 = vpop.f32.mrf.mxu0
    %v12347 = vadd.f32 %v12334, %v12346
    %v12348 = vpop.f32.mrf.mxu0
    %12349 = vdwg.mxu0
    %12350 = vmatpush.bf16.msra.mxu0 %v11701
    %12351 = vmatpush.bf16.msra.mxu0 %v11694
    %12352 = vmatpush.bf16.msra.mxu0 %v11687
    %12353 = vmatpush.bf16.msra.mxu0 %v11680
    %12354 = vmatpush.bf16.msra.mxu0 %v11673
    %12355 = vmatpush.bf16.msra.mxu0 %v11666
    %12356 = vmatpush.bf16.msra.mxu0 %v11659
    %12357 = vmatpush.bf16.msra.mxu0 %v11652
    %12358 = vmatmul.bf16.gmra.mxu0 %v9322
    %v12359 = vpop.f32.mrf.mxu0
    %v12360 = vadd.f32 %v12347, %v12359
    %v12361 = vpop.f32.mrf.mxu0
    %12362 = vdwg.mxu0
    %12363 = vmatpush.bf16.msra.mxu0 %v11310
    %12364 = vmatpush.bf16.msra.mxu0 %v11303
    %12365 = vmatpush.bf16.msra.mxu0 %v11296
    %12366 = vmatpush.bf16.msra.mxu0 %v11289
    %12367 = vmatpush.bf16.msra.mxu0 %v11282
    %12368 = vmatpush.bf16.msra.mxu0 %v11275
    %12369 = vmatpush.bf16.msra.mxu0 %v11268
    %12370 = vmatpush.bf16.msra.mxu0 %v11261
    %12371 = vmatmul.bf16.gmra.mxu0 %v9315
    %v12372 = vpop.f32.mrf.mxu0
    %v12373 = vadd.f32 %v9839, %v12372
    %v12374 = vpop.f32.mrf.mxu0
    %12375 = vdwg.mxu0
    %12376 = vmatpush.bf16.msra.mxu0 %v11366
    %12377 = vmatpush.bf16.msra.mxu0 %v11359
    %12378 = vmatpush.bf16.msra.mxu0 %v11352
    %12379 = vmatpush.bf16.msra.mxu0 %v11345
    %12380 = vmatpush.bf16.msra.mxu0 %v11338
    %12381 = vmatpush.bf16.msra.mxu0 %v11331
    %12382 = vmatpush.bf16.msra.mxu0 %v11324
    %12383 = vmatpush.bf16.msra.mxu0 %v11317
    %12384 = vmatmul.bf16.gmra.mxu0 %v9316
    %v12385 = vpop.f32.mrf.mxu0
    %v12386 = vadd.f32 %v12373, %v12385
    %v12387 = vpop.f32.mrf.mxu0
    %12388 = vdwg.mxu0
    %12389 = vmatpush.bf16.msra.mxu0 %v11422
    %12390 = vmatpush.bf16.msra.mxu0 %v11415
    %12391 = vmatpush.bf16.msra.mxu0 %v11408
    %12392 = vmatpush.bf16.msra.mxu0 %v11401
    %12393 = vmatpush.bf16.msra.mxu0 %v11394
    %12394 = vmatpush.bf16.msra.mxu0 %v11387
    %12395 = vmatpush.bf16.msra.mxu0 %v11380
    %12396 = vmatpush.bf16.msra.mxu0 %v11373
    %12397 = vmatmul.bf16.gmra.mxu0 %v9317
    %v12398 = vpop.f32.mrf.mxu0
    %v12399 = vadd.f32 %v12386, %v12398
    %v12400 = vpop.f32.mrf.mxu0
    %12401 = vdwg.mxu0
    %12402 = vmatpush.bf16.msra.mxu0 %v11478
    %12403 = vmatpush.bf16.msra.mxu0 %v11471
    %12404 = vmatpush.bf16.msra.mxu0 %v11464
    %12405 = vmatpush.bf16.msra.mxu0 %v11457
    %12406 = vmatpush.bf16.msra.mxu0 %v11450
    %12407 = vmatpush.bf16.msra.mxu0 %v11443
    %12408 = vmatpush.bf16.msra.mxu0 %v11436
    %12409 = vmatpush.bf16.msra.mxu0 %v11429
    %12410 = vmatmul.bf16.gmra.mxu0 %v9318
    %v12411 = vpop.f32.mrf.mxu0
    %v12412 = vadd.f32 %v12399, %v12411
    %v12413 = vpop.f32.mrf.mxu0
    %12414 = vdwg.mxu0
    %12415 = vmatpush.bf16.msra.mxu0 %v11534
    %12416 = vmatpush.bf16.msra.mxu0 %v11527
    %12417 = vmatpush.bf16.msra.mxu0 %v11520
    %12418 = vmatpush.bf16.msra.mxu0 %v11513
    %12419 = vmatpush.bf16.msra.mxu0 %v11506
    %12420 = vmatpush.bf16.msra.mxu0 %v11499
    %12421 = vmatpush.bf16.msra.mxu0 %v11492
    %12422 = vmatpush.bf16.msra.mxu0 %v11485
    %12423 = vmatmul.bf16.gmra.mxu0 %v9319
    %v12424 = vpop.f32.mrf.mxu0
    %v12425 = vadd.f32 %v12412, %v12424
    %v12426 = vpop.f32.mrf.mxu0
    %12427 = vdwg.mxu0
    %12428 = vmatpush.bf16.msra.mxu0 %v11590
    %12429 = vmatpush.bf16.msra.mxu0 %v11583
    %12430 = vmatpush.bf16.msra.mxu0 %v11576
    %12431 = vmatpush.bf16.msra.mxu0 %v11569
    %12432 = vmatpush.bf16.msra.mxu0 %v11562
    %12433 = vmatpush.bf16.msra.mxu0 %v11555
    %12434 = vmatpush.bf16.msra.mxu0 %v11548
    %12435 = vmatpush.bf16.msra.mxu0 %v11541
    %12436 = vmatmul.bf16.gmra.mxu0 %v9320
    %v12437 = vpop.f32.mrf.mxu0
    %v12438 = vadd.f32 %v12425, %v12437
    %v12439 = vpop.f32.mrf.mxu0
    %12440 = vdwg.mxu0
    %12441 = vmatpush.bf16.msra.mxu0 %v11646
    %12442 = vmatpush.bf16.msra.mxu0 %v11639
    %12443 = vmatpush.bf16.msra.mxu0 %v11632
    %12444 = vmatpush.bf16.msra.mxu0 %v11625
    %12445 = vmatpush.bf16.msra.mxu0 %v11618
    %12446 = vmatpush.bf16.msra.mxu0 %v11611
    %12447 = vmatpush.bf16.msra.mxu0 %v11604
    %12448 = vmatpush.bf16.msra.mxu0 %v11597
    %12449 = vmatmul.bf16.gmra.mxu0 %v9321
    %v12450 = vpop.f32.mrf.mxu0
    %v12451 = vadd.f32 %v12438, %v12450
    %v12452 = vpop.f32.mrf.mxu0
    %12453 = vdwg.mxu0
    %12454 = vmatpush.bf16.msra.mxu0 %v11702
    %12455 = vmatpush.bf16.msra.mxu0 %v11695
    %12456 = vmatpush.bf16.msra.mxu0 %v11688
    %12457 = vmatpush.bf16.msra.mxu0 %v11681
    %12458 = vmatpush.bf16.msra.mxu0 %v11674
    %12459 = vmatpush.bf16.msra.mxu0 %v11667
    %12460 = vmatpush.bf16.msra.mxu0 %v11660
    %12461 = vmatpush.bf16.msra.mxu0 %v11653
    %12462 = vmatmul.bf16.gmra.mxu0 %v9322
    %v12463 = vpop.f32.mrf.mxu0
    %v12464 = vadd.f32 %v12451, %v12463
    %v12465 = vpop.f32.mrf.mxu0
    %12466 = vdwg.mxu0
    %12467 = vmatpush.bf16.msra.mxu0 %v11311
    %12468 = vmatpush.bf16.msra.mxu0 %v11304
    %12469 = vmatpush.bf16.msra.mxu0 %v11297
    %12470 = vmatpush.bf16.msra.mxu0 %v11290
    %12471 = vmatpush.bf16.msra.mxu0 %v11283
    %12472 = vmatpush.bf16.msra.mxu0 %v11276
    %12473 = vmatpush.bf16.msra.mxu0 %v11269
    %12474 = vmatpush.bf16.msra.mxu0 %v11262
    %12475 = vmatmul.bf16.gmra.mxu0 %v9315
    %v12476 = vpop.f32.mrf.mxu0
    %v12477 = vadd.f32 %v9840, %v12476
    %v12478 = vpop.f32.mrf.mxu0
    %12479 = vdwg.mxu0
    %12480 = vmatpush.bf16.msra.mxu0 %v11367
    %12481 = vmatpush.bf16.msra.mxu0 %v11360
    %12482 = vmatpush.bf16.msra.mxu0 %v11353
    %12483 = vmatpush.bf16.msra.mxu0 %v11346
    %12484 = vmatpush.bf16.msra.mxu0 %v11339
    %12485 = vmatpush.bf16.msra.mxu0 %v11332
    %12486 = vmatpush.bf16.msra.mxu0 %v11325
    %12487 = vmatpush.bf16.msra.mxu0 %v11318
    %12488 = vmatmul.bf16.gmra.mxu0 %v9316
    %v12489 = vpop.f32.mrf.mxu0
    %v12490 = vadd.f32 %v12477, %v12489
    %v12491 = vpop.f32.mrf.mxu0
    %12492 = vdwg.mxu0
    %12493 = vmatpush.bf16.msra.mxu0 %v11423
    %12494 = vmatpush.bf16.msra.mxu0 %v11416
    %12495 = vmatpush.bf16.msra.mxu0 %v11409
    %12496 = vmatpush.bf16.msra.mxu0 %v11402
    %12497 = vmatpush.bf16.msra.mxu0 %v11395
    %12498 = vmatpush.bf16.msra.mxu0 %v11388
    %12499 = vmatpush.bf16.msra.mxu0 %v11381
    %12500 = vmatpush.bf16.msra.mxu0 %v11374
    %12501 = vmatmul.bf16.gmra.mxu0 %v9317
    %v12502 = vpop.f32.mrf.mxu0
    %v12503 = vadd.f32 %v12490, %v12502
    %v12504 = vpop.f32.mrf.mxu0
    %12505 = vdwg.mxu0
    %12506 = vmatpush.bf16.msra.mxu0 %v11479
    %12507 = vmatpush.bf16.msra.mxu0 %v11472
    %12508 = vmatpush.bf16.msra.mxu0 %v11465
    %12509 = vmatpush.bf16.msra.mxu0 %v11458
    %12510 = vmatpush.bf16.msra.mxu0 %v11451
    %12511 = vmatpush.bf16.msra.mxu0 %v11444
    %12512 = vmatpush.bf16.msra.mxu0 %v11437
    %12513 = vmatpush.bf16.msra.mxu0 %v11430
    %12514 = vmatmul.bf16.gmra.mxu0 %v9318
    %v12515 = vpop.f32.mrf.mxu0
    %v12516 = vadd.f32 %v12503, %v12515
    %v12517 = vpop.f32.mrf.mxu0
    %12518 = vdwg.mxu0
    %12519 = vmatpush.bf16.msra.mxu0 %v11535
    %12520 = vmatpush.bf16.msra.mxu0 %v11528
    %12521 = vmatpush.bf16.msra.mxu0 %v11521
    %12522 = vmatpush.bf16.msra.mxu0 %v11514
    %12523 = vmatpush.bf16.msra.mxu0 %v11507
    %12524 = vmatpush.bf16.msra.mxu0 %v11500
    %12525 = vmatpush.bf16.msra.mxu0 %v11493
    %12526 = vmatpush.bf16.msra.mxu0 %v11486
    %12527 = vmatmul.bf16.gmra.mxu0 %v9319
    %v12528 = vpop.f32.mrf.mxu0
    %v12529 = vadd.f32 %v12516, %v12528
    %v12530 = vpop.f32.mrf.mxu0
    %12531 = vdwg.mxu0
    %12532 = vmatpush.bf16.msra.mxu0 %v11591
    %12533 = vmatpush.bf16.msra.mxu0 %v11584
    %12534 = vmatpush.bf16.msra.mxu0 %v11577
    %12535 = vmatpush.bf16.msra.mxu0 %v11570
    %12536 = vmatpush.bf16.msra.mxu0 %v11563
    %12537 = vmatpush.bf16.msra.mxu0 %v11556
    %12538 = vmatpush.bf16.msra.mxu0 %v11549
    %12539 = vmatpush.bf16.msra.mxu0 %v11542
    %12540 = vmatmul.bf16.gmra.mxu0 %v9320
    %v12541 = vpop.f32.mrf.mxu0
    %v12542 = vadd.f32 %v12529, %v12541
    %v12543 = vpop.f32.mrf.mxu0
    %12544 = vdwg.mxu0
    %12545 = vmatpush.bf16.msra.mxu0 %v11647
    %12546 = vmatpush.bf16.msra.mxu0 %v11640
    %12547 = vmatpush.bf16.msra.mxu0 %v11633
    %12548 = vmatpush.bf16.msra.mxu0 %v11626
    %12549 = vmatpush.bf16.msra.mxu0 %v11619
    %12550 = vmatpush.bf16.msra.mxu0 %v11612
    %12551 = vmatpush.bf16.msra.mxu0 %v11605
    %12552 = vmatpush.bf16.msra.mxu0 %v11598
    %12553 = vmatmul.bf16.gmra.mxu0 %v9321
    %v12554 = vpop.f32.mrf.mxu0
    %v12555 = vadd.f32 %v12542, %v12554
    %v12556 = vpop.f32.mrf.mxu0
    %12557 = vdwg.mxu0
    %12558 = vmatpush.bf16.msra.mxu0 %v11703
    %12559 = vmatpush.bf16.msra.mxu0 %v11696
    %12560 = vmatpush.bf16.msra.mxu0 %v11689
    %12561 = vmatpush.bf16.msra.mxu0 %v11682
    %12562 = vmatpush.bf16.msra.mxu0 %v11675
    %12563 = vmatpush.bf16.msra.mxu0 %v11668
    %12564 = vmatpush.bf16.msra.mxu0 %v11661
    %12565 = vmatpush.bf16.msra.mxu0 %v11654
    %12566 = vmatmul.bf16.gmra.mxu0 %v9322
    %v12567 = vpop.f32.mrf.mxu0
    %v12568 = vadd.f32 %v12555, %v12567
    %v12569 = vpop.f32.mrf.mxu0
    %12570 = vdwg.mxu0
    %12571 = vmatpush.bf16.msra.mxu0 %v11312
    %12572 = vmatpush.bf16.msra.mxu0 %v11305
    %12573 = vmatpush.bf16.msra.mxu0 %v11298
    %12574 = vmatpush.bf16.msra.mxu0 %v11291
    %12575 = vmatpush.bf16.msra.mxu0 %v11284
    %12576 = vmatpush.bf16.msra.mxu0 %v11277
    %12577 = vmatpush.bf16.msra.mxu0 %v11270
    %12578 = vmatpush.bf16.msra.mxu0 %v11263
    %12579 = vmatmul.bf16.gmra.mxu0 %v9315
    %v12580 = vpop.f32.mrf.mxu0
    %v12581 = vadd.f32 %v9841, %v12580
    %v12582 = vpop.f32.mrf.mxu0
    %12583 = vdwg.mxu0
    %12584 = vmatpush.bf16.msra.mxu0 %v11368
    %12585 = vmatpush.bf16.msra.mxu0 %v11361
    %12586 = vmatpush.bf16.msra.mxu0 %v11354
    %12587 = vmatpush.bf16.msra.mxu0 %v11347
    %12588 = vmatpush.bf16.msra.mxu0 %v11340
    %12589 = vmatpush.bf16.msra.mxu0 %v11333
    %12590 = vmatpush.bf16.msra.mxu0 %v11326
    %12591 = vmatpush.bf16.msra.mxu0 %v11319
    %12592 = vmatmul.bf16.gmra.mxu0 %v9316
    %v12593 = vpop.f32.mrf.mxu0
    %v12594 = vadd.f32 %v12581, %v12593
    %v12595 = vpop.f32.mrf.mxu0
    %12596 = vdwg.mxu0
    %12597 = vmatpush.bf16.msra.mxu0 %v11424
    %12598 = vmatpush.bf16.msra.mxu0 %v11417
    %12599 = vmatpush.bf16.msra.mxu0 %v11410
    %12600 = vmatpush.bf16.msra.mxu0 %v11403
    %12601 = vmatpush.bf16.msra.mxu0 %v11396
    %12602 = vmatpush.bf16.msra.mxu0 %v11389
    %12603 = vmatpush.bf16.msra.mxu0 %v11382
    %12604 = vmatpush.bf16.msra.mxu0 %v11375
    %12605 = vmatmul.bf16.gmra.mxu0 %v9317
    %v12606 = vpop.f32.mrf.mxu0
    %v12607 = vadd.f32 %v12594, %v12606
    %v12608 = vpop.f32.mrf.mxu0
    %12609 = vdwg.mxu0
    %12610 = vmatpush.bf16.msra.mxu0 %v11480
    %12611 = vmatpush.bf16.msra.mxu0 %v11473
    %12612 = vmatpush.bf16.msra.mxu0 %v11466
    %12613 = vmatpush.bf16.msra.mxu0 %v11459
    %12614 = vmatpush.bf16.msra.mxu0 %v11452
    %12615 = vmatpush.bf16.msra.mxu0 %v11445
    %12616 = vmatpush.bf16.msra.mxu0 %v11438
    %12617 = vmatpush.bf16.msra.mxu0 %v11431
    %12618 = vmatmul.bf16.gmra.mxu0 %v9318
    %v12619 = vpop.f32.mrf.mxu0
    %v12620 = vadd.f32 %v12607, %v12619
    %v12621 = vpop.f32.mrf.mxu0
    %12622 = vdwg.mxu0
    %12623 = vmatpush.bf16.msra.mxu0 %v11536
    %12624 = vmatpush.bf16.msra.mxu0 %v11529
    %12625 = vmatpush.bf16.msra.mxu0 %v11522
    %12626 = vmatpush.bf16.msra.mxu0 %v11515
    %12627 = vmatpush.bf16.msra.mxu0 %v11508
    %12628 = vmatpush.bf16.msra.mxu0 %v11501
    %12629 = vmatpush.bf16.msra.mxu0 %v11494
    %12630 = vmatpush.bf16.msra.mxu0 %v11487
    %12631 = vmatmul.bf16.gmra.mxu0 %v9319
    %v12632 = vpop.f32.mrf.mxu0
    %v12633 = vadd.f32 %v12620, %v12632
    %v12634 = vpop.f32.mrf.mxu0
    %12635 = vdwg.mxu0
    %12636 = vmatpush.bf16.msra.mxu0 %v11592
    %12637 = vmatpush.bf16.msra.mxu0 %v11585
    %12638 = vmatpush.bf16.msra.mxu0 %v11578
    %12639 = vmatpush.bf16.msra.mxu0 %v11571
    %12640 = vmatpush.bf16.msra.mxu0 %v11564
    %12641 = vmatpush.bf16.msra.mxu0 %v11557
    %12642 = vmatpush.bf16.msra.mxu0 %v11550
    %12643 = vmatpush.bf16.msra.mxu0 %v11543
    %12644 = vmatmul.bf16.gmra.mxu0 %v9320
    %v12645 = vpop.f32.mrf.mxu0
    %v12646 = vadd.f32 %v12633, %v12645
    %v12647 = vpop.f32.mrf.mxu0
    %12648 = vdwg.mxu0
    %12649 = vmatpush.bf16.msra.mxu0 %v11648
    %12650 = vmatpush.bf16.msra.mxu0 %v11641
    %12651 = vmatpush.bf16.msra.mxu0 %v11634
    %12652 = vmatpush.bf16.msra.mxu0 %v11627
    %12653 = vmatpush.bf16.msra.mxu0 %v11620
    %12654 = vmatpush.bf16.msra.mxu0 %v11613
    %12655 = vmatpush.bf16.msra.mxu0 %v11606
    %12656 = vmatpush.bf16.msra.mxu0 %v11599
    %12657 = vmatmul.bf16.gmra.mxu0 %v9321
    %v12658 = vpop.f32.mrf.mxu0
    %v12659 = vadd.f32 %v12646, %v12658
    %v12660 = vpop.f32.mrf.mxu0
    %12661 = vdwg.mxu0
    %12662 = vmatpush.bf16.msra.mxu0 %v11704
    %12663 = vmatpush.bf16.msra.mxu0 %v11697
    %12664 = vmatpush.bf16.msra.mxu0 %v11690
    %12665 = vmatpush.bf16.msra.mxu0 %v11683
    %12666 = vmatpush.bf16.msra.mxu0 %v11676
    %12667 = vmatpush.bf16.msra.mxu0 %v11669
    %12668 = vmatpush.bf16.msra.mxu0 %v11662
    %12669 = vmatpush.bf16.msra.mxu0 %v11655
    %12670 = vmatmul.bf16.gmra.mxu0 %v9322
    %v12671 = vpop.f32.mrf.mxu0
    %v12672 = vadd.f32 %v12659, %v12671
    %v12673 = vpop.f32.mrf.mxu0
    %12674 = vdwg.mxu0
    %12675 = vmatpush.bf16.msra.mxu0 %v11313
    %12676 = vmatpush.bf16.msra.mxu0 %v11306
    %12677 = vmatpush.bf16.msra.mxu0 %v11299
    %12678 = vmatpush.bf16.msra.mxu0 %v11292
    %12679 = vmatpush.bf16.msra.mxu0 %v11285
    %12680 = vmatpush.bf16.msra.mxu0 %v11278
    %12681 = vmatpush.bf16.msra.mxu0 %v11271
    %12682 = vmatpush.bf16.msra.mxu0 %v11264
    %12683 = vmatmul.bf16.gmra.mxu0 %v9315
    %v12684 = vpop.f32.mrf.mxu0
    %v12685 = vadd.f32 %v9842, %v12684
    %v12686 = vpop.f32.mrf.mxu0
    %12687 = vdwg.mxu0
    %12688 = vmatpush.bf16.msra.mxu0 %v11369
    %12689 = vmatpush.bf16.msra.mxu0 %v11362
    %12690 = vmatpush.bf16.msra.mxu0 %v11355
    %12691 = vmatpush.bf16.msra.mxu0 %v11348
    %12692 = vmatpush.bf16.msra.mxu0 %v11341
    %12693 = vmatpush.bf16.msra.mxu0 %v11334
    %12694 = vmatpush.bf16.msra.mxu0 %v11327
    %12695 = vmatpush.bf16.msra.mxu0 %v11320
    %12696 = vmatmul.bf16.gmra.mxu0 %v9316
    %v12697 = vpop.f32.mrf.mxu0
    %v12698 = vadd.f32 %v12685, %v12697
    %v12699 = vpop.f32.mrf.mxu0
    %12700 = vdwg.mxu0
    %12701 = vmatpush.bf16.msra.mxu0 %v11425
    %12702 = vmatpush.bf16.msra.mxu0 %v11418
    %12703 = vmatpush.bf16.msra.mxu0 %v11411
    %12704 = vmatpush.bf16.msra.mxu0 %v11404
    %12705 = vmatpush.bf16.msra.mxu0 %v11397
    %12706 = vmatpush.bf16.msra.mxu0 %v11390
    %12707 = vmatpush.bf16.msra.mxu0 %v11383
    %12708 = vmatpush.bf16.msra.mxu0 %v11376
    %12709 = vmatmul.bf16.gmra.mxu0 %v9317
    %v12710 = vpop.f32.mrf.mxu0
    %v12711 = vadd.f32 %v12698, %v12710
    %v12712 = vpop.f32.mrf.mxu0
    %12713 = vdwg.mxu0
    %12714 = vmatpush.bf16.msra.mxu0 %v11481
    %12715 = vmatpush.bf16.msra.mxu0 %v11474
    %12716 = vmatpush.bf16.msra.mxu0 %v11467
    %12717 = vmatpush.bf16.msra.mxu0 %v11460
    %12718 = vmatpush.bf16.msra.mxu0 %v11453
    %12719 = vmatpush.bf16.msra.mxu0 %v11446
    %12720 = vmatpush.bf16.msra.mxu0 %v11439
    %12721 = vmatpush.bf16.msra.mxu0 %v11432
    %12722 = vmatmul.bf16.gmra.mxu0 %v9318
    %v12723 = vpop.f32.mrf.mxu0
    %v12724 = vadd.f32 %v12711, %v12723
    %v12725 = vpop.f32.mrf.mxu0
    %12726 = vdwg.mxu0
    %12727 = vmatpush.bf16.msra.mxu0 %v11537
    %12728 = vmatpush.bf16.msra.mxu0 %v11530
    %12729 = vmatpush.bf16.msra.mxu0 %v11523
    %12730 = vmatpush.bf16.msra.mxu0 %v11516
    %12731 = vmatpush.bf16.msra.mxu0 %v11509
    %12732 = vmatpush.bf16.msra.mxu0 %v11502
    %12733 = vmatpush.bf16.msra.mxu0 %v11495
    %12734 = vmatpush.bf16.msra.mxu0 %v11488
    %12735 = vmatmul.bf16.gmra.mxu0 %v9319
    %v12736 = vpop.f32.mrf.mxu0
    %v12737 = vadd.f32 %v12724, %v12736
    %v12738 = vpop.f32.mrf.mxu0
    %12739 = vdwg.mxu0
    %12740 = vmatpush.bf16.msra.mxu0 %v11593
    %12741 = vmatpush.bf16.msra.mxu0 %v11586
    %12742 = vmatpush.bf16.msra.mxu0 %v11579
    %12743 = vmatpush.bf16.msra.mxu0 %v11572
    %12744 = vmatpush.bf16.msra.mxu0 %v11565
    %12745 = vmatpush.bf16.msra.mxu0 %v11558
    %12746 = vmatpush.bf16.msra.mxu0 %v11551
    %12747 = vmatpush.bf16.msra.mxu0 %v11544
    %12748 = vmatmul.bf16.gmra.mxu0 %v9320
    %v12749 = vpop.f32.mrf.mxu0
    %v12750 = vadd.f32 %v12737, %v12749
    %v12751 = vpop.f32.mrf.mxu0
    %12752 = vdwg.mxu0
    %12753 = vmatpush.bf16.msra.mxu0 %v11649
    %12754 = vmatpush.bf16.msra.mxu0 %v11642
    %12755 = vmatpush.bf16.msra.mxu0 %v11635
    %12756 = vmatpush.bf16.msra.mxu0 %v11628
    %12757 = vmatpush.bf16.msra.mxu0 %v11621
    %12758 = vmatpush.bf16.msra.mxu0 %v11614
    %12759 = vmatpush.bf16.msra.mxu0 %v11607
    %12760 = vmatpush.bf16.msra.mxu0 %v11600
    %12761 = vmatmul.bf16.gmra.mxu0 %v9321
    %v12762 = vpop.f32.mrf.mxu0
    %v12763 = vadd.f32 %v12750, %v12762
    %v12764 = vpop.f32.mrf.mxu0
    %12765 = vdwg.mxu0
    %12766 = vmatpush.bf16.msra.mxu0 %v11705
    %12767 = vmatpush.bf16.msra.mxu0 %v11698
    %12768 = vmatpush.bf16.msra.mxu0 %v11691
    %12769 = vmatpush.bf16.msra.mxu0 %v11684
    %12770 = vmatpush.bf16.msra.mxu0 %v11677
    %12771 = vmatpush.bf16.msra.mxu0 %v11670
    %12772 = vmatpush.bf16.msra.mxu0 %v11663
    %12773 = vmatpush.bf16.msra.mxu0 %v11656
    %12774 = vmatmul.bf16.gmra.mxu0 %v9322
    %v12775 = vpop.f32.mrf.mxu0
    %v12776 = vadd.f32 %v12763, %v12775
    %v12777 = vpop.f32.mrf.mxu0
    %12778 = vdwg.mxu0
    %12779 = vmatpush.bf16.msra.mxu0 %v11314
    %12780 = vmatpush.bf16.msra.mxu0 %v11307
    %12781 = vmatpush.bf16.msra.mxu0 %v11300
    %12782 = vmatpush.bf16.msra.mxu0 %v11293
    %12783 = vmatpush.bf16.msra.mxu0 %v11286
    %12784 = vmatpush.bf16.msra.mxu0 %v11279
    %12785 = vmatpush.bf16.msra.mxu0 %v11272
    %12786 = vmatpush.bf16.msra.mxu0 %v11265
    %12787 = vmatmul.bf16.gmra.mxu0 %v9315
    %v12788 = vpop.f32.mrf.mxu0
    %v12789 = vadd.f32 %v9843, %v12788
    %v12790 = vpop.f32.mrf.mxu0
    %12791 = vdwg.mxu0
    %12792 = vmatpush.bf16.msra.mxu0 %v11370
    %12793 = vmatpush.bf16.msra.mxu0 %v11363
    %12794 = vmatpush.bf16.msra.mxu0 %v11356
    %12795 = vmatpush.bf16.msra.mxu0 %v11349
    %12796 = vmatpush.bf16.msra.mxu0 %v11342
    %12797 = vmatpush.bf16.msra.mxu0 %v11335
    %12798 = vmatpush.bf16.msra.mxu0 %v11328
    %12799 = vmatpush.bf16.msra.mxu0 %v11321
    %12800 = vmatmul.bf16.gmra.mxu0 %v9316
    %v12801 = vpop.f32.mrf.mxu0
    %v12802 = vadd.f32 %v12789, %v12801
    %v12803 = vpop.f32.mrf.mxu0
    %12804 = vdwg.mxu0
    %12805 = vmatpush.bf16.msra.mxu0 %v11426
    %12806 = vmatpush.bf16.msra.mxu0 %v11419
    %12807 = vmatpush.bf16.msra.mxu0 %v11412
    %12808 = vmatpush.bf16.msra.mxu0 %v11405
    %12809 = vmatpush.bf16.msra.mxu0 %v11398
    %12810 = vmatpush.bf16.msra.mxu0 %v11391
    %12811 = vmatpush.bf16.msra.mxu0 %v11384
    %12812 = vmatpush.bf16.msra.mxu0 %v11377
    %12813 = vmatmul.bf16.gmra.mxu0 %v9317
    %v12814 = vpop.f32.mrf.mxu0
    %v12815 = vadd.f32 %v12802, %v12814
    %v12816 = vpop.f32.mrf.mxu0
    %12817 = vdwg.mxu0
    %12818 = vmatpush.bf16.msra.mxu0 %v11482
    %12819 = vmatpush.bf16.msra.mxu0 %v11475
    %12820 = vmatpush.bf16.msra.mxu0 %v11468
    %12821 = vmatpush.bf16.msra.mxu0 %v11461
    %12822 = vmatpush.bf16.msra.mxu0 %v11454
    %12823 = vmatpush.bf16.msra.mxu0 %v11447
    %12824 = vmatpush.bf16.msra.mxu0 %v11440
    %12825 = vmatpush.bf16.msra.mxu0 %v11433
    %12826 = vmatmul.bf16.gmra.mxu0 %v9318
    %v12827 = vpop.f32.mrf.mxu0
    %v12828 = vadd.f32 %v12815, %v12827
    %v12829 = vpop.f32.mrf.mxu0
    %12830 = vdwg.mxu0
    %12831 = vmatpush.bf16.msra.mxu0 %v11538
    %12832 = vmatpush.bf16.msra.mxu0 %v11531
    %12833 = vmatpush.bf16.msra.mxu0 %v11524
    %12834 = vmatpush.bf16.msra.mxu0 %v11517
    %12835 = vmatpush.bf16.msra.mxu0 %v11510
    %12836 = vmatpush.bf16.msra.mxu0 %v11503
    %12837 = vmatpush.bf16.msra.mxu0 %v11496
    %12838 = vmatpush.bf16.msra.mxu0 %v11489
    %12839 = vmatmul.bf16.gmra.mxu0 %v9319
    %v12840 = vpop.f32.mrf.mxu0
    %v12841 = vadd.f32 %v12828, %v12840
    %v12842 = vpop.f32.mrf.mxu0
    %12843 = vdwg.mxu0
    %12844 = vmatpush.bf16.msra.mxu0 %v11594
    %12845 = vmatpush.bf16.msra.mxu0 %v11587
    %12846 = vmatpush.bf16.msra.mxu0 %v11580
    %12847 = vmatpush.bf16.msra.mxu0 %v11573
    %12848 = vmatpush.bf16.msra.mxu0 %v11566
    %12849 = vmatpush.bf16.msra.mxu0 %v11559
    %12850 = vmatpush.bf16.msra.mxu0 %v11552
    %12851 = vmatpush.bf16.msra.mxu0 %v11545
    %12852 = vmatmul.bf16.gmra.mxu0 %v9320
    %v12853 = vpop.f32.mrf.mxu0
    %v12854 = vadd.f32 %v12841, %v12853
    %v12855 = vpop.f32.mrf.mxu0
    %12856 = vdwg.mxu0
    %12857 = vmatpush.bf16.msra.mxu0 %v11650
    %12858 = vmatpush.bf16.msra.mxu0 %v11643
    %12859 = vmatpush.bf16.msra.mxu0 %v11636
    %12860 = vmatpush.bf16.msra.mxu0 %v11629
    %12861 = vmatpush.bf16.msra.mxu0 %v11622
    %12862 = vmatpush.bf16.msra.mxu0 %v11615
    %12863 = vmatpush.bf16.msra.mxu0 %v11608
    %12864 = vmatpush.bf16.msra.mxu0 %v11601
    %12865 = vmatmul.bf16.gmra.mxu0 %v9321
    %v12866 = vpop.f32.mrf.mxu0
    %v12867 = vadd.f32 %v12854, %v12866
    %v12868 = vpop.f32.mrf.mxu0
    %12869 = vdwg.mxu0
    %12870 = vmatpush.bf16.msra.mxu0 %v11706
    %12871 = vmatpush.bf16.msra.mxu0 %v11699
    %12872 = vmatpush.bf16.msra.mxu0 %v11692
    %12873 = vmatpush.bf16.msra.mxu0 %v11685
    %12874 = vmatpush.bf16.msra.mxu0 %v11678
    %12875 = vmatpush.bf16.msra.mxu0 %v11671
    %12876 = vmatpush.bf16.msra.mxu0 %v11664
    %12877 = vmatpush.bf16.msra.mxu0 %v11657
    %12878 = vmatmul.bf16.gmra.mxu0 %v9322
    %v12879 = vpop.f32.mrf.mxu0
    %v12880 = vadd.f32 %v12867, %v12879
    %v12881 = vpop.f32.mrf.mxu0
    %12882 = vdwg.mxu0
    %v12890 = vrot.slane %v12360, 6
    %v12891 = vrot.slane %v12464, 4
    %v12892 = vrot.slane %v12568, 2
    %v12893 = vrot.slane %v12776, 6
    %v12894 = vrot.slane %v12880, 4
    %vm12895 = vcmask 1041408
    %v12896 = vsel %vm12895, %v12256, %v12890
    %vm12897 = vcmask 1045508
    %v12898 = vsel %vm12897, %v12891, %v12892
    %vm12899 = vcmask 1043456
    %v12900 = vsel %vm12899, %v12896, %v12898
    %v12901 = vsel %vm12895, %v12672, %v12893
    %v12902 = vsel %vm12899, %v12901, %v12894
    %12905 = vst [vmem:[#allocation5] sm:$0xff] %v12900
    %vm12906 = vcmask 1043458
    %vm12907 = vmor %vm12906, %vm12895
    %vm12908 = vcmask 128004
    %vm12909 = vmor %vm12908, %vm12907
    %12910 = vst.msk [vmem:[#allocation5 + $0x8] sm:$0x3f] %vm12909, %v12902
    // Predicated region
    $region74: #{_forward_impl.1} parent=1 // pred_check
      _
    $region75: #{_forward_impl.1} parent=1 // pred_check_branch
      %12912 = sbr.rel (0) target = $region77
    $region76: #{_forward_impl.1} parent=1 // pred_region
      %12914 = vsyncadd [#allocation4], 0
      %s12916 = sshll.u32 [#allocation5], 4
      %s12917 = int_to_ptr.vmem [resolvable:$true] %s12916
      %s12918 = sshll.u32 %s17, 4
      %s12919 = int_to_ptr.hbm [resolvable:$true] %s12918
      %12921 = dma.vmem_to_hbm [thread:$0]  %s12917, 224, %s12919, [#allocation4]
    $region77: #{_forward_impl.1} parent=1 // pred_fallthru
      _
    // Predicated region
    $region78: #{_forward_impl.1} parent=1 // pred_check
      _
    $region79: #{_forward_impl.1} parent=1 // pred_check_branch
      %12923 = sbr.rel (0) target = $region81
    $region80: #{_forward_impl.1} parent=1 // pred_region
      %12925 = dma.done [#allocation4], 224
    $region81: #{_forward_impl.1} parent=1 // pred_fallthru
      _
    %12926 = vsyncpa [#allocation3], 1
    %12927 = vsyncpa [#allocation4], 1

</llo_original>
